<compile_context>
chip_gen: v7x
topology: tpu7x:2x2x1
jax: 0.10.0
libtpu: 0.0.40
codegen_flags: <defaults>
</compile_context>

<pallas_src>
import jax
import jax.numpy as jnp
from jax.experimental import pallas as pl
from jax.experimental.pallas import tpu as pltpu

EPS = 1e-5
CPAD = 128                        # pad output channels to one full lane width
VMEM_LIMIT = 32 * 1024 * 1024     # explicit scoped-VMEM limit, safe on v5e/v6e/v7x


# ---------------------------------------------------------------------------
# Pallas kernels
# ---------------------------------------------------------------------------
def _make_conv_kernel(k, tile_h, wo, ceff, cpad):
    """KxK 'same' conv with fused im2col + per-tile BN partial sums."""

    def kernel(x_ref, w_ref, y_ref, stats_ref, acc_ref):
        # x_ref:     (Hp, Wp, Ceff)      f32  padded image (one batch element)
        # w_ref:     (K*K, Ceff, CPAD)   bf16 folded conv weights
        # y_ref:     (tile_h, Wo, CPAD)  f32  pre-BN conv output tile
        # stats_ref: (2, CPAD)           f32  per-tile [sum, sum of squares]
        # acc_ref:   (tile_h*Wo, CPAD)   f32  VMEM accumulator
        row0 = pl.program_id(1) * tile_h
        acc_ref[...] = jnp.zeros_like(acc_ref)
        for dh in range(k):
            rows = x_ref[pl.ds(row0 + dh, tile_h), :, :]        # (tile_h, Wp, Ceff)
            for dw in range(k):
                win = rows[:, dw:dw + wo, :]                    # (tile_h, Wo, Ceff)
                a = win.reshape(tile_h * wo, ceff).astype(jnp.bfloat16)
                acc_ref[...] += jnp.dot(a, w_ref[dh * k + dw],
                                        preferred_element_type=jnp.float32)
        acc = acc_ref[...]
        y_ref[...] = acc.reshape(tile_h, wo, cpad)
        stats_ref[...] = jnp.concatenate(
            [jnp.sum(acc, axis=0, keepdims=True),
             jnp.sum(acc * acc, axis=0, keepdims=True)], axis=0)

    return kernel


def _bn_relu_kernel(y_ref, scale_ref, shift_ref, o_ref):
    """Apply precomputed BN scale/shift + ReLU on lane-dense (TILE_M, 128) tiles."""
    o_ref[...] = jnp.maximum(y_ref[...] * scale_ref[...] + shift_ref[...], 0.0)


# ---------------------------------------------------------------------------
# JAX glue (trace-time / cheap)
# ---------------------------------------------------------------------------
def _pick_tile(n, target, multiple=1):
    """Largest divisor of n that is <= target and a multiple of `multiple`."""
    t = min(target, n)
    while t > 0:
        if n % t == 0 and t % multiple == 0:
            return t
        t -= 1
    return n


def _bilinear_upsample_x2_nhwc(x):
    """nn.UpsamplingBilinear2d(scale_factor=2), align_corners=True, NHWC."""
    # TODO(synk): upsample kept as XLA glue (2-tap gather + lerp, fused by XLA);
    # could be folded into the conv kernel via scalar-prefetched index tables.
    n, h, w, c = x.shape
    ho, wo = 2 * h, 2 * w
    hs = jnp.arange(ho, dtype=jnp.float32) * (h - 1) / (ho - 1)
    ws = jnp.arange(wo, dtype=jnp.float32) * (w - 1) / (wo - 1)
    h0 = jnp.floor(hs).astype(jnp.int32)
    h1 = jnp.minimum(h0 + 1, h - 1)
    fh = (hs - h0.astype(jnp.float32))[None, :, None, None]
    w0 = jnp.floor(ws).astype(jnp.int32)
    w1 = jnp.minimum(w0 + 1, w - 1)
    fw = (ws - w0.astype(jnp.float32))[None, None, :, None]
    top = x[:, h0, :, :]
    bot = x[:, h1, :, :]
    rows = top * (1.0 - fh) + bot * fh                # (N, Ho, W, C)
    left = rows[:, :, w0, :]
    right = rows[:, :, w1, :]
    return left * (1.0 - fw) + right * fw             # (N, Ho, Wo, C)


def _fold_weights(w_reduce, w_conv, cpad):
    """Compose conv_reduce (1x1) into conv (KxK): exact weight folding.

    Returns (K*K, Cin+Cskip, CPAD) bf16 with kh*K+kw flattening and
    zero-padded output channels.
    """
    cskip, cin = w_reduce.shape[0], w_reduce.shape[1]
    cout, _, k, _ = w_conv.shape
    w1 = w_reduce[:, :, 0, 0]                                     # (Cskip, Cin)
    w_up = jnp.einsum("ochw,ci->oihw", w_conv[:, :cskip], w1)     # (Cout, Cin, K, K)
    w_skip = w_conv[:, cskip:]                                    # (Cout, Cskip, K, K)
    w_eff = jnp.concatenate([w_up, w_skip], axis=1)               # (Cout, Ceff, K, K)
    w_khwc = jnp.transpose(w_eff, (2, 3, 1, 0))                   # (K, K, Ceff, Cout)
    w_pad = jnp.pad(w_khwc, ((0, 0), (0, 0), (0, 0), (0, cpad - cout)))
    return w_pad.reshape(k * k, cin + cskip, cpad).astype(jnp.bfloat16)


def upsampling_block_forward(x, x_skip, params):
    """Forward pass of UpSamplingBlock (BatchNorm in training mode).

    x:      (N, Cin, H, W)      NCHW
    x_skip: (N, Cskip, 2H, 2W)  NCHW
    returns (N, Cout, 2H, 2W)   NCHW
    """
    w_reduce = params["w_reduce"]   # (Cskip, Cin, 1, 1)
    w_conv = params["w_conv"]       # (Cout, 2*Cskip, K, K)
    gamma = params["gamma"]         # (Cout,)
    beta = params["beta"]           # (Cout,)

    n, cin, h, w = x.shape
    cskip = x_skip.shape[1]
    cout, _, k, _ = w_conv.shape
    ho, wo = 2 * h, 2 * w
    ceff = cin + cskip
    p = k // 2
    hp, wp = ho + 2 * p, wo + 2 * p

    # --- JAX glue: NHWC, x2 bilinear upsample, concat, spatial pad ----------
    x_nhwc = jnp.transpose(x, (0, 2, 3, 1))
    x_up = _bilinear_upsample_x2_nhwc(x_nhwc)                     # (N,Ho,Wo,Cin)
    skip_nhwc = jnp.transpose(x_skip, (0, 2, 3, 1))               # (N,Ho,Wo,Cskip)
    cat = jnp.concatenate([x_up, skip_nhwc], axis=-1)             # (N,Ho,Wo,Ceff)
    xpad = jnp.pad(cat, ((0, 0), (p, p), (p, p), (0, 0)))         # (N,Hp,Wp,Ceff)

    # --- fold 1x1 conv_reduce into the KxK conv weights (exact) -------------
    w_eff = _fold_weights(w_reduce, w_conv, CPAD)                 # (K*K,Ceff,CPAD) bf16

    # --- pass 1: KxK conv (fused im2col) + per-tile BN partial sums ---------
    tile_h = _pick_tile(ho, max(1, 512 // wo))
    rt = ho // tile_h
    conv_kernel = _make_conv_kernel(k, tile_h, wo, ceff, CPAD)
    y, stats = pl.pallas_call(
        conv_kernel,
        out_shape=(
            jax.ShapeDtypeStruct((n, ho, wo, CPAD), jnp.float32),
            jax.ShapeDtypeStruct((n, rt, 2, CPAD), jnp.float32),
        ),
        grid=(n, rt),
        in_specs=[
            # Full padded image of one batch element; resident in VMEM across
            # its row-tiles (re-DMA'd only when the batch index changes).
            # TODO(synk): for large images switch to row-tiles with a manual
            # halo DMA (memory_space=pl.ANY + pltpu.make_async_copy).
            pl.BlockSpec((None, hp, wp, ceff), lambda ni, ri: (ni, 0, 0, 0)),
            pl.BlockSpec((k * k, ceff, CPAD), lambda ni, ri: (0, 0, 0)),
        ],
        out_specs=(
            pl.BlockSpec((None, tile_h, wo, CPAD), lambda ni, ri: (ni, ri, 0, 0)),
            pl.BlockSpec((None, None, 2, CPAD), lambda ni, ri: (ni, ri, 0, 0)),
        ),
        scratch_shapes=[pltpu.VMEM((tile_h * wo, CPAD), jnp.float32)],
        compiler_params=pltpu.CompilerParams(
            dimension_semantics=("parallel", "parallel"),
            vmem_limit_bytes=VMEM_LIMIT,
        ),
    )(xpad, w_eff)

    # --- tiny global BN reduction (exact training-mode batch statistics) ----
    m_total = n * ho * wo
    s = jnp.sum(stats, axis=(0, 1))                               # (2, CPAD)
    mean = s[0] / m_total
    var = jnp.maximum(s[1] / m_total - mean * mean, 0.0)          # biased variance
    gamma_p = jnp.pad(gamma.astype(jnp.float32), (0, CPAD - cout))
    beta_p = jnp.pad(beta.astype(jnp.float32), (0, CPAD - cout))
    scale = gamma_p * jax.lax.rsqrt(var + EPS)
    shift = beta_p - mean * scale

    # --- pass 2: normalize + affine + ReLU, lane-dense M-tiled --------------
    y2 = y.reshape(m_total, CPAD)
    tile_m = _pick_tile(m_total, 512, multiple=8)
    out2 = pl.pallas_call(
        _bn_relu_kernel,
        out_shape=jax.ShapeDtypeStruct((m_total, CPAD), jnp.float32),
        grid=(m_total // tile_m,),
        in_specs=[
            pl.BlockSpec((tile_m, CPAD), lambda i: (i, 0)),
            pl.BlockSpec((1, CPAD), lambda i: (0, 0)),
            pl.BlockSpec((1, CPAD), lambda i: (0, 0)),
        ],
        out_specs=pl.BlockSpec((tile_m, CPAD), lambda i: (i, 0)),
        compiler_params=pltpu.CompilerParams(
            dimension_semantics=("parallel",),
            vmem_limit_bytes=VMEM_LIMIT,
        ),
    )(y2, scale.reshape(1, CPAD), shift.reshape(1, CPAD))

    out_nhwc = out2.reshape(n, ho, wo, CPAD)[..., :cout]
    # TODO(synk): final NHWC->NCHW transpose kept in XLA to match the PyTorch
    # interface (small tensor; one pass).
    return jnp.transpose(out_nhwc, (0, 3, 1, 2))


# ---------------------------------------------------------------------------
# Deterministic parameter init + demo
# ---------------------------------------------------------------------------
def init_params(key, n_channels_in, n_skip_channels_in, n_channels_out, kernel_size):
    k1, k2, k3, k4 = jax.random.split(key, 4)
    return {
        "w_reduce": 0.1 * jax.random.normal(
            k1, (n_skip_channels_in, n_channels_in, 1, 1), jnp.float32),
        "w_conv": 0.1 * jax.random.normal(
            k2, (n_channels_out, n_skip_channels_in * 2, kernel_size, kernel_size),
            jnp.float32),
        # BatchNorm affine params (perturbed so the affine path is exercised).
        "gamma": 1.0 + 0.05 * jax.random.normal(k3, (n_channels_out,), jnp.float32),
        "beta": 0.05 * jax.random.normal(k4, (n_channels_out,), jnp.float32),
    }


if __name__ == "__main__":
    # Small shapes consistent with the module:
    #   n_channels_in=8, n_skip_channels_in=4, n_channels_out=6, kernel_size=3
    N, Cin, H, W = 2, 8, 16, 16
    Cskip, Cout, K = 4, 6, 3

    key = jax.random.PRNGKey(0)
    kx, kskip, kparams = jax.random.split(key, 3)

    x = jax.random.normal(kx, (N, Cin, H, W), jnp.float32)
    x_skip = jax.random.normal(kskip, (N, Cskip, 2 * H, 2 * W), jnp.float32)
    params = init_params(kparams, Cin, Cskip, Cout, K)

    fwd = jax.jit(upsampling_block_forward)
    out = fwd(x, x_skip, params)
    out = jax.block_until_ready(out)

    assert out.shape == (N, Cout, 2 * H, 2 * W), out.shape
    assert bool(jnp.all(out >= 0.0))          # ReLU output
    assert bool(jnp.all(jnp.isfinite(out)))
    print("KERNEL_OK")
</pallas_src>

<mosaic_0001>
module attributes {stable_mosaic.version = 11 : i64} {
  func.func @kernel(%arg0: i32, %arg1: i32, %arg2: memref<1x34x34x12xf32, #tpu.memory_space<vmem>>, %arg3: memref<9x12x128xbf16, #tpu.memory_space<vmem>>, %arg4: memref<1x16x32x128xf32, #tpu.memory_space<vmem>>, %arg5: memref<1x1x2x128xf32, #tpu.memory_space<vmem>>, %arg6: memref<512x128xf32, #tpu.memory_space<vmem>>) attributes {dimension_semantics = [#tpu.dimension_semantics<parallel>, #tpu.dimension_semantics<parallel>], iteration_bounds = array<i64: 2, 2>, scalar_prefetch = 0 : i64, scratch_operands = 1 : i64, tpu.core_type = #tpu.core_type<tc>, window_params = [{transform_indices = @transform_0, window_bounds = array<i64: 1, 34, 34, 12>}, {pipeline_mode = #tpu.pipeline_mode<synchronous>, transform_indices = @transform_1, window_bounds = array<i64: 9, 12, 128>}, {transform_indices = @transform_2, window_bounds = array<i64: 1, 16, 32, 128>}, {transform_indices = @transform_3, window_bounds = array<i64: 1, 1, 2, 128>}]} {
    %c16_i32 = arith.constant 16 : i32
    %0 = arith.muli %arg1, %c16_i32 : i32
    %cst = arith.constant 0.000000e+00 : f32
    %1 = vector.broadcast %cst : f32 to vector<512x128xf32>
    %c0 = arith.constant 0 : index
    %c0_0 = arith.constant 0 : index
    %2 = vector.load %arg6[%c0, %c0_0] : memref<512x128xf32, #tpu.memory_space<vmem>>, vector<512x128xf32>
    tpu.vector_store %arg6[%c0, %c0_0], %1 {strides = array<i32>} : memref<512x128xf32, #tpu.memory_space<vmem>>, vector<512x128xf32>,
    %c0_i32 = arith.constant 0 : i32
    %3 = arith.addi %0, %c0_i32 : i32
    %c0_1 = arith.constant 0 : index
    %4 = arith.index_cast %3 : i32 to index
    %c0_2 = arith.constant 0 : index
    %c0_3 = arith.constant 0 : index
    %5 = vector.load %arg2[%c0_1, %4, %c0_2, %c0_3] : memref<1x34x34x12xf32, #tpu.memory_space<vmem>>, vector<1x16x34x12xf32>
    %6 = vector.shape_cast %5 : vector<1x16x34x12xf32> to vector<16x34x12xf32>
    %7 = vector.extract_strided_slice %6 {offsets = [0, 0, 0], sizes = [16, 32, 12], strides = [1, 1, 1]} : vector<16x34x12xf32> to vector<16x32x12xf32>
    %8 = vector.shape_cast %7 : vector<16x32x12xf32> to vector<512x12xf32>
    %9 = arith.truncf %8 : vector<512x12xf32> to vector<512x12xbf16>
    %c0_4 = arith.constant 0 : index
    %c0_5 = arith.constant 0 : index
    %10 = vector.load %arg6[%c0_4, %c0_5] : memref<512x128xf32, #tpu.memory_space<vmem>>, vector<512x128xf32>
    %c0_6 = arith.constant 0 : index
    %c0_7 = arith.constant 0 : index
    %c0_8 = arith.constant 0 : index
    %11 = vector.load %arg3[%c0_6, %c0_7, %c0_8] : memref<9x12x128xbf16, #tpu.memory_space<vmem>>, vector<1x12x128xbf16>
    %12 = vector.shape_cast %11 : vector<1x12x128xbf16> to vector<12x128xbf16>
    %cst_9 = arith.constant dense<0.000000e+00> : vector<512x128xf32>
    %13 = tpu.matmul %9, %12, %cst_9 {dimension_numbers = #tpu.dot_dimension_numbers<[1], [0], [0], [1], [0, 0, 1, 1], [], []>} : vector<512x12xbf16>, vector<12x128xbf16>, vector<512x128xf32> -> vector<512x128xf32>
    %14 = arith.addf %10, %13 : vector<512x128xf32>
    %c0_10 = arith.constant 0 : index
    %c0_11 = arith.constant 0 : index
    %15 = vector.load %arg6[%c0_10, %c0_11] : memref<512x128xf32, #tpu.memory_space<vmem>>, vector<512x128xf32>
    tpu.vector_store %arg6[%c0_10, %c0_11], %14 {strides = array<i32>} : memref<512x128xf32, #tpu.memory_space<vmem>>, vector<512x128xf32>,
    %16 = vector.extract_strided_slice %6 {offsets = [0, 1, 0], sizes = [16, 32, 12], strides = [1, 1, 1]} : vector<16x34x12xf32> to vector<16x32x12xf32>
    %17 = vector.shape_cast %16 : vector<16x32x12xf32> to vector<512x12xf32>
    %18 = arith.truncf %17 : vector<512x12xf32> to vector<512x12xbf16>
    %c0_12 = arith.constant 0 : index
    %c0_13 = arith.constant 0 : index
    %19 = vector.load %arg6[%c0_12, %c0_13] : memref<512x128xf32, #tpu.memory_space<vmem>>, vector<512x128xf32>
    %c1 = arith.constant 1 : index
    %c0_14 = arith.constant 0 : index
    %c0_15 = arith.constant 0 : index
    %20 = vector.load %arg3[%c1, %c0_14, %c0_15] : memref<9x12x128xbf16, #tpu.memory_space<vmem>>, vector<1x12x128xbf16>
    %21 = vector.shape_cast %20 : vector<1x12x128xbf16> to vector<12x128xbf16>
    %cst_16 = arith.constant dense<0.000000e+00> : vector<512x128xf32>
    %22 = tpu.matmul %18, %21, %cst_16 {dimension_numbers = #tpu.dot_dimension_numbers<[1], [0], [0], [1], [0, 0, 1, 1], [], []>} : vector<512x12xbf16>, vector<12x128xbf16>, vector<512x128xf32> -> vector<512x128xf32>
    %23 = arith.addf %19, %22 : vector<512x128xf32>
    %c0_17 = arith.constant 0 : index
    %c0_18 = arith.constant 0 : index
    %24 = vector.load %arg6[%c0_17, %c0_18] : memref<512x128xf32, #tpu.memory_space<vmem>>, vector<512x128xf32>
    tpu.vector_store %arg6[%c0_17, %c0_18], %23 {strides = array<i32>} : memref<512x128xf32, #tpu.memory_space<vmem>>, vector<512x128xf32>,
    %25 = vector.extract_strided_slice %6 {offsets = [0, 2, 0], sizes = [16, 32, 12], strides = [1, 1, 1]} : vector<16x34x12xf32> to vector<16x32x12xf32>
    %26 = vector.shape_cast %25 : vector<16x32x12xf32> to vector<512x12xf32>
    %27 = arith.truncf %26 : vector<512x12xf32> to vector<512x12xbf16>
    %c0_19 = arith.constant 0 : index
    %c0_20 = arith.constant 0 : index
    %28 = vector.load %arg6[%c0_19, %c0_20] : memref<512x128xf32, #tpu.memory_space<vmem>>, vector<512x128xf32>
    %c2 = arith.constant 2 : index
    %c0_21 = arith.constant 0 : index
    %c0_22 = arith.constant 0 : index
    %29 = vector.load %arg3[%c2, %c0_21, %c0_22] : memref<9x12x128xbf16, #tpu.memory_space<vmem>>, vector<1x12x128xbf16>
    %30 = vector.shape_cast %29 : vector<1x12x128xbf16> to vector<12x128xbf16>
    %cst_23 = arith.constant dense<0.000000e+00> : vector<512x128xf32>
    %31 = tpu.matmul %27, %30, %cst_23 {dimension_numbers = #tpu.dot_dimension_numbers<[1], [0], [0], [1], [0, 0, 1, 1], [], []>} : vector<512x12xbf16>, vector<12x128xbf16>, vector<512x128xf32> -> vector<512x128xf32>
    %32 = arith.addf %28, %31 : vector<512x128xf32>
    %c0_24 = arith.constant 0 : index
    %c0_25 = arith.constant 0 : index
    %33 = vector.load %arg6[%c0_24, %c0_25] : memref<512x128xf32, #tpu.memory_space<vmem>>, vector<512x128xf32>
    tpu.vector_store %arg6[%c0_24, %c0_25], %32 {strides = array<i32>} : memref<512x128xf32, #tpu.memory_space<vmem>>, vector<512x128xf32>,
    %c1_i32 = arith.constant 1 : i32
    %34 = arith.addi %0, %c1_i32 : i32
    %c0_26 = arith.constant 0 : index
    %35 = arith.index_cast %34 : i32 to index
    %c0_27 = arith.constant 0 : index
    %c0_28 = arith.constant 0 : index
    %36 = vector.load %arg2[%c0_26, %35, %c0_27, %c0_28] : memref<1x34x34x12xf32, #tpu.memory_space<vmem>>, vector<1x16x34x12xf32>
    %37 = vector.shape_cast %36 : vector<1x16x34x12xf32> to vector<16x34x12xf32>
    %38 = vector.extract_strided_slice %37 {offsets = [0, 0, 0], sizes = [16, 32, 12], strides = [1, 1, 1]} : vector<16x34x12xf32> to vector<16x32x12xf32>
    %39 = vector.shape_cast %38 : vector<16x32x12xf32> to vector<512x12xf32>
    %40 = arith.truncf %39 : vector<512x12xf32> to vector<512x12xbf16>
    %c0_29 = arith.constant 0 : index
    %c0_30 = arith.constant 0 : index
    %41 = vector.load %arg6[%c0_29, %c0_30] : memref<512x128xf32, #tpu.memory_space<vmem>>, vector<512x128xf32>
    %c3 = arith.constant 3 : index
    %c0_31 = arith.constant 0 : index
    %c0_32 = arith.constant 0 : index
    %42 = vector.load %arg3[%c3, %c0_31, %c0_32] : memref<9x12x128xbf16, #tpu.memory_space<vmem>>, vector<1x12x128xbf16>
    %43 = vector.shape_cast %42 : vector<1x12x128xbf16> to vector<12x128xbf16>
    %cst_33 = arith.constant dense<0.000000e+00> : vector<512x128xf32>
    %44 = tpu.matmul %40, %43, %cst_33 {dimension_numbers = #tpu.dot_dimension_numbers<[1], [0], [0], [1], [0, 0, 1, 1], [], []>} : vector<512x12xbf16>, vector<12x128xbf16>, vector<512x128xf32> -> vector<512x128xf32>
    %45 = arith.addf %41, %44 : vector<512x128xf32>
    %c0_34 = arith.constant 0 : index
    %c0_35 = arith.constant 0 : index
    %46 = vector.load %arg6[%c0_34, %c0_35] : memref<512x128xf32, #tpu.memory_space<vmem>>, vector<512x128xf32>
    tpu.vector_store %arg6[%c0_34, %c0_35], %45 {strides = array<i32>} : memref<512x128xf32, #tpu.memory_space<vmem>>, vector<512x128xf32>,
    %47 = vector.extract_strided_slice %37 {offsets = [0, 1, 0], sizes = [16, 32, 12], strides = [1, 1, 1]} : vector<16x34x12xf32> to vector<16x32x12xf32>
    %48 = vector.shape_cast %47 : vector<16x32x12xf32> to vector<512x12xf32>
    %49 = arith.truncf %48 : vector<512x12xf32> to vector<512x12xbf16>
    %c0_36 = arith.constant 0 : index
    %c0_37 = arith.constant 0 : index
    %50 = vector.load %arg6[%c0_36, %c0_37] : memref<512x128xf32, #tpu.memory_space<vmem>>, vector<512x128xf32>
    %c4 = arith.constant 4 : index
    %c0_38 = arith.constant 0 : index
    %c0_39 = arith.constant 0 : index
    %51 = vector.load %arg3[%c4, %c0_38, %c0_39] : memref<9x12x128xbf16, #tpu.memory_space<vmem>>, vector<1x12x128xbf16>
    %52 = vector.shape_cast %51 : vector<1x12x128xbf16> to vector<12x128xbf16>
    %cst_40 = arith.constant dense<0.000000e+00> : vector<512x128xf32>
    %53 = tpu.matmul %49, %52, %cst_40 {dimension_numbers = #tpu.dot_dimension_numbers<[1], [0], [0], [1], [0, 0, 1, 1], [], []>} : vector<512x12xbf16>, vector<12x128xbf16>, vector<512x128xf32> -> vector<512x128xf32>
    %54 = arith.addf %50, %53 : vector<512x128xf32>
    %c0_41 = arith.constant 0 : index
    %c0_42 = arith.constant 0 : index
    %55 = vector.load %arg6[%c0_41, %c0_42] : memref<512x128xf32, #tpu.memory_space<vmem>>, vector<512x128xf32>
    tpu.vector_store %arg6[%c0_41, %c0_42], %54 {strides = array<i32>} : memref<512x128xf32, #tpu.memory_space<vmem>>, vector<512x128xf32>,
    %56 = vector.extract_strided_slice %37 {offsets = [0, 2, 0], sizes = [16, 32, 12], strides = [1, 1, 1]} : vector<16x34x12xf32> to vector<16x32x12xf32>
    %57 = vector.shape_cast %56 : vector<16x32x12xf32> to vector<512x12xf32>
    %58 = arith.truncf %57 : vector<512x12xf32> to vector<512x12xbf16>
    %c0_43 = arith.constant 0 : index
    %c0_44 = arith.constant 0 : index
    %59 = vector.load %arg6[%c0_43, %c0_44] : memref<512x128xf32, #tpu.memory_space<vmem>>, vector<512x128xf32>
    %c5 = arith.constant 5 : index
    %c0_45 = arith.constant 0 : index
    %c0_46 = arith.constant 0 : index
    %60 = vector.load %arg3[%c5, %c0_45, %c0_46] : memref<9x12x128xbf16, #tpu.memory_space<vmem>>, vector<1x12x128xbf16>
    %61 = vector.shape_cast %60 : vector<1x12x128xbf16> to vector<12x128xbf16>
    %cst_47 = arith.constant dense<0.000000e+00> : vector<512x128xf32>
    %62 = tpu.matmul %58, %61, %cst_47 {dimension_numbers = #tpu.dot_dimension_numbers<[1], [0], [0], [1], [0, 0, 1, 1], [], []>} : vector<512x12xbf16>, vector<12x128xbf16>, vector<512x128xf32> -> vector<512x128xf32>
    %63 = arith.addf %59, %62 : vector<512x128xf32>
    %c0_48 = arith.constant 0 : index
    %c0_49 = arith.constant 0 : index
    %64 = vector.load %arg6[%c0_48, %c0_49] : memref<512x128xf32, #tpu.memory_space<vmem>>, vector<512x128xf32>
    tpu.vector_store %arg6[%c0_48, %c0_49], %63 {strides = array<i32>} : memref<512x128xf32, #tpu.memory_space<vmem>>, vector<512x128xf32>,
    %c2_i32 = arith.constant 2 : i32
    %65 = arith.addi %0, %c2_i32 : i32
    %c0_50 = arith.constant 0 : index
    %66 = arith.index_cast %65 : i32 to index
    %c0_51 = arith.constant 0 : index
    %c0_52 = arith.constant 0 : index
    %67 = vector.load %arg2[%c0_50, %66, %c0_51, %c0_52] : memref<1x34x34x12xf32, #tpu.memory_space<vmem>>, vector<1x16x34x12xf32>
    %68 = vector.shape_cast %67 : vector<1x16x34x12xf32> to vector<16x34x12xf32>
    %69 = vector.extract_strided_slice %68 {offsets = [0, 0, 0], sizes = [16, 32, 12], strides = [1, 1, 1]} : vector<16x34x12xf32> to vector<16x32x12xf32>
    %70 = vector.shape_cast %69 : vector<16x32x12xf32> to vector<512x12xf32>
    %71 = arith.truncf %70 : vector<512x12xf32> to vector<512x12xbf16>
    %c0_53 = arith.constant 0 : index
    %c0_54 = arith.constant 0 : index
    %72 = vector.load %arg6[%c0_53, %c0_54] : memref<512x128xf32, #tpu.memory_space<vmem>>, vector<512x128xf32>
    %c6 = arith.constant 6 : index
    %c0_55 = arith.constant 0 : index
    %c0_56 = arith.constant 0 : index
    %73 = vector.load %arg3[%c6, %c0_55, %c0_56] : memref<9x12x128xbf16, #tpu.memory_space<vmem>>, vector<1x12x128xbf16>
    %74 = vector.shape_cast %73 : vector<1x12x128xbf16> to vector<12x128xbf16>
    %cst_57 = arith.constant dense<0.000000e+00> : vector<512x128xf32>
    %75 = tpu.matmul %71, %74, %cst_57 {dimension_numbers = #tpu.dot_dimension_numbers<[1], [0], [0], [1], [0, 0, 1, 1], [], []>} : vector<512x12xbf16>, vector<12x128xbf16>, vector<512x128xf32> -> vector<512x128xf32>
    %76 = arith.addf %72, %75 : vector<512x128xf32>
    %c0_58 = arith.constant 0 : index
    %c0_59 = arith.constant 0 : index
    %77 = vector.load %arg6[%c0_58, %c0_59] : memref<512x128xf32, #tpu.memory_space<vmem>>, vector<512x128xf32>
    tpu.vector_store %arg6[%c0_58, %c0_59], %76 {strides = array<i32>} : memref<512x128xf32, #tpu.memory_space<vmem>>, vector<512x128xf32>,
    %78 = vector.extract_strided_slice %68 {offsets = [0, 1, 0], sizes = [16, 32, 12], strides = [1, 1, 1]} : vector<16x34x12xf32> to vector<16x32x12xf32>
    %79 = vector.shape_cast %78 : vector<16x32x12xf32> to vector<512x12xf32>
    %80 = arith.truncf %79 : vector<512x12xf32> to vector<512x12xbf16>
    %c0_60 = arith.constant 0 : index
    %c0_61 = arith.constant 0 : index
    %81 = vector.load %arg6[%c0_60, %c0_61] : memref<512x128xf32, #tpu.memory_space<vmem>>, vector<512x128xf32>
    %c7 = arith.constant 7 : index
    %c0_62 = arith.constant 0 : index
    %c0_63 = arith.constant 0 : index
    %82 = vector.load %arg3[%c7, %c0_62, %c0_63] : memref<9x12x128xbf16, #tpu.memory_space<vmem>>, vector<1x12x128xbf16>
    %83 = vector.shape_cast %82 : vector<1x12x128xbf16> to vector<12x128xbf16>
    %cst_64 = arith.constant dense<0.000000e+00> : vector<512x128xf32>
    %84 = tpu.matmul %80, %83, %cst_64 {dimension_numbers = #tpu.dot_dimension_numbers<[1], [0], [0], [1], [0, 0, 1, 1], [], []>} : vector<512x12xbf16>, vector<12x128xbf16>, vector<512x128xf32> -> vector<512x128xf32>
    %85 = arith.addf %81, %84 : vector<512x128xf32>
    %c0_65 = arith.constant 0 : index
    %c0_66 = arith.constant 0 : index
    %86 = vector.load %arg6[%c0_65, %c0_66] : memref<512x128xf32, #tpu.memory_space<vmem>>, vector<512x128xf32>
    tpu.vector_store %arg6[%c0_65, %c0_66], %85 {strides = array<i32>} : memref<512x128xf32, #tpu.memory_space<vmem>>, vector<512x128xf32>,
    %87 = vector.extract_strided_slice %68 {offsets = [0, 2, 0], sizes = [16, 32, 12], strides = [1, 1, 1]} : vector<16x34x12xf32> to vector<16x32x12xf32>
    %88 = vector.shape_cast %87 : vector<16x32x12xf32> to vector<512x12xf32>
    %89 = arith.truncf %88 : vector<512x12xf32> to vector<512x12xbf16>
    %c0_67 = arith.constant 0 : index
    %c0_68 = arith.constant 0 : index
    %90 = vector.load %arg6[%c0_67, %c0_68] : memref<512x128xf32, #tpu.memory_space<vmem>>, vector<512x128xf32>
    %c8 = arith.constant 8 : index
    %c0_69 = arith.constant 0 : index
    %c0_70 = arith.constant 0 : index
    %91 = vector.load %arg3[%c8, %c0_69, %c0_70] : memref<9x12x128xbf16, #tpu.memory_space<vmem>>, vector<1x12x128xbf16>
    %92 = vector.shape_cast %91 : vector<1x12x128xbf16> to vector<12x128xbf16>
    %cst_71 = arith.constant dense<0.000000e+00> : vector<512x128xf32>
    %93 = tpu.matmul %89, %92, %cst_71 {dimension_numbers = #tpu.dot_dimension_numbers<[1], [0], [0], [1], [0, 0, 1, 1], [], []>} : vector<512x12xbf16>, vector<12x128xbf16>, vector<512x128xf32> -> vector<512x128xf32>
    %94 = arith.addf %90, %93 : vector<512x128xf32>
    %c0_72 = arith.constant 0 : index
    %c0_73 = arith.constant 0 : index
    %95 = vector.load %arg6[%c0_72, %c0_73] : memref<512x128xf32, #tpu.memory_space<vmem>>, vector<512x128xf32>
    tpu.vector_store %arg6[%c0_72, %c0_73], %94 {strides = array<i32>} : memref<512x128xf32, #tpu.memory_space<vmem>>, vector<512x128xf32>,
    %c0_74 = arith.constant 0 : index
    %c0_75 = arith.constant 0 : index
    %96 = vector.load %arg6[%c0_74, %c0_75] : memref<512x128xf32, #tpu.memory_space<vmem>>, vector<512x128xf32>
    %97 = vector.shape_cast %96 : vector<512x128xf32> to vector<16x32x128xf32>
    %c0_76 = arith.constant 0 : index
    %c0_77 = arith.constant 0 : index
    %c0_78 = arith.constant 0 : index
    %c0_79 = arith.constant 0 : index
    %98 = vector.load %arg4[%c0_76, %c0_77, %c0_78, %c0_79] : memref<1x16x32x128xf32, #tpu.memory_space<vmem>>, vector<1x16x32x128xf32>
    %99 = vector.shape_cast %98 : vector<1x16x32x128xf32> to vector<16x32x128xf32>
    %100 = vector.shape_cast %97 : vector<16x32x128xf32> to vector<1x16x32x128xf32>
    tpu.vector_store %arg4[%c0_76, %c0_77, %c0_78, %c0_79], %100 {strides = array<i32>} : memref<1x16x32x128xf32, #tpu.memory_space<vmem>>, vector<1x16x32x128xf32>,
    %cst_80 = arith.constant dense<0.000000e+00> : vector<128xf32>
    %101 = vector.multi_reduction <add>, %96, %cst_80 [0] : vector<512x128xf32> to vector<128xf32>
    %102 = vector.shape_cast %101 : vector<128xf32> to vector<1x128xf32>
    %103 = arith.mulf %96, %96 : vector<512x128xf32>
    %cst_81 = arith.constant dense<0.000000e+00> : vector<128xf32>
    %104 = vector.multi_reduction <add>, %103, %cst_81 [0] : vector<512x128xf32> to vector<128xf32>
    %105 = vector.shape_cast %104 : vector<128xf32> to vector<1x128xf32>
    %106 = tpu.concatenate %102, %105 in 0 : vector<1x128xf32>, vector<1x128xf32> -> vector<2x128xf32>
    %c0_82 = arith.constant 0 : index
    %c0_83 = arith.constant 0 : index
    %c0_84 = arith.constant 0 : index
    %c0_85 = arith.constant 0 : index
    %107 = vector.load %arg5[%c0_82, %c0_83, %c0_84, %c0_85] : memref<1x1x2x128xf32, #tpu.memory_space<vmem>>, vector<1x1x2x128xf32>
    %108 = vector.shape_cast %107 : vector<1x1x2x128xf32> to vector<2x128xf32>
    %109 = vector.shape_cast %106 : vector<2x128xf32> to vector<1x1x2x128xf32>
    tpu.vector_store %arg5[%c0_82, %c0_83, %c0_84, %c0_85], %109 {strides = array<i32>} : memref<1x1x2x128xf32, #tpu.memory_space<vmem>>, vector<1x1x2x128xf32>,
    return
  }
  func.func @transform_0(%arg0: i32, %arg1: i32) -> (i32, i32, i32, i32) {
    %c0_i32 = arith.constant 0 : i32
    %c0_i32_0 = arith.constant 0 : i32
    %c0_i32_1 = arith.constant 0 : i32
    %c0_i32_2 = arith.constant 0 : i32
    return %arg0, %c0_i32, %c0_i32_0, %c0_i32_1 : i32, i32, i32, i32
  }
  func.func @transform_1(%arg0: i32, %arg1: i32) -> (i32, i32, i32) {
    %c0_i32 = arith.constant 0 : i32
    %c0_i32_0 = arith.constant 0 : i32
    %c0_i32_1 = arith.constant 0 : i32
    %c0_i32_2 = arith.constant 0 : i32
    return %c0_i32, %c0_i32_0, %c0_i32_1 : i32, i32, i32
  }
  func.func @transform_2(%arg0: i32, %arg1: i32) -> (i32, i32, i32, i32) {
    %c0_i32 = arith.constant 0 : i32
    %c0_i32_0 = arith.constant 0 : i32
    %c0_i32_1 = arith.constant 0 : i32
    return %arg0, %arg1, %c0_i32, %c0_i32_0 : i32, i32, i32, i32
  }
  func.func @transform_3(%arg0: i32, %arg1: i32) -> (i32, i32, i32, i32) {
    %c0_i32 = arith.constant 0 : i32
    %c0_i32_0 = arith.constant 0 : i32
    %c0_i32_1 = arith.constant 0 : i32
    return %arg0, %arg1, %c0_i32, %c0_i32_0 : i32, i32, i32, i32
  }
}

module attributes {stable_mosaic.version = 11 : i64} {
  func.func @_bn_relu_kernel(%arg0: i32, %arg1: memref<512x128xf32, #tpu.memory_space<vmem>>, %arg2: memref<1x128xf32, #tpu.memory_space<vmem>>, %arg3: memref<1x128xf32, #tpu.memory_space<vmem>>, %arg4: memref<512x128xf32, #tpu.memory_space<vmem>>) attributes {dimension_semantics = [#tpu.dimension_semantics<parallel>], iteration_bounds = array<i64: 4>, scalar_prefetch = 0 : i64, scratch_operands = 0 : i64, tpu.core_type = #tpu.core_type<tc>, window_params = [{transform_indices = @transform_0, window_bounds = array<i64: 512, 128>}, {pipeline_mode = #tpu.pipeline_mode<synchronous>, transform_indices = @transform_1, window_bounds = array<i64: 1, 128>}, {pipeline_mode = #tpu.pipeline_mode<synchronous>, transform_indices = @transform_2, window_bounds = array<i64: 1, 128>}, {transform_indices = @transform_3, window_bounds = array<i64: 512, 128>}]} {
    %c0 = arith.constant 0 : index
    %c0_0 = arith.constant 0 : index
    %0 = vector.load %arg1[%c0, %c0_0] : memref<512x128xf32, #tpu.memory_space<vmem>>, vector<512x128xf32>
    %c0_1 = arith.constant 0 : index
    %c0_2 = arith.constant 0 : index
    %1 = vector.load %arg2[%c0_1, %c0_2] : memref<1x128xf32, #tpu.memory_space<vmem>>, vector<1x128xf32>
    %2 = vector.broadcast %1 : vector<1x128xf32> to vector<512x128xf32>
    %3 = arith.mulf %0, %2 : vector<512x128xf32>
    %c0_3 = arith.constant 0 : index
    %c0_4 = arith.constant 0 : index
    %4 = vector.load %arg3[%c0_3, %c0_4] : memref<1x128xf32, #tpu.memory_space<vmem>>, vector<1x128xf32>
    %5 = vector.broadcast %4 : vector<1x128xf32> to vector<512x128xf32>
    %6 = arith.addf %3, %5 : vector<512x128xf32>
    %cst = arith.constant 0.000000e+00 : f32
    %7 = vector.broadcast %cst : f32 to vector<512x128xf32>
    %8 = arith.maximumf %6, %7 : vector<512x128xf32>
    %c0_5 = arith.constant 0 : index
    %c0_6 = arith.constant 0 : index
    %9 = vector.load %arg4[%c0_5, %c0_6] : memref<512x128xf32, #tpu.memory_space<vmem>>, vector<512x128xf32>
    tpu.vector_store %arg4[%c0_5, %c0_6], %8 {strides = array<i32>} : memref<512x128xf32, #tpu.memory_space<vmem>>, vector<512x128xf32>,
    return
  }
  func.func @transform_0(%arg0: i32) -> (i32, i32) {
    %c0_i32 = arith.constant 0 : i32
    %c0_i32_0 = arith.constant 0 : i32
    return %arg0, %c0_i32 : i32, i32
  }
  func.func @transform_1(%arg0: i32) -> (i32, i32) {
    %c0_i32 = arith.constant 0 : i32
    %c0_i32_0 = arith.constant 0 : i32
    %c0_i32_1 = arith.constant 0 : i32
    return %c0_i32, %c0_i32_0 : i32, i32
  }
  func.func @transform_2(%arg0: i32) -> (i32, i32) {
    %c0_i32 = arith.constant 0 : i32
    %c0_i32_0 = arith.constant 0 : i32
    %c0_i32_1 = arith.constant 0 : i32
    return %c0_i32, %c0_i32_0 : i32, i32
  }
  func.func @transform_3(%arg0: i32) -> (i32, i32) {
    %c0_i32 = arith.constant 0 : i32
    %c0_i32_0 = arith.constant 0 : i32
    return %arg0, %c0_i32 : i32, i32
  }
}

</mosaic_0001>

<llo_original>
// kernel: upsampling_block_forward.3
$region0: #{upsampling_block_forward.3}
  #allocation0 [shape = 'u32[]', space=smem, size = 0x4, offset = 0x4, fixed_abs, tag = 'smem constant byte address 0x4 - core index']
  #allocation1 [shape = 'u32[144,128]{1,0:T(1,128)}', space=vmem, size = 0x12000, scoped, tag = 'internal scratch']
  %s0 = inlined_call_operand.vmem [shape: f32[2048,128], index: 0, kind: input, shape index: {}]
  %s1 = inlined_call_operand.vmem [shape: f32[1,128], index: 1, kind: input, shape index: {}]
  %s2 = inlined_call_operand.vmem [shape: f32[1,128], index: 2, kind: input, shape index: {}]
  %s3 = inlined_call_operand.vmem [shape: f32[2048,128], index: 3, kind: output, shape index: {}]
  %s4 = sld [smem:[#allocation0]]
  $region45: #{upsampling_block_forward.3} parent=0
    _
  %s6 = ssub.s32 1, %s4
  %s7 = scalar_select 0, %s6, %s4
  loop: start=0, step=1, limit=6
  $region2: #{upsampling_block_forward.3} parent=0 // loop_pre_header
    _
  $region3: #{upsampling_block_forward.3} parent=0 // loop_header
    %s9 = sphi 0, %s13
    %p10 = scmp.ge.s32.totalorder %s9, 6
    %s19 = sphi 0, %s21
    %s22 = sphi 0, %s19
    %s23 = sphi 0, %s22
    %s39 = sphi 0, %s23
    %s43 = sphi 0, %s43
    %s45 = sphi 0, %s43
    %s46 = sphi 0, %s45
    %s60 = sphi 0, %s46
    %s64 = sphi 0, %s64
    %s66 = sphi 0, %s64
    %s67 = sphi 0, %s66
    %s81 = sphi 0, %s67
    %s87 = sphi 0, %s89
    %s90 = sphi 0, %s87
    %s91 = sphi 0, %s90
    %s107 = sphi 0, %s91
  $region4: #{upsampling_block_forward.3} parent=0 // loop_header_branch
    %12 = sbr.rel (%p10) target = $region8
  $region5: #{upsampling_block_forward.3} parent=0 // loop_body
    %s14 = ssub.s32 %s9, 1
    %s15 = ssub.s32 %s9, 2
    %s16 = sadd.s32 %s9, 1
    %s17 = ssub.s32 %s9, %s16
    %p18 = scmp.eq.s32.totalorder %s17, 0
    %s20 = sadd.s32 %s19, 1
    %s21 = scalar_select %p18, %s19, %s20
    %p24 = pneg %p18
    %p25 = scmp.eq.s32.totalorder %s9, 3
    %p26 = por %p24, %p25
    %p27 = scmp.ne.s32.totalorder %s19, %s22
    %p28 = scmp.eq.s32.totalorder %s9, 0
    %p29 = por %p27, %p28
    %p30 = scmp.ne.s32.totalorder %s19, %s22
    %p31 = scmp.eq.s32.totalorder %s14, 3
    %p32 = por %p30, %p31
    %p33 = scmp.ne.s32.totalorder %s22, %s23
    %p34 = scmp.eq.s32.totalorder %s14, 0
    %p35 = por %p33, %p34
    %p36 = scmp.ne.s32.totalorder %s22, %s23
    %p37 = scmp.eq.s32.totalorder %s15, 3
    %p38 = por %p36, %p37
    %p40 = scmp.ne.s32.totalorder %s23, %s39
    %p41 = scmp.eq.s32.totalorder %s15, 0
    %p42 = por %p40, %p41
    %s44 = sadd.s32 %s43, 1
    %p47 = scmp.eq.s32.totalorder %s9, 3
    %p48 = scmp.ne.s32.totalorder %s43, %s45
    %p49 = scmp.eq.s32.totalorder %s9, 0
    %p50 = por %p48, %p49
    %p51 = scmp.ne.s32.totalorder %s43, %s45
    %p52 = scmp.eq.s32.totalorder %s14, 3
    %p53 = por %p51, %p52
    %p54 = scmp.ne.s32.totalorder %s45, %s46
    %p55 = scmp.eq.s32.totalorder %s14, 0
    %p56 = por %p54, %p55
    %p57 = scmp.ne.s32.totalorder %s45, %s46
    %p58 = scmp.eq.s32.totalorder %s15, 3
    %p59 = por %p57, %p58
    %p61 = scmp.ne.s32.totalorder %s46, %s60
    %p62 = scmp.eq.s32.totalorder %s15, 0
    %p63 = por %p61, %p62
    %s65 = sadd.s32 %s64, 1
    %p68 = scmp.eq.s32.totalorder %s9, 3
    %p69 = scmp.ne.s32.totalorder %s64, %s66
    %p70 = scmp.eq.s32.totalorder %s9, 0
    %p71 = por %p69, %p70
    %p72 = scmp.ne.s32.totalorder %s64, %s66
    %p73 = scmp.eq.s32.totalorder %s14, 3
    %p74 = por %p72, %p73
    %p75 = scmp.ne.s32.totalorder %s66, %s67
    %p76 = scmp.eq.s32.totalorder %s14, 0
    %p77 = por %p75, %p76
    %p78 = scmp.ne.s32.totalorder %s66, %s67
    %p79 = scmp.eq.s32.totalorder %s15, 3
    %p80 = por %p78, %p79
    %p82 = scmp.ne.s32.totalorder %s67, %s81
    %p83 = scmp.eq.s32.totalorder %s15, 0
    %p84 = por %p82, %p83
    %s85 = ssub.s32 %s9, %s16
    %p86 = scmp.eq.s32.totalorder %s85, 0
    %s88 = sadd.s32 %s87, 1
    %s89 = scalar_select %p86, %s87, %s88
    %p92 = pneg %p86
    %p93 = scmp.eq.s32.totalorder %s9, 3
    %p94 = por %p92, %p93
    %p95 = scmp.ne.s32.totalorder %s87, %s90
    %p96 = scmp.eq.s32.totalorder %s9, 0
    %p97 = por %p95, %p96
    %p98 = scmp.ne.s32.totalorder %s87, %s90
    %p99 = scmp.eq.s32.totalorder %s14, 3
    %p100 = por %p98, %p99
    %p101 = scmp.ne.s32.totalorder %s90, %s91
    %p102 = scmp.eq.s32.totalorder %s14, 0
    %p103 = por %p101, %p102
    %p104 = scmp.ne.s32.totalorder %s90, %s91
    %p105 = scmp.eq.s32.totalorder %s15, 3
    %p106 = por %p104, %p105
    %p108 = scmp.ne.s32.totalorder %s91, %s107
    %p109 = scmp.eq.s32.totalorder %s15, 0
    %p110 = por %p108, %p109
    %p111 = scmp.le.s32.totalorder 1, %s9
    %p112 = scmp.lt.s32.totalorder %s9, 5
    %p113 = pnand %p111, %p112
    %p114 = pneg %p113
    // Predicated region
    $region9: #{upsampling_block_forward.3} parent=5 // pred_check
      _
    $region10: #{upsampling_block_forward.3} parent=5 // pred_check_branch
      %116 = sbr.rel (%p113) target = $region12
    $region11: #{upsampling_block_forward.3} parent=5 // pred_region
      %s117 = ssub.s32 %s9, 1
      // Predicated region
      $region13: #{upsampling_block_forward.3} parent=11 // pred_check
        %p118 = pneg %p56
      $region14: #{upsampling_block_forward.3} parent=11 // pred_check_branch
        %120 = sbr.rel (%p118) target = $region16
      $region15: #{upsampling_block_forward.3} parent=11 // pred_region
        _
      $region16: #{upsampling_block_forward.3} parent=11 // pred_fallthru
        _
      // Predicated region
      $region17: #{upsampling_block_forward.3} parent=11 // pred_check
        %p121 = pneg %p77
      $region18: #{upsampling_block_forward.3} parent=11 // pred_check_branch
        %123 = sbr.rel (%p121) target = $region20
      $region19: #{upsampling_block_forward.3} parent=11 // pred_region
        _
      $region20: #{upsampling_block_forward.3} parent=11 // pred_fallthru
        _
    $region12: #{upsampling_block_forward.3} parent=5 // pred_fallthru
      _
    %p124 = scmp.lt.s32.totalorder %s9, 4
    // Predicated region
    $region21: #{upsampling_block_forward.3} parent=5 // pred_check
      %p125 = pneg %p124
    $region22: #{upsampling_block_forward.3} parent=5 // pred_check_branch
      %127 = sbr.rel (%p125) target = $region24
    $region23: #{upsampling_block_forward.3} parent=5 // pred_region
      // Predicated region
      $region25: #{upsampling_block_forward.3} parent=23 // pred_check
        %p128 = pneg %p29
      $region26: #{upsampling_block_forward.3} parent=23 // pred_check_branch
        %130 = sbr.rel (%p128) target = $region28
      $region27: #{upsampling_block_forward.3} parent=23 // pred_region
        %s131 = smul.u32 64, %s9
        %p132 = scmp.lt.s32.totalorder %s131, 255
        %s133 = scalar_select %p132, %s131, 255
        %s134 = smul.addr %s133, 8
        %s135 = scalar_lea.vmem %s0, %s134
        %s136 = smul.u32 64, %s9
      $region28: #{upsampling_block_forward.3} parent=23 // pred_fallthru
        _
    $region24: #{upsampling_block_forward.3} parent=5 // pred_fallthru
      _
    %p137 = scmp.le.s32.totalorder 1, %s9
    %p138 = scmp.lt.s32.totalorder %s9, 5
    %p139 = pnand %p137, %p138
    %p140 = pneg %p139
    // Predicated region
    $region29: #{upsampling_block_forward.3} parent=5 // pred_check
      _
    $region30: #{upsampling_block_forward.3} parent=5 // pred_check_branch
      %142 = sbr.rel (%p139) target = $region32
    $region31: #{upsampling_block_forward.3} parent=5 // pred_region
      %s143 = ssub.s32 %s9, 1
      %s144 = smul.u32 64, %s14
      %p145 = scmp.lt.s32.totalorder %s144, 255
      %s146 = scalar_select %p145, %s144, 255
      %s147 = smul.addr %s146, 8
      %s148 = scalar_lea.vmem %s0, %s147
      %p149 = pneg %p35
      %p150 = pneg %p32
      %p151 = pneg %p56
      %p152 = pneg %p53
      %p153 = pneg %p77
      %p154 = pneg %p74
      %p155 = pneg %p103
      %p156 = pneg %p100
      %s157 = smul.u32 64, %s14
      %p158 = scmp.lt.s32.totalorder %s157, 255
      %s159 = scalar_select %p158, %s157, 255
      %s160 = smul.addr %s159, 8
      %s161 = scalar_lea.vmem %s3, %s160
      %s162 = smul.u32 64, %s14
      %p163 = scmp.lt.s32.totalorder %s162, 255
      %s164 = scalar_select %p163, %s162, 255
      %s165 = smul.addr %s164, 8
      %s166 = scalar_lea.vmem %s0, %s165
      %s167 = smul.u32 64, %s14
      %s168 = smul.u32 64, %s14
      %p169 = scmp.lt.s32.totalorder %s168, 255
      %s170 = scalar_select %p169, %s168, 255
      %s171 = smul.addr %s170, 8
      %s172 = scalar_lea.vmem %s3, %s171
      %s173 = smul.u32 64, %s14
      %v174 = vld [vmem:[%s166] sm:$0xff]
      %v175 = vld [vmem:[%s166 + $0x8] sm:$0xff]
      %v176 = vld [vmem:[%s166 + $0x10] sm:$0xff]
      %v177 = vld [vmem:[%s166 + $0x18] sm:$0xff]
      %v178 = vld [vmem:[%s166 + $0x20] sm:$0xff]
      %v179 = vld [vmem:[%s166 + $0x28] sm:$0xff]
      %v180 = vld [vmem:[%s166 + $0x30] sm:$0xff]
      %v181 = vld [vmem:[%s166 + $0x38] sm:$0xff]
      %v182 = vld [vmem:[%s166 + $0x40] sm:$0xff]
      %v183 = vld [vmem:[%s166 + $0x48] sm:$0xff]
      %v184 = vld [vmem:[%s166 + $0x50] sm:$0xff]
      %v185 = vld [vmem:[%s166 + $0x58] sm:$0xff]
      %v186 = vld [vmem:[%s166 + $0x60] sm:$0xff]
      %v187 = vld [vmem:[%s166 + $0x68] sm:$0xff]
      %v188 = vld [vmem:[%s166 + $0x70] sm:$0xff]
      %v189 = vld [vmem:[%s166 + $0x78] sm:$0xff]
      %v190 = vld [vmem:[%s166 + $0x80] sm:$0xff]
      %v191 = vld [vmem:[%s166 + $0x88] sm:$0xff]
      %v192 = vld [vmem:[%s166 + $0x90] sm:$0xff]
      %v193 = vld [vmem:[%s166 + $0x98] sm:$0xff]
      %v194 = vld [vmem:[%s166 + $0xa0] sm:$0xff]
      %v195 = vld [vmem:[%s166 + $0xa8] sm:$0xff]
      %v196 = vld [vmem:[%s166 + $0xb0] sm:$0xff]
      %v197 = vld [vmem:[%s166 + $0xb8] sm:$0xff]
      %v198 = vld [vmem:[%s166 + $0xc0] sm:$0xff]
      %v199 = vld [vmem:[%s166 + $0xc8] sm:$0xff]
      %v200 = vld [vmem:[%s166 + $0xd0] sm:$0xff]
      %v201 = vld [vmem:[%s166 + $0xd8] sm:$0xff]
      %v202 = vld [vmem:[%s166 + $0xe0] sm:$0xff]
      %v203 = vld [vmem:[%s166 + $0xe8] sm:$0xff]
      %v204 = vld [vmem:[%s166 + $0xf0] sm:$0xff]
      %v205 = vld [vmem:[%s166 + $0xf8] sm:$0xff]
      %v206 = vld [vmem:[%s166 + $0x100] sm:$0xff]
      %v207 = vld [vmem:[%s166 + $0x108] sm:$0xff]
      %v208 = vld [vmem:[%s166 + $0x110] sm:$0xff]
      %v209 = vld [vmem:[%s166 + $0x118] sm:$0xff]
      %v210 = vld [vmem:[%s166 + $0x120] sm:$0xff]
      %v211 = vld [vmem:[%s166 + $0x128] sm:$0xff]
      %v212 = vld [vmem:[%s166 + $0x130] sm:$0xff]
      %v213 = vld [vmem:[%s166 + $0x138] sm:$0xff]
      %v214 = vld [vmem:[%s166 + $0x140] sm:$0xff]
      %v215 = vld [vmem:[%s166 + $0x148] sm:$0xff]
      %v216 = vld [vmem:[%s166 + $0x150] sm:$0xff]
      %v217 = vld [vmem:[%s166 + $0x158] sm:$0xff]
      %v218 = vld [vmem:[%s166 + $0x160] sm:$0xff]
      %v219 = vld [vmem:[%s166 + $0x168] sm:$0xff]
      %v220 = vld [vmem:[%s166 + $0x170] sm:$0xff]
      %v221 = vld [vmem:[%s166 + $0x178] sm:$0xff]
      %v222 = vld [vmem:[%s166 + $0x180] sm:$0xff]
      %v223 = vld [vmem:[%s166 + $0x188] sm:$0xff]
      %v224 = vld [vmem:[%s166 + $0x190] sm:$0xff]
      %v225 = vld [vmem:[%s166 + $0x198] sm:$0xff]
      %v226 = vld [vmem:[%s166 + $0x1a0] sm:$0xff]
      %v227 = vld [vmem:[%s166 + $0x1a8] sm:$0xff]
      %v228 = vld [vmem:[%s166 + $0x1b0] sm:$0xff]
      %v229 = vld [vmem:[%s166 + $0x1b8] sm:$0xff]
      %v230 = vld [vmem:[%s166 + $0x1c0] sm:$0xff]
      %v231 = vld [vmem:[%s166 + $0x1c8] sm:$0xff]
      %v232 = vld [vmem:[%s166 + $0x1d0] sm:$0xff]
      %v233 = vld [vmem:[%s166 + $0x1d8] sm:$0xff]
      %v234 = vld [vmem:[%s166 + $0x1e0] sm:$0xff]
      %v235 = vld [vmem:[%s166 + $0x1e8] sm:$0xff]
      %v236 = vld [vmem:[%s166 + $0x1f0] sm:$0xff]
      %v237 = vld [vmem:[%s166 + $0x1f8] sm:$0xff]
      %v238 = vld [vmem:[%s1] sm:$0x1]
      %v240 = vlaneseq
      %v241 = vshrl.u32 %v240, 7
      %v242 = vsub.s32 0, %v241
      %v243 = vrot.slane %v238, %v242
      %v245 = vmul.f32 %v174, %v243
      %v246 = vmul.f32 %v175, %v243
      %v247 = vmul.f32 %v176, %v243
      %v248 = vmul.f32 %v177, %v243
      %v249 = vmul.f32 %v178, %v243
      %v250 = vmul.f32 %v179, %v243
      %v251 = vmul.f32 %v180, %v243
      %v252 = vmul.f32 %v181, %v243
      %v253 = vmul.f32 %v182, %v243
      %v254 = vmul.f32 %v183, %v243
      %v255 = vmul.f32 %v184, %v243
      %v256 = vmul.f32 %v185, %v243
      %v257 = vmul.f32 %v186, %v243
      %v258 = vmul.f32 %v187, %v243
      %v259 = vmul.f32 %v188, %v243
      %v260 = vmul.f32 %v189, %v243
      %v261 = vmul.f32 %v190, %v243
      %v262 = vmul.f32 %v191, %v243
      %v263 = vmul.f32 %v192, %v243
      %v264 = vmul.f32 %v193, %v243
      %v265 = vmul.f32 %v194, %v243
      %v266 = vmul.f32 %v195, %v243
      %v267 = vmul.f32 %v196, %v243
      %v268 = vmul.f32 %v197, %v243
      %v269 = vmul.f32 %v198, %v243
      %v270 = vmul.f32 %v199, %v243
      %v271 = vmul.f32 %v200, %v243
      %v272 = vmul.f32 %v201, %v243
      %v273 = vmul.f32 %v202, %v243
      %v274 = vmul.f32 %v203, %v243
      %v275 = vmul.f32 %v204, %v243
      %v276 = vmul.f32 %v205, %v243
      %v277 = vmul.f32 %v206, %v243
      %v278 = vmul.f32 %v207, %v243
      %v279 = vmul.f32 %v208, %v243
      %v280 = vmul.f32 %v209, %v243
      %v281 = vmul.f32 %v210, %v243
      %v282 = vmul.f32 %v211, %v243
      %v283 = vmul.f32 %v212, %v243
      %v284 = vmul.f32 %v213, %v243
      %v285 = vmul.f32 %v214, %v243
      %v286 = vmul.f32 %v215, %v243
      %v287 = vmul.f32 %v216, %v243
      %v288 = vmul.f32 %v217, %v243
      %v289 = vmul.f32 %v218, %v243
      %v290 = vmul.f32 %v219, %v243
      %v291 = vmul.f32 %v220, %v243
      %v292 = vmul.f32 %v221, %v243
      %v293 = vmul.f32 %v222, %v243
      %v294 = vmul.f32 %v223, %v243
      %v295 = vmul.f32 %v224, %v243
      %v296 = vmul.f32 %v225, %v243
      %v297 = vmul.f32 %v226, %v243
      %v298 = vmul.f32 %v227, %v243
      %v299 = vmul.f32 %v228, %v243
      %v300 = vmul.f32 %v229, %v243
      %v301 = vmul.f32 %v230, %v243
      %v302 = vmul.f32 %v231, %v243
      %v303 = vmul.f32 %v232, %v243
      %v304 = vmul.f32 %v233, %v243
      %v305 = vmul.f32 %v234, %v243
      %v306 = vmul.f32 %v235, %v243
      %v307 = vmul.f32 %v236, %v243
      %v308 = vmul.f32 %v237, %v243
      %v309 = vld [vmem:[%s2] sm:$0x1]
      %v311 = vlaneseq
      %v312 = vshrl.u32 %v311, 7
      %v313 = vsub.s32 0, %v312
      %v314 = vrot.slane %v309, %v313
      %v316 = vadd.f32 %v245, %v314
      %v317 = vadd.f32 %v246, %v314
      %v318 = vadd.f32 %v247, %v314
      %v319 = vadd.f32 %v248, %v314
      %v320 = vadd.f32 %v249, %v314
      %v321 = vadd.f32 %v250, %v314
      %v322 = vadd.f32 %v251, %v314
      %v323 = vadd.f32 %v252, %v314
      %v324 = vadd.f32 %v253, %v314
      %v325 = vadd.f32 %v254, %v314
      %v326 = vadd.f32 %v255, %v314
      %v327 = vadd.f32 %v256, %v314
      %v328 = vadd.f32 %v257, %v314
      %v329 = vadd.f32 %v258, %v314
      %v330 = vadd.f32 %v259, %v314
      %v331 = vadd.f32 %v260, %v314
      %v332 = vadd.f32 %v261, %v314
      %v333 = vadd.f32 %v262, %v314
      %v334 = vadd.f32 %v263, %v314
      %v335 = vadd.f32 %v264, %v314
      %v336 = vadd.f32 %v265, %v314
      %v337 = vadd.f32 %v266, %v314
      %v338 = vadd.f32 %v267, %v314
      %v339 = vadd.f32 %v268, %v314
      %v340 = vadd.f32 %v269, %v314
      %v341 = vadd.f32 %v270, %v314
      %v342 = vadd.f32 %v271, %v314
      %v343 = vadd.f32 %v272, %v314
      %v344 = vadd.f32 %v273, %v314
      %v345 = vadd.f32 %v274, %v314
      %v346 = vadd.f32 %v275, %v314
      %v347 = vadd.f32 %v276, %v314
      %v348 = vadd.f32 %v277, %v314
      %v349 = vadd.f32 %v278, %v314
      %v350 = vadd.f32 %v279, %v314
      %v351 = vadd.f32 %v280, %v314
      %v352 = vadd.f32 %v281, %v314
      %v353 = vadd.f32 %v282, %v314
      %v354 = vadd.f32 %v283, %v314
      %v355 = vadd.f32 %v284, %v314
      %v356 = vadd.f32 %v285, %v314
      %v357 = vadd.f32 %v286, %v314
      %v358 = vadd.f32 %v287, %v314
      %v359 = vadd.f32 %v288, %v314
      %v360 = vadd.f32 %v289, %v314
      %v361 = vadd.f32 %v290, %v314
      %v362 = vadd.f32 %v291, %v314
      %v363 = vadd.f32 %v292, %v314
      %v364 = vadd.f32 %v293, %v314
      %v365 = vadd.f32 %v294, %v314
      %v366 = vadd.f32 %v295, %v314
      %v367 = vadd.f32 %v296, %v314
      %v368 = vadd.f32 %v297, %v314
      %v369 = vadd.f32 %v298, %v314
      %v370 = vadd.f32 %v299, %v314
      %v371 = vadd.f32 %v300, %v314
      %v372 = vadd.f32 %v301, %v314
      %v373 = vadd.f32 %v302, %v314
      %v374 = vadd.f32 %v303, %v314
      %v375 = vadd.f32 %v304, %v314
      %v376 = vadd.f32 %v305, %v314
      %v377 = vadd.f32 %v306, %v314
      %v378 = vadd.f32 %v307, %v314
      %v379 = vadd.f32 %v308, %v314
      %v380 = vmax.f32 %v316, 0.0
      %v381 = vmax.f32 %v317, 0.0
      %v382 = vmax.f32 %v318, 0.0
      %v383 = vmax.f32 %v319, 0.0
      %v384 = vmax.f32 %v320, 0.0
      %v385 = vmax.f32 %v321, 0.0
      %v386 = vmax.f32 %v322, 0.0
      %v387 = vmax.f32 %v323, 0.0
      %v388 = vmax.f32 %v324, 0.0
      %v389 = vmax.f32 %v325, 0.0
      %v390 = vmax.f32 %v326, 0.0
      %v391 = vmax.f32 %v327, 0.0
      %v392 = vmax.f32 %v328, 0.0
      %v393 = vmax.f32 %v329, 0.0
      %v394 = vmax.f32 %v330, 0.0
      %v395 = vmax.f32 %v331, 0.0
      %v396 = vmax.f32 %v332, 0.0
      %v397 = vmax.f32 %v333, 0.0
      %v398 = vmax.f32 %v334, 0.0
      %v399 = vmax.f32 %v335, 0.0
      %v400 = vmax.f32 %v336, 0.0
      %v401 = vmax.f32 %v337, 0.0
      %v402 = vmax.f32 %v338, 0.0
      %v403 = vmax.f32 %v339, 0.0
      %v404 = vmax.f32 %v340, 0.0
      %v405 = vmax.f32 %v341, 0.0
      %v406 = vmax.f32 %v342, 0.0
      %v407 = vmax.f32 %v343, 0.0
      %v408 = vmax.f32 %v344, 0.0
      %v409 = vmax.f32 %v345, 0.0
      %v410 = vmax.f32 %v346, 0.0
      %v411 = vmax.f32 %v347, 0.0
      %v412 = vmax.f32 %v348, 0.0
      %v413 = vmax.f32 %v349, 0.0
      %v414 = vmax.f32 %v350, 0.0
      %v415 = vmax.f32 %v351, 0.0
      %v416 = vmax.f32 %v352, 0.0
      %v417 = vmax.f32 %v353, 0.0
      %v418 = vmax.f32 %v354, 0.0
      %v419 = vmax.f32 %v355, 0.0
      %v420 = vmax.f32 %v356, 0.0
      %v421 = vmax.f32 %v357, 0.0
      %v422 = vmax.f32 %v358, 0.0
      %v423 = vmax.f32 %v359, 0.0
      %v424 = vmax.f32 %v360, 0.0
      %v425 = vmax.f32 %v361, 0.0
      %v426 = vmax.f32 %v362, 0.0
      %v427 = vmax.f32 %v363, 0.0
      %v428 = vmax.f32 %v364, 0.0
      %v429 = vmax.f32 %v365, 0.0
      %v430 = vmax.f32 %v366, 0.0
      %v431 = vmax.f32 %v367, 0.0
      %v432 = vmax.f32 %v368, 0.0
      %v433 = vmax.f32 %v369, 0.0
      %v434 = vmax.f32 %v370, 0.0
      %v435 = vmax.f32 %v371, 0.0
      %v436 = vmax.f32 %v372, 0.0
      %v437 = vmax.f32 %v373, 0.0
      %v438 = vmax.f32 %v374, 0.0
      %v439 = vmax.f32 %v375, 0.0
      %v440 = vmax.f32 %v376, 0.0
      %v441 = vmax.f32 %v377, 0.0
      %v442 = vmax.f32 %v378, 0.0
      %v443 = vmax.f32 %v379, 0.0
      %444 = vst [vmem:[%s172] sm:$0xff] %v380
      %445 = vst [vmem:[%s172 + $0x8] sm:$0xff] %v381
      %446 = vst [vmem:[%s172 + $0x10] sm:$0xff] %v382
      %447 = vst [vmem:[%s172 + $0x18] sm:$0xff] %v383
      %448 = vst [vmem:[%s172 + $0x20] sm:$0xff] %v384
      %449 = vst [vmem:[%s172 + $0x28] sm:$0xff] %v385
      %450 = vst [vmem:[%s172 + $0x30] sm:$0xff] %v386
      %451 = vst [vmem:[%s172 + $0x38] sm:$0xff] %v387
      %452 = vst [vmem:[%s172 + $0x40] sm:$0xff] %v388
      %453 = vst [vmem:[%s172 + $0x48] sm:$0xff] %v389
      %454 = vst [vmem:[%s172 + $0x50] sm:$0xff] %v390
      %455 = vst [vmem:[%s172 + $0x58] sm:$0xff] %v391
      %456 = vst [vmem:[%s172 + $0x60] sm:$0xff] %v392
      %457 = vst [vmem:[%s172 + $0x68] sm:$0xff] %v393
      %458 = vst [vmem:[%s172 + $0x70] sm:$0xff] %v394
      %459 = vst [vmem:[%s172 + $0x78] sm:$0xff] %v395
      %460 = vst [vmem:[%s172 + $0x80] sm:$0xff] %v396
      %461 = vst [vmem:[%s172 + $0x88] sm:$0xff] %v397
      %462 = vst [vmem:[%s172 + $0x90] sm:$0xff] %v398
      %463 = vst [vmem:[%s172 + $0x98] sm:$0xff] %v399
      %464 = vst [vmem:[%s172 + $0xa0] sm:$0xff] %v400
      %465 = vst [vmem:[%s172 + $0xa8] sm:$0xff] %v401
      %466 = vst [vmem:[%s172 + $0xb0] sm:$0xff] %v402
      %467 = vst [vmem:[%s172 + $0xb8] sm:$0xff] %v403
      %468 = vst [vmem:[%s172 + $0xc0] sm:$0xff] %v404
      %469 = vst [vmem:[%s172 + $0xc8] sm:$0xff] %v405
      %470 = vst [vmem:[%s172 + $0xd0] sm:$0xff] %v406
      %471 = vst [vmem:[%s172 + $0xd8] sm:$0xff] %v407
      %472 = vst [vmem:[%s172 + $0xe0] sm:$0xff] %v408
      %473 = vst [vmem:[%s172 + $0xe8] sm:$0xff] %v409
      %474 = vst [vmem:[%s172 + $0xf0] sm:$0xff] %v410
      %475 = vst [vmem:[%s172 + $0xf8] sm:$0xff] %v411
      %476 = vst [vmem:[%s172 + $0x100] sm:$0xff] %v412
      %477 = vst [vmem:[%s172 + $0x108] sm:$0xff] %v413
      %478 = vst [vmem:[%s172 + $0x110] sm:$0xff] %v414
      %479 = vst [vmem:[%s172 + $0x118] sm:$0xff] %v415
      %480 = vst [vmem:[%s172 + $0x120] sm:$0xff] %v416
      %481 = vst [vmem:[%s172 + $0x128] sm:$0xff] %v417
      %482 = vst [vmem:[%s172 + $0x130] sm:$0xff] %v418
      %483 = vst [vmem:[%s172 + $0x138] sm:$0xff] %v419
      %484 = vst [vmem:[%s172 + $0x140] sm:$0xff] %v420
      %485 = vst [vmem:[%s172 + $0x148] sm:$0xff] %v421
      %486 = vst [vmem:[%s172 + $0x150] sm:$0xff] %v422
      %487 = vst [vmem:[%s172 + $0x158] sm:$0xff] %v423
      %488 = vst [vmem:[%s172 + $0x160] sm:$0xff] %v424
      %489 = vst [vmem:[%s172 + $0x168] sm:$0xff] %v425
      %490 = vst [vmem:[%s172 + $0x170] sm:$0xff] %v426
      %491 = vst [vmem:[%s172 + $0x178] sm:$0xff] %v427
      %492 = vst [vmem:[%s172 + $0x180] sm:$0xff] %v428
      %493 = vst [vmem:[%s172 + $0x188] sm:$0xff] %v429
      %494 = vst [vmem:[%s172 + $0x190] sm:$0xff] %v430
      %495 = vst [vmem:[%s172 + $0x198] sm:$0xff] %v431
      %496 = vst [vmem:[%s172 + $0x1a0] sm:$0xff] %v432
      %497 = vst [vmem:[%s172 + $0x1a8] sm:$0xff] %v433
      %498 = vst [vmem:[%s172 + $0x1b0] sm:$0xff] %v434
      %499 = vst [vmem:[%s172 + $0x1b8] sm:$0xff] %v435
      %500 = vst [vmem:[%s172 + $0x1c0] sm:$0xff] %v436
      %501 = vst [vmem:[%s172 + $0x1c8] sm:$0xff] %v437
      %502 = vst [vmem:[%s172 + $0x1d0] sm:$0xff] %v438
      %503 = vst [vmem:[%s172 + $0x1d8] sm:$0xff] %v439
      %504 = vst [vmem:[%s172 + $0x1e0] sm:$0xff] %v440
      %505 = vst [vmem:[%s172 + $0x1e8] sm:$0xff] %v441
      %506 = vst [vmem:[%s172 + $0x1f0] sm:$0xff] %v442
      %507 = vst [vmem:[%s172 + $0x1f8] sm:$0xff] %v443
      %s508 = smul.u32 64, %s14
      %p509 = scmp.lt.s32.totalorder %s508, 255
      %s510 = scalar_select %p509, %s508, 255
      %s511 = smul.addr %s510, 8
      %s512 = scalar_lea.vmem %s3, %s511
      // Predicated region
      $region33: #{upsampling_block_forward.3} parent=31 // pred_check
        %p513 = pneg %p100
      $region34: #{upsampling_block_forward.3} parent=31 // pred_check_branch
        %515 = sbr.rel (%p513) target = $region36
      $region35: #{upsampling_block_forward.3} parent=31 // pred_region
        %s516 = smul.u32 64, %s14
      $region36: #{upsampling_block_forward.3} parent=31 // pred_fallthru
        _
    $region32: #{upsampling_block_forward.3} parent=5 // pred_fallthru
      _
    %p517 = scmp.le.s32.totalorder 2, %s9
    // Predicated region
    $region37: #{upsampling_block_forward.3} parent=5 // pred_check
      %p518 = pneg %p517
    $region38: #{upsampling_block_forward.3} parent=5 // pred_check_branch
      %520 = sbr.rel (%p518) target = $region40
    $region39: #{upsampling_block_forward.3} parent=5 // pred_region
      %s521 = ssub.s32 %s9, 2
      // Predicated region
      $region41: #{upsampling_block_forward.3} parent=39 // pred_check
        %p522 = pneg %p106
      $region42: #{upsampling_block_forward.3} parent=39 // pred_check_branch
        %524 = sbr.rel (%p522) target = $region44
      $region43: #{upsampling_block_forward.3} parent=39 // pred_region
        %s525 = smul.u32 64, %s15
        %p526 = scmp.lt.s32.totalorder %s525, 255
        %s527 = scalar_select %p526, %s525, 255
        %s528 = smul.addr %s527, 8
        %s529 = scalar_lea.vmem %s3, %s528
      $region44: #{upsampling_block_forward.3} parent=39 // pred_fallthru
        _
    $region40: #{upsampling_block_forward.3} parent=5 // pred_fallthru
      _
  $region6: #{upsampling_block_forward.3} parent=0 // loop_footer
    %s13 = sadd.s32 1, %s9
  $region7: #{upsampling_block_forward.3} parent=0 // loop_footer_branch
    %8 = sbr.rel target = $region3
  $region8: #{upsampling_block_forward.3} parent=0 // loop_exit
    _

// kernel: upsampling_block_forward.2
$region0: #{upsampling_block_forward.2}
  #allocation0 [shape = 'u32[]', space=smem, size = 0x4, offset = 0x4, fixed_abs, tag = 'smem constant byte address 0x4 - core index']
  #allocation1 [shape = 'u32[144,128]{1,0:T(1,128)}', space=vmem, size = 0x12000, scoped, tag = 'internal scratch']
  #allocation2 [shape = 'f32[512,128]{1,0:T(8,128)}', space=vmem, size = 0x40000, scoped, tag = 'scratch operand']
  %s0 = inlined_call_operand.vmem [shape: f32[2,34,34,12], index: 0, kind: input, shape index: {}]
  %s1 = inlined_call_operand.vmem [shape: bf16[9,12,128], index: 1, kind: input, shape index: {}]
  %s2 = inlined_call_operand.vmem [shape: f32[2,32,32,128], index: 2, kind: output, shape index: {0}]
  %s3 = inlined_call_operand.vmem [shape: f32[2,2,2,128], index: 3, kind: output, shape index: {1}]
  %4 = xla_tuple %s2, %s3
  %s5 = sld [smem:[#allocation0]]
  $region49: #{upsampling_block_forward.2} parent=0
    _
  %s7 = ssub.s32 1, %s5
  %s8 = scalar_select 0, %s7, %s5
  loop: start=0, step=1, limit=6
  $region2: #{upsampling_block_forward.2} parent=0 // loop_pre_header
    _
  $region3: #{upsampling_block_forward.2} parent=0 // loop_header
    %s10 = sphi 0, %s14
    %p11 = scmp.ge.s32.totalorder %s10, 6
    %s17 = sphi 0, %s29
    %s18 = sphi 0, %s25
    %s19 = sphi 0, %s17
    %s20 = sphi 0, %s18
    %s21 = sphi 0, %s19
    %s22 = sphi 0, %s20
    %s32 = sphi 0, %s34
    %s35 = sphi 0, %s32
    %s36 = sphi 0, %s35
    %s52 = sphi 0, %s36
    %s56 = sphi 0, %s56
    %s58 = sphi 0, %s56
    %s59 = sphi 0, %s58
    %s73 = sphi 0, %s59
    %s81 = sphi 0, %s83
    %s84 = sphi 0, %s81
    %s85 = sphi 0, %s84
    %s101 = sphi 0, %s85
    %s109 = sphi 0, %s111
    %s112 = sphi 0, %s109
    %s113 = sphi 0, %s112
    %s129 = sphi 0, %s113
  $region4: #{upsampling_block_forward.2} parent=0 // loop_header_branch
    %13 = sbr.rel (%p11) target = $region8
  $region5: #{upsampling_block_forward.2} parent=0 // loop_body
    %s15 = ssub.s32 %s10, 1
    %s16 = ssub.s32 %s10, 2
    %s23 = sadd.s32 1, %s18
    %p24 = scmp.ge.s32.totalorder %s23, 2
    %s25 = scalar_select %p24, 0, %s23
    %s26 = sadd.s32 1, %s17
    %s27 = scalar_select %p24, %s26, %s17
    %p28 = scmp.ge.s32.totalorder %s27, 2
    %s29 = scalar_select %p28, 0, %s27
    %s30 = ssub.s32 %s17, %s29
    %p31 = scmp.eq.s32.totalorder %s30, 0
    %s33 = sadd.s32 %s32, 1
    %s34 = scalar_select %p31, %s32, %s33
    %p37 = pneg %p31
    %p38 = scmp.eq.s32.totalorder %s10, 3
    %p39 = por %p37, %p38
    %p40 = scmp.ne.s32.totalorder %s32, %s35
    %p41 = scmp.eq.s32.totalorder %s10, 0
    %p42 = por %p40, %p41
    %p43 = scmp.ne.s32.totalorder %s32, %s35
    %p44 = scmp.eq.s32.totalorder %s15, 3
    %p45 = por %p43, %p44
    %p46 = scmp.ne.s32.totalorder %s35, %s36
    %p47 = scmp.eq.s32.totalorder %s15, 0
    %p48 = por %p46, %p47
    %p49 = scmp.ne.s32.totalorder %s35, %s36
    %p50 = scmp.eq.s32.totalorder %s16, 3
    %p51 = por %p49, %p50
    %p53 = scmp.ne.s32.totalorder %s36, %s52
    %p54 = scmp.eq.s32.totalorder %s16, 0
    %p55 = por %p53, %p54
    %s57 = sadd.s32 %s56, 1
    %p60 = scmp.eq.s32.totalorder %s10, 3
    %p61 = scmp.ne.s32.totalorder %s56, %s58
    %p62 = scmp.eq.s32.totalorder %s10, 0
    %p63 = por %p61, %p62
    %p64 = scmp.ne.s32.totalorder %s56, %s58
    %p65 = scmp.eq.s32.totalorder %s15, 3
    %p66 = por %p64, %p65
    %p67 = scmp.ne.s32.totalorder %s58, %s59
    %p68 = scmp.eq.s32.totalorder %s15, 0
    %p69 = por %p67, %p68
    %p70 = scmp.ne.s32.totalorder %s58, %s59
    %p71 = scmp.eq.s32.totalorder %s16, 3
    %p72 = por %p70, %p71
    %p74 = scmp.ne.s32.totalorder %s59, %s73
    %p75 = scmp.eq.s32.totalorder %s16, 0
    %p76 = por %p74, %p75
    %s77 = ssub.s32 %s17, %s29
    %s78 = ssub.s32 %s18, %s25
    %s79 = sor.u32 %s77, %s78
    %p80 = scmp.eq.s32.totalorder %s79, 0
    %s82 = sadd.s32 %s81, 1
    %s83 = scalar_select %p80, %s81, %s82
    %p86 = pneg %p80
    %p87 = scmp.eq.s32.totalorder %s10, 3
    %p88 = por %p86, %p87
    %p89 = scmp.ne.s32.totalorder %s81, %s84
    %p90 = scmp.eq.s32.totalorder %s10, 0
    %p91 = por %p89, %p90
    %p92 = scmp.ne.s32.totalorder %s81, %s84
    %p93 = scmp.eq.s32.totalorder %s15, 3
    %p94 = por %p92, %p93
    %p95 = scmp.ne.s32.totalorder %s84, %s85
    %p96 = scmp.eq.s32.totalorder %s15, 0
    %p97 = por %p95, %p96
    %p98 = scmp.ne.s32.totalorder %s84, %s85
    %p99 = scmp.eq.s32.totalorder %s16, 3
    %p100 = por %p98, %p99
    %p102 = scmp.ne.s32.totalorder %s85, %s101
    %p103 = scmp.eq.s32.totalorder %s16, 0
    %p104 = por %p102, %p103
    %s105 = ssub.s32 %s17, %s29
    %s106 = ssub.s32 %s18, %s25
    %s107 = sor.u32 %s105, %s106
    %p108 = scmp.eq.s32.totalorder %s107, 0
    %s110 = sadd.s32 %s109, 1
    %s111 = scalar_select %p108, %s109, %s110
    %p114 = pneg %p108
    %p115 = scmp.eq.s32.totalorder %s10, 3
    %p116 = por %p114, %p115
    %p117 = scmp.ne.s32.totalorder %s109, %s112
    %p118 = scmp.eq.s32.totalorder %s10, 0
    %p119 = por %p117, %p118
    %p120 = scmp.ne.s32.totalorder %s109, %s112
    %p121 = scmp.eq.s32.totalorder %s15, 3
    %p122 = por %p120, %p121
    %p123 = scmp.ne.s32.totalorder %s112, %s113
    %p124 = scmp.eq.s32.totalorder %s15, 0
    %p125 = por %p123, %p124
    %p126 = scmp.ne.s32.totalorder %s112, %s113
    %p127 = scmp.eq.s32.totalorder %s16, 3
    %p128 = por %p126, %p127
    %p130 = scmp.ne.s32.totalorder %s113, %s129
    %p131 = scmp.eq.s32.totalorder %s16, 0
    %p132 = por %p130, %p131
    %p133 = scmp.le.s32.totalorder 1, %s10
    %p134 = scmp.lt.s32.totalorder %s10, 5
    %p135 = pnand %p133, %p134
    %p136 = pneg %p135
    // Predicated region
    $region9: #{upsampling_block_forward.2} parent=5 // pred_check
      _
    $region10: #{upsampling_block_forward.2} parent=5 // pred_check_branch
      %138 = sbr.rel (%p135) target = $region12
    $region11: #{upsampling_block_forward.2} parent=5 // pred_region
      %s139 = ssub.s32 %s10, 1
      // Predicated region
      $region13: #{upsampling_block_forward.2} parent=11 // pred_check
        %p140 = pneg %p69
      $region14: #{upsampling_block_forward.2} parent=11 // pred_check_branch
        %142 = sbr.rel (%p140) target = $region16
      $region15: #{upsampling_block_forward.2} parent=11 // pred_region
        _
      $region16: #{upsampling_block_forward.2} parent=11 // pred_fallthru
        _
    $region12: #{upsampling_block_forward.2} parent=5 // pred_fallthru
      _
    %p143 = scmp.lt.s32.totalorder %s10, 4
    // Predicated region
    $region17: #{upsampling_block_forward.2} parent=5 // pred_check
      %p144 = pneg %p143
    $region18: #{upsampling_block_forward.2} parent=5 // pred_check_branch
      %146 = sbr.rel (%p144) target = $region20
    $region19: #{upsampling_block_forward.2} parent=5 // pred_region
      // Predicated region
      $region21: #{upsampling_block_forward.2} parent=19 // pred_check
        %p147 = pneg %p42
      $region22: #{upsampling_block_forward.2} parent=19 // pred_check_branch
        %149 = sbr.rel (%p147) target = $region24
      $region23: #{upsampling_block_forward.2} parent=19 // pred_region
        %p150 = scmp.lt.s32.totalorder %s17, 1
        %s151 = scalar_select %p150, %s17, 1
        %s152 = smul.addr %s151, 170
        %s153 = smul.addr %s152, 8
        %s154 = scalar_lea.vmem %s0, %s153
      $region24: #{upsampling_block_forward.2} parent=19 // pred_fallthru
        _
    $region20: #{upsampling_block_forward.2} parent=5 // pred_fallthru
      _
    %p155 = scmp.le.s32.totalorder 1, %s10
    %p156 = scmp.lt.s32.totalorder %s10, 5
    %p157 = pnand %p155, %p156
    %p158 = pneg %p157
    // Predicated region
    $region25: #{upsampling_block_forward.2} parent=5 // pred_check
      _
    $region26: #{upsampling_block_forward.2} parent=5 // pred_check_branch
      %160 = sbr.rel (%p157) target = $region28
    $region27: #{upsampling_block_forward.2} parent=5 // pred_region
      %s161 = ssub.s32 %s10, 1
      %p162 = scmp.lt.s32.totalorder %s19, 1
      %s163 = scalar_select %p162, %s19, 1
      %s164 = smul.addr %s163, 170
      %s165 = smul.addr %s164, 8
      %s166 = scalar_lea.vmem %s0, %s165
      %p167 = pneg %p48
      %p168 = pneg %p45
      %p169 = pneg %p69
      %p170 = pneg %p66
      %p171 = pneg %p97
      %p172 = pneg %p94
      %s173 = smul.u32 16, %s20
      %p174 = scmp.lt.s32.totalorder %s19, 1
      %s175 = scalar_select %p174, %s19, 1
      %p176 = scmp.lt.s32.totalorder %s173, 31
      %s177 = scalar_select %p176, %s173, 31
      %s178 = smul.addr %s177, 4
      %s179 = smul.addr %s175, 128
      %s180 = sadd.s32 %s178, %s179
      %s181 = smul.addr %s180, 8
      %s182 = scalar_lea.vmem %s2, %s181
      %p183 = pneg %p125
      %p184 = pneg %p122
      %p185 = scmp.lt.s32.totalorder %s19, 1
      %s186 = scalar_select %p185, %s19, 1
      %p187 = scmp.lt.s32.totalorder %s20, 1
      %s188 = scalar_select %p187, %s20, 1
      %s189 = smul.addr %s186, 2
      %s190 = sadd.s32 %s188, %s189
      %s191 = smul.addr %s190, 2
      %s192 = scalar_lea.vmem %s3, %s191
      %p193 = scmp.lt.s32.totalorder %s19, 1
      %s194 = scalar_select %p193, %s19, 1
      %s195 = smul.addr %s194, 170
      %s196 = smul.addr %s195, 8
      %s197 = scalar_lea.vmem %s0, %s196
      %s198 = smul.u32 16, %s20
      %p199 = scmp.lt.s32.totalorder %s19, 1
      %s200 = scalar_select %p199, %s19, 1
      %p201 = scmp.lt.s32.totalorder %s198, 31
      %s202 = scalar_select %p201, %s198, 31
      %s203 = smul.addr %s202, 4
      %s204 = smul.addr %s200, 128
      %s205 = sadd.s32 %s203, %s204
      %s206 = smul.addr %s205, 8
      %s207 = scalar_lea.vmem %s2, %s206
      %s208 = smul.u32 16, %s20
      %p209 = scmp.lt.s32.totalorder %s19, 1
      %s210 = scalar_select %p209, %s19, 1
      %p211 = scmp.lt.s32.totalorder %s20, 1
      %s212 = scalar_select %p211, %s20, 1
      %s213 = smul.addr %s210, 2
      %s214 = sadd.s32 %s212, %s213
      %s215 = smul.addr %s214, 2
      %s216 = scalar_lea.vmem %s3, %s215
      %s218 = smul.u32 %s20, 16
      %219 = vst [vmem:[#allocation2] sm:$0xff] 0.0
      %220 = vst [vmem:[#allocation2 + $0x8] sm:$0xff] 0.0
      %221 = vst [vmem:[#allocation2 + $0x10] sm:$0xff] 0.0
      %222 = vst [vmem:[#allocation2 + $0x18] sm:$0xff] 0.0
      %223 = vst [vmem:[#allocation2 + $0x20] sm:$0xff] 0.0
      %224 = vst [vmem:[#allocation2 + $0x28] sm:$0xff] 0.0
      %225 = vst [vmem:[#allocation2 + $0x30] sm:$0xff] 0.0
      %226 = vst [vmem:[#allocation2 + $0x38] sm:$0xff] 0.0
      %227 = vst [vmem:[#allocation2 + $0x40] sm:$0xff] 0.0
      %228 = vst [vmem:[#allocation2 + $0x48] sm:$0xff] 0.0
      %229 = vst [vmem:[#allocation2 + $0x50] sm:$0xff] 0.0
      %230 = vst [vmem:[#allocation2 + $0x58] sm:$0xff] 0.0
      %231 = vst [vmem:[#allocation2 + $0x60] sm:$0xff] 0.0
      %232 = vst [vmem:[#allocation2 + $0x68] sm:$0xff] 0.0
      %233 = vst [vmem:[#allocation2 + $0x70] sm:$0xff] 0.0
      %234 = vst [vmem:[#allocation2 + $0x78] sm:$0xff] 0.0
      %235 = vst [vmem:[#allocation2 + $0x80] sm:$0xff] 0.0
      %236 = vst [vmem:[#allocation2 + $0x88] sm:$0xff] 0.0
      %237 = vst [vmem:[#allocation2 + $0x90] sm:$0xff] 0.0
      %238 = vst [vmem:[#allocation2 + $0x98] sm:$0xff] 0.0
      %239 = vst [vmem:[#allocation2 + $0xa0] sm:$0xff] 0.0
      %240 = vst [vmem:[#allocation2 + $0xa8] sm:$0xff] 0.0
      %241 = vst [vmem:[#allocation2 + $0xb0] sm:$0xff] 0.0
      %242 = vst [vmem:[#allocation2 + $0xb8] sm:$0xff] 0.0
      %243 = vst [vmem:[#allocation2 + $0xc0] sm:$0xff] 0.0
      %244 = vst [vmem:[#allocation2 + $0xc8] sm:$0xff] 0.0
      %245 = vst [vmem:[#allocation2 + $0xd0] sm:$0xff] 0.0
      %246 = vst [vmem:[#allocation2 + $0xd8] sm:$0xff] 0.0
      %247 = vst [vmem:[#allocation2 + $0xe0] sm:$0xff] 0.0
      %248 = vst [vmem:[#allocation2 + $0xe8] sm:$0xff] 0.0
      %249 = vst [vmem:[#allocation2 + $0xf0] sm:$0xff] 0.0
      %250 = vst [vmem:[#allocation2 + $0xf8] sm:$0xff] 0.0
      %251 = vst [vmem:[#allocation2 + $0x100] sm:$0xff] 0.0
      %252 = vst [vmem:[#allocation2 + $0x108] sm:$0xff] 0.0
      %253 = vst [vmem:[#allocation2 + $0x110] sm:$0xff] 0.0
      %254 = vst [vmem:[#allocation2 + $0x118] sm:$0xff] 0.0
      %255 = vst [vmem:[#allocation2 + $0x120] sm:$0xff] 0.0
      %256 = vst [vmem:[#allocation2 + $0x128] sm:$0xff] 0.0
      %257 = vst [vmem:[#allocation2 + $0x130] sm:$0xff] 0.0
      %258 = vst [vmem:[#allocation2 + $0x138] sm:$0xff] 0.0
      %259 = vst [vmem:[#allocation2 + $0x140] sm:$0xff] 0.0
      %260 = vst [vmem:[#allocation2 + $0x148] sm:$0xff] 0.0
      %261 = vst [vmem:[#allocation2 + $0x150] sm:$0xff] 0.0
      %262 = vst [vmem:[#allocation2 + $0x158] sm:$0xff] 0.0
      %263 = vst [vmem:[#allocation2 + $0x160] sm:$0xff] 0.0
      %264 = vst [vmem:[#allocation2 + $0x168] sm:$0xff] 0.0
      %265 = vst [vmem:[#allocation2 + $0x170] sm:$0xff] 0.0
      %266 = vst [vmem:[#allocation2 + $0x178] sm:$0xff] 0.0
      %267 = vst [vmem:[#allocation2 + $0x180] sm:$0xff] 0.0
      %268 = vst [vmem:[#allocation2 + $0x188] sm:$0xff] 0.0
      %269 = vst [vmem:[#allocation2 + $0x190] sm:$0xff] 0.0
      %270 = vst [vmem:[#allocation2 + $0x198] sm:$0xff] 0.0
      %271 = vst [vmem:[#allocation2 + $0x1a0] sm:$0xff] 0.0
      %272 = vst [vmem:[#allocation2 + $0x1a8] sm:$0xff] 0.0
      %273 = vst [vmem:[#allocation2 + $0x1b0] sm:$0xff] 0.0
      %274 = vst [vmem:[#allocation2 + $0x1b8] sm:$0xff] 0.0
      %275 = vst [vmem:[#allocation2 + $0x1c0] sm:$0xff] 0.0
      %276 = vst [vmem:[#allocation2 + $0x1c8] sm:$0xff] 0.0
      %277 = vst [vmem:[#allocation2 + $0x1d0] sm:$0xff] 0.0
      %278 = vst [vmem:[#allocation2 + $0x1d8] sm:$0xff] 0.0
      %279 = vst [vmem:[#allocation2 + $0x1e0] sm:$0xff] 0.0
      %280 = vst [vmem:[#allocation2 + $0x1e8] sm:$0xff] 0.0
      %281 = vst [vmem:[#allocation2 + $0x1f0] sm:$0xff] 0.0
      %282 = vst [vmem:[#allocation2 + $0x1f8] sm:$0xff] 0.0
      %s283 = smul.u32 %s218, 40
      %s284 = scalar_lea.vmem %s197, %s283
      %v285 = vld [vmem:[%s284] sm:$0xff]
      %v286 = vld [vmem:[%s284 + $0x8] sm:$0xff]
      %v287 = vld [vmem:[%s284 + $0x10] sm:$0xff]
      %v288 = vld [vmem:[%s284 + $0x18] sm:$0xff]
      %v289 = vld [vmem:[%s284 + $0x20] sm:$0x3]
      %v290 = vld [vmem:[%s284 + $0x28] sm:$0xff]
      %v291 = vld [vmem:[%s284 + $0x30] sm:$0xff]
      %v292 = vld [vmem:[%s284 + $0x38] sm:$0xff]
      %v293 = vld [vmem:[%s284 + $0x40] sm:$0xff]
      %v294 = vld [vmem:[%s284 + $0x48] sm:$0x3]
      %v295 = vld [vmem:[%s284 + $0x50] sm:$0xff]
      %v296 = vld [vmem:[%s284 + $0x58] sm:$0xff]
      %v297 = vld [vmem:[%s284 + $0x60] sm:$0xff]
      %v298 = vld [vmem:[%s284 + $0x68] sm:$0xff]
      %v299 = vld [vmem:[%s284 + $0x70] sm:$0x3]
      %v300 = vld [vmem:[%s284 + $0x78] sm:$0xff]
      %v301 = vld [vmem:[%s284 + $0x80] sm:$0xff]
      %v302 = vld [vmem:[%s284 + $0x88] sm:$0xff]
      %v303 = vld [vmem:[%s284 + $0x90] sm:$0xff]
      %v304 = vld [vmem:[%s284 + $0x98] sm:$0x3]
      %v305 = vld [vmem:[%s284 + $0xa0] sm:$0xff]
      %v306 = vld [vmem:[%s284 + $0xa8] sm:$0xff]
      %v307 = vld [vmem:[%s284 + $0xb0] sm:$0xff]
      %v308 = vld [vmem:[%s284 + $0xb8] sm:$0xff]
      %v309 = vld [vmem:[%s284 + $0xc0] sm:$0x3]
      %v310 = vld [vmem:[%s284 + $0xc8] sm:$0xff]
      %v311 = vld [vmem:[%s284 + $0xd0] sm:$0xff]
      %v312 = vld [vmem:[%s284 + $0xd8] sm:$0xff]
      %v313 = vld [vmem:[%s284 + $0xe0] sm:$0xff]
      %v314 = vld [vmem:[%s284 + $0xe8] sm:$0x3]
      %v315 = vld [vmem:[%s284 + $0xf0] sm:$0xff]
      %v316 = vld [vmem:[%s284 + $0xf8] sm:$0xff]
      %v317 = vld [vmem:[%s284 + $0x100] sm:$0xff]
      %v318 = vld [vmem:[%s284 + $0x108] sm:$0xff]
      %v319 = vld [vmem:[%s284 + $0x110] sm:$0x3]
      %v320 = vld [vmem:[%s284 + $0x118] sm:$0xff]
      %v321 = vld [vmem:[%s284 + $0x120] sm:$0xff]
      %v322 = vld [vmem:[%s284 + $0x128] sm:$0xff]
      %v323 = vld [vmem:[%s284 + $0x130] sm:$0xff]
      %v324 = vld [vmem:[%s284 + $0x138] sm:$0x3]
      %v325 = vld [vmem:[%s284 + $0x140] sm:$0xff]
      %v326 = vld [vmem:[%s284 + $0x148] sm:$0xff]
      %v327 = vld [vmem:[%s284 + $0x150] sm:$0xff]
      %v328 = vld [vmem:[%s284 + $0x158] sm:$0xff]
      %v329 = vld [vmem:[%s284 + $0x160] sm:$0x3]
      %v330 = vld [vmem:[%s284 + $0x168] sm:$0xff]
      %v331 = vld [vmem:[%s284 + $0x170] sm:$0xff]
      %v332 = vld [vmem:[%s284 + $0x178] sm:$0xff]
      %v333 = vld [vmem:[%s284 + $0x180] sm:$0xff]
      %v334 = vld [vmem:[%s284 + $0x188] sm:$0x3]
      %v335 = vld [vmem:[%s284 + $0x190] sm:$0xff]
      %v336 = vld [vmem:[%s284 + $0x198] sm:$0xff]
      %v337 = vld [vmem:[%s284 + $0x1a0] sm:$0xff]
      %v338 = vld [vmem:[%s284 + $0x1a8] sm:$0xff]
      %v339 = vld [vmem:[%s284 + $0x1b0] sm:$0x3]
      %v340 = vld [vmem:[%s284 + $0x1b8] sm:$0xff]
      %v341 = vld [vmem:[%s284 + $0x1c0] sm:$0xff]
      %v342 = vld [vmem:[%s284 + $0x1c8] sm:$0xff]
      %v343 = vld [vmem:[%s284 + $0x1d0] sm:$0xff]
      %v344 = vld [vmem:[%s284 + $0x1d8] sm:$0x3]
      %v345 = vld [vmem:[%s284 + $0x1e0] sm:$0xff]
      %v346 = vld [vmem:[%s284 + $0x1e8] sm:$0xff]
      %v347 = vld [vmem:[%s284 + $0x1f0] sm:$0xff]
      %v348 = vld [vmem:[%s284 + $0x1f8] sm:$0xff]
      %v349 = vld [vmem:[%s284 + $0x200] sm:$0x3]
      %v350 = vld [vmem:[%s284 + $0x208] sm:$0xff]
      %v351 = vld [vmem:[%s284 + $0x210] sm:$0xff]
      %v352 = vld [vmem:[%s284 + $0x218] sm:$0xff]
      %v353 = vld [vmem:[%s284 + $0x220] sm:$0xff]
      %v354 = vld [vmem:[%s284 + $0x228] sm:$0x3]
      %v355 = vld [vmem:[%s284 + $0x230] sm:$0xff]
      %v356 = vld [vmem:[%s284 + $0x238] sm:$0xff]
      %v357 = vld [vmem:[%s284 + $0x240] sm:$0xff]
      %v358 = vld [vmem:[%s284 + $0x248] sm:$0xff]
      %v359 = vld [vmem:[%s284 + $0x250] sm:$0x3]
      %v360 = vld [vmem:[%s284 + $0x258] sm:$0xff]
      %v361 = vld [vmem:[%s284 + $0x260] sm:$0xff]
      %v362 = vld [vmem:[%s284 + $0x268] sm:$0xff]
      %v363 = vld [vmem:[%s284 + $0x270] sm:$0xff]
      %v364 = vld [vmem:[%s284 + $0x278] sm:$0x3]
      %v365 = vpack.c.bf16 %v286, %v285
      %v366 = vpack.c.bf16 %v288, %v287
      %v367 = vpack.c.bf16 %v291, %v290
      %v368 = vpack.c.bf16 %v293, %v292
      %v369 = vpack.c.bf16 %v296, %v295
      %v370 = vpack.c.bf16 %v298, %v297
      %v371 = vpack.c.bf16 %v301, %v300
      %v372 = vpack.c.bf16 %v303, %v302
      %v373 = vpack.c.bf16 %v306, %v305
      %v374 = vpack.c.bf16 %v308, %v307
      %v375 = vpack.c.bf16 %v311, %v310
      %v376 = vpack.c.bf16 %v313, %v312
      %v377 = vpack.c.bf16 %v316, %v315
      %v378 = vpack.c.bf16 %v318, %v317
      %v379 = vpack.c.bf16 %v321, %v320
      %v380 = vpack.c.bf16 %v323, %v322
      %v381 = vpack.c.bf16 %v326, %v325
      %v382 = vpack.c.bf16 %v328, %v327
      %v383 = vpack.c.bf16 %v331, %v330
      %v384 = vpack.c.bf16 %v333, %v332
      %v385 = vpack.c.bf16 %v336, %v335
      %v386 = vpack.c.bf16 %v338, %v337
      %v387 = vpack.c.bf16 %v341, %v340
      %v388 = vpack.c.bf16 %v343, %v342
      %v389 = vpack.c.bf16 %v346, %v345
      %v390 = vpack.c.bf16 %v348, %v347
      %v391 = vpack.c.bf16 %v351, %v350
      %v392 = vpack.c.bf16 %v353, %v352
      %v393 = vpack.c.bf16 %v356, %v355
      %v394 = vpack.c.bf16 %v358, %v357
      %v395 = vpack.c.bf16 %v361, %v360
      %v396 = vpack.c.bf16 %v363, %v362
      %v397 = vld [vmem:[#allocation2] sm:$0xff]
      %v398 = vld [vmem:[#allocation2 + $0x8] sm:$0xff]
      %v399 = vld [vmem:[#allocation2 + $0x10] sm:$0xff]
      %v400 = vld [vmem:[#allocation2 + $0x18] sm:$0xff]
      %v401 = vld [vmem:[#allocation2 + $0x20] sm:$0xff]
      %v402 = vld [vmem:[#allocation2 + $0x28] sm:$0xff]
      %v403 = vld [vmem:[#allocation2 + $0x30] sm:$0xff]
      %v404 = vld [vmem:[#allocation2 + $0x38] sm:$0xff]
      %v405 = vld [vmem:[#allocation2 + $0x40] sm:$0xff]
      %v406 = vld [vmem:[#allocation2 + $0x48] sm:$0xff]
      %v407 = vld [vmem:[#allocation2 + $0x50] sm:$0xff]
      %v408 = vld [vmem:[#allocation2 + $0x58] sm:$0xff]
      %v409 = vld [vmem:[#allocation2 + $0x60] sm:$0xff]
      %v410 = vld [vmem:[#allocation2 + $0x68] sm:$0xff]
      %v411 = vld [vmem:[#allocation2 + $0x70] sm:$0xff]
      %v412 = vld [vmem:[#allocation2 + $0x78] sm:$0xff]
      %v413 = vld [vmem:[#allocation2 + $0x80] sm:$0xff]
      %v414 = vld [vmem:[#allocation2 + $0x88] sm:$0xff]
      %v415 = vld [vmem:[#allocation2 + $0x90] sm:$0xff]
      %v416 = vld [vmem:[#allocation2 + $0x98] sm:$0xff]
      %v417 = vld [vmem:[#allocation2 + $0xa0] sm:$0xff]
      %v418 = vld [vmem:[#allocation2 + $0xa8] sm:$0xff]
      %v419 = vld [vmem:[#allocation2 + $0xb0] sm:$0xff]
      %v420 = vld [vmem:[#allocation2 + $0xb8] sm:$0xff]
      %v421 = vld [vmem:[#allocation2 + $0xc0] sm:$0xff]
      %v422 = vld [vmem:[#allocation2 + $0xc8] sm:$0xff]
      %v423 = vld [vmem:[#allocation2 + $0xd0] sm:$0xff]
      %v424 = vld [vmem:[#allocation2 + $0xd8] sm:$0xff]
      %v425 = vld [vmem:[#allocation2 + $0xe0] sm:$0xff]
      %v426 = vld [vmem:[#allocation2 + $0xe8] sm:$0xff]
      %v427 = vld [vmem:[#allocation2 + $0xf0] sm:$0xff]
      %v428 = vld [vmem:[#allocation2 + $0xf8] sm:$0xff]
      %v429 = vld [vmem:[#allocation2 + $0x100] sm:$0xff]
      %v430 = vld [vmem:[#allocation2 + $0x108] sm:$0xff]
      %v431 = vld [vmem:[#allocation2 + $0x110] sm:$0xff]
      %v432 = vld [vmem:[#allocation2 + $0x118] sm:$0xff]
      %v433 = vld [vmem:[#allocation2 + $0x120] sm:$0xff]
      %v434 = vld [vmem:[#allocation2 + $0x128] sm:$0xff]
      %v435 = vld [vmem:[#allocation2 + $0x130] sm:$0xff]
      %v436 = vld [vmem:[#allocation2 + $0x138] sm:$0xff]
      %v437 = vld [vmem:[#allocation2 + $0x140] sm:$0xff]
      %v438 = vld [vmem:[#allocation2 + $0x148] sm:$0xff]
      %v439 = vld [vmem:[#allocation2 + $0x150] sm:$0xff]
      %v440 = vld [vmem:[#allocation2 + $0x158] sm:$0xff]
      %v441 = vld [vmem:[#allocation2 + $0x160] sm:$0xff]
      %v442 = vld [vmem:[#allocation2 + $0x168] sm:$0xff]
      %v443 = vld [vmem:[#allocation2 + $0x170] sm:$0xff]
      %v444 = vld [vmem:[#allocation2 + $0x178] sm:$0xff]
      %v445 = vld [vmem:[#allocation2 + $0x180] sm:$0xff]
      %v446 = vld [vmem:[#allocation2 + $0x188] sm:$0xff]
      %v447 = vld [vmem:[#allocation2 + $0x190] sm:$0xff]
      %v448 = vld [vmem:[#allocation2 + $0x198] sm:$0xff]
      %v449 = vld [vmem:[#allocation2 + $0x1a0] sm:$0xff]
      %v450 = vld [vmem:[#allocation2 + $0x1a8] sm:$0xff]
      %v451 = vld [vmem:[#allocation2 + $0x1b0] sm:$0xff]
      %v452 = vld [vmem:[#allocation2 + $0x1b8] sm:$0xff]
      %v453 = vld [vmem:[#allocation2 + $0x1c0] sm:$0xff]
      %v454 = vld [vmem:[#allocation2 + $0x1c8] sm:$0xff]
      %v455 = vld [vmem:[#allocation2 + $0x1d0] sm:$0xff]
      %v456 = vld [vmem:[#allocation2 + $0x1d8] sm:$0xff]
      %v457 = vld [vmem:[#allocation2 + $0x1e0] sm:$0xff]
      %v458 = vld [vmem:[#allocation2 + $0x1e8] sm:$0xff]
      %v459 = vld [vmem:[#allocation2 + $0x1f0] sm:$0xff]
      %v460 = vld [vmem:[#allocation2 + $0x1f8] sm:$0xff]
      %v461 = vld [vmem:[%s1] sm:$0xf]
      %v462 = vld [vmem:[%s1 + $0x4] sm:$0x3]
      %v465 = vunpack.c.l.b16 %v461
      %v466 = vunpack.c.l.b16 %v462
      %v467 = vpack.c.b16 %v466, %v465
      %vm468 = vcmask 97280
      %v470 = vsel %vm468, %v365, 0
      %v473 = vsel %vm468, %v366, 0
      %v476 = vsel %vm468, %v367, 0
      %v479 = vsel %vm468, %v368, 0
      %v482 = vsel %vm468, %v369, 0
      %v485 = vsel %vm468, %v370, 0
      %v488 = vsel %vm468, %v371, 0
      %v491 = vsel %vm468, %v372, 0
      %v494 = vsel %vm468, %v373, 0
      %v497 = vsel %vm468, %v374, 0
      %v500 = vsel %vm468, %v375, 0
      %v503 = vsel %vm468, %v376, 0
      %v506 = vsel %vm468, %v377, 0
      %v509 = vsel %vm468, %v378, 0
      %v512 = vsel %vm468, %v379, 0
      %v515 = vsel %vm468, %v380, 0
      %v518 = vsel %vm468, %v381, 0
      %v521 = vsel %vm468, %v382, 0
      %v524 = vsel %vm468, %v383, 0
      %v527 = vsel %vm468, %v384, 0
      %v530 = vsel %vm468, %v385, 0
      %v533 = vsel %vm468, %v386, 0
      %v536 = vsel %vm468, %v387, 0
      %v539 = vsel %vm468, %v388, 0
      %v542 = vsel %vm468, %v389, 0
      %v545 = vsel %vm468, %v390, 0
      %v548 = vsel %vm468, %v391, 0
      %v551 = vsel %vm468, %v392, 0
      %v554 = vsel %vm468, %v393, 0
      %v557 = vsel %vm468, %v394, 0
      %v560 = vsel %vm468, %v395, 0
      %v563 = vsel %vm468, %v396, 0
      %vm565 = vcmask 1045504
      %v567 = vsel %vm565, %v467, 0
      %569 = vmatprep.subr.bf16.mxu0 0
      %570 = vmatpush1.bf16.msra.mxu0 %v567
      %571 = vmatprep.subr.bf16.mxu0 0
      %572 = vmatpush1.bf16.msra.mxu0 0
      %573 = vmatprep.subr.bf16.mxu0 0
      %574 = vmatpush1.bf16.msra.mxu0 0
      %575 = vmatprep.subr.bf16.mxu0 0
      %576 = vmatpush1.bf16.msra.mxu0 0
      %577 = vmatprep.subr.bf16.mxu0 0
      %578 = vmatpush1.bf16.msra.mxu0 0
      %579 = vmatprep.subr.bf16.mxu0 0
      %580 = vmatpush1.bf16.msra.mxu0 0
      %581 = vmatprep.subr.bf16.mxu0 0
      %582 = vmatpush1.bf16.msra.mxu0 0
      %583 = vmatprep.subr.bf16.mxu0 0
      %584 = vmatpush1.bf16.msra.mxu0 0
      %585 = vmatprep.subr.bf16.mxu0 0
      %586 = vmatpush1.bf16.msra.mxu0 0
      %587 = vmatprep.subr.bf16.mxu0 0
      %588 = vmatpush1.bf16.msra.mxu0 0
      %589 = vmatprep.subr.bf16.mxu0 0
      %590 = vmatpush1.bf16.msra.mxu0 0
      %591 = vmatprep.subr.bf16.mxu0 0
      %592 = vmatpush1.bf16.msra.mxu0 0
      %593 = vmatprep.subr.bf16.mxu0 0
      %594 = vmatpush1.bf16.msra.mxu0 0
      %595 = vmatprep.subr.bf16.mxu0 0
      %596 = vmatpush1.bf16.msra.mxu0 0
      %597 = vmatprep.subr.bf16.mxu0 0
      %598 = vmatpush1.bf16.msra.mxu0 0
      %599 = vmatprep.subr.bf16.mxu0 0
      %600 = vmatpush1.bf16.msra.mxu0 0
      %601 = vmatprep.mubr.bf16.mxu0 0
      %602 = vmatmul.mubr.bf16.gmra.mrb[0].mxu0 %v470
      %v603 = vpop.f32.mrb[0].mxu0
      %v604 = vadd.f32 0.0, %v603
      %v605 = vpop.f32.mrb[0].mxu0
      %v606 = vpop.f32.mrb[0].mxu0
      %v607 = vadd.f32 0.0, %v606
      %v608 = vpop.f32.mrb[0].mxu0
      %609 = vmatprep.mubr.bf16.mxu0 0
      %610 = vmatmul.mubr.bf16.gmra.mrb[0].mxu0 %v473
      %v611 = vpop.f32.mrb[0].mxu0
      %v612 = vadd.f32 0.0, %v611
      %v613 = vpop.f32.mrb[0].mxu0
      %v614 = vpop.f32.mrb[0].mxu0
      %v615 = vadd.f32 0.0, %v614
      %v616 = vpop.f32.mrb[0].mxu0
      %617 = vmatprep.mubr.bf16.mxu0 0
      %618 = vmatmul.mubr.bf16.gmra.mrb[0].mxu0 %v476
      %v619 = vpop.f32.mrb[0].mxu0
      %v620 = vadd.f32 0.0, %v619
      %v621 = vpop.f32.mrb[0].mxu0
      %v622 = vpop.f32.mrb[0].mxu0
      %v623 = vadd.f32 0.0, %v622
      %v624 = vpop.f32.mrb[0].mxu0
      %625 = vmatprep.mubr.bf16.mxu0 0
      %626 = vmatmul.mubr.bf16.gmra.mrb[0].mxu0 %v479
      %v627 = vpop.f32.mrb[0].mxu0
      %v628 = vadd.f32 0.0, %v627
      %v629 = vpop.f32.mrb[0].mxu0
      %v630 = vpop.f32.mrb[0].mxu0
      %v631 = vadd.f32 0.0, %v630
      %v632 = vpop.f32.mrb[0].mxu0
      %633 = vmatprep.mubr.bf16.mxu0 0
      %634 = vmatmul.mubr.bf16.gmra.mrb[0].mxu0 %v482
      %v635 = vpop.f32.mrb[0].mxu0
      %v636 = vadd.f32 0.0, %v635
      %v637 = vpop.f32.mrb[0].mxu0
      %v638 = vpop.f32.mrb[0].mxu0
      %v639 = vadd.f32 0.0, %v638
      %v640 = vpop.f32.mrb[0].mxu0
      %641 = vmatprep.mubr.bf16.mxu0 0
      %642 = vmatmul.mubr.bf16.gmra.mrb[0].mxu0 %v485
      %v643 = vpop.f32.mrb[0].mxu0
      %v644 = vadd.f32 0.0, %v643
      %v645 = vpop.f32.mrb[0].mxu0
      %v646 = vpop.f32.mrb[0].mxu0
      %v647 = vadd.f32 0.0, %v646
      %v648 = vpop.f32.mrb[0].mxu0
      %649 = vmatprep.mubr.bf16.mxu0 0
      %650 = vmatmul.mubr.bf16.gmra.mrb[0].mxu0 %v488
      %v651 = vpop.f32.mrb[0].mxu0
      %v652 = vadd.f32 0.0, %v651
      %v653 = vpop.f32.mrb[0].mxu0
      %v654 = vpop.f32.mrb[0].mxu0
      %v655 = vadd.f32 0.0, %v654
      %v656 = vpop.f32.mrb[0].mxu0
      %657 = vmatprep.mubr.bf16.mxu0 0
      %658 = vmatmul.mubr.bf16.gmra.mrb[0].mxu0 %v491
      %v659 = vpop.f32.mrb[0].mxu0
      %v660 = vadd.f32 0.0, %v659
      %v661 = vpop.f32.mrb[0].mxu0
      %v662 = vpop.f32.mrb[0].mxu0
      %v663 = vadd.f32 0.0, %v662
      %v664 = vpop.f32.mrb[0].mxu0
      %665 = vmatprep.mubr.bf16.mxu0 0
      %666 = vmatmul.mubr.bf16.gmra.mrb[0].mxu0 %v494
      %v667 = vpop.f32.mrb[0].mxu0
      %v668 = vadd.f32 0.0, %v667
      %v669 = vpop.f32.mrb[0].mxu0
      %v670 = vpop.f32.mrb[0].mxu0
      %v671 = vadd.f32 0.0, %v670
      %v672 = vpop.f32.mrb[0].mxu0
      %673 = vmatprep.mubr.bf16.mxu0 0
      %674 = vmatmul.mubr.bf16.gmra.mrb[0].mxu0 %v497
      %v675 = vpop.f32.mrb[0].mxu0
      %v676 = vadd.f32 0.0, %v675
      %v677 = vpop.f32.mrb[0].mxu0
      %v678 = vpop.f32.mrb[0].mxu0
      %v679 = vadd.f32 0.0, %v678
      %v680 = vpop.f32.mrb[0].mxu0
      %681 = vmatprep.mubr.bf16.mxu0 0
      %682 = vmatmul.mubr.bf16.gmra.mrb[0].mxu0 %v500
      %v683 = vpop.f32.mrb[0].mxu0
      %v684 = vadd.f32 0.0, %v683
      %v685 = vpop.f32.mrb[0].mxu0
      %v686 = vpop.f32.mrb[0].mxu0
      %v687 = vadd.f32 0.0, %v686
      %v688 = vpop.f32.mrb[0].mxu0
      %689 = vmatprep.mubr.bf16.mxu0 0
      %690 = vmatmul.mubr.bf16.gmra.mrb[0].mxu0 %v503
      %v691 = vpop.f32.mrb[0].mxu0
      %v692 = vadd.f32 0.0, %v691
      %v693 = vpop.f32.mrb[0].mxu0
      %v694 = vpop.f32.mrb[0].mxu0
      %v695 = vadd.f32 0.0, %v694
      %v696 = vpop.f32.mrb[0].mxu0
      %697 = vmatprep.mubr.bf16.mxu0 0
      %698 = vmatmul.mubr.bf16.gmra.mrb[0].mxu0 %v506
      %v699 = vpop.f32.mrb[0].mxu0
      %v700 = vadd.f32 0.0, %v699
      %v701 = vpop.f32.mrb[0].mxu0
      %v702 = vpop.f32.mrb[0].mxu0
      %v703 = vadd.f32 0.0, %v702
      %v704 = vpop.f32.mrb[0].mxu0
      %705 = vmatprep.mubr.bf16.mxu0 0
      %706 = vmatmul.mubr.bf16.gmra.mrb[0].mxu0 %v509
      %v707 = vpop.f32.mrb[0].mxu0
      %v708 = vadd.f32 0.0, %v707
      %v709 = vpop.f32.mrb[0].mxu0
      %v710 = vpop.f32.mrb[0].mxu0
      %v711 = vadd.f32 0.0, %v710
      %v712 = vpop.f32.mrb[0].mxu0
      %713 = vmatprep.mubr.bf16.mxu0 0
      %714 = vmatmul.mubr.bf16.gmra.mrb[0].mxu0 %v512
      %v715 = vpop.f32.mrb[0].mxu0
      %v716 = vadd.f32 0.0, %v715
      %v717 = vpop.f32.mrb[0].mxu0
      %v718 = vpop.f32.mrb[0].mxu0
      %v719 = vadd.f32 0.0, %v718
      %v720 = vpop.f32.mrb[0].mxu0
      %721 = vmatprep.mubr.bf16.mxu0 0
      %722 = vmatmul.mubr.bf16.gmra.mrb[0].mxu0 %v515
      %v723 = vpop.f32.mrb[0].mxu0
      %v724 = vadd.f32 0.0, %v723
      %v725 = vpop.f32.mrb[0].mxu0
      %v726 = vpop.f32.mrb[0].mxu0
      %v727 = vadd.f32 0.0, %v726
      %v728 = vpop.f32.mrb[0].mxu0
      %729 = vmatprep.mubr.bf16.mxu0 0
      %730 = vmatmul.mubr.bf16.gmra.mrb[0].mxu0 %v518
      %v731 = vpop.f32.mrb[0].mxu0
      %v732 = vadd.f32 0.0, %v731
      %v733 = vpop.f32.mrb[0].mxu0
      %v734 = vpop.f32.mrb[0].mxu0
      %v735 = vadd.f32 0.0, %v734
      %v736 = vpop.f32.mrb[0].mxu0
      %737 = vmatprep.mubr.bf16.mxu0 0
      %738 = vmatmul.mubr.bf16.gmra.mrb[0].mxu0 %v521
      %v739 = vpop.f32.mrb[0].mxu0
      %v740 = vadd.f32 0.0, %v739
      %v741 = vpop.f32.mrb[0].mxu0
      %v742 = vpop.f32.mrb[0].mxu0
      %v743 = vadd.f32 0.0, %v742
      %v744 = vpop.f32.mrb[0].mxu0
      %745 = vmatprep.mubr.bf16.mxu0 0
      %746 = vmatmul.mubr.bf16.gmra.mrb[0].mxu0 %v524
      %v747 = vpop.f32.mrb[0].mxu0
      %v748 = vadd.f32 0.0, %v747
      %v749 = vpop.f32.mrb[0].mxu0
      %v750 = vpop.f32.mrb[0].mxu0
      %v751 = vadd.f32 0.0, %v750
      %v752 = vpop.f32.mrb[0].mxu0
      %753 = vmatprep.mubr.bf16.mxu0 0
      %754 = vmatmul.mubr.bf16.gmra.mrb[0].mxu0 %v527
      %v755 = vpop.f32.mrb[0].mxu0
      %v756 = vadd.f32 0.0, %v755
      %v757 = vpop.f32.mrb[0].mxu0
      %v758 = vpop.f32.mrb[0].mxu0
      %v759 = vadd.f32 0.0, %v758
      %v760 = vpop.f32.mrb[0].mxu0
      %761 = vmatprep.mubr.bf16.mxu0 0
      %762 = vmatmul.mubr.bf16.gmra.mrb[0].mxu0 %v530
      %v763 = vpop.f32.mrb[0].mxu0
      %v764 = vadd.f32 0.0, %v763
      %v765 = vpop.f32.mrb[0].mxu0
      %v766 = vpop.f32.mrb[0].mxu0
      %v767 = vadd.f32 0.0, %v766
      %v768 = vpop.f32.mrb[0].mxu0
      %769 = vmatprep.mubr.bf16.mxu0 0
      %770 = vmatmul.mubr.bf16.gmra.mrb[0].mxu0 %v533
      %v771 = vpop.f32.mrb[0].mxu0
      %v772 = vadd.f32 0.0, %v771
      %v773 = vpop.f32.mrb[0].mxu0
      %v774 = vpop.f32.mrb[0].mxu0
      %v775 = vadd.f32 0.0, %v774
      %v776 = vpop.f32.mrb[0].mxu0
      %777 = vmatprep.mubr.bf16.mxu0 0
      %778 = vmatmul.mubr.bf16.gmra.mrb[0].mxu0 %v536
      %v779 = vpop.f32.mrb[0].mxu0
      %v780 = vadd.f32 0.0, %v779
      %v781 = vpop.f32.mrb[0].mxu0
      %v782 = vpop.f32.mrb[0].mxu0
      %v783 = vadd.f32 0.0, %v782
      %v784 = vpop.f32.mrb[0].mxu0
      %785 = vmatprep.mubr.bf16.mxu0 0
      %786 = vmatmul.mubr.bf16.gmra.mrb[0].mxu0 %v539
      %v787 = vpop.f32.mrb[0].mxu0
      %v788 = vadd.f32 0.0, %v787
      %v789 = vpop.f32.mrb[0].mxu0
      %v790 = vpop.f32.mrb[0].mxu0
      %v791 = vadd.f32 0.0, %v790
      %v792 = vpop.f32.mrb[0].mxu0
      %793 = vmatprep.mubr.bf16.mxu0 0
      %794 = vmatmul.mubr.bf16.gmra.mrb[0].mxu0 %v542
      %v795 = vpop.f32.mrb[0].mxu0
      %v796 = vadd.f32 0.0, %v795
      %v797 = vpop.f32.mrb[0].mxu0
      %v798 = vpop.f32.mrb[0].mxu0
      %v799 = vadd.f32 0.0, %v798
      %v800 = vpop.f32.mrb[0].mxu0
      %801 = vmatprep.mubr.bf16.mxu0 0
      %802 = vmatmul.mubr.bf16.gmra.mrb[0].mxu0 %v545
      %v803 = vpop.f32.mrb[0].mxu0
      %v804 = vadd.f32 0.0, %v803
      %v805 = vpop.f32.mrb[0].mxu0
      %v806 = vpop.f32.mrb[0].mxu0
      %v807 = vadd.f32 0.0, %v806
      %v808 = vpop.f32.mrb[0].mxu0
      %809 = vmatprep.mubr.bf16.mxu0 0
      %810 = vmatmul.mubr.bf16.gmra.mrb[0].mxu0 %v548
      %v811 = vpop.f32.mrb[0].mxu0
      %v812 = vadd.f32 0.0, %v811
      %v813 = vpop.f32.mrb[0].mxu0
      %v814 = vpop.f32.mrb[0].mxu0
      %v815 = vadd.f32 0.0, %v814
      %v816 = vpop.f32.mrb[0].mxu0
      %817 = vmatprep.mubr.bf16.mxu0 0
      %818 = vmatmul.mubr.bf16.gmra.mrb[0].mxu0 %v551
      %v819 = vpop.f32.mrb[0].mxu0
      %v820 = vadd.f32 0.0, %v819
      %v821 = vpop.f32.mrb[0].mxu0
      %v822 = vpop.f32.mrb[0].mxu0
      %v823 = vadd.f32 0.0, %v822
      %v824 = vpop.f32.mrb[0].mxu0
      %825 = vmatprep.mubr.bf16.mxu0 0
      %826 = vmatmul.mubr.bf16.gmra.mrb[0].mxu0 %v554
      %v827 = vpop.f32.mrb[0].mxu0
      %v828 = vadd.f32 0.0, %v827
      %v829 = vpop.f32.mrb[0].mxu0
      %v830 = vpop.f32.mrb[0].mxu0
      %v831 = vadd.f32 0.0, %v830
      %v832 = vpop.f32.mrb[0].mxu0
      %833 = vmatprep.mubr.bf16.mxu0 0
      %834 = vmatmul.mubr.bf16.gmra.mrb[0].mxu0 %v557
      %v835 = vpop.f32.mrb[0].mxu0
      %v836 = vadd.f32 0.0, %v835
      %v837 = vpop.f32.mrb[0].mxu0
      %v838 = vpop.f32.mrb[0].mxu0
      %v839 = vadd.f32 0.0, %v838
      %v840 = vpop.f32.mrb[0].mxu0
      %841 = vmatprep.mubr.bf16.mxu0 0
      %842 = vmatmul.mubr.bf16.gmra.mrb[0].mxu0 %v560
      %v843 = vpop.f32.mrb[0].mxu0
      %v844 = vadd.f32 0.0, %v843
      %v845 = vpop.f32.mrb[0].mxu0
      %v846 = vpop.f32.mrb[0].mxu0
      %v847 = vadd.f32 0.0, %v846
      %v848 = vpop.f32.mrb[0].mxu0
      %849 = vmatprep.mubr.bf16.mxu0 0
      %850 = vmatmul.mubr.bf16.gmra.mrb[0].mxu0 %v563
      %v851 = vpop.f32.mrb[0].mxu0
      %v852 = vadd.f32 0.0, %v851
      %v853 = vpop.f32.mrb[0].mxu0
      %v854 = vpop.f32.mrb[0].mxu0
      %v855 = vadd.f32 0.0, %v854
      %v856 = vpop.f32.mrb[0].mxu0
      %857 = vdwg.mxu0
      %v858 = vadd.f32 %v397, %v604
      %v859 = vadd.f32 %v398, %v607
      %v860 = vadd.f32 %v399, %v612
      %v861 = vadd.f32 %v400, %v615
      %v862 = vadd.f32 %v401, %v620
      %v863 = vadd.f32 %v402, %v623
      %v864 = vadd.f32 %v403, %v628
      %v865 = vadd.f32 %v404, %v631
      %v866 = vadd.f32 %v405, %v636
      %v867 = vadd.f32 %v406, %v639
      %v868 = vadd.f32 %v407, %v644
      %v869 = vadd.f32 %v408, %v647
      %v870 = vadd.f32 %v409, %v652
      %v871 = vadd.f32 %v410, %v655
      %v872 = vadd.f32 %v411, %v660
      %v873 = vadd.f32 %v412, %v663
      %v874 = vadd.f32 %v413, %v668
      %v875 = vadd.f32 %v414, %v671
      %v876 = vadd.f32 %v415, %v676
      %v877 = vadd.f32 %v416, %v679
      %v878 = vadd.f32 %v417, %v684
      %v879 = vadd.f32 %v418, %v687
      %v880 = vadd.f32 %v419, %v692
      %v881 = vadd.f32 %v420, %v695
      %v882 = vadd.f32 %v421, %v700
      %v883 = vadd.f32 %v422, %v703
      %v884 = vadd.f32 %v423, %v708
      %v885 = vadd.f32 %v424, %v711
      %v886 = vadd.f32 %v425, %v716
      %v887 = vadd.f32 %v426, %v719
      %v888 = vadd.f32 %v427, %v724
      %v889 = vadd.f32 %v428, %v727
      %v890 = vadd.f32 %v429, %v732
      %v891 = vadd.f32 %v430, %v735
      %v892 = vadd.f32 %v431, %v740
      %v893 = vadd.f32 %v432, %v743
      %v894 = vadd.f32 %v433, %v748
      %v895 = vadd.f32 %v434, %v751
      %v896 = vadd.f32 %v435, %v756
      %v897 = vadd.f32 %v436, %v759
      %v898 = vadd.f32 %v437, %v764
      %v899 = vadd.f32 %v438, %v767
      %v900 = vadd.f32 %v439, %v772
      %v901 = vadd.f32 %v440, %v775
      %v902 = vadd.f32 %v441, %v780
      %v903 = vadd.f32 %v442, %v783
      %v904 = vadd.f32 %v443, %v788
      %v905 = vadd.f32 %v444, %v791
      %v906 = vadd.f32 %v445, %v796
      %v907 = vadd.f32 %v446, %v799
      %v908 = vadd.f32 %v447, %v804
      %v909 = vadd.f32 %v448, %v807
      %v910 = vadd.f32 %v449, %v812
      %v911 = vadd.f32 %v450, %v815
      %v912 = vadd.f32 %v451, %v820
      %v913 = vadd.f32 %v452, %v823
      %v914 = vadd.f32 %v453, %v828
      %v915 = vadd.f32 %v454, %v831
      %v916 = vadd.f32 %v455, %v836
      %v917 = vadd.f32 %v456, %v839
      %v918 = vadd.f32 %v457, %v844
      %v919 = vadd.f32 %v458, %v847
      %v920 = vadd.f32 %v459, %v852
      %v921 = vadd.f32 %v460, %v855
      %922 = vst [vmem:[#allocation2] sm:$0xff] %v858
      %923 = vst [vmem:[#allocation2 + $0x8] sm:$0xff] %v859
      %924 = vst [vmem:[#allocation2 + $0x10] sm:$0xff] %v860
      %925 = vst [vmem:[#allocation2 + $0x18] sm:$0xff] %v861
      %926 = vst [vmem:[#allocation2 + $0x20] sm:$0xff] %v862
      %927 = vst [vmem:[#allocation2 + $0x28] sm:$0xff] %v863
      %928 = vst [vmem:[#allocation2 + $0x30] sm:$0xff] %v864
      %929 = vst [vmem:[#allocation2 + $0x38] sm:$0xff] %v865
      %930 = vst [vmem:[#allocation2 + $0x40] sm:$0xff] %v866
      %931 = vst [vmem:[#allocation2 + $0x48] sm:$0xff] %v867
      %932 = vst [vmem:[#allocation2 + $0x50] sm:$0xff] %v868
      %933 = vst [vmem:[#allocation2 + $0x58] sm:$0xff] %v869
      %934 = vst [vmem:[#allocation2 + $0x60] sm:$0xff] %v870
      %935 = vst [vmem:[#allocation2 + $0x68] sm:$0xff] %v871
      %936 = vst [vmem:[#allocation2 + $0x70] sm:$0xff] %v872
      %937 = vst [vmem:[#allocation2 + $0x78] sm:$0xff] %v873
      %938 = vst [vmem:[#allocation2 + $0x80] sm:$0xff] %v874
      %939 = vst [vmem:[#allocation2 + $0x88] sm:$0xff] %v875
      %940 = vst [vmem:[#allocation2 + $0x90] sm:$0xff] %v876
      %941 = vst [vmem:[#allocation2 + $0x98] sm:$0xff] %v877
      %942 = vst [vmem:[#allocation2 + $0xa0] sm:$0xff] %v878
      %943 = vst [vmem:[#allocation2 + $0xa8] sm:$0xff] %v879
      %944 = vst [vmem:[#allocation2 + $0xb0] sm:$0xff] %v880
      %945 = vst [vmem:[#allocation2 + $0xb8] sm:$0xff] %v881
      %946 = vst [vmem:[#allocation2 + $0xc0] sm:$0xff] %v882
      %947 = vst [vmem:[#allocation2 + $0xc8] sm:$0xff] %v883
      %948 = vst [vmem:[#allocation2 + $0xd0] sm:$0xff] %v884
      %949 = vst [vmem:[#allocation2 + $0xd8] sm:$0xff] %v885
      %950 = vst [vmem:[#allocation2 + $0xe0] sm:$0xff] %v886
      %951 = vst [vmem:[#allocation2 + $0xe8] sm:$0xff] %v887
      %952 = vst [vmem:[#allocation2 + $0xf0] sm:$0xff] %v888
      %953 = vst [vmem:[#allocation2 + $0xf8] sm:$0xff] %v889
      %954 = vst [vmem:[#allocation2 + $0x100] sm:$0xff] %v890
      %955 = vst [vmem:[#allocation2 + $0x108] sm:$0xff] %v891
      %956 = vst [vmem:[#allocation2 + $0x110] sm:$0xff] %v892
      %957 = vst [vmem:[#allocation2 + $0x118] sm:$0xff] %v893
      %958 = vst [vmem:[#allocation2 + $0x120] sm:$0xff] %v894
      %959 = vst [vmem:[#allocation2 + $0x128] sm:$0xff] %v895
      %960 = vst [vmem:[#allocation2 + $0x130] sm:$0xff] %v896
      %961 = vst [vmem:[#allocation2 + $0x138] sm:$0xff] %v897
      %962 = vst [vmem:[#allocation2 + $0x140] sm:$0xff] %v898
      %963 = vst [vmem:[#allocation2 + $0x148] sm:$0xff] %v899
      %964 = vst [vmem:[#allocation2 + $0x150] sm:$0xff] %v900
      %965 = vst [vmem:[#allocation2 + $0x158] sm:$0xff] %v901
      %966 = vst [vmem:[#allocation2 + $0x160] sm:$0xff] %v902
      %967 = vst [vmem:[#allocation2 + $0x168] sm:$0xff] %v903
      %968 = vst [vmem:[#allocation2 + $0x170] sm:$0xff] %v904
      %969 = vst [vmem:[#allocation2 + $0x178] sm:$0xff] %v905
      %970 = vst [vmem:[#allocation2 + $0x180] sm:$0xff] %v906
      %971 = vst [vmem:[#allocation2 + $0x188] sm:$0xff] %v907
      %972 = vst [vmem:[#allocation2 + $0x190] sm:$0xff] %v908
      %973 = vst [vmem:[#allocation2 + $0x198] sm:$0xff] %v909
      %974 = vst [vmem:[#allocation2 + $0x1a0] sm:$0xff] %v910
      %975 = vst [vmem:[#allocation2 + $0x1a8] sm:$0xff] %v911
      %976 = vst [vmem:[#allocation2 + $0x1b0] sm:$0xff] %v912
      %977 = vst [vmem:[#allocation2 + $0x1b8] sm:$0xff] %v913
      %978 = vst [vmem:[#allocation2 + $0x1c0] sm:$0xff] %v914
      %979 = vst [vmem:[#allocation2 + $0x1c8] sm:$0xff] %v915
      %980 = vst [vmem:[#allocation2 + $0x1d0] sm:$0xff] %v916
      %981 = vst [vmem:[#allocation2 + $0x1d8] sm:$0xff] %v917
      %982 = vst [vmem:[#allocation2 + $0x1e0] sm:$0xff] %v918
      %983 = vst [vmem:[#allocation2 + $0x1e8] sm:$0xff] %v919
      %984 = vst [vmem:[#allocation2 + $0x1f0] sm:$0xff] %v920
      %985 = vst [vmem:[#allocation2 + $0x1f8] sm:$0xff] %v921
      %vm1066 = vcmask 1046528
      %v1067 = vrot.slane %v285, 1
      %v1068 = vrot.slane %v286, 1
      %v1069 = vsel %vm1066, %v1067, %v1068
      %v1070 = vrot.slane %v287, 1
      %v1071 = vsel %vm1066, %v1068, %v1070
      %v1072 = vrot.slane %v288, 1
      %v1073 = vsel %vm1066, %v1070, %v1072
      %v1074 = vrot.slane %v289, 1
      %v1075 = vsel %vm1066, %v1072, %v1074
      %v1076 = vrot.slane %v290, 1
      %v1077 = vrot.slane %v291, 1
      %v1078 = vsel %vm1066, %v1076, %v1077
      %v1079 = vrot.slane %v292, 1
      %v1080 = vsel %vm1066, %v1077, %v1079
      %v1081 = vrot.slane %v293, 1
      %v1082 = vsel %vm1066, %v1079, %v1081
      %v1083 = vrot.slane %v294, 1
      %v1084 = vsel %vm1066, %v1081, %v1083
      %v1085 = vrot.slane %v295, 1
      %v1086 = vrot.slane %v296, 1
      %v1087 = vsel %vm1066, %v1085, %v1086
      %v1088 = vrot.slane %v297, 1
      %v1089 = vsel %vm1066, %v1086, %v1088
      %v1090 = vrot.slane %v298, 1
      %v1091 = vsel %vm1066, %v1088, %v1090
      %v1092 = vrot.slane %v299, 1
      %v1093 = vsel %vm1066, %v1090, %v1092
      %v1094 = vrot.slane %v300, 1
      %v1095 = vrot.slane %v301, 1
      %v1096 = vsel %vm1066, %v1094, %v1095
      %v1097 = vrot.slane %v302, 1
      %v1098 = vsel %vm1066, %v1095, %v1097
      %v1099 = vrot.slane %v303, 1
      %v1100 = vsel %vm1066, %v1097, %v1099
      %v1101 = vrot.slane %v304, 1
      %v1102 = vsel %vm1066, %v1099, %v1101
      %v1103 = vrot.slane %v305, 1
      %v1104 = vrot.slane %v306, 1
      %v1105 = vsel %vm1066, %v1103, %v1104
      %v1106 = vrot.slane %v307, 1
      %v1107 = vsel %vm1066, %v1104, %v1106
      %v1108 = vrot.slane %v308, 1
      %v1109 = vsel %vm1066, %v1106, %v1108
      %v1110 = vrot.slane %v309, 1
      %v1111 = vsel %vm1066, %v1108, %v1110
      %v1112 = vrot.slane %v310, 1
      %v1113 = vrot.slane %v311, 1
      %v1114 = vsel %vm1066, %v1112, %v1113
      %v1115 = vrot.slane %v312, 1
      %v1116 = vsel %vm1066, %v1113, %v1115
      %v1117 = vrot.slane %v313, 1
      %v1118 = vsel %vm1066, %v1115, %v1117
      %v1119 = vrot.slane %v314, 1
      %v1120 = vsel %vm1066, %v1117, %v1119
      %v1121 = vrot.slane %v315, 1
      %v1122 = vrot.slane %v316, 1
      %v1123 = vsel %vm1066, %v1121, %v1122
      %v1124 = vrot.slane %v317, 1
      %v1125 = vsel %vm1066, %v1122, %v1124
      %v1126 = vrot.slane %v318, 1
      %v1127 = vsel %vm1066, %v1124, %v1126
      %v1128 = vrot.slane %v319, 1
      %v1129 = vsel %vm1066, %v1126, %v1128
      %v1130 = vrot.slane %v320, 1
      %v1131 = vrot.slane %v321, 1
      %v1132 = vsel %vm1066, %v1130, %v1131
      %v1133 = vrot.slane %v322, 1
      %v1134 = vsel %vm1066, %v1131, %v1133
      %v1135 = vrot.slane %v323, 1
      %v1136 = vsel %vm1066, %v1133, %v1135
      %v1137 = vrot.slane %v324, 1
      %v1138 = vsel %vm1066, %v1135, %v1137
      %v1139 = vrot.slane %v325, 1
      %v1140 = vrot.slane %v326, 1
      %v1141 = vsel %vm1066, %v1139, %v1140
      %v1142 = vrot.slane %v327, 1
      %v1143 = vsel %vm1066, %v1140, %v1142
      %v1144 = vrot.slane %v328, 1
      %v1145 = vsel %vm1066, %v1142, %v1144
      %v1146 = vrot.slane %v329, 1
      %v1147 = vsel %vm1066, %v1144, %v1146
      %v1148 = vrot.slane %v330, 1
      %v1149 = vrot.slane %v331, 1
      %v1150 = vsel %vm1066, %v1148, %v1149
      %v1151 = vrot.slane %v332, 1
      %v1152 = vsel %vm1066, %v1149, %v1151
      %v1153 = vrot.slane %v333, 1
      %v1154 = vsel %vm1066, %v1151, %v1153
      %v1155 = vrot.slane %v334, 1
      %v1156 = vsel %vm1066, %v1153, %v1155
      %v1157 = vrot.slane %v335, 1
      %v1158 = vrot.slane %v336, 1
      %v1159 = vsel %vm1066, %v1157, %v1158
      %v1160 = vrot.slane %v337, 1
      %v1161 = vsel %vm1066, %v1158, %v1160
      %v1162 = vrot.slane %v338, 1
      %v1163 = vsel %vm1066, %v1160, %v1162
      %v1164 = vrot.slane %v339, 1
      %v1165 = vsel %vm1066, %v1162, %v1164
      %v1166 = vrot.slane %v340, 1
      %v1167 = vrot.slane %v341, 1
      %v1168 = vsel %vm1066, %v1166, %v1167
      %v1169 = vrot.slane %v342, 1
      %v1170 = vsel %vm1066, %v1167, %v1169
      %v1171 = vrot.slane %v343, 1
      %v1172 = vsel %vm1066, %v1169, %v1171
      %v1173 = vrot.slane %v344, 1
      %v1174 = vsel %vm1066, %v1171, %v1173
      %v1175 = vrot.slane %v345, 1
      %v1176 = vrot.slane %v346, 1
      %v1177 = vsel %vm1066, %v1175, %v1176
      %v1178 = vrot.slane %v347, 1
      %v1179 = vsel %vm1066, %v1176, %v1178
      %v1180 = vrot.slane %v348, 1
      %v1181 = vsel %vm1066, %v1178, %v1180
      %v1182 = vrot.slane %v349, 1
      %v1183 = vsel %vm1066, %v1180, %v1182
      %v1184 = vrot.slane %v350, 1
      %v1185 = vrot.slane %v351, 1
      %v1186 = vsel %vm1066, %v1184, %v1185
      %v1187 = vrot.slane %v352, 1
      %v1188 = vsel %vm1066, %v1185, %v1187
      %v1189 = vrot.slane %v353, 1
      %v1190 = vsel %vm1066, %v1187, %v1189
      %v1191 = vrot.slane %v354, 1
      %v1192 = vsel %vm1066, %v1189, %v1191
      %v1193 = vrot.slane %v355, 1
      %v1194 = vrot.slane %v356, 1
      %v1195 = vsel %vm1066, %v1193, %v1194
      %v1196 = vrot.slane %v357, 1
      %v1197 = vsel %vm1066, %v1194, %v1196
      %v1198 = vrot.slane %v358, 1
      %v1199 = vsel %vm1066, %v1196, %v1198
      %v1200 = vrot.slane %v359, 1
      %v1201 = vsel %vm1066, %v1198, %v1200
      %v1202 = vrot.slane %v360, 1
      %v1203 = vrot.slane %v361, 1
      %v1204 = vsel %vm1066, %v1202, %v1203
      %v1205 = vrot.slane %v362, 1
      %v1206 = vsel %vm1066, %v1203, %v1205
      %v1207 = vrot.slane %v363, 1
      %v1208 = vsel %vm1066, %v1205, %v1207
      %v1209 = vrot.slane %v364, 1
      %v1210 = vsel %vm1066, %v1207, %v1209
      %v1275 = vpack.c.bf16 %v1071, %v1069
      %v1276 = vpack.c.bf16 %v1075, %v1073
      %v1277 = vpack.c.bf16 %v1080, %v1078
      %v1278 = vpack.c.bf16 %v1084, %v1082
      %v1279 = vpack.c.bf16 %v1089, %v1087
      %v1280 = vpack.c.bf16 %v1093, %v1091
      %v1281 = vpack.c.bf16 %v1098, %v1096
      %v1282 = vpack.c.bf16 %v1102, %v1100
      %v1283 = vpack.c.bf16 %v1107, %v1105
      %v1284 = vpack.c.bf16 %v1111, %v1109
      %v1285 = vpack.c.bf16 %v1116, %v1114
      %v1286 = vpack.c.bf16 %v1120, %v1118
      %v1287 = vpack.c.bf16 %v1125, %v1123
      %v1288 = vpack.c.bf16 %v1129, %v1127
      %v1289 = vpack.c.bf16 %v1134, %v1132
      %v1290 = vpack.c.bf16 %v1138, %v1136
      %v1291 = vpack.c.bf16 %v1143, %v1141
      %v1292 = vpack.c.bf16 %v1147, %v1145
      %v1293 = vpack.c.bf16 %v1152, %v1150
      %v1294 = vpack.c.bf16 %v1156, %v1154
      %v1295 = vpack.c.bf16 %v1161, %v1159
      %v1296 = vpack.c.bf16 %v1165, %v1163
      %v1297 = vpack.c.bf16 %v1170, %v1168
      %v1298 = vpack.c.bf16 %v1174, %v1172
      %v1299 = vpack.c.bf16 %v1179, %v1177
      %v1300 = vpack.c.bf16 %v1183, %v1181
      %v1301 = vpack.c.bf16 %v1188, %v1186
      %v1302 = vpack.c.bf16 %v1192, %v1190
      %v1303 = vpack.c.bf16 %v1197, %v1195
      %v1304 = vpack.c.bf16 %v1201, %v1199
      %v1305 = vpack.c.bf16 %v1206, %v1204
      %v1306 = vpack.c.bf16 %v1210, %v1208
      %v1307 = vld [vmem:[#allocation2] sm:$0xff]
      %v1308 = vld [vmem:[#allocation2 + $0x8] sm:$0xff]
      %v1309 = vld [vmem:[#allocation2 + $0x10] sm:$0xff]
      %v1310 = vld [vmem:[#allocation2 + $0x18] sm:$0xff]
      %v1311 = vld [vmem:[#allocation2 + $0x20] sm:$0xff]
      %v1312 = vld [vmem:[#allocation2 + $0x28] sm:$0xff]
      %v1313 = vld [vmem:[#allocation2 + $0x30] sm:$0xff]
      %v1314 = vld [vmem:[#allocation2 + $0x38] sm:$0xff]
      %v1315 = vld [vmem:[#allocation2 + $0x40] sm:$0xff]
      %v1316 = vld [vmem:[#allocation2 + $0x48] sm:$0xff]
      %v1317 = vld [vmem:[#allocation2 + $0x50] sm:$0xff]
      %v1318 = vld [vmem:[#allocation2 + $0x58] sm:$0xff]
      %v1319 = vld [vmem:[#allocation2 + $0x60] sm:$0xff]
      %v1320 = vld [vmem:[#allocation2 + $0x68] sm:$0xff]
      %v1321 = vld [vmem:[#allocation2 + $0x70] sm:$0xff]
      %v1322 = vld [vmem:[#allocation2 + $0x78] sm:$0xff]
      %v1323 = vld [vmem:[#allocation2 + $0x80] sm:$0xff]
      %v1324 = vld [vmem:[#allocation2 + $0x88] sm:$0xff]
      %v1325 = vld [vmem:[#allocation2 + $0x90] sm:$0xff]
      %v1326 = vld [vmem:[#allocation2 + $0x98] sm:$0xff]
      %v1327 = vld [vmem:[#allocation2 + $0xa0] sm:$0xff]
      %v1328 = vld [vmem:[#allocation2 + $0xa8] sm:$0xff]
      %v1329 = vld [vmem:[#allocation2 + $0xb0] sm:$0xff]
      %v1330 = vld [vmem:[#allocation2 + $0xb8] sm:$0xff]
      %v1331 = vld [vmem:[#allocation2 + $0xc0] sm:$0xff]
      %v1332 = vld [vmem:[#allocation2 + $0xc8] sm:$0xff]
      %v1333 = vld [vmem:[#allocation2 + $0xd0] sm:$0xff]
      %v1334 = vld [vmem:[#allocation2 + $0xd8] sm:$0xff]
      %v1335 = vld [vmem:[#allocation2 + $0xe0] sm:$0xff]
      %v1336 = vld [vmem:[#allocation2 + $0xe8] sm:$0xff]
      %v1337 = vld [vmem:[#allocation2 + $0xf0] sm:$0xff]
      %v1338 = vld [vmem:[#allocation2 + $0xf8] sm:$0xff]
      %v1339 = vld [vmem:[#allocation2 + $0x100] sm:$0xff]
      %v1340 = vld [vmem:[#allocation2 + $0x108] sm:$0xff]
      %v1341 = vld [vmem:[#allocation2 + $0x110] sm:$0xff]
      %v1342 = vld [vmem:[#allocation2 + $0x118] sm:$0xff]
      %v1343 = vld [vmem:[#allocation2 + $0x120] sm:$0xff]
      %v1344 = vld [vmem:[#allocation2 + $0x128] sm:$0xff]
      %v1345 = vld [vmem:[#allocation2 + $0x130] sm:$0xff]
      %v1346 = vld [vmem:[#allocation2 + $0x138] sm:$0xff]
      %v1347 = vld [vmem:[#allocation2 + $0x140] sm:$0xff]
      %v1348 = vld [vmem:[#allocation2 + $0x148] sm:$0xff]
      %v1349 = vld [vmem:[#allocation2 + $0x150] sm:$0xff]
      %v1350 = vld [vmem:[#allocation2 + $0x158] sm:$0xff]
      %v1351 = vld [vmem:[#allocation2 + $0x160] sm:$0xff]
      %v1352 = vld [vmem:[#allocation2 + $0x168] sm:$0xff]
      %v1353 = vld [vmem:[#allocation2 + $0x170] sm:$0xff]
      %v1354 = vld [vmem:[#allocation2 + $0x178] sm:$0xff]
      %v1355 = vld [vmem:[#allocation2 + $0x180] sm:$0xff]
      %v1356 = vld [vmem:[#allocation2 + $0x188] sm:$0xff]
      %v1357 = vld [vmem:[#allocation2 + $0x190] sm:$0xff]
      %v1358 = vld [vmem:[#allocation2 + $0x198] sm:$0xff]
      %v1359 = vld [vmem:[#allocation2 + $0x1a0] sm:$0xff]
      %v1360 = vld [vmem:[#allocation2 + $0x1a8] sm:$0xff]
      %v1361 = vld [vmem:[#allocation2 + $0x1b0] sm:$0xff]
      %v1362 = vld [vmem:[#allocation2 + $0x1b8] sm:$0xff]
      %v1363 = vld [vmem:[#allocation2 + $0x1c0] sm:$0xff]
      %v1364 = vld [vmem:[#allocation2 + $0x1c8] sm:$0xff]
      %v1365 = vld [vmem:[#allocation2 + $0x1d0] sm:$0xff]
      %v1366 = vld [vmem:[#allocation2 + $0x1d8] sm:$0xff]
      %v1367 = vld [vmem:[#allocation2 + $0x1e0] sm:$0xff]
      %v1368 = vld [vmem:[#allocation2 + $0x1e8] sm:$0xff]
      %v1369 = vld [vmem:[#allocation2 + $0x1f0] sm:$0xff]
      %v1370 = vld [vmem:[#allocation2 + $0x1f8] sm:$0xff]
      %s1371 = scalar_lea.vmem %s1, 8
      %v1372 = vld [vmem:[%s1371] sm:$0xf]
      %v1373 = vld [vmem:[%s1371 + $0x4] sm:$0x3]
      %v1376 = vunpack.c.l.b16 %v1372
      %v1377 = vunpack.c.l.b16 %v1373
      %v1378 = vpack.c.b16 %v1377, %v1376
      %v1380 = vsel %vm468, %v1275, 0
      %v1383 = vsel %vm468, %v1276, 0
      %v1386 = vsel %vm468, %v1277, 0
      %v1389 = vsel %vm468, %v1278, 0
      %v1392 = vsel %vm468, %v1279, 0
      %v1395 = vsel %vm468, %v1280, 0
      %v1398 = vsel %vm468, %v1281, 0
      %v1401 = vsel %vm468, %v1282, 0
      %v1404 = vsel %vm468, %v1283, 0
      %v1407 = vsel %vm468, %v1284, 0
      %v1410 = vsel %vm468, %v1285, 0
      %v1413 = vsel %vm468, %v1286, 0
      %v1416 = vsel %vm468, %v1287, 0
      %v1419 = vsel %vm468, %v1288, 0
      %v1422 = vsel %vm468, %v1289, 0
      %v1425 = vsel %vm468, %v1290, 0
      %v1428 = vsel %vm468, %v1291, 0
      %v1431 = vsel %vm468, %v1292, 0
      %v1434 = vsel %vm468, %v1293, 0
      %v1437 = vsel %vm468, %v1294, 0
      %v1440 = vsel %vm468, %v1295, 0
      %v1443 = vsel %vm468, %v1296, 0
      %v1446 = vsel %vm468, %v1297, 0
      %v1449 = vsel %vm468, %v1298, 0
      %v1452 = vsel %vm468, %v1299, 0
      %v1455 = vsel %vm468, %v1300, 0
      %v1458 = vsel %vm468, %v1301, 0
      %v1461 = vsel %vm468, %v1302, 0
      %v1464 = vsel %vm468, %v1303, 0
      %v1467 = vsel %vm468, %v1304, 0
      %v1470 = vsel %vm468, %v1305, 0
      %v1473 = vsel %vm468, %v1306, 0
      %v1476 = vsel %vm565, %v1378, 0
      %1478 = vmatprep.subr.bf16.mxu0 0
      %1479 = vmatpush1.bf16.msra.mxu0 %v1476
      %1480 = vmatprep.subr.bf16.mxu0 0
      %1481 = vmatpush1.bf16.msra.mxu0 0
      %1482 = vmatprep.subr.bf16.mxu0 0
      %1483 = vmatpush1.bf16.msra.mxu0 0
      %1484 = vmatprep.subr.bf16.mxu0 0
      %1485 = vmatpush1.bf16.msra.mxu0 0
      %1486 = vmatprep.subr.bf16.mxu0 0
      %1487 = vmatpush1.bf16.msra.mxu0 0
      %1488 = vmatprep.subr.bf16.mxu0 0
      %1489 = vmatpush1.bf16.msra.mxu0 0
      %1490 = vmatprep.subr.bf16.mxu0 0
      %1491 = vmatpush1.bf16.msra.mxu0 0
      %1492 = vmatprep.subr.bf16.mxu0 0
      %1493 = vmatpush1.bf16.msra.mxu0 0
      %1494 = vmatprep.subr.bf16.mxu0 0
      %1495 = vmatpush1.bf16.msra.mxu0 0
      %1496 = vmatprep.subr.bf16.mxu0 0
      %1497 = vmatpush1.bf16.msra.mxu0 0
      %1498 = vmatprep.subr.bf16.mxu0 0
      %1499 = vmatpush1.bf16.msra.mxu0 0
      %1500 = vmatprep.subr.bf16.mxu0 0
      %1501 = vmatpush1.bf16.msra.mxu0 0
      %1502 = vmatprep.subr.bf16.mxu0 0
      %1503 = vmatpush1.bf16.msra.mxu0 0
      %1504 = vmatprep.subr.bf16.mxu0 0
      %1505 = vmatpush1.bf16.msra.mxu0 0
      %1506 = vmatprep.subr.bf16.mxu0 0
      %1507 = vmatpush1.bf16.msra.mxu0 0
      %1508 = vmatprep.subr.bf16.mxu0 0
      %1509 = vmatpush1.bf16.msra.mxu0 0
      %1510 = vmatprep.mubr.bf16.mxu0 0
      %1511 = vmatmul.mubr.bf16.gmra.mrb[0].mxu0 %v1380
      %v1512 = vpop.f32.mrb[0].mxu0
      %v1513 = vadd.f32 0.0, %v1512
      %v1514 = vpop.f32.mrb[0].mxu0
      %v1515 = vpop.f32.mrb[0].mxu0
      %v1516 = vadd.f32 0.0, %v1515
      %v1517 = vpop.f32.mrb[0].mxu0
      %1518 = vmatprep.mubr.bf16.mxu0 0
      %1519 = vmatmul.mubr.bf16.gmra.mrb[0].mxu0 %v1383
      %v1520 = vpop.f32.mrb[0].mxu0
      %v1521 = vadd.f32 0.0, %v1520
      %v1522 = vpop.f32.mrb[0].mxu0
      %v1523 = vpop.f32.mrb[0].mxu0
      %v1524 = vadd.f32 0.0, %v1523
      %v1525 = vpop.f32.mrb[0].mxu0
      %1526 = vmatprep.mubr.bf16.mxu0 0
      %1527 = vmatmul.mubr.bf16.gmra.mrb[0].mxu0 %v1386
      %v1528 = vpop.f32.mrb[0].mxu0
      %v1529 = vadd.f32 0.0, %v1528
      %v1530 = vpop.f32.mrb[0].mxu0
      %v1531 = vpop.f32.mrb[0].mxu0
      %v1532 = vadd.f32 0.0, %v1531
      %v1533 = vpop.f32.mrb[0].mxu0
      %1534 = vmatprep.mubr.bf16.mxu0 0
      %1535 = vmatmul.mubr.bf16.gmra.mrb[0].mxu0 %v1389
      %v1536 = vpop.f32.mrb[0].mxu0
      %v1537 = vadd.f32 0.0, %v1536
      %v1538 = vpop.f32.mrb[0].mxu0
      %v1539 = vpop.f32.mrb[0].mxu0
      %v1540 = vadd.f32 0.0, %v1539
      %v1541 = vpop.f32.mrb[0].mxu0
      %1542 = vmatprep.mubr.bf16.mxu0 0
      %1543 = vmatmul.mubr.bf16.gmra.mrb[0].mxu0 %v1392
      %v1544 = vpop.f32.mrb[0].mxu0
      %v1545 = vadd.f32 0.0, %v1544
      %v1546 = vpop.f32.mrb[0].mxu0
      %v1547 = vpop.f32.mrb[0].mxu0
      %v1548 = vadd.f32 0.0, %v1547
      %v1549 = vpop.f32.mrb[0].mxu0
      %1550 = vmatprep.mubr.bf16.mxu0 0
      %1551 = vmatmul.mubr.bf16.gmra.mrb[0].mxu0 %v1395
      %v1552 = vpop.f32.mrb[0].mxu0
      %v1553 = vadd.f32 0.0, %v1552
      %v1554 = vpop.f32.mrb[0].mxu0
      %v1555 = vpop.f32.mrb[0].mxu0
      %v1556 = vadd.f32 0.0, %v1555
      %v1557 = vpop.f32.mrb[0].mxu0
      %1558 = vmatprep.mubr.bf16.mxu0 0
      %1559 = vmatmul.mubr.bf16.gmra.mrb[0].mxu0 %v1398
      %v1560 = vpop.f32.mrb[0].mxu0
      %v1561 = vadd.f32 0.0, %v1560
      %v1562 = vpop.f32.mrb[0].mxu0
      %v1563 = vpop.f32.mrb[0].mxu0
      %v1564 = vadd.f32 0.0, %v1563
      %v1565 = vpop.f32.mrb[0].mxu0
      %1566 = vmatprep.mubr.bf16.mxu0 0
      %1567 = vmatmul.mubr.bf16.gmra.mrb[0].mxu0 %v1401
      %v1568 = vpop.f32.mrb[0].mxu0
      %v1569 = vadd.f32 0.0, %v1568
      %v1570 = vpop.f32.mrb[0].mxu0
      %v1571 = vpop.f32.mrb[0].mxu0
      %v1572 = vadd.f32 0.0, %v1571
      %v1573 = vpop.f32.mrb[0].mxu0
      %1574 = vmatprep.mubr.bf16.mxu0 0
      %1575 = vmatmul.mubr.bf16.gmra.mrb[0].mxu0 %v1404
      %v1576 = vpop.f32.mrb[0].mxu0
      %v1577 = vadd.f32 0.0, %v1576
      %v1578 = vpop.f32.mrb[0].mxu0
      %v1579 = vpop.f32.mrb[0].mxu0
      %v1580 = vadd.f32 0.0, %v1579
      %v1581 = vpop.f32.mrb[0].mxu0
      %1582 = vmatprep.mubr.bf16.mxu0 0
      %1583 = vmatmul.mubr.bf16.gmra.mrb[0].mxu0 %v1407
      %v1584 = vpop.f32.mrb[0].mxu0
      %v1585 = vadd.f32 0.0, %v1584
      %v1586 = vpop.f32.mrb[0].mxu0
      %v1587 = vpop.f32.mrb[0].mxu0
      %v1588 = vadd.f32 0.0, %v1587
      %v1589 = vpop.f32.mrb[0].mxu0
      %1590 = vmatprep.mubr.bf16.mxu0 0
      %1591 = vmatmul.mubr.bf16.gmra.mrb[0].mxu0 %v1410
      %v1592 = vpop.f32.mrb[0].mxu0
      %v1593 = vadd.f32 0.0, %v1592
      %v1594 = vpop.f32.mrb[0].mxu0
      %v1595 = vpop.f32.mrb[0].mxu0
      %v1596 = vadd.f32 0.0, %v1595
      %v1597 = vpop.f32.mrb[0].mxu0
      %1598 = vmatprep.mubr.bf16.mxu0 0
      %1599 = vmatmul.mubr.bf16.gmra.mrb[0].mxu0 %v1413
      %v1600 = vpop.f32.mrb[0].mxu0
      %v1601 = vadd.f32 0.0, %v1600
      %v1602 = vpop.f32.mrb[0].mxu0
      %v1603 = vpop.f32.mrb[0].mxu0
      %v1604 = vadd.f32 0.0, %v1603
      %v1605 = vpop.f32.mrb[0].mxu0
      %1606 = vmatprep.mubr.bf16.mxu0 0
      %1607 = vmatmul.mubr.bf16.gmra.mrb[0].mxu0 %v1416
      %v1608 = vpop.f32.mrb[0].mxu0
      %v1609 = vadd.f32 0.0, %v1608
      %v1610 = vpop.f32.mrb[0].mxu0
      %v1611 = vpop.f32.mrb[0].mxu0
      %v1612 = vadd.f32 0.0, %v1611
      %v1613 = vpop.f32.mrb[0].mxu0
      %1614 = vmatprep.mubr.bf16.mxu0 0
      %1615 = vmatmul.mubr.bf16.gmra.mrb[0].mxu0 %v1419
      %v1616 = vpop.f32.mrb[0].mxu0
      %v1617 = vadd.f32 0.0, %v1616
      %v1618 = vpop.f32.mrb[0].mxu0
      %v1619 = vpop.f32.mrb[0].mxu0
      %v1620 = vadd.f32 0.0, %v1619
      %v1621 = vpop.f32.mrb[0].mxu0
      %1622 = vmatprep.mubr.bf16.mxu0 0
      %1623 = vmatmul.mubr.bf16.gmra.mrb[0].mxu0 %v1422
      %v1624 = vpop.f32.mrb[0].mxu0
      %v1625 = vadd.f32 0.0, %v1624
      %v1626 = vpop.f32.mrb[0].mxu0
      %v1627 = vpop.f32.mrb[0].mxu0
      %v1628 = vadd.f32 0.0, %v1627
      %v1629 = vpop.f32.mrb[0].mxu0
      %1630 = vmatprep.mubr.bf16.mxu0 0
      %1631 = vmatmul.mubr.bf16.gmra.mrb[0].mxu0 %v1425
      %v1632 = vpop.f32.mrb[0].mxu0
      %v1633 = vadd.f32 0.0, %v1632
      %v1634 = vpop.f32.mrb[0].mxu0
      %v1635 = vpop.f32.mrb[0].mxu0
      %v1636 = vadd.f32 0.0, %v1635
      %v1637 = vpop.f32.mrb[0].mxu0
      %1638 = vmatprep.mubr.bf16.mxu0 0
      %1639 = vmatmul.mubr.bf16.gmra.mrb[0].mxu0 %v1428
      %v1640 = vpop.f32.mrb[0].mxu0
      %v1641 = vadd.f32 0.0, %v1640
      %v1642 = vpop.f32.mrb[0].mxu0
      %v1643 = vpop.f32.mrb[0].mxu0
      %v1644 = vadd.f32 0.0, %v1643
      %v1645 = vpop.f32.mrb[0].mxu0
      %1646 = vmatprep.mubr.bf16.mxu0 0
      %1647 = vmatmul.mubr.bf16.gmra.mrb[0].mxu0 %v1431
      %v1648 = vpop.f32.mrb[0].mxu0
      %v1649 = vadd.f32 0.0, %v1648
      %v1650 = vpop.f32.mrb[0].mxu0
      %v1651 = vpop.f32.mrb[0].mxu0
      %v1652 = vadd.f32 0.0, %v1651
      %v1653 = vpop.f32.mrb[0].mxu0
      %1654 = vmatprep.mubr.bf16.mxu0 0
      %1655 = vmatmul.mubr.bf16.gmra.mrb[0].mxu0 %v1434
      %v1656 = vpop.f32.mrb[0].mxu0
      %v1657 = vadd.f32 0.0, %v1656
      %v1658 = vpop.f32.mrb[0].mxu0
      %v1659 = vpop.f32.mrb[0].mxu0
      %v1660 = vadd.f32 0.0, %v1659
      %v1661 = vpop.f32.mrb[0].mxu0
      %1662 = vmatprep.mubr.bf16.mxu0 0
      %1663 = vmatmul.mubr.bf16.gmra.mrb[0].mxu0 %v1437
      %v1664 = vpop.f32.mrb[0].mxu0
      %v1665 = vadd.f32 0.0, %v1664
      %v1666 = vpop.f32.mrb[0].mxu0
      %v1667 = vpop.f32.mrb[0].mxu0
      %v1668 = vadd.f32 0.0, %v1667
      %v1669 = vpop.f32.mrb[0].mxu0
      %1670 = vmatprep.mubr.bf16.mxu0 0
      %1671 = vmatmul.mubr.bf16.gmra.mrb[0].mxu0 %v1440
      %v1672 = vpop.f32.mrb[0].mxu0
      %v1673 = vadd.f32 0.0, %v1672
      %v1674 = vpop.f32.mrb[0].mxu0
      %v1675 = vpop.f32.mrb[0].mxu0
      %v1676 = vadd.f32 0.0, %v1675
      %v1677 = vpop.f32.mrb[0].mxu0
      %1678 = vmatprep.mubr.bf16.mxu0 0
      %1679 = vmatmul.mubr.bf16.gmra.mrb[0].mxu0 %v1443
      %v1680 = vpop.f32.mrb[0].mxu0
      %v1681 = vadd.f32 0.0, %v1680
      %v1682 = vpop.f32.mrb[0].mxu0
      %v1683 = vpop.f32.mrb[0].mxu0
      %v1684 = vadd.f32 0.0, %v1683
      %v1685 = vpop.f32.mrb[0].mxu0
      %1686 = vmatprep.mubr.bf16.mxu0 0
      %1687 = vmatmul.mubr.bf16.gmra.mrb[0].mxu0 %v1446
      %v1688 = vpop.f32.mrb[0].mxu0
      %v1689 = vadd.f32 0.0, %v1688
      %v1690 = vpop.f32.mrb[0].mxu0
      %v1691 = vpop.f32.mrb[0].mxu0
      %v1692 = vadd.f32 0.0, %v1691
      %v1693 = vpop.f32.mrb[0].mxu0
      %1694 = vmatprep.mubr.bf16.mxu0 0
      %1695 = vmatmul.mubr.bf16.gmra.mrb[0].mxu0 %v1449
      %v1696 = vpop.f32.mrb[0].mxu0
      %v1697 = vadd.f32 0.0, %v1696
      %v1698 = vpop.f32.mrb[0].mxu0
      %v1699 = vpop.f32.mrb[0].mxu0
      %v1700 = vadd.f32 0.0, %v1699
      %v1701 = vpop.f32.mrb[0].mxu0
      %1702 = vmatprep.mubr.bf16.mxu0 0
      %1703 = vmatmul.mubr.bf16.gmra.mrb[0].mxu0 %v1452
      %v1704 = vpop.f32.mrb[0].mxu0
      %v1705 = vadd.f32 0.0, %v1704
      %v1706 = vpop.f32.mrb[0].mxu0
      %v1707 = vpop.f32.mrb[0].mxu0
      %v1708 = vadd.f32 0.0, %v1707
      %v1709 = vpop.f32.mrb[0].mxu0
      %1710 = vmatprep.mubr.bf16.mxu0 0
      %1711 = vmatmul.mubr.bf16.gmra.mrb[0].mxu0 %v1455
      %v1712 = vpop.f32.mrb[0].mxu0
      %v1713 = vadd.f32 0.0, %v1712
      %v1714 = vpop.f32.mrb[0].mxu0
      %v1715 = vpop.f32.mrb[0].mxu0
      %v1716 = vadd.f32 0.0, %v1715
      %v1717 = vpop.f32.mrb[0].mxu0
      %1718 = vmatprep.mubr.bf16.mxu0 0
      %1719 = vmatmul.mubr.bf16.gmra.mrb[0].mxu0 %v1458
      %v1720 = vpop.f32.mrb[0].mxu0
      %v1721 = vadd.f32 0.0, %v1720
      %v1722 = vpop.f32.mrb[0].mxu0
      %v1723 = vpop.f32.mrb[0].mxu0
      %v1724 = vadd.f32 0.0, %v1723
      %v1725 = vpop.f32.mrb[0].mxu0
      %1726 = vmatprep.mubr.bf16.mxu0 0
      %1727 = vmatmul.mubr.bf16.gmra.mrb[0].mxu0 %v1461
      %v1728 = vpop.f32.mrb[0].mxu0
      %v1729 = vadd.f32 0.0, %v1728
      %v1730 = vpop.f32.mrb[0].mxu0
      %v1731 = vpop.f32.mrb[0].mxu0
      %v1732 = vadd.f32 0.0, %v1731
      %v1733 = vpop.f32.mrb[0].mxu0
      %1734 = vmatprep.mubr.bf16.mxu0 0
      %1735 = vmatmul.mubr.bf16.gmra.mrb[0].mxu0 %v1464
      %v1736 = vpop.f32.mrb[0].mxu0
      %v1737 = vadd.f32 0.0, %v1736
      %v1738 = vpop.f32.mrb[0].mxu0
      %v1739 = vpop.f32.mrb[0].mxu0
      %v1740 = vadd.f32 0.0, %v1739
      %v1741 = vpop.f32.mrb[0].mxu0
      %1742 = vmatprep.mubr.bf16.mxu0 0
      %1743 = vmatmul.mubr.bf16.gmra.mrb[0].mxu0 %v1467
      %v1744 = vpop.f32.mrb[0].mxu0
      %v1745 = vadd.f32 0.0, %v1744
      %v1746 = vpop.f32.mrb[0].mxu0
      %v1747 = vpop.f32.mrb[0].mxu0
      %v1748 = vadd.f32 0.0, %v1747
      %v1749 = vpop.f32.mrb[0].mxu0
      %1750 = vmatprep.mubr.bf16.mxu0 0
      %1751 = vmatmul.mubr.bf16.gmra.mrb[0].mxu0 %v1470
      %v1752 = vpop.f32.mrb[0].mxu0
      %v1753 = vadd.f32 0.0, %v1752
      %v1754 = vpop.f32.mrb[0].mxu0
      %v1755 = vpop.f32.mrb[0].mxu0
      %v1756 = vadd.f32 0.0, %v1755
      %v1757 = vpop.f32.mrb[0].mxu0
      %1758 = vmatprep.mubr.bf16.mxu0 0
      %1759 = vmatmul.mubr.bf16.gmra.mrb[0].mxu0 %v1473
      %v1760 = vpop.f32.mrb[0].mxu0
      %v1761 = vadd.f32 0.0, %v1760
      %v1762 = vpop.f32.mrb[0].mxu0
      %v1763 = vpop.f32.mrb[0].mxu0
      %v1764 = vadd.f32 0.0, %v1763
      %v1765 = vpop.f32.mrb[0].mxu0
      %1766 = vdwg.mxu0
      %v1767 = vadd.f32 %v1307, %v1513
      %v1768 = vadd.f32 %v1308, %v1516
      %v1769 = vadd.f32 %v1309, %v1521
      %v1770 = vadd.f32 %v1310, %v1524
      %v1771 = vadd.f32 %v1311, %v1529
      %v1772 = vadd.f32 %v1312, %v1532
      %v1773 = vadd.f32 %v1313, %v1537
      %v1774 = vadd.f32 %v1314, %v1540
      %v1775 = vadd.f32 %v1315, %v1545
      %v1776 = vadd.f32 %v1316, %v1548
      %v1777 = vadd.f32 %v1317, %v1553
      %v1778 = vadd.f32 %v1318, %v1556
      %v1779 = vadd.f32 %v1319, %v1561
      %v1780 = vadd.f32 %v1320, %v1564
      %v1781 = vadd.f32 %v1321, %v1569
      %v1782 = vadd.f32 %v1322, %v1572
      %v1783 = vadd.f32 %v1323, %v1577
      %v1784 = vadd.f32 %v1324, %v1580
      %v1785 = vadd.f32 %v1325, %v1585
      %v1786 = vadd.f32 %v1326, %v1588
      %v1787 = vadd.f32 %v1327, %v1593
      %v1788 = vadd.f32 %v1328, %v1596
      %v1789 = vadd.f32 %v1329, %v1601
      %v1790 = vadd.f32 %v1330, %v1604
      %v1791 = vadd.f32 %v1331, %v1609
      %v1792 = vadd.f32 %v1332, %v1612
      %v1793 = vadd.f32 %v1333, %v1617
      %v1794 = vadd.f32 %v1334, %v1620
      %v1795 = vadd.f32 %v1335, %v1625
      %v1796 = vadd.f32 %v1336, %v1628
      %v1797 = vadd.f32 %v1337, %v1633
      %v1798 = vadd.f32 %v1338, %v1636
      %v1799 = vadd.f32 %v1339, %v1641
      %v1800 = vadd.f32 %v1340, %v1644
      %v1801 = vadd.f32 %v1341, %v1649
      %v1802 = vadd.f32 %v1342, %v1652
      %v1803 = vadd.f32 %v1343, %v1657
      %v1804 = vadd.f32 %v1344, %v1660
      %v1805 = vadd.f32 %v1345, %v1665
      %v1806 = vadd.f32 %v1346, %v1668
      %v1807 = vadd.f32 %v1347, %v1673
      %v1808 = vadd.f32 %v1348, %v1676
      %v1809 = vadd.f32 %v1349, %v1681
      %v1810 = vadd.f32 %v1350, %v1684
      %v1811 = vadd.f32 %v1351, %v1689
      %v1812 = vadd.f32 %v1352, %v1692
      %v1813 = vadd.f32 %v1353, %v1697
      %v1814 = vadd.f32 %v1354, %v1700
      %v1815 = vadd.f32 %v1355, %v1705
      %v1816 = vadd.f32 %v1356, %v1708
      %v1817 = vadd.f32 %v1357, %v1713
      %v1818 = vadd.f32 %v1358, %v1716
      %v1819 = vadd.f32 %v1359, %v1721
      %v1820 = vadd.f32 %v1360, %v1724
      %v1821 = vadd.f32 %v1361, %v1729
      %v1822 = vadd.f32 %v1362, %v1732
      %v1823 = vadd.f32 %v1363, %v1737
      %v1824 = vadd.f32 %v1364, %v1740
      %v1825 = vadd.f32 %v1365, %v1745
      %v1826 = vadd.f32 %v1366, %v1748
      %v1827 = vadd.f32 %v1367, %v1753
      %v1828 = vadd.f32 %v1368, %v1756
      %v1829 = vadd.f32 %v1369, %v1761
      %v1830 = vadd.f32 %v1370, %v1764
      %1831 = vst [vmem:[#allocation2] sm:$0xff] %v1767
      %1832 = vst [vmem:[#allocation2 + $0x8] sm:$0xff] %v1768
      %1833 = vst [vmem:[#allocation2 + $0x10] sm:$0xff] %v1769
      %1834 = vst [vmem:[#allocation2 + $0x18] sm:$0xff] %v1770
      %1835 = vst [vmem:[#allocation2 + $0x20] sm:$0xff] %v1771
      %1836 = vst [vmem:[#allocation2 + $0x28] sm:$0xff] %v1772
      %1837 = vst [vmem:[#allocation2 + $0x30] sm:$0xff] %v1773
      %1838 = vst [vmem:[#allocation2 + $0x38] sm:$0xff] %v1774
      %1839 = vst [vmem:[#allocation2 + $0x40] sm:$0xff] %v1775
      %1840 = vst [vmem:[#allocation2 + $0x48] sm:$0xff] %v1776
      %1841 = vst [vmem:[#allocation2 + $0x50] sm:$0xff] %v1777
      %1842 = vst [vmem:[#allocation2 + $0x58] sm:$0xff] %v1778
      %1843 = vst [vmem:[#allocation2 + $0x60] sm:$0xff] %v1779
      %1844 = vst [vmem:[#allocation2 + $0x68] sm:$0xff] %v1780
      %1845 = vst [vmem:[#allocation2 + $0x70] sm:$0xff] %v1781
      %1846 = vst [vmem:[#allocation2 + $0x78] sm:$0xff] %v1782
      %1847 = vst [vmem:[#allocation2 + $0x80] sm:$0xff] %v1783
      %1848 = vst [vmem:[#allocation2 + $0x88] sm:$0xff] %v1784
      %1849 = vst [vmem:[#allocation2 + $0x90] sm:$0xff] %v1785
      %1850 = vst [vmem:[#allocation2 + $0x98] sm:$0xff] %v1786
      %1851 = vst [vmem:[#allocation2 + $0xa0] sm:$0xff] %v1787
      %1852 = vst [vmem:[#allocation2 + $0xa8] sm:$0xff] %v1788
      %1853 = vst [vmem:[#allocation2 + $0xb0] sm:$0xff] %v1789
      %1854 = vst [vmem:[#allocation2 + $0xb8] sm:$0xff] %v1790
      %1855 = vst [vmem:[#allocation2 + $0xc0] sm:$0xff] %v1791
      %1856 = vst [vmem:[#allocation2 + $0xc8] sm:$0xff] %v1792
      %1857 = vst [vmem:[#allocation2 + $0xd0] sm:$0xff] %v1793
      %1858 = vst [vmem:[#allocation2 + $0xd8] sm:$0xff] %v1794
      %1859 = vst [vmem:[#allocation2 + $0xe0] sm:$0xff] %v1795
      %1860 = vst [vmem:[#allocation2 + $0xe8] sm:$0xff] %v1796
      %1861 = vst [vmem:[#allocation2 + $0xf0] sm:$0xff] %v1797
      %1862 = vst [vmem:[#allocation2 + $0xf8] sm:$0xff] %v1798
      %1863 = vst [vmem:[#allocation2 + $0x100] sm:$0xff] %v1799
      %1864 = vst [vmem:[#allocation2 + $0x108] sm:$0xff] %v1800
      %1865 = vst [vmem:[#allocation2 + $0x110] sm:$0xff] %v1801
      %1866 = vst [vmem:[#allocation2 + $0x118] sm:$0xff] %v1802
      %1867 = vst [vmem:[#allocation2 + $0x120] sm:$0xff] %v1803
      %1868 = vst [vmem:[#allocation2 + $0x128] sm:$0xff] %v1804
      %1869 = vst [vmem:[#allocation2 + $0x130] sm:$0xff] %v1805
      %1870 = vst [vmem:[#allocation2 + $0x138] sm:$0xff] %v1806
      %1871 = vst [vmem:[#allocation2 + $0x140] sm:$0xff] %v1807
      %1872 = vst [vmem:[#allocation2 + $0x148] sm:$0xff] %v1808
      %1873 = vst [vmem:[#allocation2 + $0x150] sm:$0xff] %v1809
      %1874 = vst [vmem:[#allocation2 + $0x158] sm:$0xff] %v1810
      %1875 = vst [vmem:[#allocation2 + $0x160] sm:$0xff] %v1811
      %1876 = vst [vmem:[#allocation2 + $0x168] sm:$0xff] %v1812
      %1877 = vst [vmem:[#allocation2 + $0x170] sm:$0xff] %v1813
      %1878 = vst [vmem:[#allocation2 + $0x178] sm:$0xff] %v1814
      %1879 = vst [vmem:[#allocation2 + $0x180] sm:$0xff] %v1815
      %1880 = vst [vmem:[#allocation2 + $0x188] sm:$0xff] %v1816
      %1881 = vst [vmem:[#allocation2 + $0x190] sm:$0xff] %v1817
      %1882 = vst [vmem:[#allocation2 + $0x198] sm:$0xff] %v1818
      %1883 = vst [vmem:[#allocation2 + $0x1a0] sm:$0xff] %v1819
      %1884 = vst [vmem:[#allocation2 + $0x1a8] sm:$0xff] %v1820
      %1885 = vst [vmem:[#allocation2 + $0x1b0] sm:$0xff] %v1821
      %1886 = vst [vmem:[#allocation2 + $0x1b8] sm:$0xff] %v1822
      %1887 = vst [vmem:[#allocation2 + $0x1c0] sm:$0xff] %v1823
      %1888 = vst [vmem:[#allocation2 + $0x1c8] sm:$0xff] %v1824
      %1889 = vst [vmem:[#allocation2 + $0x1d0] sm:$0xff] %v1825
      %1890 = vst [vmem:[#allocation2 + $0x1d8] sm:$0xff] %v1826
      %1891 = vst [vmem:[#allocation2 + $0x1e0] sm:$0xff] %v1827
      %1892 = vst [vmem:[#allocation2 + $0x1e8] sm:$0xff] %v1828
      %1893 = vst [vmem:[#allocation2 + $0x1f0] sm:$0xff] %v1829
      %1894 = vst [vmem:[#allocation2 + $0x1f8] sm:$0xff] %v1830
      %v1895 = vrot.slane %v285, 2
      %v1896 = vrot.slane %v286, 2
      %v1897 = vsel %vm565, %v1895, %v1896
      %v1898 = vrot.slane %v287, 2
      %v1899 = vsel %vm565, %v1896, %v1898
      %v1900 = vrot.slane %v288, 2
      %v1901 = vsel %vm565, %v1898, %v1900
      %v1902 = vrot.slane %v289, 2
      %v1903 = vsel %vm565, %v1900, %v1902
      %v1904 = vrot.slane %v290, 2
      %v1905 = vrot.slane %v291, 2
      %v1906 = vsel %vm565, %v1904, %v1905
      %v1907 = vrot.slane %v292, 2
      %v1908 = vsel %vm565, %v1905, %v1907
      %v1909 = vrot.slane %v293, 2
      %v1910 = vsel %vm565, %v1907, %v1909
      %v1911 = vrot.slane %v294, 2
      %v1912 = vsel %vm565, %v1909, %v1911
      %v1913 = vrot.slane %v295, 2
      %v1914 = vrot.slane %v296, 2
      %v1915 = vsel %vm565, %v1913, %v1914
      %v1916 = vrot.slane %v297, 2
      %v1917 = vsel %vm565, %v1914, %v1916
      %v1918 = vrot.slane %v298, 2
      %v1919 = vsel %vm565, %v1916, %v1918
      %v1920 = vrot.slane %v299, 2
      %v1921 = vsel %vm565, %v1918, %v1920
      %v1922 = vrot.slane %v300, 2
      %v1923 = vrot.slane %v301, 2
      %v1924 = vsel %vm565, %v1922, %v1923
      %v1925 = vrot.slane %v302, 2
      %v1926 = vsel %vm565, %v1923, %v1925
      %v1927 = vrot.slane %v303, 2
      %v1928 = vsel %vm565, %v1925, %v1927
      %v1929 = vrot.slane %v304, 2
      %v1930 = vsel %vm565, %v1927, %v1929
      %v1931 = vrot.slane %v305, 2
      %v1932 = vrot.slane %v306, 2
      %v1933 = vsel %vm565, %v1931, %v1932
      %v1934 = vrot.slane %v307, 2
      %v1935 = vsel %vm565, %v1932, %v1934
      %v1936 = vrot.slane %v308, 2
      %v1937 = vsel %vm565, %v1934, %v1936
      %v1938 = vrot.slane %v309, 2
      %v1939 = vsel %vm565, %v1936, %v1938
      %v1940 = vrot.slane %v310, 2
      %v1941 = vrot.slane %v311, 2
      %v1942 = vsel %vm565, %v1940, %v1941
      %v1943 = vrot.slane %v312, 2
      %v1944 = vsel %vm565, %v1941, %v1943
      %v1945 = vrot.slane %v313, 2
      %v1946 = vsel %vm565, %v1943, %v1945
      %v1947 = vrot.slane %v314, 2
      %v1948 = vsel %vm565, %v1945, %v1947
      %v1949 = vrot.slane %v315, 2
      %v1950 = vrot.slane %v316, 2
      %v1951 = vsel %vm565, %v1949, %v1950
      %v1952 = vrot.slane %v317, 2
      %v1953 = vsel %vm565, %v1950, %v1952
      %v1954 = vrot.slane %v318, 2
      %v1955 = vsel %vm565, %v1952, %v1954
      %v1956 = vrot.slane %v319, 2
      %v1957 = vsel %vm565, %v1954, %v1956
      %v1958 = vrot.slane %v320, 2
      %v1959 = vrot.slane %v321, 2
      %v1960 = vsel %vm565, %v1958, %v1959
      %v1961 = vrot.slane %v322, 2
      %v1962 = vsel %vm565, %v1959, %v1961
      %v1963 = vrot.slane %v323, 2
      %v1964 = vsel %vm565, %v1961, %v1963
      %v1965 = vrot.slane %v324, 2
      %v1966 = vsel %vm565, %v1963, %v1965
      %v1967 = vrot.slane %v325, 2
      %v1968 = vrot.slane %v326, 2
      %v1969 = vsel %vm565, %v1967, %v1968
      %v1970 = vrot.slane %v327, 2
      %v1971 = vsel %vm565, %v1968, %v1970
      %v1972 = vrot.slane %v328, 2
      %v1973 = vsel %vm565, %v1970, %v1972
      %v1974 = vrot.slane %v329, 2
      %v1975 = vsel %vm565, %v1972, %v1974
      %v1976 = vrot.slane %v330, 2
      %v1977 = vrot.slane %v331, 2
      %v1978 = vsel %vm565, %v1976, %v1977
      %v1979 = vrot.slane %v332, 2
      %v1980 = vsel %vm565, %v1977, %v1979
      %v1981 = vrot.slane %v333, 2
      %v1982 = vsel %vm565, %v1979, %v1981
      %v1983 = vrot.slane %v334, 2
      %v1984 = vsel %vm565, %v1981, %v1983
      %v1985 = vrot.slane %v335, 2
      %v1986 = vrot.slane %v336, 2
      %v1987 = vsel %vm565, %v1985, %v1986
      %v1988 = vrot.slane %v337, 2
      %v1989 = vsel %vm565, %v1986, %v1988
      %v1990 = vrot.slane %v338, 2
      %v1991 = vsel %vm565, %v1988, %v1990
      %v1992 = vrot.slane %v339, 2
      %v1993 = vsel %vm565, %v1990, %v1992
      %v1994 = vrot.slane %v340, 2
      %v1995 = vrot.slane %v341, 2
      %v1996 = vsel %vm565, %v1994, %v1995
      %v1997 = vrot.slane %v342, 2
      %v1998 = vsel %vm565, %v1995, %v1997
      %v1999 = vrot.slane %v343, 2
      %v2000 = vsel %vm565, %v1997, %v1999
      %v2001 = vrot.slane %v344, 2
      %v2002 = vsel %vm565, %v1999, %v2001
      %v2003 = vrot.slane %v345, 2
      %v2004 = vrot.slane %v346, 2
      %v2005 = vsel %vm565, %v2003, %v2004
      %v2006 = vrot.slane %v347, 2
      %v2007 = vsel %vm565, %v2004, %v2006
      %v2008 = vrot.slane %v348, 2
      %v2009 = vsel %vm565, %v2006, %v2008
      %v2010 = vrot.slane %v349, 2
      %v2011 = vsel %vm565, %v2008, %v2010
      %v2012 = vrot.slane %v350, 2
      %v2013 = vrot.slane %v351, 2
      %v2014 = vsel %vm565, %v2012, %v2013
      %v2015 = vrot.slane %v352, 2
      %v2016 = vsel %vm565, %v2013, %v2015
      %v2017 = vrot.slane %v353, 2
      %v2018 = vsel %vm565, %v2015, %v2017
      %v2019 = vrot.slane %v354, 2
      %v2020 = vsel %vm565, %v2017, %v2019
      %v2021 = vrot.slane %v355, 2
      %v2022 = vrot.slane %v356, 2
      %v2023 = vsel %vm565, %v2021, %v2022
      %v2024 = vrot.slane %v357, 2
      %v2025 = vsel %vm565, %v2022, %v2024
      %v2026 = vrot.slane %v358, 2
      %v2027 = vsel %vm565, %v2024, %v2026
      %v2028 = vrot.slane %v359, 2
      %v2029 = vsel %vm565, %v2026, %v2028
      %v2030 = vrot.slane %v360, 2
      %v2031 = vrot.slane %v361, 2
      %v2032 = vsel %vm565, %v2030, %v2031
      %v2033 = vrot.slane %v362, 2
      %v2034 = vsel %vm565, %v2031, %v2033
      %v2035 = vrot.slane %v363, 2
      %v2036 = vsel %vm565, %v2033, %v2035
      %v2037 = vrot.slane %v364, 2
      %v2038 = vsel %vm565, %v2035, %v2037
      %v2103 = vpack.c.bf16 %v1899, %v1897
      %v2104 = vpack.c.bf16 %v1903, %v1901
      %v2105 = vpack.c.bf16 %v1908, %v1906
      %v2106 = vpack.c.bf16 %v1912, %v1910
      %v2107 = vpack.c.bf16 %v1917, %v1915
      %v2108 = vpack.c.bf16 %v1921, %v1919
      %v2109 = vpack.c.bf16 %v1926, %v1924
      %v2110 = vpack.c.bf16 %v1930, %v1928
      %v2111 = vpack.c.bf16 %v1935, %v1933
      %v2112 = vpack.c.bf16 %v1939, %v1937
      %v2113 = vpack.c.bf16 %v1944, %v1942
      %v2114 = vpack.c.bf16 %v1948, %v1946
      %v2115 = vpack.c.bf16 %v1953, %v1951
      %v2116 = vpack.c.bf16 %v1957, %v1955
      %v2117 = vpack.c.bf16 %v1962, %v1960
      %v2118 = vpack.c.bf16 %v1966, %v1964
      %v2119 = vpack.c.bf16 %v1971, %v1969
      %v2120 = vpack.c.bf16 %v1975, %v1973
      %v2121 = vpack.c.bf16 %v1980, %v1978
      %v2122 = vpack.c.bf16 %v1984, %v1982
      %v2123 = vpack.c.bf16 %v1989, %v1987
      %v2124 = vpack.c.bf16 %v1993, %v1991
      %v2125 = vpack.c.bf16 %v1998, %v1996
      %v2126 = vpack.c.bf16 %v2002, %v2000
      %v2127 = vpack.c.bf16 %v2007, %v2005
      %v2128 = vpack.c.bf16 %v2011, %v2009
      %v2129 = vpack.c.bf16 %v2016, %v2014
      %v2130 = vpack.c.bf16 %v2020, %v2018
      %v2131 = vpack.c.bf16 %v2025, %v2023
      %v2132 = vpack.c.bf16 %v2029, %v2027
      %v2133 = vpack.c.bf16 %v2034, %v2032
      %v2134 = vpack.c.bf16 %v2038, %v2036
      %v2135 = vld [vmem:[#allocation2] sm:$0xff]
      %v2136 = vld [vmem:[#allocation2 + $0x8] sm:$0xff]
      %v2137 = vld [vmem:[#allocation2 + $0x10] sm:$0xff]
      %v2138 = vld [vmem:[#allocation2 + $0x18] sm:$0xff]
      %v2139 = vld [vmem:[#allocation2 + $0x20] sm:$0xff]
      %v2140 = vld [vmem:[#allocation2 + $0x28] sm:$0xff]
      %v2141 = vld [vmem:[#allocation2 + $0x30] sm:$0xff]
      %v2142 = vld [vmem:[#allocation2 + $0x38] sm:$0xff]
      %v2143 = vld [vmem:[#allocation2 + $0x40] sm:$0xff]
      %v2144 = vld [vmem:[#allocation2 + $0x48] sm:$0xff]
      %v2145 = vld [vmem:[#allocation2 + $0x50] sm:$0xff]
      %v2146 = vld [vmem:[#allocation2 + $0x58] sm:$0xff]
      %v2147 = vld [vmem:[#allocation2 + $0x60] sm:$0xff]
      %v2148 = vld [vmem:[#allocation2 + $0x68] sm:$0xff]
      %v2149 = vld [vmem:[#allocation2 + $0x70] sm:$0xff]
      %v2150 = vld [vmem:[#allocation2 + $0x78] sm:$0xff]
      %v2151 = vld [vmem:[#allocation2 + $0x80] sm:$0xff]
      %v2152 = vld [vmem:[#allocation2 + $0x88] sm:$0xff]
      %v2153 = vld [vmem:[#allocation2 + $0x90] sm:$0xff]
      %v2154 = vld [vmem:[#allocation2 + $0x98] sm:$0xff]
      %v2155 = vld [vmem:[#allocation2 + $0xa0] sm:$0xff]
      %v2156 = vld [vmem:[#allocation2 + $0xa8] sm:$0xff]
      %v2157 = vld [vmem:[#allocation2 + $0xb0] sm:$0xff]
      %v2158 = vld [vmem:[#allocation2 + $0xb8] sm:$0xff]
      %v2159 = vld [vmem:[#allocation2 + $0xc0] sm:$0xff]
      %v2160 = vld [vmem:[#allocation2 + $0xc8] sm:$0xff]
      %v2161 = vld [vmem:[#allocation2 + $0xd0] sm:$0xff]
      %v2162 = vld [vmem:[#allocation2 + $0xd8] sm:$0xff]
      %v2163 = vld [vmem:[#allocation2 + $0xe0] sm:$0xff]
      %v2164 = vld [vmem:[#allocation2 + $0xe8] sm:$0xff]
      %v2165 = vld [vmem:[#allocation2 + $0xf0] sm:$0xff]
      %v2166 = vld [vmem:[#allocation2 + $0xf8] sm:$0xff]
      %v2167 = vld [vmem:[#allocation2 + $0x100] sm:$0xff]
      %v2168 = vld [vmem:[#allocation2 + $0x108] sm:$0xff]
      %v2169 = vld [vmem:[#allocation2 + $0x110] sm:$0xff]
      %v2170 = vld [vmem:[#allocation2 + $0x118] sm:$0xff]
      %v2171 = vld [vmem:[#allocation2 + $0x120] sm:$0xff]
      %v2172 = vld [vmem:[#allocation2 + $0x128] sm:$0xff]
      %v2173 = vld [vmem:[#allocation2 + $0x130] sm:$0xff]
      %v2174 = vld [vmem:[#allocation2 + $0x138] sm:$0xff]
      %v2175 = vld [vmem:[#allocation2 + $0x140] sm:$0xff]
      %v2176 = vld [vmem:[#allocation2 + $0x148] sm:$0xff]
      %v2177 = vld [vmem:[#allocation2 + $0x150] sm:$0xff]
      %v2178 = vld [vmem:[#allocation2 + $0x158] sm:$0xff]
      %v2179 = vld [vmem:[#allocation2 + $0x160] sm:$0xff]
      %v2180 = vld [vmem:[#allocation2 + $0x168] sm:$0xff]
      %v2181 = vld [vmem:[#allocation2 + $0x170] sm:$0xff]
      %v2182 = vld [vmem:[#allocation2 + $0x178] sm:$0xff]
      %v2183 = vld [vmem:[#allocation2 + $0x180] sm:$0xff]
      %v2184 = vld [vmem:[#allocation2 + $0x188] sm:$0xff]
      %v2185 = vld [vmem:[#allocation2 + $0x190] sm:$0xff]
      %v2186 = vld [vmem:[#allocation2 + $0x198] sm:$0xff]
      %v2187 = vld [vmem:[#allocation2 + $0x1a0] sm:$0xff]
      %v2188 = vld [vmem:[#allocation2 + $0x1a8] sm:$0xff]
      %v2189 = vld [vmem:[#allocation2 + $0x1b0] sm:$0xff]
      %v2190 = vld [vmem:[#allocation2 + $0x1b8] sm:$0xff]
      %v2191 = vld [vmem:[#allocation2 + $0x1c0] sm:$0xff]
      %v2192 = vld [vmem:[#allocation2 + $0x1c8] sm:$0xff]
      %v2193 = vld [vmem:[#allocation2 + $0x1d0] sm:$0xff]
      %v2194 = vld [vmem:[#allocation2 + $0x1d8] sm:$0xff]
      %v2195 = vld [vmem:[#allocation2 + $0x1e0] sm:$0xff]
      %v2196 = vld [vmem:[#allocation2 + $0x1e8] sm:$0xff]
      %v2197 = vld [vmem:[#allocation2 + $0x1f0] sm:$0xff]
      %v2198 = vld [vmem:[#allocation2 + $0x1f8] sm:$0xff]
      %s2199 = scalar_lea.vmem %s1, 16
      %v2200 = vld [vmem:[%s2199] sm:$0xf]
      %v2201 = vld [vmem:[%s2199 + $0x4] sm:$0x3]
      %v2204 = vunpack.c.l.b16 %v2200
      %v2205 = vunpack.c.l.b16 %v2201
      %v2206 = vpack.c.b16 %v2205, %v2204
      %v2208 = vsel %vm468, %v2103, 0
      %v2211 = vsel %vm468, %v2104, 0
      %v2214 = vsel %vm468, %v2105, 0
      %v2217 = vsel %vm468, %v2106, 0
      %v2220 = vsel %vm468, %v2107, 0
      %v2223 = vsel %vm468, %v2108, 0
      %v2226 = vsel %vm468, %v2109, 0
      %v2229 = vsel %vm468, %v2110, 0
      %v2232 = vsel %vm468, %v2111, 0
      %v2235 = vsel %vm468, %v2112, 0
      %v2238 = vsel %vm468, %v2113, 0
      %v2241 = vsel %vm468, %v2114, 0
      %v2244 = vsel %vm468, %v2115, 0
      %v2247 = vsel %vm468, %v2116, 0
      %v2250 = vsel %vm468, %v2117, 0
      %v2253 = vsel %vm468, %v2118, 0
      %v2256 = vsel %vm468, %v2119, 0
      %v2259 = vsel %vm468, %v2120, 0
      %v2262 = vsel %vm468, %v2121, 0
      %v2265 = vsel %vm468, %v2122, 0
      %v2268 = vsel %vm468, %v2123, 0
      %v2271 = vsel %vm468, %v2124, 0
      %v2274 = vsel %vm468, %v2125, 0
      %v2277 = vsel %vm468, %v2126, 0
      %v2280 = vsel %vm468, %v2127, 0
      %v2283 = vsel %vm468, %v2128, 0
      %v2286 = vsel %vm468, %v2129, 0
      %v2289 = vsel %vm468, %v2130, 0
      %v2292 = vsel %vm468, %v2131, 0
      %v2295 = vsel %vm468, %v2132, 0
      %v2298 = vsel %vm468, %v2133, 0
      %v2301 = vsel %vm468, %v2134, 0
      %v2304 = vsel %vm565, %v2206, 0
      %2306 = vmatprep.subr.bf16.mxu0 0
      %2307 = vmatpush1.bf16.msra.mxu0 %v2304
      %2308 = vmatprep.subr.bf16.mxu0 0
      %2309 = vmatpush1.bf16.msra.mxu0 0
      %2310 = vmatprep.subr.bf16.mxu0 0
      %2311 = vmatpush1.bf16.msra.mxu0 0
      %2312 = vmatprep.subr.bf16.mxu0 0
      %2313 = vmatpush1.bf16.msra.mxu0 0
      %2314 = vmatprep.subr.bf16.mxu0 0
      %2315 = vmatpush1.bf16.msra.mxu0 0
      %2316 = vmatprep.subr.bf16.mxu0 0
      %2317 = vmatpush1.bf16.msra.mxu0 0
      %2318 = vmatprep.subr.bf16.mxu0 0
      %2319 = vmatpush1.bf16.msra.mxu0 0
      %2320 = vmatprep.subr.bf16.mxu0 0
      %2321 = vmatpush1.bf16.msra.mxu0 0
      %2322 = vmatprep.subr.bf16.mxu0 0
      %2323 = vmatpush1.bf16.msra.mxu0 0
      %2324 = vmatprep.subr.bf16.mxu0 0
      %2325 = vmatpush1.bf16.msra.mxu0 0
      %2326 = vmatprep.subr.bf16.mxu0 0
      %2327 = vmatpush1.bf16.msra.mxu0 0
      %2328 = vmatprep.subr.bf16.mxu0 0
      %2329 = vmatpush1.bf16.msra.mxu0 0
      %2330 = vmatprep.subr.bf16.mxu0 0
      %2331 = vmatpush1.bf16.msra.mxu0 0
      %2332 = vmatprep.subr.bf16.mxu0 0
      %2333 = vmatpush1.bf16.msra.mxu0 0
      %2334 = vmatprep.subr.bf16.mxu0 0
      %2335 = vmatpush1.bf16.msra.mxu0 0
      %2336 = vmatprep.subr.bf16.mxu0 0
      %2337 = vmatpush1.bf16.msra.mxu0 0
      %2338 = vmatprep.mubr.bf16.mxu0 0
      %2339 = vmatmul.mubr.bf16.gmra.mrb[0].mxu0 %v2208
      %v2340 = vpop.f32.mrb[0].mxu0
      %v2341 = vadd.f32 0.0, %v2340
      %v2342 = vpop.f32.mrb[0].mxu0
      %v2343 = vpop.f32.mrb[0].mxu0
      %v2344 = vadd.f32 0.0, %v2343
      %v2345 = vpop.f32.mrb[0].mxu0
      %2346 = vmatprep.mubr.bf16.mxu0 0
      %2347 = vmatmul.mubr.bf16.gmra.mrb[0].mxu0 %v2211
      %v2348 = vpop.f32.mrb[0].mxu0
      %v2349 = vadd.f32 0.0, %v2348
      %v2350 = vpop.f32.mrb[0].mxu0
      %v2351 = vpop.f32.mrb[0].mxu0
      %v2352 = vadd.f32 0.0, %v2351
      %v2353 = vpop.f32.mrb[0].mxu0
      %2354 = vmatprep.mubr.bf16.mxu0 0
      %2355 = vmatmul.mubr.bf16.gmra.mrb[0].mxu0 %v2214
      %v2356 = vpop.f32.mrb[0].mxu0
      %v2357 = vadd.f32 0.0, %v2356
      %v2358 = vpop.f32.mrb[0].mxu0
      %v2359 = vpop.f32.mrb[0].mxu0
      %v2360 = vadd.f32 0.0, %v2359
      %v2361 = vpop.f32.mrb[0].mxu0
      %2362 = vmatprep.mubr.bf16.mxu0 0
      %2363 = vmatmul.mubr.bf16.gmra.mrb[0].mxu0 %v2217
      %v2364 = vpop.f32.mrb[0].mxu0
      %v2365 = vadd.f32 0.0, %v2364
      %v2366 = vpop.f32.mrb[0].mxu0
      %v2367 = vpop.f32.mrb[0].mxu0
      %v2368 = vadd.f32 0.0, %v2367
      %v2369 = vpop.f32.mrb[0].mxu0
      %2370 = vmatprep.mubr.bf16.mxu0 0
      %2371 = vmatmul.mubr.bf16.gmra.mrb[0].mxu0 %v2220
      %v2372 = vpop.f32.mrb[0].mxu0
      %v2373 = vadd.f32 0.0, %v2372
      %v2374 = vpop.f32.mrb[0].mxu0
      %v2375 = vpop.f32.mrb[0].mxu0
      %v2376 = vadd.f32 0.0, %v2375
      %v2377 = vpop.f32.mrb[0].mxu0
      %2378 = vmatprep.mubr.bf16.mxu0 0
      %2379 = vmatmul.mubr.bf16.gmra.mrb[0].mxu0 %v2223
      %v2380 = vpop.f32.mrb[0].mxu0
      %v2381 = vadd.f32 0.0, %v2380
      %v2382 = vpop.f32.mrb[0].mxu0
      %v2383 = vpop.f32.mrb[0].mxu0
      %v2384 = vadd.f32 0.0, %v2383
      %v2385 = vpop.f32.mrb[0].mxu0
      %2386 = vmatprep.mubr.bf16.mxu0 0
      %2387 = vmatmul.mubr.bf16.gmra.mrb[0].mxu0 %v2226
      %v2388 = vpop.f32.mrb[0].mxu0
      %v2389 = vadd.f32 0.0, %v2388
      %v2390 = vpop.f32.mrb[0].mxu0
      %v2391 = vpop.f32.mrb[0].mxu0
      %v2392 = vadd.f32 0.0, %v2391
      %v2393 = vpop.f32.mrb[0].mxu0
      %2394 = vmatprep.mubr.bf16.mxu0 0
      %2395 = vmatmul.mubr.bf16.gmra.mrb[0].mxu0 %v2229
      %v2396 = vpop.f32.mrb[0].mxu0
      %v2397 = vadd.f32 0.0, %v2396
      %v2398 = vpop.f32.mrb[0].mxu0
      %v2399 = vpop.f32.mrb[0].mxu0
      %v2400 = vadd.f32 0.0, %v2399
      %v2401 = vpop.f32.mrb[0].mxu0
      %2402 = vmatprep.mubr.bf16.mxu0 0
      %2403 = vmatmul.mubr.bf16.gmra.mrb[0].mxu0 %v2232
      %v2404 = vpop.f32.mrb[0].mxu0
      %v2405 = vadd.f32 0.0, %v2404
      %v2406 = vpop.f32.mrb[0].mxu0
      %v2407 = vpop.f32.mrb[0].mxu0
      %v2408 = vadd.f32 0.0, %v2407
      %v2409 = vpop.f32.mrb[0].mxu0
      %2410 = vmatprep.mubr.bf16.mxu0 0
      %2411 = vmatmul.mubr.bf16.gmra.mrb[0].mxu0 %v2235
      %v2412 = vpop.f32.mrb[0].mxu0
      %v2413 = vadd.f32 0.0, %v2412
      %v2414 = vpop.f32.mrb[0].mxu0
      %v2415 = vpop.f32.mrb[0].mxu0
      %v2416 = vadd.f32 0.0, %v2415
      %v2417 = vpop.f32.mrb[0].mxu0
      %2418 = vmatprep.mubr.bf16.mxu0 0
      %2419 = vmatmul.mubr.bf16.gmra.mrb[0].mxu0 %v2238
      %v2420 = vpop.f32.mrb[0].mxu0
      %v2421 = vadd.f32 0.0, %v2420
      %v2422 = vpop.f32.mrb[0].mxu0
      %v2423 = vpop.f32.mrb[0].mxu0
      %v2424 = vadd.f32 0.0, %v2423
      %v2425 = vpop.f32.mrb[0].mxu0
      %2426 = vmatprep.mubr.bf16.mxu0 0
      %2427 = vmatmul.mubr.bf16.gmra.mrb[0].mxu0 %v2241
      %v2428 = vpop.f32.mrb[0].mxu0
      %v2429 = vadd.f32 0.0, %v2428
      %v2430 = vpop.f32.mrb[0].mxu0
      %v2431 = vpop.f32.mrb[0].mxu0
      %v2432 = vadd.f32 0.0, %v2431
      %v2433 = vpop.f32.mrb[0].mxu0
      %2434 = vmatprep.mubr.bf16.mxu0 0
      %2435 = vmatmul.mubr.bf16.gmra.mrb[0].mxu0 %v2244
      %v2436 = vpop.f32.mrb[0].mxu0
      %v2437 = vadd.f32 0.0, %v2436
      %v2438 = vpop.f32.mrb[0].mxu0
      %v2439 = vpop.f32.mrb[0].mxu0
      %v2440 = vadd.f32 0.0, %v2439
      %v2441 = vpop.f32.mrb[0].mxu0
      %2442 = vmatprep.mubr.bf16.mxu0 0
      %2443 = vmatmul.mubr.bf16.gmra.mrb[0].mxu0 %v2247
      %v2444 = vpop.f32.mrb[0].mxu0
      %v2445 = vadd.f32 0.0, %v2444
      %v2446 = vpop.f32.mrb[0].mxu0
      %v2447 = vpop.f32.mrb[0].mxu0
      %v2448 = vadd.f32 0.0, %v2447
      %v2449 = vpop.f32.mrb[0].mxu0
      %2450 = vmatprep.mubr.bf16.mxu0 0
      %2451 = vmatmul.mubr.bf16.gmra.mrb[0].mxu0 %v2250
      %v2452 = vpop.f32.mrb[0].mxu0
      %v2453 = vadd.f32 0.0, %v2452
      %v2454 = vpop.f32.mrb[0].mxu0
      %v2455 = vpop.f32.mrb[0].mxu0
      %v2456 = vadd.f32 0.0, %v2455
      %v2457 = vpop.f32.mrb[0].mxu0
      %2458 = vmatprep.mubr.bf16.mxu0 0
      %2459 = vmatmul.mubr.bf16.gmra.mrb[0].mxu0 %v2253
      %v2460 = vpop.f32.mrb[0].mxu0
      %v2461 = vadd.f32 0.0, %v2460
      %v2462 = vpop.f32.mrb[0].mxu0
      %v2463 = vpop.f32.mrb[0].mxu0
      %v2464 = vadd.f32 0.0, %v2463
      %v2465 = vpop.f32.mrb[0].mxu0
      %2466 = vmatprep.mubr.bf16.mxu0 0
      %2467 = vmatmul.mubr.bf16.gmra.mrb[0].mxu0 %v2256
      %v2468 = vpop.f32.mrb[0].mxu0
      %v2469 = vadd.f32 0.0, %v2468
      %v2470 = vpop.f32.mrb[0].mxu0
      %v2471 = vpop.f32.mrb[0].mxu0
      %v2472 = vadd.f32 0.0, %v2471
      %v2473 = vpop.f32.mrb[0].mxu0
      %2474 = vmatprep.mubr.bf16.mxu0 0
      %2475 = vmatmul.mubr.bf16.gmra.mrb[0].mxu0 %v2259
      %v2476 = vpop.f32.mrb[0].mxu0
      %v2477 = vadd.f32 0.0, %v2476
      %v2478 = vpop.f32.mrb[0].mxu0
      %v2479 = vpop.f32.mrb[0].mxu0
      %v2480 = vadd.f32 0.0, %v2479
      %v2481 = vpop.f32.mrb[0].mxu0
      %2482 = vmatprep.mubr.bf16.mxu0 0
      %2483 = vmatmul.mubr.bf16.gmra.mrb[0].mxu0 %v2262
      %v2484 = vpop.f32.mrb[0].mxu0
      %v2485 = vadd.f32 0.0, %v2484
      %v2486 = vpop.f32.mrb[0].mxu0
      %v2487 = vpop.f32.mrb[0].mxu0
      %v2488 = vadd.f32 0.0, %v2487
      %v2489 = vpop.f32.mrb[0].mxu0
      %2490 = vmatprep.mubr.bf16.mxu0 0
      %2491 = vmatmul.mubr.bf16.gmra.mrb[0].mxu0 %v2265
      %v2492 = vpop.f32.mrb[0].mxu0
      %v2493 = vadd.f32 0.0, %v2492
      %v2494 = vpop.f32.mrb[0].mxu0
      %v2495 = vpop.f32.mrb[0].mxu0
      %v2496 = vadd.f32 0.0, %v2495
      %v2497 = vpop.f32.mrb[0].mxu0
      %2498 = vmatprep.mubr.bf16.mxu0 0
      %2499 = vmatmul.mubr.bf16.gmra.mrb[0].mxu0 %v2268
      %v2500 = vpop.f32.mrb[0].mxu0
      %v2501 = vadd.f32 0.0, %v2500
      %v2502 = vpop.f32.mrb[0].mxu0
      %v2503 = vpop.f32.mrb[0].mxu0
      %v2504 = vadd.f32 0.0, %v2503
      %v2505 = vpop.f32.mrb[0].mxu0
      %2506 = vmatprep.mubr.bf16.mxu0 0
      %2507 = vmatmul.mubr.bf16.gmra.mrb[0].mxu0 %v2271
      %v2508 = vpop.f32.mrb[0].mxu0
      %v2509 = vadd.f32 0.0, %v2508
      %v2510 = vpop.f32.mrb[0].mxu0
      %v2511 = vpop.f32.mrb[0].mxu0
      %v2512 = vadd.f32 0.0, %v2511
      %v2513 = vpop.f32.mrb[0].mxu0
      %2514 = vmatprep.mubr.bf16.mxu0 0
      %2515 = vmatmul.mubr.bf16.gmra.mrb[0].mxu0 %v2274
      %v2516 = vpop.f32.mrb[0].mxu0
      %v2517 = vadd.f32 0.0, %v2516
      %v2518 = vpop.f32.mrb[0].mxu0
      %v2519 = vpop.f32.mrb[0].mxu0
      %v2520 = vadd.f32 0.0, %v2519
      %v2521 = vpop.f32.mrb[0].mxu0
      %2522 = vmatprep.mubr.bf16.mxu0 0
      %2523 = vmatmul.mubr.bf16.gmra.mrb[0].mxu0 %v2277
      %v2524 = vpop.f32.mrb[0].mxu0
      %v2525 = vadd.f32 0.0, %v2524
      %v2526 = vpop.f32.mrb[0].mxu0
      %v2527 = vpop.f32.mrb[0].mxu0
      %v2528 = vadd.f32 0.0, %v2527
      %v2529 = vpop.f32.mrb[0].mxu0
      %2530 = vmatprep.mubr.bf16.mxu0 0
      %2531 = vmatmul.mubr.bf16.gmra.mrb[0].mxu0 %v2280
      %v2532 = vpop.f32.mrb[0].mxu0
      %v2533 = vadd.f32 0.0, %v2532
      %v2534 = vpop.f32.mrb[0].mxu0
      %v2535 = vpop.f32.mrb[0].mxu0
      %v2536 = vadd.f32 0.0, %v2535
      %v2537 = vpop.f32.mrb[0].mxu0
      %2538 = vmatprep.mubr.bf16.mxu0 0
      %2539 = vmatmul.mubr.bf16.gmra.mrb[0].mxu0 %v2283
      %v2540 = vpop.f32.mrb[0].mxu0
      %v2541 = vadd.f32 0.0, %v2540
      %v2542 = vpop.f32.mrb[0].mxu0
      %v2543 = vpop.f32.mrb[0].mxu0
      %v2544 = vadd.f32 0.0, %v2543
      %v2545 = vpop.f32.mrb[0].mxu0
      %2546 = vmatprep.mubr.bf16.mxu0 0
      %2547 = vmatmul.mubr.bf16.gmra.mrb[0].mxu0 %v2286
      %v2548 = vpop.f32.mrb[0].mxu0
      %v2549 = vadd.f32 0.0, %v2548
      %v2550 = vpop.f32.mrb[0].mxu0
      %v2551 = vpop.f32.mrb[0].mxu0
      %v2552 = vadd.f32 0.0, %v2551
      %v2553 = vpop.f32.mrb[0].mxu0
      %2554 = vmatprep.mubr.bf16.mxu0 0
      %2555 = vmatmul.mubr.bf16.gmra.mrb[0].mxu0 %v2289
      %v2556 = vpop.f32.mrb[0].mxu0
      %v2557 = vadd.f32 0.0, %v2556
      %v2558 = vpop.f32.mrb[0].mxu0
      %v2559 = vpop.f32.mrb[0].mxu0
      %v2560 = vadd.f32 0.0, %v2559
      %v2561 = vpop.f32.mrb[0].mxu0
      %2562 = vmatprep.mubr.bf16.mxu0 0
      %2563 = vmatmul.mubr.bf16.gmra.mrb[0].mxu0 %v2292
      %v2564 = vpop.f32.mrb[0].mxu0
      %v2565 = vadd.f32 0.0, %v2564
      %v2566 = vpop.f32.mrb[0].mxu0
      %v2567 = vpop.f32.mrb[0].mxu0
      %v2568 = vadd.f32 0.0, %v2567
      %v2569 = vpop.f32.mrb[0].mxu0
      %2570 = vmatprep.mubr.bf16.mxu0 0
      %2571 = vmatmul.mubr.bf16.gmra.mrb[0].mxu0 %v2295
      %v2572 = vpop.f32.mrb[0].mxu0
      %v2573 = vadd.f32 0.0, %v2572
      %v2574 = vpop.f32.mrb[0].mxu0
      %v2575 = vpop.f32.mrb[0].mxu0
      %v2576 = vadd.f32 0.0, %v2575
      %v2577 = vpop.f32.mrb[0].mxu0
      %2578 = vmatprep.mubr.bf16.mxu0 0
      %2579 = vmatmul.mubr.bf16.gmra.mrb[0].mxu0 %v2298
      %v2580 = vpop.f32.mrb[0].mxu0
      %v2581 = vadd.f32 0.0, %v2580
      %v2582 = vpop.f32.mrb[0].mxu0
      %v2583 = vpop.f32.mrb[0].mxu0
      %v2584 = vadd.f32 0.0, %v2583
      %v2585 = vpop.f32.mrb[0].mxu0
      %2586 = vmatprep.mubr.bf16.mxu0 0
      %2587 = vmatmul.mubr.bf16.gmra.mrb[0].mxu0 %v2301
      %v2588 = vpop.f32.mrb[0].mxu0
      %v2589 = vadd.f32 0.0, %v2588
      %v2590 = vpop.f32.mrb[0].mxu0
      %v2591 = vpop.f32.mrb[0].mxu0
      %v2592 = vadd.f32 0.0, %v2591
      %v2593 = vpop.f32.mrb[0].mxu0
      %2594 = vdwg.mxu0
      %v2595 = vadd.f32 %v2135, %v2341
      %v2596 = vadd.f32 %v2136, %v2344
      %v2597 = vadd.f32 %v2137, %v2349
      %v2598 = vadd.f32 %v2138, %v2352
      %v2599 = vadd.f32 %v2139, %v2357
      %v2600 = vadd.f32 %v2140, %v2360
      %v2601 = vadd.f32 %v2141, %v2365
      %v2602 = vadd.f32 %v2142, %v2368
      %v2603 = vadd.f32 %v2143, %v2373
      %v2604 = vadd.f32 %v2144, %v2376
      %v2605 = vadd.f32 %v2145, %v2381
      %v2606 = vadd.f32 %v2146, %v2384
      %v2607 = vadd.f32 %v2147, %v2389
      %v2608 = vadd.f32 %v2148, %v2392
      %v2609 = vadd.f32 %v2149, %v2397
      %v2610 = vadd.f32 %v2150, %v2400
      %v2611 = vadd.f32 %v2151, %v2405
      %v2612 = vadd.f32 %v2152, %v2408
      %v2613 = vadd.f32 %v2153, %v2413
      %v2614 = vadd.f32 %v2154, %v2416
      %v2615 = vadd.f32 %v2155, %v2421
      %v2616 = vadd.f32 %v2156, %v2424
      %v2617 = vadd.f32 %v2157, %v2429
      %v2618 = vadd.f32 %v2158, %v2432
      %v2619 = vadd.f32 %v2159, %v2437
      %v2620 = vadd.f32 %v2160, %v2440
      %v2621 = vadd.f32 %v2161, %v2445
      %v2622 = vadd.f32 %v2162, %v2448
      %v2623 = vadd.f32 %v2163, %v2453
      %v2624 = vadd.f32 %v2164, %v2456
      %v2625 = vadd.f32 %v2165, %v2461
      %v2626 = vadd.f32 %v2166, %v2464
      %v2627 = vadd.f32 %v2167, %v2469
      %v2628 = vadd.f32 %v2168, %v2472
      %v2629 = vadd.f32 %v2169, %v2477
      %v2630 = vadd.f32 %v2170, %v2480
      %v2631 = vadd.f32 %v2171, %v2485
      %v2632 = vadd.f32 %v2172, %v2488
      %v2633 = vadd.f32 %v2173, %v2493
      %v2634 = vadd.f32 %v2174, %v2496
      %v2635 = vadd.f32 %v2175, %v2501
      %v2636 = vadd.f32 %v2176, %v2504
      %v2637 = vadd.f32 %v2177, %v2509
      %v2638 = vadd.f32 %v2178, %v2512
      %v2639 = vadd.f32 %v2179, %v2517
      %v2640 = vadd.f32 %v2180, %v2520
      %v2641 = vadd.f32 %v2181, %v2525
      %v2642 = vadd.f32 %v2182, %v2528
      %v2643 = vadd.f32 %v2183, %v2533
      %v2644 = vadd.f32 %v2184, %v2536
      %v2645 = vadd.f32 %v2185, %v2541
      %v2646 = vadd.f32 %v2186, %v2544
      %v2647 = vadd.f32 %v2187, %v2549
      %v2648 = vadd.f32 %v2188, %v2552
      %v2649 = vadd.f32 %v2189, %v2557
      %v2650 = vadd.f32 %v2190, %v2560
      %v2651 = vadd.f32 %v2191, %v2565
      %v2652 = vadd.f32 %v2192, %v2568
      %v2653 = vadd.f32 %v2193, %v2573
      %v2654 = vadd.f32 %v2194, %v2576
      %v2655 = vadd.f32 %v2195, %v2581
      %v2656 = vadd.f32 %v2196, %v2584
      %v2657 = vadd.f32 %v2197, %v2589
      %v2658 = vadd.f32 %v2198, %v2592
      %2659 = vst [vmem:[#allocation2] sm:$0xff] %v2595
      %2660 = vst [vmem:[#allocation2 + $0x8] sm:$0xff] %v2596
      %2661 = vst [vmem:[#allocation2 + $0x10] sm:$0xff] %v2597
      %2662 = vst [vmem:[#allocation2 + $0x18] sm:$0xff] %v2598
      %2663 = vst [vmem:[#allocation2 + $0x20] sm:$0xff] %v2599
      %2664 = vst [vmem:[#allocation2 + $0x28] sm:$0xff] %v2600
      %2665 = vst [vmem:[#allocation2 + $0x30] sm:$0xff] %v2601
      %2666 = vst [vmem:[#allocation2 + $0x38] sm:$0xff] %v2602
      %2667 = vst [vmem:[#allocation2 + $0x40] sm:$0xff] %v2603
      %2668 = vst [vmem:[#allocation2 + $0x48] sm:$0xff] %v2604
      %2669 = vst [vmem:[#allocation2 + $0x50] sm:$0xff] %v2605
      %2670 = vst [vmem:[#allocation2 + $0x58] sm:$0xff] %v2606
      %2671 = vst [vmem:[#allocation2 + $0x60] sm:$0xff] %v2607
      %2672 = vst [vmem:[#allocation2 + $0x68] sm:$0xff] %v2608
      %2673 = vst [vmem:[#allocation2 + $0x70] sm:$0xff] %v2609
      %2674 = vst [vmem:[#allocation2 + $0x78] sm:$0xff] %v2610
      %2675 = vst [vmem:[#allocation2 + $0x80] sm:$0xff] %v2611
      %2676 = vst [vmem:[#allocation2 + $0x88] sm:$0xff] %v2612
      %2677 = vst [vmem:[#allocation2 + $0x90] sm:$0xff] %v2613
      %2678 = vst [vmem:[#allocation2 + $0x98] sm:$0xff] %v2614
      %2679 = vst [vmem:[#allocation2 + $0xa0] sm:$0xff] %v2615
      %2680 = vst [vmem:[#allocation2 + $0xa8] sm:$0xff] %v2616
      %2681 = vst [vmem:[#allocation2 + $0xb0] sm:$0xff] %v2617
      %2682 = vst [vmem:[#allocation2 + $0xb8] sm:$0xff] %v2618
      %2683 = vst [vmem:[#allocation2 + $0xc0] sm:$0xff] %v2619
      %2684 = vst [vmem:[#allocation2 + $0xc8] sm:$0xff] %v2620
      %2685 = vst [vmem:[#allocation2 + $0xd0] sm:$0xff] %v2621
      %2686 = vst [vmem:[#allocation2 + $0xd8] sm:$0xff] %v2622
      %2687 = vst [vmem:[#allocation2 + $0xe0] sm:$0xff] %v2623
      %2688 = vst [vmem:[#allocation2 + $0xe8] sm:$0xff] %v2624
      %2689 = vst [vmem:[#allocation2 + $0xf0] sm:$0xff] %v2625
      %2690 = vst [vmem:[#allocation2 + $0xf8] sm:$0xff] %v2626
      %2691 = vst [vmem:[#allocation2 + $0x100] sm:$0xff] %v2627
      %2692 = vst [vmem:[#allocation2 + $0x108] sm:$0xff] %v2628
      %2693 = vst [vmem:[#allocation2 + $0x110] sm:$0xff] %v2629
      %2694 = vst [vmem:[#allocation2 + $0x118] sm:$0xff] %v2630
      %2695 = vst [vmem:[#allocation2 + $0x120] sm:$0xff] %v2631
      %2696 = vst [vmem:[#allocation2 + $0x128] sm:$0xff] %v2632
      %2697 = vst [vmem:[#allocation2 + $0x130] sm:$0xff] %v2633
      %2698 = vst [vmem:[#allocation2 + $0x138] sm:$0xff] %v2634
      %2699 = vst [vmem:[#allocation2 + $0x140] sm:$0xff] %v2635
      %2700 = vst [vmem:[#allocation2 + $0x148] sm:$0xff] %v2636
      %2701 = vst [vmem:[#allocation2 + $0x150] sm:$0xff] %v2637
      %2702 = vst [vmem:[#allocation2 + $0x158] sm:$0xff] %v2638
      %2703 = vst [vmem:[#allocation2 + $0x160] sm:$0xff] %v2639
      %2704 = vst [vmem:[#allocation2 + $0x168] sm:$0xff] %v2640
      %2705 = vst [vmem:[#allocation2 + $0x170] sm:$0xff] %v2641
      %2706 = vst [vmem:[#allocation2 + $0x178] sm:$0xff] %v2642
      %2707 = vst [vmem:[#allocation2 + $0x180] sm:$0xff] %v2643
      %2708 = vst [vmem:[#allocation2 + $0x188] sm:$0xff] %v2644
      %2709 = vst [vmem:[#allocation2 + $0x190] sm:$0xff] %v2645
      %2710 = vst [vmem:[#allocation2 + $0x198] sm:$0xff] %v2646
      %2711 = vst [vmem:[#allocation2 + $0x1a0] sm:$0xff] %v2647
      %2712 = vst [vmem:[#allocation2 + $0x1a8] sm:$0xff] %v2648
      %2713 = vst [vmem:[#allocation2 + $0x1b0] sm:$0xff] %v2649
      %2714 = vst [vmem:[#allocation2 + $0x1b8] sm:$0xff] %v2650
      %2715 = vst [vmem:[#allocation2 + $0x1c0] sm:$0xff] %v2651
      %2716 = vst [vmem:[#allocation2 + $0x1c8] sm:$0xff] %v2652
      %2717 = vst [vmem:[#allocation2 + $0x1d0] sm:$0xff] %v2653
      %2718 = vst [vmem:[#allocation2 + $0x1d8] sm:$0xff] %v2654
      %2719 = vst [vmem:[#allocation2 + $0x1e0] sm:$0xff] %v2655
      %2720 = vst [vmem:[#allocation2 + $0x1e8] sm:$0xff] %v2656
      %2721 = vst [vmem:[#allocation2 + $0x1f0] sm:$0xff] %v2657
      %2722 = vst [vmem:[#allocation2 + $0x1f8] sm:$0xff] %v2658
      %s2723 = sadd.s32 %s218, 1
      %s2724 = smul.u32 %s2723, 40
      %s2725 = scalar_lea.vmem %s197, %s2724
      %v2726 = vld [vmem:[%s2725] sm:$0xff]
      %v2727 = vld [vmem:[%s2725 + $0x8] sm:$0xff]
      %v2728 = vld [vmem:[%s2725 + $0x10] sm:$0xff]
      %v2729 = vld [vmem:[%s2725 + $0x18] sm:$0xff]
      %v2730 = vld [vmem:[%s2725 + $0x20] sm:$0x3]
      %v2731 = vld [vmem:[%s2725 + $0x28] sm:$0xff]
      %v2732 = vld [vmem:[%s2725 + $0x30] sm:$0xff]
      %v2733 = vld [vmem:[%s2725 + $0x38] sm:$0xff]
      %v2734 = vld [vmem:[%s2725 + $0x40] sm:$0xff]
      %v2735 = vld [vmem:[%s2725 + $0x48] sm:$0x3]
      %v2736 = vld [vmem:[%s2725 + $0x50] sm:$0xff]
      %v2737 = vld [vmem:[%s2725 + $0x58] sm:$0xff]
      %v2738 = vld [vmem:[%s2725 + $0x60] sm:$0xff]
      %v2739 = vld [vmem:[%s2725 + $0x68] sm:$0xff]
      %v2740 = vld [vmem:[%s2725 + $0x70] sm:$0x3]
      %v2741 = vld [vmem:[%s2725 + $0x78] sm:$0xff]
      %v2742 = vld [vmem:[%s2725 + $0x80] sm:$0xff]
      %v2743 = vld [vmem:[%s2725 + $0x88] sm:$0xff]
      %v2744 = vld [vmem:[%s2725 + $0x90] sm:$0xff]
      %v2745 = vld [vmem:[%s2725 + $0x98] sm:$0x3]
      %v2746 = vld [vmem:[%s2725 + $0xa0] sm:$0xff]
      %v2747 = vld [vmem:[%s2725 + $0xa8] sm:$0xff]
      %v2748 = vld [vmem:[%s2725 + $0xb0] sm:$0xff]
      %v2749 = vld [vmem:[%s2725 + $0xb8] sm:$0xff]
      %v2750 = vld [vmem:[%s2725 + $0xc0] sm:$0x3]
      %v2751 = vld [vmem:[%s2725 + $0xc8] sm:$0xff]
      %v2752 = vld [vmem:[%s2725 + $0xd0] sm:$0xff]
      %v2753 = vld [vmem:[%s2725 + $0xd8] sm:$0xff]
      %v2754 = vld [vmem:[%s2725 + $0xe0] sm:$0xff]
      %v2755 = vld [vmem:[%s2725 + $0xe8] sm:$0x3]
      %v2756 = vld [vmem:[%s2725 + $0xf0] sm:$0xff]
      %v2757 = vld [vmem:[%s2725 + $0xf8] sm:$0xff]
      %v2758 = vld [vmem:[%s2725 + $0x100] sm:$0xff]
      %v2759 = vld [vmem:[%s2725 + $0x108] sm:$0xff]
      %v2760 = vld [vmem:[%s2725 + $0x110] sm:$0x3]
      %v2761 = vld [vmem:[%s2725 + $0x118] sm:$0xff]
      %v2762 = vld [vmem:[%s2725 + $0x120] sm:$0xff]
      %v2763 = vld [vmem:[%s2725 + $0x128] sm:$0xff]
      %v2764 = vld [vmem:[%s2725 + $0x130] sm:$0xff]
      %v2765 = vld [vmem:[%s2725 + $0x138] sm:$0x3]
      %v2766 = vld [vmem:[%s2725 + $0x140] sm:$0xff]
      %v2767 = vld [vmem:[%s2725 + $0x148] sm:$0xff]
      %v2768 = vld [vmem:[%s2725 + $0x150] sm:$0xff]
      %v2769 = vld [vmem:[%s2725 + $0x158] sm:$0xff]
      %v2770 = vld [vmem:[%s2725 + $0x160] sm:$0x3]
      %v2771 = vld [vmem:[%s2725 + $0x168] sm:$0xff]
      %v2772 = vld [vmem:[%s2725 + $0x170] sm:$0xff]
      %v2773 = vld [vmem:[%s2725 + $0x178] sm:$0xff]
      %v2774 = vld [vmem:[%s2725 + $0x180] sm:$0xff]
      %v2775 = vld [vmem:[%s2725 + $0x188] sm:$0x3]
      %v2776 = vld [vmem:[%s2725 + $0x190] sm:$0xff]
      %v2777 = vld [vmem:[%s2725 + $0x198] sm:$0xff]
      %v2778 = vld [vmem:[%s2725 + $0x1a0] sm:$0xff]
      %v2779 = vld [vmem:[%s2725 + $0x1a8] sm:$0xff]
      %v2780 = vld [vmem:[%s2725 + $0x1b0] sm:$0x3]
      %v2781 = vld [vmem:[%s2725 + $0x1b8] sm:$0xff]
      %v2782 = vld [vmem:[%s2725 + $0x1c0] sm:$0xff]
      %v2783 = vld [vmem:[%s2725 + $0x1c8] sm:$0xff]
      %v2784 = vld [vmem:[%s2725 + $0x1d0] sm:$0xff]
      %v2785 = vld [vmem:[%s2725 + $0x1d8] sm:$0x3]
      %v2786 = vld [vmem:[%s2725 + $0x1e0] sm:$0xff]
      %v2787 = vld [vmem:[%s2725 + $0x1e8] sm:$0xff]
      %v2788 = vld [vmem:[%s2725 + $0x1f0] sm:$0xff]
      %v2789 = vld [vmem:[%s2725 + $0x1f8] sm:$0xff]
      %v2790 = vld [vmem:[%s2725 + $0x200] sm:$0x3]
      %v2791 = vld [vmem:[%s2725 + $0x208] sm:$0xff]
      %v2792 = vld [vmem:[%s2725 + $0x210] sm:$0xff]
      %v2793 = vld [vmem:[%s2725 + $0x218] sm:$0xff]
      %v2794 = vld [vmem:[%s2725 + $0x220] sm:$0xff]
      %v2795 = vld [vmem:[%s2725 + $0x228] sm:$0x3]
      %v2796 = vld [vmem:[%s2725 + $0x230] sm:$0xff]
      %v2797 = vld [vmem:[%s2725 + $0x238] sm:$0xff]
      %v2798 = vld [vmem:[%s2725 + $0x240] sm:$0xff]
      %v2799 = vld [vmem:[%s2725 + $0x248] sm:$0xff]
      %v2800 = vld [vmem:[%s2725 + $0x250] sm:$0x3]
      %v2801 = vld [vmem:[%s2725 + $0x258] sm:$0xff]
      %v2802 = vld [vmem:[%s2725 + $0x260] sm:$0xff]
      %v2803 = vld [vmem:[%s2725 + $0x268] sm:$0xff]
      %v2804 = vld [vmem:[%s2725 + $0x270] sm:$0xff]
      %v2805 = vld [vmem:[%s2725 + $0x278] sm:$0x3]
      %v2806 = vpack.c.bf16 %v2727, %v2726
      %v2807 = vpack.c.bf16 %v2729, %v2728
      %v2808 = vpack.c.bf16 %v2732, %v2731
      %v2809 = vpack.c.bf16 %v2734, %v2733
      %v2810 = vpack.c.bf16 %v2737, %v2736
      %v2811 = vpack.c.bf16 %v2739, %v2738
      %v2812 = vpack.c.bf16 %v2742, %v2741
      %v2813 = vpack.c.bf16 %v2744, %v2743
      %v2814 = vpack.c.bf16 %v2747, %v2746
      %v2815 = vpack.c.bf16 %v2749, %v2748
      %v2816 = vpack.c.bf16 %v2752, %v2751
      %v2817 = vpack.c.bf16 %v2754, %v2753
      %v2818 = vpack.c.bf16 %v2757, %v2756
      %v2819 = vpack.c.bf16 %v2759, %v2758
      %v2820 = vpack.c.bf16 %v2762, %v2761
      %v2821 = vpack.c.bf16 %v2764, %v2763
      %v2822 = vpack.c.bf16 %v2767, %v2766
      %v2823 = vpack.c.bf16 %v2769, %v2768
      %v2824 = vpack.c.bf16 %v2772, %v2771
      %v2825 = vpack.c.bf16 %v2774, %v2773
      %v2826 = vpack.c.bf16 %v2777, %v2776
      %v2827 = vpack.c.bf16 %v2779, %v2778
      %v2828 = vpack.c.bf16 %v2782, %v2781
      %v2829 = vpack.c.bf16 %v2784, %v2783
      %v2830 = vpack.c.bf16 %v2787, %v2786
      %v2831 = vpack.c.bf16 %v2789, %v2788
      %v2832 = vpack.c.bf16 %v2792, %v2791
      %v2833 = vpack.c.bf16 %v2794, %v2793
      %v2834 = vpack.c.bf16 %v2797, %v2796
      %v2835 = vpack.c.bf16 %v2799, %v2798
      %v2836 = vpack.c.bf16 %v2802, %v2801
      %v2837 = vpack.c.bf16 %v2804, %v2803
      %v2838 = vld [vmem:[#allocation2] sm:$0xff]
      %v2839 = vld [vmem:[#allocation2 + $0x8] sm:$0xff]
      %v2840 = vld [vmem:[#allocation2 + $0x10] sm:$0xff]
      %v2841 = vld [vmem:[#allocation2 + $0x18] sm:$0xff]
      %v2842 = vld [vmem:[#allocation2 + $0x20] sm:$0xff]
      %v2843 = vld [vmem:[#allocation2 + $0x28] sm:$0xff]
      %v2844 = vld [vmem:[#allocation2 + $0x30] sm:$0xff]
      %v2845 = vld [vmem:[#allocation2 + $0x38] sm:$0xff]
      %v2846 = vld [vmem:[#allocation2 + $0x40] sm:$0xff]
      %v2847 = vld [vmem:[#allocation2 + $0x48] sm:$0xff]
      %v2848 = vld [vmem:[#allocation2 + $0x50] sm:$0xff]
      %v2849 = vld [vmem:[#allocation2 + $0x58] sm:$0xff]
      %v2850 = vld [vmem:[#allocation2 + $0x60] sm:$0xff]
      %v2851 = vld [vmem:[#allocation2 + $0x68] sm:$0xff]
      %v2852 = vld [vmem:[#allocation2 + $0x70] sm:$0xff]
      %v2853 = vld [vmem:[#allocation2 + $0x78] sm:$0xff]
      %v2854 = vld [vmem:[#allocation2 + $0x80] sm:$0xff]
      %v2855 = vld [vmem:[#allocation2 + $0x88] sm:$0xff]
      %v2856 = vld [vmem:[#allocation2 + $0x90] sm:$0xff]
      %v2857 = vld [vmem:[#allocation2 + $0x98] sm:$0xff]
      %v2858 = vld [vmem:[#allocation2 + $0xa0] sm:$0xff]
      %v2859 = vld [vmem:[#allocation2 + $0xa8] sm:$0xff]
      %v2860 = vld [vmem:[#allocation2 + $0xb0] sm:$0xff]
      %v2861 = vld [vmem:[#allocation2 + $0xb8] sm:$0xff]
      %v2862 = vld [vmem:[#allocation2 + $0xc0] sm:$0xff]
      %v2863 = vld [vmem:[#allocation2 + $0xc8] sm:$0xff]
      %v2864 = vld [vmem:[#allocation2 + $0xd0] sm:$0xff]
      %v2865 = vld [vmem:[#allocation2 + $0xd8] sm:$0xff]
      %v2866 = vld [vmem:[#allocation2 + $0xe0] sm:$0xff]
      %v2867 = vld [vmem:[#allocation2 + $0xe8] sm:$0xff]
      %v2868 = vld [vmem:[#allocation2 + $0xf0] sm:$0xff]
      %v2869 = vld [vmem:[#allocation2 + $0xf8] sm:$0xff]
      %v2870 = vld [vmem:[#allocation2 + $0x100] sm:$0xff]
      %v2871 = vld [vmem:[#allocation2 + $0x108] sm:$0xff]
      %v2872 = vld [vmem:[#allocation2 + $0x110] sm:$0xff]
      %v2873 = vld [vmem:[#allocation2 + $0x118] sm:$0xff]
      %v2874 = vld [vmem:[#allocation2 + $0x120] sm:$0xff]
      %v2875 = vld [vmem:[#allocation2 + $0x128] sm:$0xff]
      %v2876 = vld [vmem:[#allocation2 + $0x130] sm:$0xff]
      %v2877 = vld [vmem:[#allocation2 + $0x138] sm:$0xff]
      %v2878 = vld [vmem:[#allocation2 + $0x140] sm:$0xff]
      %v2879 = vld [vmem:[#allocation2 + $0x148] sm:$0xff]
      %v2880 = vld [vmem:[#allocation2 + $0x150] sm:$0xff]
      %v2881 = vld [vmem:[#allocation2 + $0x158] sm:$0xff]
      %v2882 = vld [vmem:[#allocation2 + $0x160] sm:$0xff]
      %v2883 = vld [vmem:[#allocation2 + $0x168] sm:$0xff]
      %v2884 = vld [vmem:[#allocation2 + $0x170] sm:$0xff]
      %v2885 = vld [vmem:[#allocation2 + $0x178] sm:$0xff]
      %v2886 = vld [vmem:[#allocation2 + $0x180] sm:$0xff]
      %v2887 = vld [vmem:[#allocation2 + $0x188] sm:$0xff]
      %v2888 = vld [vmem:[#allocation2 + $0x190] sm:$0xff]
      %v2889 = vld [vmem:[#allocation2 + $0x198] sm:$0xff]
      %v2890 = vld [vmem:[#allocation2 + $0x1a0] sm:$0xff]
      %v2891 = vld [vmem:[#allocation2 + $0x1a8] sm:$0xff]
      %v2892 = vld [vmem:[#allocation2 + $0x1b0] sm:$0xff]
      %v2893 = vld [vmem:[#allocation2 + $0x1b8] sm:$0xff]
      %v2894 = vld [vmem:[#allocation2 + $0x1c0] sm:$0xff]
      %v2895 = vld [vmem:[#allocation2 + $0x1c8] sm:$0xff]
      %v2896 = vld [vmem:[#allocation2 + $0x1d0] sm:$0xff]
      %v2897 = vld [vmem:[#allocation2 + $0x1d8] sm:$0xff]
      %v2898 = vld [vmem:[#allocation2 + $0x1e0] sm:$0xff]
      %v2899 = vld [vmem:[#allocation2 + $0x1e8] sm:$0xff]
      %v2900 = vld [vmem:[#allocation2 + $0x1f0] sm:$0xff]
      %v2901 = vld [vmem:[#allocation2 + $0x1f8] sm:$0xff]
      %s2902 = scalar_lea.vmem %s1, 24
      %v2903 = vld [vmem:[%s2902] sm:$0xf]
      %v2904 = vld [vmem:[%s2902 + $0x4] sm:$0x3]
      %v2907 = vunpack.c.l.b16 %v2903
      %v2908 = vunpack.c.l.b16 %v2904
      %v2909 = vpack.c.b16 %v2908, %v2907
      %v2911 = vsel %vm468, %v2806, 0
      %v2914 = vsel %vm468, %v2807, 0
      %v2917 = vsel %vm468, %v2808, 0
      %v2920 = vsel %vm468, %v2809, 0
      %v2923 = vsel %vm468, %v2810, 0
      %v2926 = vsel %vm468, %v2811, 0
      %v2929 = vsel %vm468, %v2812, 0
      %v2932 = vsel %vm468, %v2813, 0
      %v2935 = vsel %vm468, %v2814, 0
      %v2938 = vsel %vm468, %v2815, 0
      %v2941 = vsel %vm468, %v2816, 0
      %v2944 = vsel %vm468, %v2817, 0
      %v2947 = vsel %vm468, %v2818, 0
      %v2950 = vsel %vm468, %v2819, 0
      %v2953 = vsel %vm468, %v2820, 0
      %v2956 = vsel %vm468, %v2821, 0
      %v2959 = vsel %vm468, %v2822, 0
      %v2962 = vsel %vm468, %v2823, 0
      %v2965 = vsel %vm468, %v2824, 0
      %v2968 = vsel %vm468, %v2825, 0
      %v2971 = vsel %vm468, %v2826, 0
      %v2974 = vsel %vm468, %v2827, 0
      %v2977 = vsel %vm468, %v2828, 0
      %v2980 = vsel %vm468, %v2829, 0
      %v2983 = vsel %vm468, %v2830, 0
      %v2986 = vsel %vm468, %v2831, 0
      %v2989 = vsel %vm468, %v2832, 0
      %v2992 = vsel %vm468, %v2833, 0
      %v2995 = vsel %vm468, %v2834, 0
      %v2998 = vsel %vm468, %v2835, 0
      %v3001 = vsel %vm468, %v2836, 0
      %v3004 = vsel %vm468, %v2837, 0
      %v3007 = vsel %vm565, %v2909, 0
      %3009 = vmatprep.subr.bf16.mxu0 0
      %3010 = vmatpush1.bf16.msra.mxu0 %v3007
      %3011 = vmatprep.subr.bf16.mxu0 0
      %3012 = vmatpush1.bf16.msra.mxu0 0
      %3013 = vmatprep.subr.bf16.mxu0 0
      %3014 = vmatpush1.bf16.msra.mxu0 0
      %3015 = vmatprep.subr.bf16.mxu0 0
      %3016 = vmatpush1.bf16.msra.mxu0 0
      %3017 = vmatprep.subr.bf16.mxu0 0
      %3018 = vmatpush1.bf16.msra.mxu0 0
      %3019 = vmatprep.subr.bf16.mxu0 0
      %3020 = vmatpush1.bf16.msra.mxu0 0
      %3021 = vmatprep.subr.bf16.mxu0 0
      %3022 = vmatpush1.bf16.msra.mxu0 0
      %3023 = vmatprep.subr.bf16.mxu0 0
      %3024 = vmatpush1.bf16.msra.mxu0 0
      %3025 = vmatprep.subr.bf16.mxu0 0
      %3026 = vmatpush1.bf16.msra.mxu0 0
      %3027 = vmatprep.subr.bf16.mxu0 0
      %3028 = vmatpush1.bf16.msra.mxu0 0
      %3029 = vmatprep.subr.bf16.mxu0 0
      %3030 = vmatpush1.bf16.msra.mxu0 0
      %3031 = vmatprep.subr.bf16.mxu0 0
      %3032 = vmatpush1.bf16.msra.mxu0 0
      %3033 = vmatprep.subr.bf16.mxu0 0
      %3034 = vmatpush1.bf16.msra.mxu0 0
      %3035 = vmatprep.subr.bf16.mxu0 0
      %3036 = vmatpush1.bf16.msra.mxu0 0
      %3037 = vmatprep.subr.bf16.mxu0 0
      %3038 = vmatpush1.bf16.msra.mxu0 0
      %3039 = vmatprep.subr.bf16.mxu0 0
      %3040 = vmatpush1.bf16.msra.mxu0 0
      %3041 = vmatprep.mubr.bf16.mxu0 0
      %3042 = vmatmul.mubr.bf16.gmra.mrb[0].mxu0 %v2911
      %v3043 = vpop.f32.mrb[0].mxu0
      %v3044 = vadd.f32 0.0, %v3043
      %v3045 = vpop.f32.mrb[0].mxu0
      %v3046 = vpop.f32.mrb[0].mxu0
      %v3047 = vadd.f32 0.0, %v3046
      %v3048 = vpop.f32.mrb[0].mxu0
      %3049 = vmatprep.mubr.bf16.mxu0 0
      %3050 = vmatmul.mubr.bf16.gmra.mrb[0].mxu0 %v2914
      %v3051 = vpop.f32.mrb[0].mxu0
      %v3052 = vadd.f32 0.0, %v3051
      %v3053 = vpop.f32.mrb[0].mxu0
      %v3054 = vpop.f32.mrb[0].mxu0
      %v3055 = vadd.f32 0.0, %v3054
      %v3056 = vpop.f32.mrb[0].mxu0
      %3057 = vmatprep.mubr.bf16.mxu0 0
      %3058 = vmatmul.mubr.bf16.gmra.mrb[0].mxu0 %v2917
      %v3059 = vpop.f32.mrb[0].mxu0
      %v3060 = vadd.f32 0.0, %v3059
      %v3061 = vpop.f32.mrb[0].mxu0
      %v3062 = vpop.f32.mrb[0].mxu0
      %v3063 = vadd.f32 0.0, %v3062
      %v3064 = vpop.f32.mrb[0].mxu0
      %3065 = vmatprep.mubr.bf16.mxu0 0
      %3066 = vmatmul.mubr.bf16.gmra.mrb[0].mxu0 %v2920
      %v3067 = vpop.f32.mrb[0].mxu0
      %v3068 = vadd.f32 0.0, %v3067
      %v3069 = vpop.f32.mrb[0].mxu0
      %v3070 = vpop.f32.mrb[0].mxu0
      %v3071 = vadd.f32 0.0, %v3070
      %v3072 = vpop.f32.mrb[0].mxu0
      %3073 = vmatprep.mubr.bf16.mxu0 0
      %3074 = vmatmul.mubr.bf16.gmra.mrb[0].mxu0 %v2923
      %v3075 = vpop.f32.mrb[0].mxu0
      %v3076 = vadd.f32 0.0, %v3075
      %v3077 = vpop.f32.mrb[0].mxu0
      %v3078 = vpop.f32.mrb[0].mxu0
      %v3079 = vadd.f32 0.0, %v3078
      %v3080 = vpop.f32.mrb[0].mxu0
      %3081 = vmatprep.mubr.bf16.mxu0 0
      %3082 = vmatmul.mubr.bf16.gmra.mrb[0].mxu0 %v2926
      %v3083 = vpop.f32.mrb[0].mxu0
      %v3084 = vadd.f32 0.0, %v3083
      %v3085 = vpop.f32.mrb[0].mxu0
      %v3086 = vpop.f32.mrb[0].mxu0
      %v3087 = vadd.f32 0.0, %v3086
      %v3088 = vpop.f32.mrb[0].mxu0
      %3089 = vmatprep.mubr.bf16.mxu0 0
      %3090 = vmatmul.mubr.bf16.gmra.mrb[0].mxu0 %v2929
      %v3091 = vpop.f32.mrb[0].mxu0
      %v3092 = vadd.f32 0.0, %v3091
      %v3093 = vpop.f32.mrb[0].mxu0
      %v3094 = vpop.f32.mrb[0].mxu0
      %v3095 = vadd.f32 0.0, %v3094
      %v3096 = vpop.f32.mrb[0].mxu0
      %3097 = vmatprep.mubr.bf16.mxu0 0
      %3098 = vmatmul.mubr.bf16.gmra.mrb[0].mxu0 %v2932
      %v3099 = vpop.f32.mrb[0].mxu0
      %v3100 = vadd.f32 0.0, %v3099
      %v3101 = vpop.f32.mrb[0].mxu0
      %v3102 = vpop.f32.mrb[0].mxu0
      %v3103 = vadd.f32 0.0, %v3102
      %v3104 = vpop.f32.mrb[0].mxu0
      %3105 = vmatprep.mubr.bf16.mxu0 0
      %3106 = vmatmul.mubr.bf16.gmra.mrb[0].mxu0 %v2935
      %v3107 = vpop.f32.mrb[0].mxu0
      %v3108 = vadd.f32 0.0, %v3107
      %v3109 = vpop.f32.mrb[0].mxu0
      %v3110 = vpop.f32.mrb[0].mxu0
      %v3111 = vadd.f32 0.0, %v3110
      %v3112 = vpop.f32.mrb[0].mxu0
      %3113 = vmatprep.mubr.bf16.mxu0 0
      %3114 = vmatmul.mubr.bf16.gmra.mrb[0].mxu0 %v2938
      %v3115 = vpop.f32.mrb[0].mxu0
      %v3116 = vadd.f32 0.0, %v3115
      %v3117 = vpop.f32.mrb[0].mxu0
      %v3118 = vpop.f32.mrb[0].mxu0
      %v3119 = vadd.f32 0.0, %v3118
      %v3120 = vpop.f32.mrb[0].mxu0
      %3121 = vmatprep.mubr.bf16.mxu0 0
      %3122 = vmatmul.mubr.bf16.gmra.mrb[0].mxu0 %v2941
      %v3123 = vpop.f32.mrb[0].mxu0
      %v3124 = vadd.f32 0.0, %v3123
      %v3125 = vpop.f32.mrb[0].mxu0
      %v3126 = vpop.f32.mrb[0].mxu0
      %v3127 = vadd.f32 0.0, %v3126
      %v3128 = vpop.f32.mrb[0].mxu0
      %3129 = vmatprep.mubr.bf16.mxu0 0
      %3130 = vmatmul.mubr.bf16.gmra.mrb[0].mxu0 %v2944
      %v3131 = vpop.f32.mrb[0].mxu0
      %v3132 = vadd.f32 0.0, %v3131
      %v3133 = vpop.f32.mrb[0].mxu0
      %v3134 = vpop.f32.mrb[0].mxu0
      %v3135 = vadd.f32 0.0, %v3134
      %v3136 = vpop.f32.mrb[0].mxu0
      %3137 = vmatprep.mubr.bf16.mxu0 0
      %3138 = vmatmul.mubr.bf16.gmra.mrb[0].mxu0 %v2947
      %v3139 = vpop.f32.mrb[0].mxu0
      %v3140 = vadd.f32 0.0, %v3139
      %v3141 = vpop.f32.mrb[0].mxu0
      %v3142 = vpop.f32.mrb[0].mxu0
      %v3143 = vadd.f32 0.0, %v3142
      %v3144 = vpop.f32.mrb[0].mxu0
      %3145 = vmatprep.mubr.bf16.mxu0 0
      %3146 = vmatmul.mubr.bf16.gmra.mrb[0].mxu0 %v2950
      %v3147 = vpop.f32.mrb[0].mxu0
      %v3148 = vadd.f32 0.0, %v3147
      %v3149 = vpop.f32.mrb[0].mxu0
      %v3150 = vpop.f32.mrb[0].mxu0
      %v3151 = vadd.f32 0.0, %v3150
      %v3152 = vpop.f32.mrb[0].mxu0
      %3153 = vmatprep.mubr.bf16.mxu0 0
      %3154 = vmatmul.mubr.bf16.gmra.mrb[0].mxu0 %v2953
      %v3155 = vpop.f32.mrb[0].mxu0
      %v3156 = vadd.f32 0.0, %v3155
      %v3157 = vpop.f32.mrb[0].mxu0
      %v3158 = vpop.f32.mrb[0].mxu0
      %v3159 = vadd.f32 0.0, %v3158
      %v3160 = vpop.f32.mrb[0].mxu0
      %3161 = vmatprep.mubr.bf16.mxu0 0
      %3162 = vmatmul.mubr.bf16.gmra.mrb[0].mxu0 %v2956
      %v3163 = vpop.f32.mrb[0].mxu0
      %v3164 = vadd.f32 0.0, %v3163
      %v3165 = vpop.f32.mrb[0].mxu0
      %v3166 = vpop.f32.mrb[0].mxu0
      %v3167 = vadd.f32 0.0, %v3166
      %v3168 = vpop.f32.mrb[0].mxu0
      %3169 = vmatprep.mubr.bf16.mxu0 0
      %3170 = vmatmul.mubr.bf16.gmra.mrb[0].mxu0 %v2959
      %v3171 = vpop.f32.mrb[0].mxu0
      %v3172 = vadd.f32 0.0, %v3171
      %v3173 = vpop.f32.mrb[0].mxu0
      %v3174 = vpop.f32.mrb[0].mxu0
      %v3175 = vadd.f32 0.0, %v3174
      %v3176 = vpop.f32.mrb[0].mxu0
      %3177 = vmatprep.mubr.bf16.mxu0 0
      %3178 = vmatmul.mubr.bf16.gmra.mrb[0].mxu0 %v2962
      %v3179 = vpop.f32.mrb[0].mxu0
      %v3180 = vadd.f32 0.0, %v3179
      %v3181 = vpop.f32.mrb[0].mxu0
      %v3182 = vpop.f32.mrb[0].mxu0
      %v3183 = vadd.f32 0.0, %v3182
      %v3184 = vpop.f32.mrb[0].mxu0
      %3185 = vmatprep.mubr.bf16.mxu0 0
      %3186 = vmatmul.mubr.bf16.gmra.mrb[0].mxu0 %v2965
      %v3187 = vpop.f32.mrb[0].mxu0
      %v3188 = vadd.f32 0.0, %v3187
      %v3189 = vpop.f32.mrb[0].mxu0
      %v3190 = vpop.f32.mrb[0].mxu0
      %v3191 = vadd.f32 0.0, %v3190
      %v3192 = vpop.f32.mrb[0].mxu0
      %3193 = vmatprep.mubr.bf16.mxu0 0
      %3194 = vmatmul.mubr.bf16.gmra.mrb[0].mxu0 %v2968
      %v3195 = vpop.f32.mrb[0].mxu0
      %v3196 = vadd.f32 0.0, %v3195
      %v3197 = vpop.f32.mrb[0].mxu0
      %v3198 = vpop.f32.mrb[0].mxu0
      %v3199 = vadd.f32 0.0, %v3198
      %v3200 = vpop.f32.mrb[0].mxu0
      %3201 = vmatprep.mubr.bf16.mxu0 0
      %3202 = vmatmul.mubr.bf16.gmra.mrb[0].mxu0 %v2971
      %v3203 = vpop.f32.mrb[0].mxu0
      %v3204 = vadd.f32 0.0, %v3203
      %v3205 = vpop.f32.mrb[0].mxu0
      %v3206 = vpop.f32.mrb[0].mxu0
      %v3207 = vadd.f32 0.0, %v3206
      %v3208 = vpop.f32.mrb[0].mxu0
      %3209 = vmatprep.mubr.bf16.mxu0 0
      %3210 = vmatmul.mubr.bf16.gmra.mrb[0].mxu0 %v2974
      %v3211 = vpop.f32.mrb[0].mxu0
      %v3212 = vadd.f32 0.0, %v3211
      %v3213 = vpop.f32.mrb[0].mxu0
      %v3214 = vpop.f32.mrb[0].mxu0
      %v3215 = vadd.f32 0.0, %v3214
      %v3216 = vpop.f32.mrb[0].mxu0
      %3217 = vmatprep.mubr.bf16.mxu0 0
      %3218 = vmatmul.mubr.bf16.gmra.mrb[0].mxu0 %v2977
      %v3219 = vpop.f32.mrb[0].mxu0
      %v3220 = vadd.f32 0.0, %v3219
      %v3221 = vpop.f32.mrb[0].mxu0
      %v3222 = vpop.f32.mrb[0].mxu0
      %v3223 = vadd.f32 0.0, %v3222
      %v3224 = vpop.f32.mrb[0].mxu0
      %3225 = vmatprep.mubr.bf16.mxu0 0
      %3226 = vmatmul.mubr.bf16.gmra.mrb[0].mxu0 %v2980
      %v3227 = vpop.f32.mrb[0].mxu0
      %v3228 = vadd.f32 0.0, %v3227
      %v3229 = vpop.f32.mrb[0].mxu0
      %v3230 = vpop.f32.mrb[0].mxu0
      %v3231 = vadd.f32 0.0, %v3230
      %v3232 = vpop.f32.mrb[0].mxu0
      %3233 = vmatprep.mubr.bf16.mxu0 0
      %3234 = vmatmul.mubr.bf16.gmra.mrb[0].mxu0 %v2983
      %v3235 = vpop.f32.mrb[0].mxu0
      %v3236 = vadd.f32 0.0, %v3235
      %v3237 = vpop.f32.mrb[0].mxu0
      %v3238 = vpop.f32.mrb[0].mxu0
      %v3239 = vadd.f32 0.0, %v3238
      %v3240 = vpop.f32.mrb[0].mxu0
      %3241 = vmatprep.mubr.bf16.mxu0 0
      %3242 = vmatmul.mubr.bf16.gmra.mrb[0].mxu0 %v2986
      %v3243 = vpop.f32.mrb[0].mxu0
      %v3244 = vadd.f32 0.0, %v3243
      %v3245 = vpop.f32.mrb[0].mxu0
      %v3246 = vpop.f32.mrb[0].mxu0
      %v3247 = vadd.f32 0.0, %v3246
      %v3248 = vpop.f32.mrb[0].mxu0
      %3249 = vmatprep.mubr.bf16.mxu0 0
      %3250 = vmatmul.mubr.bf16.gmra.mrb[0].mxu0 %v2989
      %v3251 = vpop.f32.mrb[0].mxu0
      %v3252 = vadd.f32 0.0, %v3251
      %v3253 = vpop.f32.mrb[0].mxu0
      %v3254 = vpop.f32.mrb[0].mxu0
      %v3255 = vadd.f32 0.0, %v3254
      %v3256 = vpop.f32.mrb[0].mxu0
      %3257 = vmatprep.mubr.bf16.mxu0 0
      %3258 = vmatmul.mubr.bf16.gmra.mrb[0].mxu0 %v2992
      %v3259 = vpop.f32.mrb[0].mxu0
      %v3260 = vadd.f32 0.0, %v3259
      %v3261 = vpop.f32.mrb[0].mxu0
      %v3262 = vpop.f32.mrb[0].mxu0
      %v3263 = vadd.f32 0.0, %v3262
      %v3264 = vpop.f32.mrb[0].mxu0
      %3265 = vmatprep.mubr.bf16.mxu0 0
      %3266 = vmatmul.mubr.bf16.gmra.mrb[0].mxu0 %v2995
      %v3267 = vpop.f32.mrb[0].mxu0
      %v3268 = vadd.f32 0.0, %v3267
      %v3269 = vpop.f32.mrb[0].mxu0
      %v3270 = vpop.f32.mrb[0].mxu0
      %v3271 = vadd.f32 0.0, %v3270
      %v3272 = vpop.f32.mrb[0].mxu0
      %3273 = vmatprep.mubr.bf16.mxu0 0
      %3274 = vmatmul.mubr.bf16.gmra.mrb[0].mxu0 %v2998
      %v3275 = vpop.f32.mrb[0].mxu0
      %v3276 = vadd.f32 0.0, %v3275
      %v3277 = vpop.f32.mrb[0].mxu0
      %v3278 = vpop.f32.mrb[0].mxu0
      %v3279 = vadd.f32 0.0, %v3278
      %v3280 = vpop.f32.mrb[0].mxu0
      %3281 = vmatprep.mubr.bf16.mxu0 0
      %3282 = vmatmul.mubr.bf16.gmra.mrb[0].mxu0 %v3001
      %v3283 = vpop.f32.mrb[0].mxu0
      %v3284 = vadd.f32 0.0, %v3283
      %v3285 = vpop.f32.mrb[0].mxu0
      %v3286 = vpop.f32.mrb[0].mxu0
      %v3287 = vadd.f32 0.0, %v3286
      %v3288 = vpop.f32.mrb[0].mxu0
      %3289 = vmatprep.mubr.bf16.mxu0 0
      %3290 = vmatmul.mubr.bf16.gmra.mrb[0].mxu0 %v3004
      %v3291 = vpop.f32.mrb[0].mxu0
      %v3292 = vadd.f32 0.0, %v3291
      %v3293 = vpop.f32.mrb[0].mxu0
      %v3294 = vpop.f32.mrb[0].mxu0
      %v3295 = vadd.f32 0.0, %v3294
      %v3296 = vpop.f32.mrb[0].mxu0
      %3297 = vdwg.mxu0
      %v3298 = vadd.f32 %v2838, %v3044
      %v3299 = vadd.f32 %v2839, %v3047
      %v3300 = vadd.f32 %v2840, %v3052
      %v3301 = vadd.f32 %v2841, %v3055
      %v3302 = vadd.f32 %v2842, %v3060
      %v3303 = vadd.f32 %v2843, %v3063
      %v3304 = vadd.f32 %v2844, %v3068
      %v3305 = vadd.f32 %v2845, %v3071
      %v3306 = vadd.f32 %v2846, %v3076
      %v3307 = vadd.f32 %v2847, %v3079
      %v3308 = vadd.f32 %v2848, %v3084
      %v3309 = vadd.f32 %v2849, %v3087
      %v3310 = vadd.f32 %v2850, %v3092
      %v3311 = vadd.f32 %v2851, %v3095
      %v3312 = vadd.f32 %v2852, %v3100
      %v3313 = vadd.f32 %v2853, %v3103
      %v3314 = vadd.f32 %v2854, %v3108
      %v3315 = vadd.f32 %v2855, %v3111
      %v3316 = vadd.f32 %v2856, %v3116
      %v3317 = vadd.f32 %v2857, %v3119
      %v3318 = vadd.f32 %v2858, %v3124
      %v3319 = vadd.f32 %v2859, %v3127
      %v3320 = vadd.f32 %v2860, %v3132
      %v3321 = vadd.f32 %v2861, %v3135
      %v3322 = vadd.f32 %v2862, %v3140
      %v3323 = vadd.f32 %v2863, %v3143
      %v3324 = vadd.f32 %v2864, %v3148
      %v3325 = vadd.f32 %v2865, %v3151
      %v3326 = vadd.f32 %v2866, %v3156
      %v3327 = vadd.f32 %v2867, %v3159
      %v3328 = vadd.f32 %v2868, %v3164
      %v3329 = vadd.f32 %v2869, %v3167
      %v3330 = vadd.f32 %v2870, %v3172
      %v3331 = vadd.f32 %v2871, %v3175
      %v3332 = vadd.f32 %v2872, %v3180
      %v3333 = vadd.f32 %v2873, %v3183
      %v3334 = vadd.f32 %v2874, %v3188
      %v3335 = vadd.f32 %v2875, %v3191
      %v3336 = vadd.f32 %v2876, %v3196
      %v3337 = vadd.f32 %v2877, %v3199
      %v3338 = vadd.f32 %v2878, %v3204
      %v3339 = vadd.f32 %v2879, %v3207
      %v3340 = vadd.f32 %v2880, %v3212
      %v3341 = vadd.f32 %v2881, %v3215
      %v3342 = vadd.f32 %v2882, %v3220
      %v3343 = vadd.f32 %v2883, %v3223
      %v3344 = vadd.f32 %v2884, %v3228
      %v3345 = vadd.f32 %v2885, %v3231
      %v3346 = vadd.f32 %v2886, %v3236
      %v3347 = vadd.f32 %v2887, %v3239
      %v3348 = vadd.f32 %v2888, %v3244
      %v3349 = vadd.f32 %v2889, %v3247
      %v3350 = vadd.f32 %v2890, %v3252
      %v3351 = vadd.f32 %v2891, %v3255
      %v3352 = vadd.f32 %v2892, %v3260
      %v3353 = vadd.f32 %v2893, %v3263
      %v3354 = vadd.f32 %v2894, %v3268
      %v3355 = vadd.f32 %v2895, %v3271
      %v3356 = vadd.f32 %v2896, %v3276
      %v3357 = vadd.f32 %v2897, %v3279
      %v3358 = vadd.f32 %v2898, %v3284
      %v3359 = vadd.f32 %v2899, %v3287
      %v3360 = vadd.f32 %v2900, %v3292
      %v3361 = vadd.f32 %v2901, %v3295
      %3362 = vst [vmem:[#allocation2] sm:$0xff] %v3298
      %3363 = vst [vmem:[#allocation2 + $0x8] sm:$0xff] %v3299
      %3364 = vst [vmem:[#allocation2 + $0x10] sm:$0xff] %v3300
      %3365 = vst [vmem:[#allocation2 + $0x18] sm:$0xff] %v3301
      %3366 = vst [vmem:[#allocation2 + $0x20] sm:$0xff] %v3302
      %3367 = vst [vmem:[#allocation2 + $0x28] sm:$0xff] %v3303
      %3368 = vst [vmem:[#allocation2 + $0x30] sm:$0xff] %v3304
      %3369 = vst [vmem:[#allocation2 + $0x38] sm:$0xff] %v3305
      %3370 = vst [vmem:[#allocation2 + $0x40] sm:$0xff] %v3306
      %3371 = vst [vmem:[#allocation2 + $0x48] sm:$0xff] %v3307
      %3372 = vst [vmem:[#allocation2 + $0x50] sm:$0xff] %v3308
      %3373 = vst [vmem:[#allocation2 + $0x58] sm:$0xff] %v3309
      %3374 = vst [vmem:[#allocation2 + $0x60] sm:$0xff] %v3310
      %3375 = vst [vmem:[#allocation2 + $0x68] sm:$0xff] %v3311
      %3376 = vst [vmem:[#allocation2 + $0x70] sm:$0xff] %v3312
      %3377 = vst [vmem:[#allocation2 + $0x78] sm:$0xff] %v3313
      %3378 = vst [vmem:[#allocation2 + $0x80] sm:$0xff] %v3314
      %3379 = vst [vmem:[#allocation2 + $0x88] sm:$0xff] %v3315
      %3380 = vst [vmem:[#allocation2 + $0x90] sm:$0xff] %v3316
      %3381 = vst [vmem:[#allocation2 + $0x98] sm:$0xff] %v3317
      %3382 = vst [vmem:[#allocation2 + $0xa0] sm:$0xff] %v3318
      %3383 = vst [vmem:[#allocation2 + $0xa8] sm:$0xff] %v3319
      %3384 = vst [vmem:[#allocation2 + $0xb0] sm:$0xff] %v3320
      %3385 = vst [vmem:[#allocation2 + $0xb8] sm:$0xff] %v3321
      %3386 = vst [vmem:[#allocation2 + $0xc0] sm:$0xff] %v3322
      %3387 = vst [vmem:[#allocation2 + $0xc8] sm:$0xff] %v3323
      %3388 = vst [vmem:[#allocation2 + $0xd0] sm:$0xff] %v3324
      %3389 = vst [vmem:[#allocation2 + $0xd8] sm:$0xff] %v3325
      %3390 = vst [vmem:[#allocation2 + $0xe0] sm:$0xff] %v3326
      %3391 = vst [vmem:[#allocation2 + $0xe8] sm:$0xff] %v3327
      %3392 = vst [vmem:[#allocation2 + $0xf0] sm:$0xff] %v3328
      %3393 = vst [vmem:[#allocation2 + $0xf8] sm:$0xff] %v3329
      %3394 = vst [vmem:[#allocation2 + $0x100] sm:$0xff] %v3330
      %3395 = vst [vmem:[#allocation2 + $0x108] sm:$0xff] %v3331
      %3396 = vst [vmem:[#allocation2 + $0x110] sm:$0xff] %v3332
      %3397 = vst [vmem:[#allocation2 + $0x118] sm:$0xff] %v3333
      %3398 = vst [vmem:[#allocation2 + $0x120] sm:$0xff] %v3334
      %3399 = vst [vmem:[#allocation2 + $0x128] sm:$0xff] %v3335
      %3400 = vst [vmem:[#allocation2 + $0x130] sm:$0xff] %v3336
      %3401 = vst [vmem:[#allocation2 + $0x138] sm:$0xff] %v3337
      %3402 = vst [vmem:[#allocation2 + $0x140] sm:$0xff] %v3338
      %3403 = vst [vmem:[#allocation2 + $0x148] sm:$0xff] %v3339
      %3404 = vst [vmem:[#allocation2 + $0x150] sm:$0xff] %v3340
      %3405 = vst [vmem:[#allocation2 + $0x158] sm:$0xff] %v3341
      %3406 = vst [vmem:[#allocation2 + $0x160] sm:$0xff] %v3342
      %3407 = vst [vmem:[#allocation2 + $0x168] sm:$0xff] %v3343
      %3408 = vst [vmem:[#allocation2 + $0x170] sm:$0xff] %v3344
      %3409 = vst [vmem:[#allocation2 + $0x178] sm:$0xff] %v3345
      %3410 = vst [vmem:[#allocation2 + $0x180] sm:$0xff] %v3346
      %3411 = vst [vmem:[#allocation2 + $0x188] sm:$0xff] %v3347
      %3412 = vst [vmem:[#allocation2 + $0x190] sm:$0xff] %v3348
      %3413 = vst [vmem:[#allocation2 + $0x198] sm:$0xff] %v3349
      %3414 = vst [vmem:[#allocation2 + $0x1a0] sm:$0xff] %v3350
      %3415 = vst [vmem:[#allocation2 + $0x1a8] sm:$0xff] %v3351
      %3416 = vst [vmem:[#allocation2 + $0x1b0] sm:$0xff] %v3352
      %3417 = vst [vmem:[#allocation2 + $0x1b8] sm:$0xff] %v3353
      %3418 = vst [vmem:[#allocation2 + $0x1c0] sm:$0xff] %v3354
      %3419 = vst [vmem:[#allocation2 + $0x1c8] sm:$0xff] %v3355
      %3420 = vst [vmem:[#allocation2 + $0x1d0] sm:$0xff] %v3356
      %3421 = vst [vmem:[#allocation2 + $0x1d8] sm:$0xff] %v3357
      %3422 = vst [vmem:[#allocation2 + $0x1e0] sm:$0xff] %v3358
      %3423 = vst [vmem:[#allocation2 + $0x1e8] sm:$0xff] %v3359
      %3424 = vst [vmem:[#allocation2 + $0x1f0] sm:$0xff] %v3360
      %3425 = vst [vmem:[#allocation2 + $0x1f8] sm:$0xff] %v3361
      %v3506 = vrot.slane %v2726, 1
      %v3507 = vrot.slane %v2727, 1
      %v3508 = vsel %vm1066, %v3506, %v3507
      %v3509 = vrot.slane %v2728, 1
      %v3510 = vsel %vm1066, %v3507, %v3509
      %v3511 = vrot.slane %v2729, 1
      %v3512 = vsel %vm1066, %v3509, %v3511
      %v3513 = vrot.slane %v2730, 1
      %v3514 = vsel %vm1066, %v3511, %v3513
      %v3515 = vrot.slane %v2731, 1
      %v3516 = vrot.slane %v2732, 1
      %v3517 = vsel %vm1066, %v3515, %v3516
      %v3518 = vrot.slane %v2733, 1
      %v3519 = vsel %vm1066, %v3516, %v3518
      %v3520 = vrot.slane %v2734, 1
      %v3521 = vsel %vm1066, %v3518, %v3520
      %v3522 = vrot.slane %v2735, 1
      %v3523 = vsel %vm1066, %v3520, %v3522
      %v3524 = vrot.slane %v2736, 1
      %v3525 = vrot.slane %v2737, 1
      %v3526 = vsel %vm1066, %v3524, %v3525
      %v3527 = vrot.slane %v2738, 1
      %v3528 = vsel %vm1066, %v3525, %v3527
      %v3529 = vrot.slane %v2739, 1
      %v3530 = vsel %vm1066, %v3527, %v3529
      %v3531 = vrot.slane %v2740, 1
      %v3532 = vsel %vm1066, %v3529, %v3531
      %v3533 = vrot.slane %v2741, 1
      %v3534 = vrot.slane %v2742, 1
      %v3535 = vsel %vm1066, %v3533, %v3534
      %v3536 = vrot.slane %v2743, 1
      %v3537 = vsel %vm1066, %v3534, %v3536
      %v3538 = vrot.slane %v2744, 1
      %v3539 = vsel %vm1066, %v3536, %v3538
      %v3540 = vrot.slane %v2745, 1
      %v3541 = vsel %vm1066, %v3538, %v3540
      %v3542 = vrot.slane %v2746, 1
      %v3543 = vrot.slane %v2747, 1
      %v3544 = vsel %vm1066, %v3542, %v3543
      %v3545 = vrot.slane %v2748, 1
      %v3546 = vsel %vm1066, %v3543, %v3545
      %v3547 = vrot.slane %v2749, 1
      %v3548 = vsel %vm1066, %v3545, %v3547
      %v3549 = vrot.slane %v2750, 1
      %v3550 = vsel %vm1066, %v3547, %v3549
      %v3551 = vrot.slane %v2751, 1
      %v3552 = vrot.slane %v2752, 1
      %v3553 = vsel %vm1066, %v3551, %v3552
      %v3554 = vrot.slane %v2753, 1
      %v3555 = vsel %vm1066, %v3552, %v3554
      %v3556 = vrot.slane %v2754, 1
      %v3557 = vsel %vm1066, %v3554, %v3556
      %v3558 = vrot.slane %v2755, 1
      %v3559 = vsel %vm1066, %v3556, %v3558
      %v3560 = vrot.slane %v2756, 1
      %v3561 = vrot.slane %v2757, 1
      %v3562 = vsel %vm1066, %v3560, %v3561
      %v3563 = vrot.slane %v2758, 1
      %v3564 = vsel %vm1066, %v3561, %v3563
      %v3565 = vrot.slane %v2759, 1
      %v3566 = vsel %vm1066, %v3563, %v3565
      %v3567 = vrot.slane %v2760, 1
      %v3568 = vsel %vm1066, %v3565, %v3567
      %v3569 = vrot.slane %v2761, 1
      %v3570 = vrot.slane %v2762, 1
      %v3571 = vsel %vm1066, %v3569, %v3570
      %v3572 = vrot.slane %v2763, 1
      %v3573 = vsel %vm1066, %v3570, %v3572
      %v3574 = vrot.slane %v2764, 1
      %v3575 = vsel %vm1066, %v3572, %v3574
      %v3576 = vrot.slane %v2765, 1
      %v3577 = vsel %vm1066, %v3574, %v3576
      %v3578 = vrot.slane %v2766, 1
      %v3579 = vrot.slane %v2767, 1
      %v3580 = vsel %vm1066, %v3578, %v3579
      %v3581 = vrot.slane %v2768, 1
      %v3582 = vsel %vm1066, %v3579, %v3581
      %v3583 = vrot.slane %v2769, 1
      %v3584 = vsel %vm1066, %v3581, %v3583
      %v3585 = vrot.slane %v2770, 1
      %v3586 = vsel %vm1066, %v3583, %v3585
      %v3587 = vrot.slane %v2771, 1
      %v3588 = vrot.slane %v2772, 1
      %v3589 = vsel %vm1066, %v3587, %v3588
      %v3590 = vrot.slane %v2773, 1
      %v3591 = vsel %vm1066, %v3588, %v3590
      %v3592 = vrot.slane %v2774, 1
      %v3593 = vsel %vm1066, %v3590, %v3592
      %v3594 = vrot.slane %v2775, 1
      %v3595 = vsel %vm1066, %v3592, %v3594
      %v3596 = vrot.slane %v2776, 1
      %v3597 = vrot.slane %v2777, 1
      %v3598 = vsel %vm1066, %v3596, %v3597
      %v3599 = vrot.slane %v2778, 1
      %v3600 = vsel %vm1066, %v3597, %v3599
      %v3601 = vrot.slane %v2779, 1
      %v3602 = vsel %vm1066, %v3599, %v3601
      %v3603 = vrot.slane %v2780, 1
      %v3604 = vsel %vm1066, %v3601, %v3603
      %v3605 = vrot.slane %v2781, 1
      %v3606 = vrot.slane %v2782, 1
      %v3607 = vsel %vm1066, %v3605, %v3606
      %v3608 = vrot.slane %v2783, 1
      %v3609 = vsel %vm1066, %v3606, %v3608
      %v3610 = vrot.slane %v2784, 1
      %v3611 = vsel %vm1066, %v3608, %v3610
      %v3612 = vrot.slane %v2785, 1
      %v3613 = vsel %vm1066, %v3610, %v3612
      %v3614 = vrot.slane %v2786, 1
      %v3615 = vrot.slane %v2787, 1
      %v3616 = vsel %vm1066, %v3614, %v3615
      %v3617 = vrot.slane %v2788, 1
      %v3618 = vsel %vm1066, %v3615, %v3617
      %v3619 = vrot.slane %v2789, 1
      %v3620 = vsel %vm1066, %v3617, %v3619
      %v3621 = vrot.slane %v2790, 1
      %v3622 = vsel %vm1066, %v3619, %v3621
      %v3623 = vrot.slane %v2791, 1
      %v3624 = vrot.slane %v2792, 1
      %v3625 = vsel %vm1066, %v3623, %v3624
      %v3626 = vrot.slane %v2793, 1
      %v3627 = vsel %vm1066, %v3624, %v3626
      %v3628 = vrot.slane %v2794, 1
      %v3629 = vsel %vm1066, %v3626, %v3628
      %v3630 = vrot.slane %v2795, 1
      %v3631 = vsel %vm1066, %v3628, %v3630
      %v3632 = vrot.slane %v2796, 1
      %v3633 = vrot.slane %v2797, 1
      %v3634 = vsel %vm1066, %v3632, %v3633
      %v3635 = vrot.slane %v2798, 1
      %v3636 = vsel %vm1066, %v3633, %v3635
      %v3637 = vrot.slane %v2799, 1
      %v3638 = vsel %vm1066, %v3635, %v3637
      %v3639 = vrot.slane %v2800, 1
      %v3640 = vsel %vm1066, %v3637, %v3639
      %v3641 = vrot.slane %v2801, 1
      %v3642 = vrot.slane %v2802, 1
      %v3643 = vsel %vm1066, %v3641, %v3642
      %v3644 = vrot.slane %v2803, 1
      %v3645 = vsel %vm1066, %v3642, %v3644
      %v3646 = vrot.slane %v2804, 1
      %v3647 = vsel %vm1066, %v3644, %v3646
      %v3648 = vrot.slane %v2805, 1
      %v3649 = vsel %vm1066, %v3646, %v3648
      %v3714 = vpack.c.bf16 %v3510, %v3508
      %v3715 = vpack.c.bf16 %v3514, %v3512
      %v3716 = vpack.c.bf16 %v3519, %v3517
      %v3717 = vpack.c.bf16 %v3523, %v3521
      %v3718 = vpack.c.bf16 %v3528, %v3526
      %v3719 = vpack.c.bf16 %v3532, %v3530
      %v3720 = vpack.c.bf16 %v3537, %v3535
      %v3721 = vpack.c.bf16 %v3541, %v3539
      %v3722 = vpack.c.bf16 %v3546, %v3544
      %v3723 = vpack.c.bf16 %v3550, %v3548
      %v3724 = vpack.c.bf16 %v3555, %v3553
      %v3725 = vpack.c.bf16 %v3559, %v3557
      %v3726 = vpack.c.bf16 %v3564, %v3562
      %v3727 = vpack.c.bf16 %v3568, %v3566
      %v3728 = vpack.c.bf16 %v3573, %v3571
      %v3729 = vpack.c.bf16 %v3577, %v3575
      %v3730 = vpack.c.bf16 %v3582, %v3580
      %v3731 = vpack.c.bf16 %v3586, %v3584
      %v3732 = vpack.c.bf16 %v3591, %v3589
      %v3733 = vpack.c.bf16 %v3595, %v3593
      %v3734 = vpack.c.bf16 %v3600, %v3598
      %v3735 = vpack.c.bf16 %v3604, %v3602
      %v3736 = vpack.c.bf16 %v3609, %v3607
      %v3737 = vpack.c.bf16 %v3613, %v3611
      %v3738 = vpack.c.bf16 %v3618, %v3616
      %v3739 = vpack.c.bf16 %v3622, %v3620
      %v3740 = vpack.c.bf16 %v3627, %v3625
      %v3741 = vpack.c.bf16 %v3631, %v3629
      %v3742 = vpack.c.bf16 %v3636, %v3634
      %v3743 = vpack.c.bf16 %v3640, %v3638
      %v3744 = vpack.c.bf16 %v3645, %v3643
      %v3745 = vpack.c.bf16 %v3649, %v3647
      %v3746 = vld [vmem:[#allocation2] sm:$0xff]
      %v3747 = vld [vmem:[#allocation2 + $0x8] sm:$0xff]
      %v3748 = vld [vmem:[#allocation2 + $0x10] sm:$0xff]
      %v3749 = vld [vmem:[#allocation2 + $0x18] sm:$0xff]
      %v3750 = vld [vmem:[#allocation2 + $0x20] sm:$0xff]
      %v3751 = vld [vmem:[#allocation2 + $0x28] sm:$0xff]
      %v3752 = vld [vmem:[#allocation2 + $0x30] sm:$0xff]
      %v3753 = vld [vmem:[#allocation2 + $0x38] sm:$0xff]
      %v3754 = vld [vmem:[#allocation2 + $0x40] sm:$0xff]
      %v3755 = vld [vmem:[#allocation2 + $0x48] sm:$0xff]
      %v3756 = vld [vmem:[#allocation2 + $0x50] sm:$0xff]
      %v3757 = vld [vmem:[#allocation2 + $0x58] sm:$0xff]
      %v3758 = vld [vmem:[#allocation2 + $0x60] sm:$0xff]
      %v3759 = vld [vmem:[#allocation2 + $0x68] sm:$0xff]
      %v3760 = vld [vmem:[#allocation2 + $0x70] sm:$0xff]
      %v3761 = vld [vmem:[#allocation2 + $0x78] sm:$0xff]
      %v3762 = vld [vmem:[#allocation2 + $0x80] sm:$0xff]
      %v3763 = vld [vmem:[#allocation2 + $0x88] sm:$0xff]
      %v3764 = vld [vmem:[#allocation2 + $0x90] sm:$0xff]
      %v3765 = vld [vmem:[#allocation2 + $0x98] sm:$0xff]
      %v3766 = vld [vmem:[#allocation2 + $0xa0] sm:$0xff]
      %v3767 = vld [vmem:[#allocation2 + $0xa8] sm:$0xff]
      %v3768 = vld [vmem:[#allocation2 + $0xb0] sm:$0xff]
      %v3769 = vld [vmem:[#allocation2 + $0xb8] sm:$0xff]
      %v3770 = vld [vmem:[#allocation2 + $0xc0] sm:$0xff]
      %v3771 = vld [vmem:[#allocation2 + $0xc8] sm:$0xff]
      %v3772 = vld [vmem:[#allocation2 + $0xd0] sm:$0xff]
      %v3773 = vld [vmem:[#allocation2 + $0xd8] sm:$0xff]
      %v3774 = vld [vmem:[#allocation2 + $0xe0] sm:$0xff]
      %v3775 = vld [vmem:[#allocation2 + $0xe8] sm:$0xff]
      %v3776 = vld [vmem:[#allocation2 + $0xf0] sm:$0xff]
      %v3777 = vld [vmem:[#allocation2 + $0xf8] sm:$0xff]
      %v3778 = vld [vmem:[#allocation2 + $0x100] sm:$0xff]
      %v3779 = vld [vmem:[#allocation2 + $0x108] sm:$0xff]
      %v3780 = vld [vmem:[#allocation2 + $0x110] sm:$0xff]
      %v3781 = vld [vmem:[#allocation2 + $0x118] sm:$0xff]
      %v3782 = vld [vmem:[#allocation2 + $0x120] sm:$0xff]
      %v3783 = vld [vmem:[#allocation2 + $0x128] sm:$0xff]
      %v3784 = vld [vmem:[#allocation2 + $0x130] sm:$0xff]
      %v3785 = vld [vmem:[#allocation2 + $0x138] sm:$0xff]
      %v3786 = vld [vmem:[#allocation2 + $0x140] sm:$0xff]
      %v3787 = vld [vmem:[#allocation2 + $0x148] sm:$0xff]
      %v3788 = vld [vmem:[#allocation2 + $0x150] sm:$0xff]
      %v3789 = vld [vmem:[#allocation2 + $0x158] sm:$0xff]
      %v3790 = vld [vmem:[#allocation2 + $0x160] sm:$0xff]
      %v3791 = vld [vmem:[#allocation2 + $0x168] sm:$0xff]
      %v3792 = vld [vmem:[#allocation2 + $0x170] sm:$0xff]
      %v3793 = vld [vmem:[#allocation2 + $0x178] sm:$0xff]
      %v3794 = vld [vmem:[#allocation2 + $0x180] sm:$0xff]
      %v3795 = vld [vmem:[#allocation2 + $0x188] sm:$0xff]
      %v3796 = vld [vmem:[#allocation2 + $0x190] sm:$0xff]
      %v3797 = vld [vmem:[#allocation2 + $0x198] sm:$0xff]
      %v3798 = vld [vmem:[#allocation2 + $0x1a0] sm:$0xff]
      %v3799 = vld [vmem:[#allocation2 + $0x1a8] sm:$0xff]
      %v3800 = vld [vmem:[#allocation2 + $0x1b0] sm:$0xff]
      %v3801 = vld [vmem:[#allocation2 + $0x1b8] sm:$0xff]
      %v3802 = vld [vmem:[#allocation2 + $0x1c0] sm:$0xff]
      %v3803 = vld [vmem:[#allocation2 + $0x1c8] sm:$0xff]
      %v3804 = vld [vmem:[#allocation2 + $0x1d0] sm:$0xff]
      %v3805 = vld [vmem:[#allocation2 + $0x1d8] sm:$0xff]
      %v3806 = vld [vmem:[#allocation2 + $0x1e0] sm:$0xff]
      %v3807 = vld [vmem:[#allocation2 + $0x1e8] sm:$0xff]
      %v3808 = vld [vmem:[#allocation2 + $0x1f0] sm:$0xff]
      %v3809 = vld [vmem:[#allocation2 + $0x1f8] sm:$0xff]
      %s3810 = scalar_lea.vmem %s1, 32
      %v3811 = vld [vmem:[%s3810] sm:$0xf]
      %v3812 = vld [vmem:[%s3810 + $0x4] sm:$0x3]
      %v3815 = vunpack.c.l.b16 %v3811
      %v3816 = vunpack.c.l.b16 %v3812
      %v3817 = vpack.c.b16 %v3816, %v3815
      %v3819 = vsel %vm468, %v3714, 0
      %v3822 = vsel %vm468, %v3715, 0
      %v3825 = vsel %vm468, %v3716, 0
      %v3828 = vsel %vm468, %v3717, 0
      %v3831 = vsel %vm468, %v3718, 0
      %v3834 = vsel %vm468, %v3719, 0
      %v3837 = vsel %vm468, %v3720, 0
      %v3840 = vsel %vm468, %v3721, 0
      %v3843 = vsel %vm468, %v3722, 0
      %v3846 = vsel %vm468, %v3723, 0
      %v3849 = vsel %vm468, %v3724, 0
      %v3852 = vsel %vm468, %v3725, 0
      %v3855 = vsel %vm468, %v3726, 0
      %v3858 = vsel %vm468, %v3727, 0
      %v3861 = vsel %vm468, %v3728, 0
      %v3864 = vsel %vm468, %v3729, 0
      %v3867 = vsel %vm468, %v3730, 0
      %v3870 = vsel %vm468, %v3731, 0
      %v3873 = vsel %vm468, %v3732, 0
      %v3876 = vsel %vm468, %v3733, 0
      %v3879 = vsel %vm468, %v3734, 0
      %v3882 = vsel %vm468, %v3735, 0
      %v3885 = vsel %vm468, %v3736, 0
      %v3888 = vsel %vm468, %v3737, 0
      %v3891 = vsel %vm468, %v3738, 0
      %v3894 = vsel %vm468, %v3739, 0
      %v3897 = vsel %vm468, %v3740, 0
      %v3900 = vsel %vm468, %v3741, 0
      %v3903 = vsel %vm468, %v3742, 0
      %v3906 = vsel %vm468, %v3743, 0
      %v3909 = vsel %vm468, %v3744, 0
      %v3912 = vsel %vm468, %v3745, 0
      %v3915 = vsel %vm565, %v3817, 0
      %3917 = vmatprep.subr.bf16.mxu0 0
      %3918 = vmatpush1.bf16.msra.mxu0 %v3915
      %3919 = vmatprep.subr.bf16.mxu0 0
      %3920 = vmatpush1.bf16.msra.mxu0 0
      %3921 = vmatprep.subr.bf16.mxu0 0
      %3922 = vmatpush1.bf16.msra.mxu0 0
      %3923 = vmatprep.subr.bf16.mxu0 0
      %3924 = vmatpush1.bf16.msra.mxu0 0
      %3925 = vmatprep.subr.bf16.mxu0 0
      %3926 = vmatpush1.bf16.msra.mxu0 0
      %3927 = vmatprep.subr.bf16.mxu0 0
      %3928 = vmatpush1.bf16.msra.mxu0 0
      %3929 = vmatprep.subr.bf16.mxu0 0
      %3930 = vmatpush1.bf16.msra.mxu0 0
      %3931 = vmatprep.subr.bf16.mxu0 0
      %3932 = vmatpush1.bf16.msra.mxu0 0
      %3933 = vmatprep.subr.bf16.mxu0 0
      %3934 = vmatpush1.bf16.msra.mxu0 0
      %3935 = vmatprep.subr.bf16.mxu0 0
      %3936 = vmatpush1.bf16.msra.mxu0 0
      %3937 = vmatprep.subr.bf16.mxu0 0
      %3938 = vmatpush1.bf16.msra.mxu0 0
      %3939 = vmatprep.subr.bf16.mxu0 0
      %3940 = vmatpush1.bf16.msra.mxu0 0
      %3941 = vmatprep.subr.bf16.mxu0 0
      %3942 = vmatpush1.bf16.msra.mxu0 0
      %3943 = vmatprep.subr.bf16.mxu0 0
      %3944 = vmatpush1.bf16.msra.mxu0 0
      %3945 = vmatprep.subr.bf16.mxu0 0
      %3946 = vmatpush1.bf16.msra.mxu0 0
      %3947 = vmatprep.subr.bf16.mxu0 0
      %3948 = vmatpush1.bf16.msra.mxu0 0
      %3949 = vmatprep.mubr.bf16.mxu0 0
      %3950 = vmatmul.mubr.bf16.gmra.mrb[0].mxu0 %v3819
      %v3951 = vpop.f32.mrb[0].mxu0
      %v3952 = vadd.f32 0.0, %v3951
      %v3953 = vpop.f32.mrb[0].mxu0
      %v3954 = vpop.f32.mrb[0].mxu0
      %v3955 = vadd.f32 0.0, %v3954
      %v3956 = vpop.f32.mrb[0].mxu0
      %3957 = vmatprep.mubr.bf16.mxu0 0
      %3958 = vmatmul.mubr.bf16.gmra.mrb[0].mxu0 %v3822
      %v3959 = vpop.f32.mrb[0].mxu0
      %v3960 = vadd.f32 0.0, %v3959
      %v3961 = vpop.f32.mrb[0].mxu0
      %v3962 = vpop.f32.mrb[0].mxu0
      %v3963 = vadd.f32 0.0, %v3962
      %v3964 = vpop.f32.mrb[0].mxu0
      %3965 = vmatprep.mubr.bf16.mxu0 0
      %3966 = vmatmul.mubr.bf16.gmra.mrb[0].mxu0 %v3825
      %v3967 = vpop.f32.mrb[0].mxu0
      %v3968 = vadd.f32 0.0, %v3967
      %v3969 = vpop.f32.mrb[0].mxu0
      %v3970 = vpop.f32.mrb[0].mxu0
      %v3971 = vadd.f32 0.0, %v3970
      %v3972 = vpop.f32.mrb[0].mxu0
      %3973 = vmatprep.mubr.bf16.mxu0 0
      %3974 = vmatmul.mubr.bf16.gmra.mrb[0].mxu0 %v3828
      %v3975 = vpop.f32.mrb[0].mxu0
      %v3976 = vadd.f32 0.0, %v3975
      %v3977 = vpop.f32.mrb[0].mxu0
      %v3978 = vpop.f32.mrb[0].mxu0
      %v3979 = vadd.f32 0.0, %v3978
      %v3980 = vpop.f32.mrb[0].mxu0
      %3981 = vmatprep.mubr.bf16.mxu0 0
      %3982 = vmatmul.mubr.bf16.gmra.mrb[0].mxu0 %v3831
      %v3983 = vpop.f32.mrb[0].mxu0
      %v3984 = vadd.f32 0.0, %v3983
      %v3985 = vpop.f32.mrb[0].mxu0
      %v3986 = vpop.f32.mrb[0].mxu0
      %v3987 = vadd.f32 0.0, %v3986
      %v3988 = vpop.f32.mrb[0].mxu0
      %3989 = vmatprep.mubr.bf16.mxu0 0
      %3990 = vmatmul.mubr.bf16.gmra.mrb[0].mxu0 %v3834
      %v3991 = vpop.f32.mrb[0].mxu0
      %v3992 = vadd.f32 0.0, %v3991
      %v3993 = vpop.f32.mrb[0].mxu0
      %v3994 = vpop.f32.mrb[0].mxu0
      %v3995 = vadd.f32 0.0, %v3994
      %v3996 = vpop.f32.mrb[0].mxu0
      %3997 = vmatprep.mubr.bf16.mxu0 0
      %3998 = vmatmul.mubr.bf16.gmra.mrb[0].mxu0 %v3837
      %v3999 = vpop.f32.mrb[0].mxu0
      %v4000 = vadd.f32 0.0, %v3999
      %v4001 = vpop.f32.mrb[0].mxu0
      %v4002 = vpop.f32.mrb[0].mxu0
      %v4003 = vadd.f32 0.0, %v4002
      %v4004 = vpop.f32.mrb[0].mxu0
      %4005 = vmatprep.mubr.bf16.mxu0 0
      %4006 = vmatmul.mubr.bf16.gmra.mrb[0].mxu0 %v3840
      %v4007 = vpop.f32.mrb[0].mxu0
      %v4008 = vadd.f32 0.0, %v4007
      %v4009 = vpop.f32.mrb[0].mxu0
      %v4010 = vpop.f32.mrb[0].mxu0
      %v4011 = vadd.f32 0.0, %v4010
      %v4012 = vpop.f32.mrb[0].mxu0
      %4013 = vmatprep.mubr.bf16.mxu0 0
      %4014 = vmatmul.mubr.bf16.gmra.mrb[0].mxu0 %v3843
      %v4015 = vpop.f32.mrb[0].mxu0
      %v4016 = vadd.f32 0.0, %v4015
      %v4017 = vpop.f32.mrb[0].mxu0
      %v4018 = vpop.f32.mrb[0].mxu0
      %v4019 = vadd.f32 0.0, %v4018
      %v4020 = vpop.f32.mrb[0].mxu0
      %4021 = vmatprep.mubr.bf16.mxu0 0
      %4022 = vmatmul.mubr.bf16.gmra.mrb[0].mxu0 %v3846
      %v4023 = vpop.f32.mrb[0].mxu0
      %v4024 = vadd.f32 0.0, %v4023
      %v4025 = vpop.f32.mrb[0].mxu0
      %v4026 = vpop.f32.mrb[0].mxu0
      %v4027 = vadd.f32 0.0, %v4026
      %v4028 = vpop.f32.mrb[0].mxu0
      %4029 = vmatprep.mubr.bf16.mxu0 0
      %4030 = vmatmul.mubr.bf16.gmra.mrb[0].mxu0 %v3849
      %v4031 = vpop.f32.mrb[0].mxu0
      %v4032 = vadd.f32 0.0, %v4031
      %v4033 = vpop.f32.mrb[0].mxu0
      %v4034 = vpop.f32.mrb[0].mxu0
      %v4035 = vadd.f32 0.0, %v4034
      %v4036 = vpop.f32.mrb[0].mxu0
      %4037 = vmatprep.mubr.bf16.mxu0 0
      %4038 = vmatmul.mubr.bf16.gmra.mrb[0].mxu0 %v3852
      %v4039 = vpop.f32.mrb[0].mxu0
      %v4040 = vadd.f32 0.0, %v4039
      %v4041 = vpop.f32.mrb[0].mxu0
      %v4042 = vpop.f32.mrb[0].mxu0
      %v4043 = vadd.f32 0.0, %v4042
      %v4044 = vpop.f32.mrb[0].mxu0
      %4045 = vmatprep.mubr.bf16.mxu0 0
      %4046 = vmatmul.mubr.bf16.gmra.mrb[0].mxu0 %v3855
      %v4047 = vpop.f32.mrb[0].mxu0
      %v4048 = vadd.f32 0.0, %v4047
      %v4049 = vpop.f32.mrb[0].mxu0
      %v4050 = vpop.f32.mrb[0].mxu0
      %v4051 = vadd.f32 0.0, %v4050
      %v4052 = vpop.f32.mrb[0].mxu0
      %4053 = vmatprep.mubr.bf16.mxu0 0
      %4054 = vmatmul.mubr.bf16.gmra.mrb[0].mxu0 %v3858
      %v4055 = vpop.f32.mrb[0].mxu0
      %v4056 = vadd.f32 0.0, %v4055
      %v4057 = vpop.f32.mrb[0].mxu0
      %v4058 = vpop.f32.mrb[0].mxu0
      %v4059 = vadd.f32 0.0, %v4058
      %v4060 = vpop.f32.mrb[0].mxu0
      %4061 = vmatprep.mubr.bf16.mxu0 0
      %4062 = vmatmul.mubr.bf16.gmra.mrb[0].mxu0 %v3861
      %v4063 = vpop.f32.mrb[0].mxu0
      %v4064 = vadd.f32 0.0, %v4063
      %v4065 = vpop.f32.mrb[0].mxu0
      %v4066 = vpop.f32.mrb[0].mxu0
      %v4067 = vadd.f32 0.0, %v4066
      %v4068 = vpop.f32.mrb[0].mxu0
      %4069 = vmatprep.mubr.bf16.mxu0 0
      %4070 = vmatmul.mubr.bf16.gmra.mrb[0].mxu0 %v3864
      %v4071 = vpop.f32.mrb[0].mxu0
      %v4072 = vadd.f32 0.0, %v4071
      %v4073 = vpop.f32.mrb[0].mxu0
      %v4074 = vpop.f32.mrb[0].mxu0
      %v4075 = vadd.f32 0.0, %v4074
      %v4076 = vpop.f32.mrb[0].mxu0
      %4077 = vmatprep.mubr.bf16.mxu0 0
      %4078 = vmatmul.mubr.bf16.gmra.mrb[0].mxu0 %v3867
      %v4079 = vpop.f32.mrb[0].mxu0
      %v4080 = vadd.f32 0.0, %v4079
      %v4081 = vpop.f32.mrb[0].mxu0
      %v4082 = vpop.f32.mrb[0].mxu0
      %v4083 = vadd.f32 0.0, %v4082
      %v4084 = vpop.f32.mrb[0].mxu0
      %4085 = vmatprep.mubr.bf16.mxu0 0
      %4086 = vmatmul.mubr.bf16.gmra.mrb[0].mxu0 %v3870
      %v4087 = vpop.f32.mrb[0].mxu0
      %v4088 = vadd.f32 0.0, %v4087
      %v4089 = vpop.f32.mrb[0].mxu0
      %v4090 = vpop.f32.mrb[0].mxu0
      %v4091 = vadd.f32 0.0, %v4090
      %v4092 = vpop.f32.mrb[0].mxu0
      %4093 = vmatprep.mubr.bf16.mxu0 0
      %4094 = vmatmul.mubr.bf16.gmra.mrb[0].mxu0 %v3873
      %v4095 = vpop.f32.mrb[0].mxu0
      %v4096 = vadd.f32 0.0, %v4095
      %v4097 = vpop.f32.mrb[0].mxu0
      %v4098 = vpop.f32.mrb[0].mxu0
      %v4099 = vadd.f32 0.0, %v4098
      %v4100 = vpop.f32.mrb[0].mxu0
      %4101 = vmatprep.mubr.bf16.mxu0 0
      %4102 = vmatmul.mubr.bf16.gmra.mrb[0].mxu0 %v3876
      %v4103 = vpop.f32.mrb[0].mxu0
      %v4104 = vadd.f32 0.0, %v4103
      %v4105 = vpop.f32.mrb[0].mxu0
      %v4106 = vpop.f32.mrb[0].mxu0
      %v4107 = vadd.f32 0.0, %v4106
      %v4108 = vpop.f32.mrb[0].mxu0
      %4109 = vmatprep.mubr.bf16.mxu0 0
      %4110 = vmatmul.mubr.bf16.gmra.mrb[0].mxu0 %v3879
      %v4111 = vpop.f32.mrb[0].mxu0
      %v4112 = vadd.f32 0.0, %v4111
      %v4113 = vpop.f32.mrb[0].mxu0
      %v4114 = vpop.f32.mrb[0].mxu0
      %v4115 = vadd.f32 0.0, %v4114
      %v4116 = vpop.f32.mrb[0].mxu0
      %4117 = vmatprep.mubr.bf16.mxu0 0
      %4118 = vmatmul.mubr.bf16.gmra.mrb[0].mxu0 %v3882
      %v4119 = vpop.f32.mrb[0].mxu0
      %v4120 = vadd.f32 0.0, %v4119
      %v4121 = vpop.f32.mrb[0].mxu0
      %v4122 = vpop.f32.mrb[0].mxu0
      %v4123 = vadd.f32 0.0, %v4122
      %v4124 = vpop.f32.mrb[0].mxu0
      %4125 = vmatprep.mubr.bf16.mxu0 0
      %4126 = vmatmul.mubr.bf16.gmra.mrb[0].mxu0 %v3885
      %v4127 = vpop.f32.mrb[0].mxu0
      %v4128 = vadd.f32 0.0, %v4127
      %v4129 = vpop.f32.mrb[0].mxu0
      %v4130 = vpop.f32.mrb[0].mxu0
      %v4131 = vadd.f32 0.0, %v4130
      %v4132 = vpop.f32.mrb[0].mxu0
      %4133 = vmatprep.mubr.bf16.mxu0 0
      %4134 = vmatmul.mubr.bf16.gmra.mrb[0].mxu0 %v3888
      %v4135 = vpop.f32.mrb[0].mxu0
      %v4136 = vadd.f32 0.0, %v4135
      %v4137 = vpop.f32.mrb[0].mxu0
      %v4138 = vpop.f32.mrb[0].mxu0
      %v4139 = vadd.f32 0.0, %v4138
      %v4140 = vpop.f32.mrb[0].mxu0
      %4141 = vmatprep.mubr.bf16.mxu0 0
      %4142 = vmatmul.mubr.bf16.gmra.mrb[0].mxu0 %v3891
      %v4143 = vpop.f32.mrb[0].mxu0
      %v4144 = vadd.f32 0.0, %v4143
      %v4145 = vpop.f32.mrb[0].mxu0
      %v4146 = vpop.f32.mrb[0].mxu0
      %v4147 = vadd.f32 0.0, %v4146
      %v4148 = vpop.f32.mrb[0].mxu0
      %4149 = vmatprep.mubr.bf16.mxu0 0
      %4150 = vmatmul.mubr.bf16.gmra.mrb[0].mxu0 %v3894
      %v4151 = vpop.f32.mrb[0].mxu0
      %v4152 = vadd.f32 0.0, %v4151
      %v4153 = vpop.f32.mrb[0].mxu0
      %v4154 = vpop.f32.mrb[0].mxu0
      %v4155 = vadd.f32 0.0, %v4154
      %v4156 = vpop.f32.mrb[0].mxu0
      %4157 = vmatprep.mubr.bf16.mxu0 0
      %4158 = vmatmul.mubr.bf16.gmra.mrb[0].mxu0 %v3897
      %v4159 = vpop.f32.mrb[0].mxu0
      %v4160 = vadd.f32 0.0, %v4159
      %v4161 = vpop.f32.mrb[0].mxu0
      %v4162 = vpop.f32.mrb[0].mxu0
      %v4163 = vadd.f32 0.0, %v4162
      %v4164 = vpop.f32.mrb[0].mxu0
      %4165 = vmatprep.mubr.bf16.mxu0 0
      %4166 = vmatmul.mubr.bf16.gmra.mrb[0].mxu0 %v3900
      %v4167 = vpop.f32.mrb[0].mxu0
      %v4168 = vadd.f32 0.0, %v4167
      %v4169 = vpop.f32.mrb[0].mxu0
      %v4170 = vpop.f32.mrb[0].mxu0
      %v4171 = vadd.f32 0.0, %v4170
      %v4172 = vpop.f32.mrb[0].mxu0
      %4173 = vmatprep.mubr.bf16.mxu0 0
      %4174 = vmatmul.mubr.bf16.gmra.mrb[0].mxu0 %v3903
      %v4175 = vpop.f32.mrb[0].mxu0
      %v4176 = vadd.f32 0.0, %v4175
      %v4177 = vpop.f32.mrb[0].mxu0
      %v4178 = vpop.f32.mrb[0].mxu0
      %v4179 = vadd.f32 0.0, %v4178
      %v4180 = vpop.f32.mrb[0].mxu0
      %4181 = vmatprep.mubr.bf16.mxu0 0
      %4182 = vmatmul.mubr.bf16.gmra.mrb[0].mxu0 %v3906
      %v4183 = vpop.f32.mrb[0].mxu0
      %v4184 = vadd.f32 0.0, %v4183
      %v4185 = vpop.f32.mrb[0].mxu0
      %v4186 = vpop.f32.mrb[0].mxu0
      %v4187 = vadd.f32 0.0, %v4186
      %v4188 = vpop.f32.mrb[0].mxu0
      %4189 = vmatprep.mubr.bf16.mxu0 0
      %4190 = vmatmul.mubr.bf16.gmra.mrb[0].mxu0 %v3909
      %v4191 = vpop.f32.mrb[0].mxu0
      %v4192 = vadd.f32 0.0, %v4191
      %v4193 = vpop.f32.mrb[0].mxu0
      %v4194 = vpop.f32.mrb[0].mxu0
      %v4195 = vadd.f32 0.0, %v4194
      %v4196 = vpop.f32.mrb[0].mxu0
      %4197 = vmatprep.mubr.bf16.mxu0 0
      %4198 = vmatmul.mubr.bf16.gmra.mrb[0].mxu0 %v3912
      %v4199 = vpop.f32.mrb[0].mxu0
      %v4200 = vadd.f32 0.0, %v4199
      %v4201 = vpop.f32.mrb[0].mxu0
      %v4202 = vpop.f32.mrb[0].mxu0
      %v4203 = vadd.f32 0.0, %v4202
      %v4204 = vpop.f32.mrb[0].mxu0
      %4205 = vdwg.mxu0
      %v4206 = vadd.f32 %v3746, %v3952
      %v4207 = vadd.f32 %v3747, %v3955
      %v4208 = vadd.f32 %v3748, %v3960
      %v4209 = vadd.f32 %v3749, %v3963
      %v4210 = vadd.f32 %v3750, %v3968
      %v4211 = vadd.f32 %v3751, %v3971
      %v4212 = vadd.f32 %v3752, %v3976
      %v4213 = vadd.f32 %v3753, %v3979
      %v4214 = vadd.f32 %v3754, %v3984
      %v4215 = vadd.f32 %v3755, %v3987
      %v4216 = vadd.f32 %v3756, %v3992
      %v4217 = vadd.f32 %v3757, %v3995
      %v4218 = vadd.f32 %v3758, %v4000
      %v4219 = vadd.f32 %v3759, %v4003
      %v4220 = vadd.f32 %v3760, %v4008
      %v4221 = vadd.f32 %v3761, %v4011
      %v4222 = vadd.f32 %v3762, %v4016
      %v4223 = vadd.f32 %v3763, %v4019
      %v4224 = vadd.f32 %v3764, %v4024
      %v4225 = vadd.f32 %v3765, %v4027
      %v4226 = vadd.f32 %v3766, %v4032
      %v4227 = vadd.f32 %v3767, %v4035
      %v4228 = vadd.f32 %v3768, %v4040
      %v4229 = vadd.f32 %v3769, %v4043
      %v4230 = vadd.f32 %v3770, %v4048
      %v4231 = vadd.f32 %v3771, %v4051
      %v4232 = vadd.f32 %v3772, %v4056
      %v4233 = vadd.f32 %v3773, %v4059
      %v4234 = vadd.f32 %v3774, %v4064
      %v4235 = vadd.f32 %v3775, %v4067
      %v4236 = vadd.f32 %v3776, %v4072
      %v4237 = vadd.f32 %v3777, %v4075
      %v4238 = vadd.f32 %v3778, %v4080
      %v4239 = vadd.f32 %v3779, %v4083
      %v4240 = vadd.f32 %v3780, %v4088
      %v4241 = vadd.f32 %v3781, %v4091
      %v4242 = vadd.f32 %v3782, %v4096
      %v4243 = vadd.f32 %v3783, %v4099
      %v4244 = vadd.f32 %v3784, %v4104
      %v4245 = vadd.f32 %v3785, %v4107
      %v4246 = vadd.f32 %v3786, %v4112
      %v4247 = vadd.f32 %v3787, %v4115
      %v4248 = vadd.f32 %v3788, %v4120
      %v4249 = vadd.f32 %v3789, %v4123
      %v4250 = vadd.f32 %v3790, %v4128
      %v4251 = vadd.f32 %v3791, %v4131
      %v4252 = vadd.f32 %v3792, %v4136
      %v4253 = vadd.f32 %v3793, %v4139
      %v4254 = vadd.f32 %v3794, %v4144
      %v4255 = vadd.f32 %v3795, %v4147
      %v4256 = vadd.f32 %v3796, %v4152
      %v4257 = vadd.f32 %v3797, %v4155
      %v4258 = vadd.f32 %v3798, %v4160
      %v4259 = vadd.f32 %v3799, %v4163
      %v4260 = vadd.f32 %v3800, %v4168
      %v4261 = vadd.f32 %v3801, %v4171
      %v4262 = vadd.f32 %v3802, %v4176
      %v4263 = vadd.f32 %v3803, %v4179
      %v4264 = vadd.f32 %v3804, %v4184
      %v4265 = vadd.f32 %v3805, %v4187
      %v4266 = vadd.f32 %v3806, %v4192
      %v4267 = vadd.f32 %v3807, %v4195
      %v4268 = vadd.f32 %v3808, %v4200
      %v4269 = vadd.f32 %v3809, %v4203
      %4270 = vst [vmem:[#allocation2] sm:$0xff] %v4206
      %4271 = vst [vmem:[#allocation2 + $0x8] sm:$0xff] %v4207
      %4272 = vst [vmem:[#allocation2 + $0x10] sm:$0xff] %v4208
      %4273 = vst [vmem:[#allocation2 + $0x18] sm:$0xff] %v4209
      %4274 = vst [vmem:[#allocation2 + $0x20] sm:$0xff] %v4210
      %4275 = vst [vmem:[#allocation2 + $0x28] sm:$0xff] %v4211
      %4276 = vst [vmem:[#allocation2 + $0x30] sm:$0xff] %v4212
      %4277 = vst [vmem:[#allocation2 + $0x38] sm:$0xff] %v4213
      %4278 = vst [vmem:[#allocation2 + $0x40] sm:$0xff] %v4214
      %4279 = vst [vmem:[#allocation2 + $0x48] sm:$0xff] %v4215
      %4280 = vst [vmem:[#allocation2 + $0x50] sm:$0xff] %v4216
      %4281 = vst [vmem:[#allocation2 + $0x58] sm:$0xff] %v4217
      %4282 = vst [vmem:[#allocation2 + $0x60] sm:$0xff] %v4218
      %4283 = vst [vmem:[#allocation2 + $0x68] sm:$0xff] %v4219
      %4284 = vst [vmem:[#allocation2 + $0x70] sm:$0xff] %v4220
      %4285 = vst [vmem:[#allocation2 + $0x78] sm:$0xff] %v4221
      %4286 = vst [vmem:[#allocation2 + $0x80] sm:$0xff] %v4222
      %4287 = vst [vmem:[#allocation2 + $0x88] sm:$0xff] %v4223
      %4288 = vst [vmem:[#allocation2 + $0x90] sm:$0xff] %v4224
      %4289 = vst [vmem:[#allocation2 + $0x98] sm:$0xff] %v4225
      %4290 = vst [vmem:[#allocation2 + $0xa0] sm:$0xff] %v4226
      %4291 = vst [vmem:[#allocation2 + $0xa8] sm:$0xff] %v4227
      %4292 = vst [vmem:[#allocation2 + $0xb0] sm:$0xff] %v4228
      %4293 = vst [vmem:[#allocation2 + $0xb8] sm:$0xff] %v4229
      %4294 = vst [vmem:[#allocation2 + $0xc0] sm:$0xff] %v4230
      %4295 = vst [vmem:[#allocation2 + $0xc8] sm:$0xff] %v4231
      %4296 = vst [vmem:[#allocation2 + $0xd0] sm:$0xff] %v4232
      %4297 = vst [vmem:[#allocation2 + $0xd8] sm:$0xff] %v4233
      %4298 = vst [vmem:[#allocation2 + $0xe0] sm:$0xff] %v4234
      %4299 = vst [vmem:[#allocation2 + $0xe8] sm:$0xff] %v4235
      %4300 = vst [vmem:[#allocation2 + $0xf0] sm:$0xff] %v4236
      %4301 = vst [vmem:[#allocation2 + $0xf8] sm:$0xff] %v4237
      %4302 = vst [vmem:[#allocation2 + $0x100] sm:$0xff] %v4238
      %4303 = vst [vmem:[#allocation2 + $0x108] sm:$0xff] %v4239
      %4304 = vst [vmem:[#allocation2 + $0x110] sm:$0xff] %v4240
      %4305 = vst [vmem:[#allocation2 + $0x118] sm:$0xff] %v4241
      %4306 = vst [vmem:[#allocation2 + $0x120] sm:$0xff] %v4242
      %4307 = vst [vmem:[#allocation2 + $0x128] sm:$0xff] %v4243
      %4308 = vst [vmem:[#allocation2 + $0x130] sm:$0xff] %v4244
      %4309 = vst [vmem:[#allocation2 + $0x138] sm:$0xff] %v4245
      %4310 = vst [vmem:[#allocation2 + $0x140] sm:$0xff] %v4246
      %4311 = vst [vmem:[#allocation2 + $0x148] sm:$0xff] %v4247
      %4312 = vst [vmem:[#allocation2 + $0x150] sm:$0xff] %v4248
      %4313 = vst [vmem:[#allocation2 + $0x158] sm:$0xff] %v4249
      %4314 = vst [vmem:[#allocation2 + $0x160] sm:$0xff] %v4250
      %4315 = vst [vmem:[#allocation2 + $0x168] sm:$0xff] %v4251
      %4316 = vst [vmem:[#allocation2 + $0x170] sm:$0xff] %v4252
      %4317 = vst [vmem:[#allocation2 + $0x178] sm:$0xff] %v4253
      %4318 = vst [vmem:[#allocation2 + $0x180] sm:$0xff] %v4254
      %4319 = vst [vmem:[#allocation2 + $0x188] sm:$0xff] %v4255
      %4320 = vst [vmem:[#allocation2 + $0x190] sm:$0xff] %v4256
      %4321 = vst [vmem:[#allocation2 + $0x198] sm:$0xff] %v4257
      %4322 = vst [vmem:[#allocation2 + $0x1a0] sm:$0xff] %v4258
      %4323 = vst [vmem:[#allocation2 + $0x1a8] sm:$0xff] %v4259
      %4324 = vst [vmem:[#allocation2 + $0x1b0] sm:$0xff] %v4260
      %4325 = vst [vmem:[#allocation2 + $0x1b8] sm:$0xff] %v4261
      %4326 = vst [vmem:[#allocation2 + $0x1c0] sm:$0xff] %v4262
      %4327 = vst [vmem:[#allocation2 + $0x1c8] sm:$0xff] %v4263
      %4328 = vst [vmem:[#allocation2 + $0x1d0] sm:$0xff] %v4264
      %4329 = vst [vmem:[#allocation2 + $0x1d8] sm:$0xff] %v4265
      %4330 = vst [vmem:[#allocation2 + $0x1e0] sm:$0xff] %v4266
      %4331 = vst [vmem:[#allocation2 + $0x1e8] sm:$0xff] %v4267
      %4332 = vst [vmem:[#allocation2 + $0x1f0] sm:$0xff] %v4268
      %4333 = vst [vmem:[#allocation2 + $0x1f8] sm:$0xff] %v4269
      %v4334 = vrot.slane %v2726, 2
      %v4335 = vrot.slane %v2727, 2
      %v4336 = vsel %vm565, %v4334, %v4335
      %v4337 = vrot.slane %v2728, 2
      %v4338 = vsel %vm565, %v4335, %v4337
      %v4339 = vrot.slane %v2729, 2
      %v4340 = vsel %vm565, %v4337, %v4339
      %v4341 = vrot.slane %v2730, 2
      %v4342 = vsel %vm565, %v4339, %v4341
      %v4343 = vrot.slane %v2731, 2
      %v4344 = vrot.slane %v2732, 2
      %v4345 = vsel %vm565, %v4343, %v4344
      %v4346 = vrot.slane %v2733, 2
      %v4347 = vsel %vm565, %v4344, %v4346
      %v4348 = vrot.slane %v2734, 2
      %v4349 = vsel %vm565, %v4346, %v4348
      %v4350 = vrot.slane %v2735, 2
      %v4351 = vsel %vm565, %v4348, %v4350
      %v4352 = vrot.slane %v2736, 2
      %v4353 = vrot.slane %v2737, 2
      %v4354 = vsel %vm565, %v4352, %v4353
      %v4355 = vrot.slane %v2738, 2
      %v4356 = vsel %vm565, %v4353, %v4355
      %v4357 = vrot.slane %v2739, 2
      %v4358 = vsel %vm565, %v4355, %v4357
      %v4359 = vrot.slane %v2740, 2
      %v4360 = vsel %vm565, %v4357, %v4359
      %v4361 = vrot.slane %v2741, 2
      %v4362 = vrot.slane %v2742, 2
      %v4363 = vsel %vm565, %v4361, %v4362
      %v4364 = vrot.slane %v2743, 2
      %v4365 = vsel %vm565, %v4362, %v4364
      %v4366 = vrot.slane %v2744, 2
      %v4367 = vsel %vm565, %v4364, %v4366
      %v4368 = vrot.slane %v2745, 2
      %v4369 = vsel %vm565, %v4366, %v4368
      %v4370 = vrot.slane %v2746, 2
      %v4371 = vrot.slane %v2747, 2
      %v4372 = vsel %vm565, %v4370, %v4371
      %v4373 = vrot.slane %v2748, 2
      %v4374 = vsel %vm565, %v4371, %v4373
      %v4375 = vrot.slane %v2749, 2
      %v4376 = vsel %vm565, %v4373, %v4375
      %v4377 = vrot.slane %v2750, 2
      %v4378 = vsel %vm565, %v4375, %v4377
      %v4379 = vrot.slane %v2751, 2
      %v4380 = vrot.slane %v2752, 2
      %v4381 = vsel %vm565, %v4379, %v4380
      %v4382 = vrot.slane %v2753, 2
      %v4383 = vsel %vm565, %v4380, %v4382
      %v4384 = vrot.slane %v2754, 2
      %v4385 = vsel %vm565, %v4382, %v4384
      %v4386 = vrot.slane %v2755, 2
      %v4387 = vsel %vm565, %v4384, %v4386
      %v4388 = vrot.slane %v2756, 2
      %v4389 = vrot.slane %v2757, 2
      %v4390 = vsel %vm565, %v4388, %v4389
      %v4391 = vrot.slane %v2758, 2
      %v4392 = vsel %vm565, %v4389, %v4391
      %v4393 = vrot.slane %v2759, 2
      %v4394 = vsel %vm565, %v4391, %v4393
      %v4395 = vrot.slane %v2760, 2
      %v4396 = vsel %vm565, %v4393, %v4395
      %v4397 = vrot.slane %v2761, 2
      %v4398 = vrot.slane %v2762, 2
      %v4399 = vsel %vm565, %v4397, %v4398
      %v4400 = vrot.slane %v2763, 2
      %v4401 = vsel %vm565, %v4398, %v4400
      %v4402 = vrot.slane %v2764, 2
      %v4403 = vsel %vm565, %v4400, %v4402
      %v4404 = vrot.slane %v2765, 2
      %v4405 = vsel %vm565, %v4402, %v4404
      %v4406 = vrot.slane %v2766, 2
      %v4407 = vrot.slane %v2767, 2
      %v4408 = vsel %vm565, %v4406, %v4407
      %v4409 = vrot.slane %v2768, 2
      %v4410 = vsel %vm565, %v4407, %v4409
      %v4411 = vrot.slane %v2769, 2
      %v4412 = vsel %vm565, %v4409, %v4411
      %v4413 = vrot.slane %v2770, 2
      %v4414 = vsel %vm565, %v4411, %v4413
      %v4415 = vrot.slane %v2771, 2
      %v4416 = vrot.slane %v2772, 2
      %v4417 = vsel %vm565, %v4415, %v4416
      %v4418 = vrot.slane %v2773, 2
      %v4419 = vsel %vm565, %v4416, %v4418
      %v4420 = vrot.slane %v2774, 2
      %v4421 = vsel %vm565, %v4418, %v4420
      %v4422 = vrot.slane %v2775, 2
      %v4423 = vsel %vm565, %v4420, %v4422
      %v4424 = vrot.slane %v2776, 2
      %v4425 = vrot.slane %v2777, 2
      %v4426 = vsel %vm565, %v4424, %v4425
      %v4427 = vrot.slane %v2778, 2
      %v4428 = vsel %vm565, %v4425, %v4427
      %v4429 = vrot.slane %v2779, 2
      %v4430 = vsel %vm565, %v4427, %v4429
      %v4431 = vrot.slane %v2780, 2
      %v4432 = vsel %vm565, %v4429, %v4431
      %v4433 = vrot.slane %v2781, 2
      %v4434 = vrot.slane %v2782, 2
      %v4435 = vsel %vm565, %v4433, %v4434
      %v4436 = vrot.slane %v2783, 2
      %v4437 = vsel %vm565, %v4434, %v4436
      %v4438 = vrot.slane %v2784, 2
      %v4439 = vsel %vm565, %v4436, %v4438
      %v4440 = vrot.slane %v2785, 2
      %v4441 = vsel %vm565, %v4438, %v4440
      %v4442 = vrot.slane %v2786, 2
      %v4443 = vrot.slane %v2787, 2
      %v4444 = vsel %vm565, %v4442, %v4443
      %v4445 = vrot.slane %v2788, 2
      %v4446 = vsel %vm565, %v4443, %v4445
      %v4447 = vrot.slane %v2789, 2
      %v4448 = vsel %vm565, %v4445, %v4447
      %v4449 = vrot.slane %v2790, 2
      %v4450 = vsel %vm565, %v4447, %v4449
      %v4451 = vrot.slane %v2791, 2
      %v4452 = vrot.slane %v2792, 2
      %v4453 = vsel %vm565, %v4451, %v4452
      %v4454 = vrot.slane %v2793, 2
      %v4455 = vsel %vm565, %v4452, %v4454
      %v4456 = vrot.slane %v2794, 2
      %v4457 = vsel %vm565, %v4454, %v4456
      %v4458 = vrot.slane %v2795, 2
      %v4459 = vsel %vm565, %v4456, %v4458
      %v4460 = vrot.slane %v2796, 2
      %v4461 = vrot.slane %v2797, 2
      %v4462 = vsel %vm565, %v4460, %v4461
      %v4463 = vrot.slane %v2798, 2
      %v4464 = vsel %vm565, %v4461, %v4463
      %v4465 = vrot.slane %v2799, 2
      %v4466 = vsel %vm565, %v4463, %v4465
      %v4467 = vrot.slane %v2800, 2
      %v4468 = vsel %vm565, %v4465, %v4467
      %v4469 = vrot.slane %v2801, 2
      %v4470 = vrot.slane %v2802, 2
      %v4471 = vsel %vm565, %v4469, %v4470
      %v4472 = vrot.slane %v2803, 2
      %v4473 = vsel %vm565, %v4470, %v4472
      %v4474 = vrot.slane %v2804, 2
      %v4475 = vsel %vm565, %v4472, %v4474
      %v4476 = vrot.slane %v2805, 2
      %v4477 = vsel %vm565, %v4474, %v4476
      %v4542 = vpack.c.bf16 %v4338, %v4336
      %v4543 = vpack.c.bf16 %v4342, %v4340
      %v4544 = vpack.c.bf16 %v4347, %v4345
      %v4545 = vpack.c.bf16 %v4351, %v4349
      %v4546 = vpack.c.bf16 %v4356, %v4354
      %v4547 = vpack.c.bf16 %v4360, %v4358
      %v4548 = vpack.c.bf16 %v4365, %v4363
      %v4549 = vpack.c.bf16 %v4369, %v4367
      %v4550 = vpack.c.bf16 %v4374, %v4372
      %v4551 = vpack.c.bf16 %v4378, %v4376
      %v4552 = vpack.c.bf16 %v4383, %v4381
      %v4553 = vpack.c.bf16 %v4387, %v4385
      %v4554 = vpack.c.bf16 %v4392, %v4390
      %v4555 = vpack.c.bf16 %v4396, %v4394
      %v4556 = vpack.c.bf16 %v4401, %v4399
      %v4557 = vpack.c.bf16 %v4405, %v4403
      %v4558 = vpack.c.bf16 %v4410, %v4408
      %v4559 = vpack.c.bf16 %v4414, %v4412
      %v4560 = vpack.c.bf16 %v4419, %v4417
      %v4561 = vpack.c.bf16 %v4423, %v4421
      %v4562 = vpack.c.bf16 %v4428, %v4426
      %v4563 = vpack.c.bf16 %v4432, %v4430
      %v4564 = vpack.c.bf16 %v4437, %v4435
      %v4565 = vpack.c.bf16 %v4441, %v4439
      %v4566 = vpack.c.bf16 %v4446, %v4444
      %v4567 = vpack.c.bf16 %v4450, %v4448
      %v4568 = vpack.c.bf16 %v4455, %v4453
      %v4569 = vpack.c.bf16 %v4459, %v4457
      %v4570 = vpack.c.bf16 %v4464, %v4462
      %v4571 = vpack.c.bf16 %v4468, %v4466
      %v4572 = vpack.c.bf16 %v4473, %v4471
      %v4573 = vpack.c.bf16 %v4477, %v4475
      %v4574 = vld [vmem:[#allocation2] sm:$0xff]
      %v4575 = vld [vmem:[#allocation2 + $0x8] sm:$0xff]
      %v4576 = vld [vmem:[#allocation2 + $0x10] sm:$0xff]
      %v4577 = vld [vmem:[#allocation2 + $0x18] sm:$0xff]
      %v4578 = vld [vmem:[#allocation2 + $0x20] sm:$0xff]
      %v4579 = vld [vmem:[#allocation2 + $0x28] sm:$0xff]
      %v4580 = vld [vmem:[#allocation2 + $0x30] sm:$0xff]
      %v4581 = vld [vmem:[#allocation2 + $0x38] sm:$0xff]
      %v4582 = vld [vmem:[#allocation2 + $0x40] sm:$0xff]
      %v4583 = vld [vmem:[#allocation2 + $0x48] sm:$0xff]
      %v4584 = vld [vmem:[#allocation2 + $0x50] sm:$0xff]
      %v4585 = vld [vmem:[#allocation2 + $0x58] sm:$0xff]
      %v4586 = vld [vmem:[#allocation2 + $0x60] sm:$0xff]
      %v4587 = vld [vmem:[#allocation2 + $0x68] sm:$0xff]
      %v4588 = vld [vmem:[#allocation2 + $0x70] sm:$0xff]
      %v4589 = vld [vmem:[#allocation2 + $0x78] sm:$0xff]
      %v4590 = vld [vmem:[#allocation2 + $0x80] sm:$0xff]
      %v4591 = vld [vmem:[#allocation2 + $0x88] sm:$0xff]
      %v4592 = vld [vmem:[#allocation2 + $0x90] sm:$0xff]
      %v4593 = vld [vmem:[#allocation2 + $0x98] sm:$0xff]
      %v4594 = vld [vmem:[#allocation2 + $0xa0] sm:$0xff]
      %v4595 = vld [vmem:[#allocation2 + $0xa8] sm:$0xff]
      %v4596 = vld [vmem:[#allocation2 + $0xb0] sm:$0xff]
      %v4597 = vld [vmem:[#allocation2 + $0xb8] sm:$0xff]
      %v4598 = vld [vmem:[#allocation2 + $0xc0] sm:$0xff]
      %v4599 = vld [vmem:[#allocation2 + $0xc8] sm:$0xff]
      %v4600 = vld [vmem:[#allocation2 + $0xd0] sm:$0xff]
      %v4601 = vld [vmem:[#allocation2 + $0xd8] sm:$0xff]
      %v4602 = vld [vmem:[#allocation2 + $0xe0] sm:$0xff]
      %v4603 = vld [vmem:[#allocation2 + $0xe8] sm:$0xff]
      %v4604 = vld [vmem:[#allocation2 + $0xf0] sm:$0xff]
      %v4605 = vld [vmem:[#allocation2 + $0xf8] sm:$0xff]
      %v4606 = vld [vmem:[#allocation2 + $0x100] sm:$0xff]
      %v4607 = vld [vmem:[#allocation2 + $0x108] sm:$0xff]
      %v4608 = vld [vmem:[#allocation2 + $0x110] sm:$0xff]
      %v4609 = vld [vmem:[#allocation2 + $0x118] sm:$0xff]
      %v4610 = vld [vmem:[#allocation2 + $0x120] sm:$0xff]
      %v4611 = vld [vmem:[#allocation2 + $0x128] sm:$0xff]
      %v4612 = vld [vmem:[#allocation2 + $0x130] sm:$0xff]
      %v4613 = vld [vmem:[#allocation2 + $0x138] sm:$0xff]
      %v4614 = vld [vmem:[#allocation2 + $0x140] sm:$0xff]
      %v4615 = vld [vmem:[#allocation2 + $0x148] sm:$0xff]
      %v4616 = vld [vmem:[#allocation2 + $0x150] sm:$0xff]
      %v4617 = vld [vmem:[#allocation2 + $0x158] sm:$0xff]
      %v4618 = vld [vmem:[#allocation2 + $0x160] sm:$0xff]
      %v4619 = vld [vmem:[#allocation2 + $0x168] sm:$0xff]
      %v4620 = vld [vmem:[#allocation2 + $0x170] sm:$0xff]
      %v4621 = vld [vmem:[#allocation2 + $0x178] sm:$0xff]
      %v4622 = vld [vmem:[#allocation2 + $0x180] sm:$0xff]
      %v4623 = vld [vmem:[#allocation2 + $0x188] sm:$0xff]
      %v4624 = vld [vmem:[#allocation2 + $0x190] sm:$0xff]
      %v4625 = vld [vmem:[#allocation2 + $0x198] sm:$0xff]
      %v4626 = vld [vmem:[#allocation2 + $0x1a0] sm:$0xff]
      %v4627 = vld [vmem:[#allocation2 + $0x1a8] sm:$0xff]
      %v4628 = vld [vmem:[#allocation2 + $0x1b0] sm:$0xff]
      %v4629 = vld [vmem:[#allocation2 + $0x1b8] sm:$0xff]
      %v4630 = vld [vmem:[#allocation2 + $0x1c0] sm:$0xff]
      %v4631 = vld [vmem:[#allocation2 + $0x1c8] sm:$0xff]
      %v4632 = vld [vmem:[#allocation2 + $0x1d0] sm:$0xff]
      %v4633 = vld [vmem:[#allocation2 + $0x1d8] sm:$0xff]
      %v4634 = vld [vmem:[#allocation2 + $0x1e0] sm:$0xff]
      %v4635 = vld [vmem:[#allocation2 + $0x1e8] sm:$0xff]
      %v4636 = vld [vmem:[#allocation2 + $0x1f0] sm:$0xff]
      %v4637 = vld [vmem:[#allocation2 + $0x1f8] sm:$0xff]
      %s4638 = scalar_lea.vmem %s1, 40
      %v4639 = vld [vmem:[%s4638] sm:$0xf]
      %v4640 = vld [vmem:[%s4638 + $0x4] sm:$0x3]
      %v4643 = vunpack.c.l.b16 %v4639
      %v4644 = vunpack.c.l.b16 %v4640
      %v4645 = vpack.c.b16 %v4644, %v4643
      %v4647 = vsel %vm468, %v4542, 0
      %v4650 = vsel %vm468, %v4543, 0
      %v4653 = vsel %vm468, %v4544, 0
      %v4656 = vsel %vm468, %v4545, 0
      %v4659 = vsel %vm468, %v4546, 0
      %v4662 = vsel %vm468, %v4547, 0
      %v4665 = vsel %vm468, %v4548, 0
      %v4668 = vsel %vm468, %v4549, 0
      %v4671 = vsel %vm468, %v4550, 0
      %v4674 = vsel %vm468, %v4551, 0
      %v4677 = vsel %vm468, %v4552, 0
      %v4680 = vsel %vm468, %v4553, 0
      %v4683 = vsel %vm468, %v4554, 0
      %v4686 = vsel %vm468, %v4555, 0
      %v4689 = vsel %vm468, %v4556, 0
      %v4692 = vsel %vm468, %v4557, 0
      %v4695 = vsel %vm468, %v4558, 0
      %v4698 = vsel %vm468, %v4559, 0
      %v4701 = vsel %vm468, %v4560, 0
      %v4704 = vsel %vm468, %v4561, 0
      %v4707 = vsel %vm468, %v4562, 0
      %v4710 = vsel %vm468, %v4563, 0
      %v4713 = vsel %vm468, %v4564, 0
      %v4716 = vsel %vm468, %v4565, 0
      %v4719 = vsel %vm468, %v4566, 0
      %v4722 = vsel %vm468, %v4567, 0
      %v4725 = vsel %vm468, %v4568, 0
      %v4728 = vsel %vm468, %v4569, 0
      %v4731 = vsel %vm468, %v4570, 0
      %v4734 = vsel %vm468, %v4571, 0
      %v4737 = vsel %vm468, %v4572, 0
      %v4740 = vsel %vm468, %v4573, 0
      %v4743 = vsel %vm565, %v4645, 0
      %4745 = vmatprep.subr.bf16.mxu0 0
      %4746 = vmatpush1.bf16.msra.mxu0 %v4743
      %4747 = vmatprep.subr.bf16.mxu0 0
      %4748 = vmatpush1.bf16.msra.mxu0 0
      %4749 = vmatprep.subr.bf16.mxu0 0
      %4750 = vmatpush1.bf16.msra.mxu0 0
      %4751 = vmatprep.subr.bf16.mxu0 0
      %4752 = vmatpush1.bf16.msra.mxu0 0
      %4753 = vmatprep.subr.bf16.mxu0 0
      %4754 = vmatpush1.bf16.msra.mxu0 0
      %4755 = vmatprep.subr.bf16.mxu0 0
      %4756 = vmatpush1.bf16.msra.mxu0 0
      %4757 = vmatprep.subr.bf16.mxu0 0
      %4758 = vmatpush1.bf16.msra.mxu0 0
      %4759 = vmatprep.subr.bf16.mxu0 0
      %4760 = vmatpush1.bf16.msra.mxu0 0
      %4761 = vmatprep.subr.bf16.mxu0 0
      %4762 = vmatpush1.bf16.msra.mxu0 0
      %4763 = vmatprep.subr.bf16.mxu0 0
      %4764 = vmatpush1.bf16.msra.mxu0 0
      %4765 = vmatprep.subr.bf16.mxu0 0
      %4766 = vmatpush1.bf16.msra.mxu0 0
      %4767 = vmatprep.subr.bf16.mxu0 0
      %4768 = vmatpush1.bf16.msra.mxu0 0
      %4769 = vmatprep.subr.bf16.mxu0 0
      %4770 = vmatpush1.bf16.msra.mxu0 0
      %4771 = vmatprep.subr.bf16.mxu0 0
      %4772 = vmatpush1.bf16.msra.mxu0 0
      %4773 = vmatprep.subr.bf16.mxu0 0
      %4774 = vmatpush1.bf16.msra.mxu0 0
      %4775 = vmatprep.subr.bf16.mxu0 0
      %4776 = vmatpush1.bf16.msra.mxu0 0
      %4777 = vmatprep.mubr.bf16.mxu0 0
      %4778 = vmatmul.mubr.bf16.gmra.mrb[0].mxu0 %v4647
      %v4779 = vpop.f32.mrb[0].mxu0
      %v4780 = vadd.f32 0.0, %v4779
      %v4781 = vpop.f32.mrb[0].mxu0
      %v4782 = vpop.f32.mrb[0].mxu0
      %v4783 = vadd.f32 0.0, %v4782
      %v4784 = vpop.f32.mrb[0].mxu0
      %4785 = vmatprep.mubr.bf16.mxu0 0
      %4786 = vmatmul.mubr.bf16.gmra.mrb[0].mxu0 %v4650
      %v4787 = vpop.f32.mrb[0].mxu0
      %v4788 = vadd.f32 0.0, %v4787
      %v4789 = vpop.f32.mrb[0].mxu0
      %v4790 = vpop.f32.mrb[0].mxu0
      %v4791 = vadd.f32 0.0, %v4790
      %v4792 = vpop.f32.mrb[0].mxu0
      %4793 = vmatprep.mubr.bf16.mxu0 0
      %4794 = vmatmul.mubr.bf16.gmra.mrb[0].mxu0 %v4653
      %v4795 = vpop.f32.mrb[0].mxu0
      %v4796 = vadd.f32 0.0, %v4795
      %v4797 = vpop.f32.mrb[0].mxu0
      %v4798 = vpop.f32.mrb[0].mxu0
      %v4799 = vadd.f32 0.0, %v4798
      %v4800 = vpop.f32.mrb[0].mxu0
      %4801 = vmatprep.mubr.bf16.mxu0 0
      %4802 = vmatmul.mubr.bf16.gmra.mrb[0].mxu0 %v4656
      %v4803 = vpop.f32.mrb[0].mxu0
      %v4804 = vadd.f32 0.0, %v4803
      %v4805 = vpop.f32.mrb[0].mxu0
      %v4806 = vpop.f32.mrb[0].mxu0
      %v4807 = vadd.f32 0.0, %v4806
      %v4808 = vpop.f32.mrb[0].mxu0
      %4809 = vmatprep.mubr.bf16.mxu0 0
      %4810 = vmatmul.mubr.bf16.gmra.mrb[0].mxu0 %v4659
      %v4811 = vpop.f32.mrb[0].mxu0
      %v4812 = vadd.f32 0.0, %v4811
      %v4813 = vpop.f32.mrb[0].mxu0
      %v4814 = vpop.f32.mrb[0].mxu0
      %v4815 = vadd.f32 0.0, %v4814
      %v4816 = vpop.f32.mrb[0].mxu0
      %4817 = vmatprep.mubr.bf16.mxu0 0
      %4818 = vmatmul.mubr.bf16.gmra.mrb[0].mxu0 %v4662
      %v4819 = vpop.f32.mrb[0].mxu0
      %v4820 = vadd.f32 0.0, %v4819
      %v4821 = vpop.f32.mrb[0].mxu0
      %v4822 = vpop.f32.mrb[0].mxu0
      %v4823 = vadd.f32 0.0, %v4822
      %v4824 = vpop.f32.mrb[0].mxu0
      %4825 = vmatprep.mubr.bf16.mxu0 0
      %4826 = vmatmul.mubr.bf16.gmra.mrb[0].mxu0 %v4665
      %v4827 = vpop.f32.mrb[0].mxu0
      %v4828 = vadd.f32 0.0, %v4827
      %v4829 = vpop.f32.mrb[0].mxu0
      %v4830 = vpop.f32.mrb[0].mxu0
      %v4831 = vadd.f32 0.0, %v4830
      %v4832 = vpop.f32.mrb[0].mxu0
      %4833 = vmatprep.mubr.bf16.mxu0 0
      %4834 = vmatmul.mubr.bf16.gmra.mrb[0].mxu0 %v4668
      %v4835 = vpop.f32.mrb[0].mxu0
      %v4836 = vadd.f32 0.0, %v4835
      %v4837 = vpop.f32.mrb[0].mxu0
      %v4838 = vpop.f32.mrb[0].mxu0
      %v4839 = vadd.f32 0.0, %v4838
      %v4840 = vpop.f32.mrb[0].mxu0
      %4841 = vmatprep.mubr.bf16.mxu0 0
      %4842 = vmatmul.mubr.bf16.gmra.mrb[0].mxu0 %v4671
      %v4843 = vpop.f32.mrb[0].mxu0
      %v4844 = vadd.f32 0.0, %v4843
      %v4845 = vpop.f32.mrb[0].mxu0
      %v4846 = vpop.f32.mrb[0].mxu0
      %v4847 = vadd.f32 0.0, %v4846
      %v4848 = vpop.f32.mrb[0].mxu0
      %4849 = vmatprep.mubr.bf16.mxu0 0
      %4850 = vmatmul.mubr.bf16.gmra.mrb[0].mxu0 %v4674
      %v4851 = vpop.f32.mrb[0].mxu0
      %v4852 = vadd.f32 0.0, %v4851
      %v4853 = vpop.f32.mrb[0].mxu0
      %v4854 = vpop.f32.mrb[0].mxu0
      %v4855 = vadd.f32 0.0, %v4854
      %v4856 = vpop.f32.mrb[0].mxu0
      %4857 = vmatprep.mubr.bf16.mxu0 0
      %4858 = vmatmul.mubr.bf16.gmra.mrb[0].mxu0 %v4677
      %v4859 = vpop.f32.mrb[0].mxu0
      %v4860 = vadd.f32 0.0, %v4859
      %v4861 = vpop.f32.mrb[0].mxu0
      %v4862 = vpop.f32.mrb[0].mxu0
      %v4863 = vadd.f32 0.0, %v4862
      %v4864 = vpop.f32.mrb[0].mxu0
      %4865 = vmatprep.mubr.bf16.mxu0 0
      %4866 = vmatmul.mubr.bf16.gmra.mrb[0].mxu0 %v4680
      %v4867 = vpop.f32.mrb[0].mxu0
      %v4868 = vadd.f32 0.0, %v4867
      %v4869 = vpop.f32.mrb[0].mxu0
      %v4870 = vpop.f32.mrb[0].mxu0
      %v4871 = vadd.f32 0.0, %v4870
      %v4872 = vpop.f32.mrb[0].mxu0
      %4873 = vmatprep.mubr.bf16.mxu0 0
      %4874 = vmatmul.mubr.bf16.gmra.mrb[0].mxu0 %v4683
      %v4875 = vpop.f32.mrb[0].mxu0
      %v4876 = vadd.f32 0.0, %v4875
      %v4877 = vpop.f32.mrb[0].mxu0
      %v4878 = vpop.f32.mrb[0].mxu0
      %v4879 = vadd.f32 0.0, %v4878
      %v4880 = vpop.f32.mrb[0].mxu0
      %4881 = vmatprep.mubr.bf16.mxu0 0
      %4882 = vmatmul.mubr.bf16.gmra.mrb[0].mxu0 %v4686
      %v4883 = vpop.f32.mrb[0].mxu0
      %v4884 = vadd.f32 0.0, %v4883
      %v4885 = vpop.f32.mrb[0].mxu0
      %v4886 = vpop.f32.mrb[0].mxu0
      %v4887 = vadd.f32 0.0, %v4886
      %v4888 = vpop.f32.mrb[0].mxu0
      %4889 = vmatprep.mubr.bf16.mxu0 0
      %4890 = vmatmul.mubr.bf16.gmra.mrb[0].mxu0 %v4689
      %v4891 = vpop.f32.mrb[0].mxu0
      %v4892 = vadd.f32 0.0, %v4891
      %v4893 = vpop.f32.mrb[0].mxu0
      %v4894 = vpop.f32.mrb[0].mxu0
      %v4895 = vadd.f32 0.0, %v4894
      %v4896 = vpop.f32.mrb[0].mxu0
      %4897 = vmatprep.mubr.bf16.mxu0 0
      %4898 = vmatmul.mubr.bf16.gmra.mrb[0].mxu0 %v4692
      %v4899 = vpop.f32.mrb[0].mxu0
      %v4900 = vadd.f32 0.0, %v4899
      %v4901 = vpop.f32.mrb[0].mxu0
      %v4902 = vpop.f32.mrb[0].mxu0
      %v4903 = vadd.f32 0.0, %v4902
      %v4904 = vpop.f32.mrb[0].mxu0
      %4905 = vmatprep.mubr.bf16.mxu0 0
      %4906 = vmatmul.mubr.bf16.gmra.mrb[0].mxu0 %v4695
      %v4907 = vpop.f32.mrb[0].mxu0
      %v4908 = vadd.f32 0.0, %v4907
      %v4909 = vpop.f32.mrb[0].mxu0
      %v4910 = vpop.f32.mrb[0].mxu0
      %v4911 = vadd.f32 0.0, %v4910
      %v4912 = vpop.f32.mrb[0].mxu0
      %4913 = vmatprep.mubr.bf16.mxu0 0
      %4914 = vmatmul.mubr.bf16.gmra.mrb[0].mxu0 %v4698
      %v4915 = vpop.f32.mrb[0].mxu0
      %v4916 = vadd.f32 0.0, %v4915
      %v4917 = vpop.f32.mrb[0].mxu0
      %v4918 = vpop.f32.mrb[0].mxu0
      %v4919 = vadd.f32 0.0, %v4918
      %v4920 = vpop.f32.mrb[0].mxu0
      %4921 = vmatprep.mubr.bf16.mxu0 0
      %4922 = vmatmul.mubr.bf16.gmra.mrb[0].mxu0 %v4701
      %v4923 = vpop.f32.mrb[0].mxu0
      %v4924 = vadd.f32 0.0, %v4923
      %v4925 = vpop.f32.mrb[0].mxu0
      %v4926 = vpop.f32.mrb[0].mxu0
      %v4927 = vadd.f32 0.0, %v4926
      %v4928 = vpop.f32.mrb[0].mxu0
      %4929 = vmatprep.mubr.bf16.mxu0 0
      %4930 = vmatmul.mubr.bf16.gmra.mrb[0].mxu0 %v4704
      %v4931 = vpop.f32.mrb[0].mxu0
      %v4932 = vadd.f32 0.0, %v4931
      %v4933 = vpop.f32.mrb[0].mxu0
      %v4934 = vpop.f32.mrb[0].mxu0
      %v4935 = vadd.f32 0.0, %v4934
      %v4936 = vpop.f32.mrb[0].mxu0
      %4937 = vmatprep.mubr.bf16.mxu0 0
      %4938 = vmatmul.mubr.bf16.gmra.mrb[0].mxu0 %v4707
      %v4939 = vpop.f32.mrb[0].mxu0
      %v4940 = vadd.f32 0.0, %v4939
      %v4941 = vpop.f32.mrb[0].mxu0
      %v4942 = vpop.f32.mrb[0].mxu0
      %v4943 = vadd.f32 0.0, %v4942
      %v4944 = vpop.f32.mrb[0].mxu0
      %4945 = vmatprep.mubr.bf16.mxu0 0
      %4946 = vmatmul.mubr.bf16.gmra.mrb[0].mxu0 %v4710
      %v4947 = vpop.f32.mrb[0].mxu0
      %v4948 = vadd.f32 0.0, %v4947
      %v4949 = vpop.f32.mrb[0].mxu0
      %v4950 = vpop.f32.mrb[0].mxu0
      %v4951 = vadd.f32 0.0, %v4950
      %v4952 = vpop.f32.mrb[0].mxu0
      %4953 = vmatprep.mubr.bf16.mxu0 0
      %4954 = vmatmul.mubr.bf16.gmra.mrb[0].mxu0 %v4713
      %v4955 = vpop.f32.mrb[0].mxu0
      %v4956 = vadd.f32 0.0, %v4955
      %v4957 = vpop.f32.mrb[0].mxu0
      %v4958 = vpop.f32.mrb[0].mxu0
      %v4959 = vadd.f32 0.0, %v4958
      %v4960 = vpop.f32.mrb[0].mxu0
      %4961 = vmatprep.mubr.bf16.mxu0 0
      %4962 = vmatmul.mubr.bf16.gmra.mrb[0].mxu0 %v4716
      %v4963 = vpop.f32.mrb[0].mxu0
      %v4964 = vadd.f32 0.0, %v4963
      %v4965 = vpop.f32.mrb[0].mxu0
      %v4966 = vpop.f32.mrb[0].mxu0
      %v4967 = vadd.f32 0.0, %v4966
      %v4968 = vpop.f32.mrb[0].mxu0
      %4969 = vmatprep.mubr.bf16.mxu0 0
      %4970 = vmatmul.mubr.bf16.gmra.mrb[0].mxu0 %v4719
      %v4971 = vpop.f32.mrb[0].mxu0
      %v4972 = vadd.f32 0.0, %v4971
      %v4973 = vpop.f32.mrb[0].mxu0
      %v4974 = vpop.f32.mrb[0].mxu0
      %v4975 = vadd.f32 0.0, %v4974
      %v4976 = vpop.f32.mrb[0].mxu0
      %4977 = vmatprep.mubr.bf16.mxu0 0
      %4978 = vmatmul.mubr.bf16.gmra.mrb[0].mxu0 %v4722
      %v4979 = vpop.f32.mrb[0].mxu0
      %v4980 = vadd.f32 0.0, %v4979
      %v4981 = vpop.f32.mrb[0].mxu0
      %v4982 = vpop.f32.mrb[0].mxu0
      %v4983 = vadd.f32 0.0, %v4982
      %v4984 = vpop.f32.mrb[0].mxu0
      %4985 = vmatprep.mubr.bf16.mxu0 0
      %4986 = vmatmul.mubr.bf16.gmra.mrb[0].mxu0 %v4725
      %v4987 = vpop.f32.mrb[0].mxu0
      %v4988 = vadd.f32 0.0, %v4987
      %v4989 = vpop.f32.mrb[0].mxu0
      %v4990 = vpop.f32.mrb[0].mxu0
      %v4991 = vadd.f32 0.0, %v4990
      %v4992 = vpop.f32.mrb[0].mxu0
      %4993 = vmatprep.mubr.bf16.mxu0 0
      %4994 = vmatmul.mubr.bf16.gmra.mrb[0].mxu0 %v4728
      %v4995 = vpop.f32.mrb[0].mxu0
      %v4996 = vadd.f32 0.0, %v4995
      %v4997 = vpop.f32.mrb[0].mxu0
      %v4998 = vpop.f32.mrb[0].mxu0
      %v4999 = vadd.f32 0.0, %v4998
      %v5000 = vpop.f32.mrb[0].mxu0
      %5001 = vmatprep.mubr.bf16.mxu0 0
      %5002 = vmatmul.mubr.bf16.gmra.mrb[0].mxu0 %v4731
      %v5003 = vpop.f32.mrb[0].mxu0
      %v5004 = vadd.f32 0.0, %v5003
      %v5005 = vpop.f32.mrb[0].mxu0
      %v5006 = vpop.f32.mrb[0].mxu0
      %v5007 = vadd.f32 0.0, %v5006
      %v5008 = vpop.f32.mrb[0].mxu0
      %5009 = vmatprep.mubr.bf16.mxu0 0
      %5010 = vmatmul.mubr.bf16.gmra.mrb[0].mxu0 %v4734
      %v5011 = vpop.f32.mrb[0].mxu0
      %v5012 = vadd.f32 0.0, %v5011
      %v5013 = vpop.f32.mrb[0].mxu0
      %v5014 = vpop.f32.mrb[0].mxu0
      %v5015 = vadd.f32 0.0, %v5014
      %v5016 = vpop.f32.mrb[0].mxu0
      %5017 = vmatprep.mubr.bf16.mxu0 0
      %5018 = vmatmul.mubr.bf16.gmra.mrb[0].mxu0 %v4737
      %v5019 = vpop.f32.mrb[0].mxu0
      %v5020 = vadd.f32 0.0, %v5019
      %v5021 = vpop.f32.mrb[0].mxu0
      %v5022 = vpop.f32.mrb[0].mxu0
      %v5023 = vadd.f32 0.0, %v5022
      %v5024 = vpop.f32.mrb[0].mxu0
      %5025 = vmatprep.mubr.bf16.mxu0 0
      %5026 = vmatmul.mubr.bf16.gmra.mrb[0].mxu0 %v4740
      %v5027 = vpop.f32.mrb[0].mxu0
      %v5028 = vadd.f32 0.0, %v5027
      %v5029 = vpop.f32.mrb[0].mxu0
      %v5030 = vpop.f32.mrb[0].mxu0
      %v5031 = vadd.f32 0.0, %v5030
      %v5032 = vpop.f32.mrb[0].mxu0
      %5033 = vdwg.mxu0
      %v5034 = vadd.f32 %v4574, %v4780
      %v5035 = vadd.f32 %v4575, %v4783
      %v5036 = vadd.f32 %v4576, %v4788
      %v5037 = vadd.f32 %v4577, %v4791
      %v5038 = vadd.f32 %v4578, %v4796
      %v5039 = vadd.f32 %v4579, %v4799
      %v5040 = vadd.f32 %v4580, %v4804
      %v5041 = vadd.f32 %v4581, %v4807
      %v5042 = vadd.f32 %v4582, %v4812
      %v5043 = vadd.f32 %v4583, %v4815
      %v5044 = vadd.f32 %v4584, %v4820
      %v5045 = vadd.f32 %v4585, %v4823
      %v5046 = vadd.f32 %v4586, %v4828
      %v5047 = vadd.f32 %v4587, %v4831
      %v5048 = vadd.f32 %v4588, %v4836
      %v5049 = vadd.f32 %v4589, %v4839
      %v5050 = vadd.f32 %v4590, %v4844
      %v5051 = vadd.f32 %v4591, %v4847
      %v5052 = vadd.f32 %v4592, %v4852
      %v5053 = vadd.f32 %v4593, %v4855
      %v5054 = vadd.f32 %v4594, %v4860
      %v5055 = vadd.f32 %v4595, %v4863
      %v5056 = vadd.f32 %v4596, %v4868
      %v5057 = vadd.f32 %v4597, %v4871
      %v5058 = vadd.f32 %v4598, %v4876
      %v5059 = vadd.f32 %v4599, %v4879
      %v5060 = vadd.f32 %v4600, %v4884
      %v5061 = vadd.f32 %v4601, %v4887
      %v5062 = vadd.f32 %v4602, %v4892
      %v5063 = vadd.f32 %v4603, %v4895
      %v5064 = vadd.f32 %v4604, %v4900
      %v5065 = vadd.f32 %v4605, %v4903
      %v5066 = vadd.f32 %v4606, %v4908
      %v5067 = vadd.f32 %v4607, %v4911
      %v5068 = vadd.f32 %v4608, %v4916
      %v5069 = vadd.f32 %v4609, %v4919
      %v5070 = vadd.f32 %v4610, %v4924
      %v5071 = vadd.f32 %v4611, %v4927
      %v5072 = vadd.f32 %v4612, %v4932
      %v5073 = vadd.f32 %v4613, %v4935
      %v5074 = vadd.f32 %v4614, %v4940
      %v5075 = vadd.f32 %v4615, %v4943
      %v5076 = vadd.f32 %v4616, %v4948
      %v5077 = vadd.f32 %v4617, %v4951
      %v5078 = vadd.f32 %v4618, %v4956
      %v5079 = vadd.f32 %v4619, %v4959
      %v5080 = vadd.f32 %v4620, %v4964
      %v5081 = vadd.f32 %v4621, %v4967
      %v5082 = vadd.f32 %v4622, %v4972
      %v5083 = vadd.f32 %v4623, %v4975
      %v5084 = vadd.f32 %v4624, %v4980
      %v5085 = vadd.f32 %v4625, %v4983
      %v5086 = vadd.f32 %v4626, %v4988
      %v5087 = vadd.f32 %v4627, %v4991
      %v5088 = vadd.f32 %v4628, %v4996
      %v5089 = vadd.f32 %v4629, %v4999
      %v5090 = vadd.f32 %v4630, %v5004
      %v5091 = vadd.f32 %v4631, %v5007
      %v5092 = vadd.f32 %v4632, %v5012
      %v5093 = vadd.f32 %v4633, %v5015
      %v5094 = vadd.f32 %v4634, %v5020
      %v5095 = vadd.f32 %v4635, %v5023
      %v5096 = vadd.f32 %v4636, %v5028
      %v5097 = vadd.f32 %v4637, %v5031
      %5098 = vst [vmem:[#allocation2] sm:$0xff] %v5034
      %5099 = vst [vmem:[#allocation2 + $0x8] sm:$0xff] %v5035
      %5100 = vst [vmem:[#allocation2 + $0x10] sm:$0xff] %v5036
      %5101 = vst [vmem:[#allocation2 + $0x18] sm:$0xff] %v5037
      %5102 = vst [vmem:[#allocation2 + $0x20] sm:$0xff] %v5038
      %5103 = vst [vmem:[#allocation2 + $0x28] sm:$0xff] %v5039
      %5104 = vst [vmem:[#allocation2 + $0x30] sm:$0xff] %v5040
      %5105 = vst [vmem:[#allocation2 + $0x38] sm:$0xff] %v5041
      %5106 = vst [vmem:[#allocation2 + $0x40] sm:$0xff] %v5042
      %5107 = vst [vmem:[#allocation2 + $0x48] sm:$0xff] %v5043
      %5108 = vst [vmem:[#allocation2 + $0x50] sm:$0xff] %v5044
      %5109 = vst [vmem:[#allocation2 + $0x58] sm:$0xff] %v5045
      %5110 = vst [vmem:[#allocation2 + $0x60] sm:$0xff] %v5046
      %5111 = vst [vmem:[#allocation2 + $0x68] sm:$0xff] %v5047
      %5112 = vst [vmem:[#allocation2 + $0x70] sm:$0xff] %v5048
      %5113 = vst [vmem:[#allocation2 + $0x78] sm:$0xff] %v5049
      %5114 = vst [vmem:[#allocation2 + $0x80] sm:$0xff] %v5050
      %5115 = vst [vmem:[#allocation2 + $0x88] sm:$0xff] %v5051
      %5116 = vst [vmem:[#allocation2 + $0x90] sm:$0xff] %v5052
      %5117 = vst [vmem:[#allocation2 + $0x98] sm:$0xff] %v5053
      %5118 = vst [vmem:[#allocation2 + $0xa0] sm:$0xff] %v5054
      %5119 = vst [vmem:[#allocation2 + $0xa8] sm:$0xff] %v5055
      %5120 = vst [vmem:[#allocation2 + $0xb0] sm:$0xff] %v5056
      %5121 = vst [vmem:[#allocation2 + $0xb8] sm:$0xff] %v5057
      %5122 = vst [vmem:[#allocation2 + $0xc0] sm:$0xff] %v5058
      %5123 = vst [vmem:[#allocation2 + $0xc8] sm:$0xff] %v5059
      %5124 = vst [vmem:[#allocation2 + $0xd0] sm:$0xff] %v5060
      %5125 = vst [vmem:[#allocation2 + $0xd8] sm:$0xff] %v5061
      %5126 = vst [vmem:[#allocation2 + $0xe0] sm:$0xff] %v5062
      %5127 = vst [vmem:[#allocation2 + $0xe8] sm:$0xff] %v5063
      %5128 = vst [vmem:[#allocation2 + $0xf0] sm:$0xff] %v5064
      %5129 = vst [vmem:[#allocation2 + $0xf8] sm:$0xff] %v5065
      %5130 = vst [vmem:[#allocation2 + $0x100] sm:$0xff] %v5066
      %5131 = vst [vmem:[#allocation2 + $0x108] sm:$0xff] %v5067
      %5132 = vst [vmem:[#allocation2 + $0x110] sm:$0xff] %v5068
      %5133 = vst [vmem:[#allocation2 + $0x118] sm:$0xff] %v5069
      %5134 = vst [vmem:[#allocation2 + $0x120] sm:$0xff] %v5070
      %5135 = vst [vmem:[#allocation2 + $0x128] sm:$0xff] %v5071
      %5136 = vst [vmem:[#allocation2 + $0x130] sm:$0xff] %v5072
      %5137 = vst [vmem:[#allocation2 + $0x138] sm:$0xff] %v5073
      %5138 = vst [vmem:[#allocation2 + $0x140] sm:$0xff] %v5074
      %5139 = vst [vmem:[#allocation2 + $0x148] sm:$0xff] %v5075
      %5140 = vst [vmem:[#allocation2 + $0x150] sm:$0xff] %v5076
      %5141 = vst [vmem:[#allocation2 + $0x158] sm:$0xff] %v5077
      %5142 = vst [vmem:[#allocation2 + $0x160] sm:$0xff] %v5078
      %5143 = vst [vmem:[#allocation2 + $0x168] sm:$0xff] %v5079
      %5144 = vst [vmem:[#allocation2 + $0x170] sm:$0xff] %v5080
      %5145 = vst [vmem:[#allocation2 + $0x178] sm:$0xff] %v5081
      %5146 = vst [vmem:[#allocation2 + $0x180] sm:$0xff] %v5082
      %5147 = vst [vmem:[#allocation2 + $0x188] sm:$0xff] %v5083
      %5148 = vst [vmem:[#allocation2 + $0x190] sm:$0xff] %v5084
      %5149 = vst [vmem:[#allocation2 + $0x198] sm:$0xff] %v5085
      %5150 = vst [vmem:[#allocation2 + $0x1a0] sm:$0xff] %v5086
      %5151 = vst [vmem:[#allocation2 + $0x1a8] sm:$0xff] %v5087
      %5152 = vst [vmem:[#allocation2 + $0x1b0] sm:$0xff] %v5088
      %5153 = vst [vmem:[#allocation2 + $0x1b8] sm:$0xff] %v5089
      %5154 = vst [vmem:[#allocation2 + $0x1c0] sm:$0xff] %v5090
      %5155 = vst [vmem:[#allocation2 + $0x1c8] sm:$0xff] %v5091
      %5156 = vst [vmem:[#allocation2 + $0x1d0] sm:$0xff] %v5092
      %5157 = vst [vmem:[#allocation2 + $0x1d8] sm:$0xff] %v5093
      %5158 = vst [vmem:[#allocation2 + $0x1e0] sm:$0xff] %v5094
      %5159 = vst [vmem:[#allocation2 + $0x1e8] sm:$0xff] %v5095
      %5160 = vst [vmem:[#allocation2 + $0x1f0] sm:$0xff] %v5096
      %5161 = vst [vmem:[#allocation2 + $0x1f8] sm:$0xff] %v5097
      %s5162 = sadd.s32 %s218, 2
      %s5163 = smul.u32 %s5162, 40
      %s5164 = scalar_lea.vmem %s197, %s5163
      %v5165 = vld [vmem:[%s5164] sm:$0xff]
      %v5166 = vld [vmem:[%s5164 + $0x8] sm:$0xff]
      %v5167 = vld [vmem:[%s5164 + $0x10] sm:$0xff]
      %v5168 = vld [vmem:[%s5164 + $0x18] sm:$0xff]
      %v5169 = vld [vmem:[%s5164 + $0x20] sm:$0x3]
      %v5170 = vld [vmem:[%s5164 + $0x28] sm:$0xff]
      %v5171 = vld [vmem:[%s5164 + $0x30] sm:$0xff]
      %v5172 = vld [vmem:[%s5164 + $0x38] sm:$0xff]
      %v5173 = vld [vmem:[%s5164 + $0x40] sm:$0xff]
      %v5174 = vld [vmem:[%s5164 + $0x48] sm:$0x3]
      %v5175 = vld [vmem:[%s5164 + $0x50] sm:$0xff]
      %v5176 = vld [vmem:[%s5164 + $0x58] sm:$0xff]
      %v5177 = vld [vmem:[%s5164 + $0x60] sm:$0xff]
      %v5178 = vld [vmem:[%s5164 + $0x68] sm:$0xff]
      %v5179 = vld [vmem:[%s5164 + $0x70] sm:$0x3]
      %v5180 = vld [vmem:[%s5164 + $0x78] sm:$0xff]
      %v5181 = vld [vmem:[%s5164 + $0x80] sm:$0xff]
      %v5182 = vld [vmem:[%s5164 + $0x88] sm:$0xff]
      %v5183 = vld [vmem:[%s5164 + $0x90] sm:$0xff]
      %v5184 = vld [vmem:[%s5164 + $0x98] sm:$0x3]
      %v5185 = vld [vmem:[%s5164 + $0xa0] sm:$0xff]
      %v5186 = vld [vmem:[%s5164 + $0xa8] sm:$0xff]
      %v5187 = vld [vmem:[%s5164 + $0xb0] sm:$0xff]
      %v5188 = vld [vmem:[%s5164 + $0xb8] sm:$0xff]
      %v5189 = vld [vmem:[%s5164 + $0xc0] sm:$0x3]
      %v5190 = vld [vmem:[%s5164 + $0xc8] sm:$0xff]
      %v5191 = vld [vmem:[%s5164 + $0xd0] sm:$0xff]
      %v5192 = vld [vmem:[%s5164 + $0xd8] sm:$0xff]
      %v5193 = vld [vmem:[%s5164 + $0xe0] sm:$0xff]
      %v5194 = vld [vmem:[%s5164 + $0xe8] sm:$0x3]
      %v5195 = vld [vmem:[%s5164 + $0xf0] sm:$0xff]
      %v5196 = vld [vmem:[%s5164 + $0xf8] sm:$0xff]
      %v5197 = vld [vmem:[%s5164 + $0x100] sm:$0xff]
      %v5198 = vld [vmem:[%s5164 + $0x108] sm:$0xff]
      %v5199 = vld [vmem:[%s5164 + $0x110] sm:$0x3]
      %v5200 = vld [vmem:[%s5164 + $0x118] sm:$0xff]
      %v5201 = vld [vmem:[%s5164 + $0x120] sm:$0xff]
      %v5202 = vld [vmem:[%s5164 + $0x128] sm:$0xff]
      %v5203 = vld [vmem:[%s5164 + $0x130] sm:$0xff]
      %v5204 = vld [vmem:[%s5164 + $0x138] sm:$0x3]
      %v5205 = vld [vmem:[%s5164 + $0x140] sm:$0xff]
      %v5206 = vld [vmem:[%s5164 + $0x148] sm:$0xff]
      %v5207 = vld [vmem:[%s5164 + $0x150] sm:$0xff]
      %v5208 = vld [vmem:[%s5164 + $0x158] sm:$0xff]
      %v5209 = vld [vmem:[%s5164 + $0x160] sm:$0x3]
      %v5210 = vld [vmem:[%s5164 + $0x168] sm:$0xff]
      %v5211 = vld [vmem:[%s5164 + $0x170] sm:$0xff]
      %v5212 = vld [vmem:[%s5164 + $0x178] sm:$0xff]
      %v5213 = vld [vmem:[%s5164 + $0x180] sm:$0xff]
      %v5214 = vld [vmem:[%s5164 + $0x188] sm:$0x3]
      %v5215 = vld [vmem:[%s5164 + $0x190] sm:$0xff]
      %v5216 = vld [vmem:[%s5164 + $0x198] sm:$0xff]
      %v5217 = vld [vmem:[%s5164 + $0x1a0] sm:$0xff]
      %v5218 = vld [vmem:[%s5164 + $0x1a8] sm:$0xff]
      %v5219 = vld [vmem:[%s5164 + $0x1b0] sm:$0x3]
      %v5220 = vld [vmem:[%s5164 + $0x1b8] sm:$0xff]
      %v5221 = vld [vmem:[%s5164 + $0x1c0] sm:$0xff]
      %v5222 = vld [vmem:[%s5164 + $0x1c8] sm:$0xff]
      %v5223 = vld [vmem:[%s5164 + $0x1d0] sm:$0xff]
      %v5224 = vld [vmem:[%s5164 + $0x1d8] sm:$0x3]
      %v5225 = vld [vmem:[%s5164 + $0x1e0] sm:$0xff]
      %v5226 = vld [vmem:[%s5164 + $0x1e8] sm:$0xff]
      %v5227 = vld [vmem:[%s5164 + $0x1f0] sm:$0xff]
      %v5228 = vld [vmem:[%s5164 + $0x1f8] sm:$0xff]
      %v5229 = vld [vmem:[%s5164 + $0x200] sm:$0x3]
      %v5230 = vld [vmem:[%s5164 + $0x208] sm:$0xff]
      %v5231 = vld [vmem:[%s5164 + $0x210] sm:$0xff]
      %v5232 = vld [vmem:[%s5164 + $0x218] sm:$0xff]
      %v5233 = vld [vmem:[%s5164 + $0x220] sm:$0xff]
      %v5234 = vld [vmem:[%s5164 + $0x228] sm:$0x3]
      %v5235 = vld [vmem:[%s5164 + $0x230] sm:$0xff]
      %v5236 = vld [vmem:[%s5164 + $0x238] sm:$0xff]
      %v5237 = vld [vmem:[%s5164 + $0x240] sm:$0xff]
      %v5238 = vld [vmem:[%s5164 + $0x248] sm:$0xff]
      %v5239 = vld [vmem:[%s5164 + $0x250] sm:$0x3]
      %v5240 = vld [vmem:[%s5164 + $0x258] sm:$0xff]
      %v5241 = vld [vmem:[%s5164 + $0x260] sm:$0xff]
      %v5242 = vld [vmem:[%s5164 + $0x268] sm:$0xff]
      %v5243 = vld [vmem:[%s5164 + $0x270] sm:$0xff]
      %v5244 = vld [vmem:[%s5164 + $0x278] sm:$0x3]
      %v5245 = vpack.c.bf16 %v5166, %v5165
      %v5246 = vpack.c.bf16 %v5168, %v5167
      %v5247 = vpack.c.bf16 %v5171, %v5170
      %v5248 = vpack.c.bf16 %v5173, %v5172
      %v5249 = vpack.c.bf16 %v5176, %v5175
      %v5250 = vpack.c.bf16 %v5178, %v5177
      %v5251 = vpack.c.bf16 %v5181, %v5180
      %v5252 = vpack.c.bf16 %v5183, %v5182
      %v5253 = vpack.c.bf16 %v5186, %v5185
      %v5254 = vpack.c.bf16 %v5188, %v5187
      %v5255 = vpack.c.bf16 %v5191, %v5190
      %v5256 = vpack.c.bf16 %v5193, %v5192
      %v5257 = vpack.c.bf16 %v5196, %v5195
      %v5258 = vpack.c.bf16 %v5198, %v5197
      %v5259 = vpack.c.bf16 %v5201, %v5200
      %v5260 = vpack.c.bf16 %v5203, %v5202
      %v5261 = vpack.c.bf16 %v5206, %v5205
      %v5262 = vpack.c.bf16 %v5208, %v5207
      %v5263 = vpack.c.bf16 %v5211, %v5210
      %v5264 = vpack.c.bf16 %v5213, %v5212
      %v5265 = vpack.c.bf16 %v5216, %v5215
      %v5266 = vpack.c.bf16 %v5218, %v5217
      %v5267 = vpack.c.bf16 %v5221, %v5220
      %v5268 = vpack.c.bf16 %v5223, %v5222
      %v5269 = vpack.c.bf16 %v5226, %v5225
      %v5270 = vpack.c.bf16 %v5228, %v5227
      %v5271 = vpack.c.bf16 %v5231, %v5230
      %v5272 = vpack.c.bf16 %v5233, %v5232
      %v5273 = vpack.c.bf16 %v5236, %v5235
      %v5274 = vpack.c.bf16 %v5238, %v5237
      %v5275 = vpack.c.bf16 %v5241, %v5240
      %v5276 = vpack.c.bf16 %v5243, %v5242
      %v5277 = vld [vmem:[#allocation2] sm:$0xff]
      %v5278 = vld [vmem:[#allocation2 + $0x8] sm:$0xff]
      %v5279 = vld [vmem:[#allocation2 + $0x10] sm:$0xff]
      %v5280 = vld [vmem:[#allocation2 + $0x18] sm:$0xff]
      %v5281 = vld [vmem:[#allocation2 + $0x20] sm:$0xff]
      %v5282 = vld [vmem:[#allocation2 + $0x28] sm:$0xff]
      %v5283 = vld [vmem:[#allocation2 + $0x30] sm:$0xff]
      %v5284 = vld [vmem:[#allocation2 + $0x38] sm:$0xff]
      %v5285 = vld [vmem:[#allocation2 + $0x40] sm:$0xff]
      %v5286 = vld [vmem:[#allocation2 + $0x48] sm:$0xff]
      %v5287 = vld [vmem:[#allocation2 + $0x50] sm:$0xff]
      %v5288 = vld [vmem:[#allocation2 + $0x58] sm:$0xff]
      %v5289 = vld [vmem:[#allocation2 + $0x60] sm:$0xff]
      %v5290 = vld [vmem:[#allocation2 + $0x68] sm:$0xff]
      %v5291 = vld [vmem:[#allocation2 + $0x70] sm:$0xff]
      %v5292 = vld [vmem:[#allocation2 + $0x78] sm:$0xff]
      %v5293 = vld [vmem:[#allocation2 + $0x80] sm:$0xff]
      %v5294 = vld [vmem:[#allocation2 + $0x88] sm:$0xff]
      %v5295 = vld [vmem:[#allocation2 + $0x90] sm:$0xff]
      %v5296 = vld [vmem:[#allocation2 + $0x98] sm:$0xff]
      %v5297 = vld [vmem:[#allocation2 + $0xa0] sm:$0xff]
      %v5298 = vld [vmem:[#allocation2 + $0xa8] sm:$0xff]
      %v5299 = vld [vmem:[#allocation2 + $0xb0] sm:$0xff]
      %v5300 = vld [vmem:[#allocation2 + $0xb8] sm:$0xff]
      %v5301 = vld [vmem:[#allocation2 + $0xc0] sm:$0xff]
      %v5302 = vld [vmem:[#allocation2 + $0xc8] sm:$0xff]
      %v5303 = vld [vmem:[#allocation2 + $0xd0] sm:$0xff]
      %v5304 = vld [vmem:[#allocation2 + $0xd8] sm:$0xff]
      %v5305 = vld [vmem:[#allocation2 + $0xe0] sm:$0xff]
      %v5306 = vld [vmem:[#allocation2 + $0xe8] sm:$0xff]
      %v5307 = vld [vmem:[#allocation2 + $0xf0] sm:$0xff]
      %v5308 = vld [vmem:[#allocation2 + $0xf8] sm:$0xff]
      %v5309 = vld [vmem:[#allocation2 + $0x100] sm:$0xff]
      %v5310 = vld [vmem:[#allocation2 + $0x108] sm:$0xff]
      %v5311 = vld [vmem:[#allocation2 + $0x110] sm:$0xff]
      %v5312 = vld [vmem:[#allocation2 + $0x118] sm:$0xff]
      %v5313 = vld [vmem:[#allocation2 + $0x120] sm:$0xff]
      %v5314 = vld [vmem:[#allocation2 + $0x128] sm:$0xff]
      %v5315 = vld [vmem:[#allocation2 + $0x130] sm:$0xff]
      %v5316 = vld [vmem:[#allocation2 + $0x138] sm:$0xff]
      %v5317 = vld [vmem:[#allocation2 + $0x140] sm:$0xff]
      %v5318 = vld [vmem:[#allocation2 + $0x148] sm:$0xff]
      %v5319 = vld [vmem:[#allocation2 + $0x150] sm:$0xff]
      %v5320 = vld [vmem:[#allocation2 + $0x158] sm:$0xff]
      %v5321 = vld [vmem:[#allocation2 + $0x160] sm:$0xff]
      %v5322 = vld [vmem:[#allocation2 + $0x168] sm:$0xff]
      %v5323 = vld [vmem:[#allocation2 + $0x170] sm:$0xff]
      %v5324 = vld [vmem:[#allocation2 + $0x178] sm:$0xff]
      %v5325 = vld [vmem:[#allocation2 + $0x180] sm:$0xff]
      %v5326 = vld [vmem:[#allocation2 + $0x188] sm:$0xff]
      %v5327 = vld [vmem:[#allocation2 + $0x190] sm:$0xff]
      %v5328 = vld [vmem:[#allocation2 + $0x198] sm:$0xff]
      %v5329 = vld [vmem:[#allocation2 + $0x1a0] sm:$0xff]
      %v5330 = vld [vmem:[#allocation2 + $0x1a8] sm:$0xff]
      %v5331 = vld [vmem:[#allocation2 + $0x1b0] sm:$0xff]
      %v5332 = vld [vmem:[#allocation2 + $0x1b8] sm:$0xff]
      %v5333 = vld [vmem:[#allocation2 + $0x1c0] sm:$0xff]
      %v5334 = vld [vmem:[#allocation2 + $0x1c8] sm:$0xff]
      %v5335 = vld [vmem:[#allocation2 + $0x1d0] sm:$0xff]
      %v5336 = vld [vmem:[#allocation2 + $0x1d8] sm:$0xff]
      %v5337 = vld [vmem:[#allocation2 + $0x1e0] sm:$0xff]
      %v5338 = vld [vmem:[#allocation2 + $0x1e8] sm:$0xff]
      %v5339 = vld [vmem:[#allocation2 + $0x1f0] sm:$0xff]
      %v5340 = vld [vmem:[#allocation2 + $0x1f8] sm:$0xff]
      %s5341 = scalar_lea.vmem %s1, 48
      %v5342 = vld [vmem:[%s5341] sm:$0xf]
      %v5343 = vld [vmem:[%s5341 + $0x4] sm:$0x3]
      %v5346 = vunpack.c.l.b16 %v5342
      %v5347 = vunpack.c.l.b16 %v5343
      %v5348 = vpack.c.b16 %v5347, %v5346
      %v5350 = vsel %vm468, %v5245, 0
      %v5353 = vsel %vm468, %v5246, 0
      %v5356 = vsel %vm468, %v5247, 0
      %v5359 = vsel %vm468, %v5248, 0
      %v5362 = vsel %vm468, %v5249, 0
      %v5365 = vsel %vm468, %v5250, 0
      %v5368 = vsel %vm468, %v5251, 0
      %v5371 = vsel %vm468, %v5252, 0
      %v5374 = vsel %vm468, %v5253, 0
      %v5377 = vsel %vm468, %v5254, 0
      %v5380 = vsel %vm468, %v5255, 0
      %v5383 = vsel %vm468, %v5256, 0
      %v5386 = vsel %vm468, %v5257, 0
      %v5389 = vsel %vm468, %v5258, 0
      %v5392 = vsel %vm468, %v5259, 0
      %v5395 = vsel %vm468, %v5260, 0
      %v5398 = vsel %vm468, %v5261, 0
      %v5401 = vsel %vm468, %v5262, 0
      %v5404 = vsel %vm468, %v5263, 0
      %v5407 = vsel %vm468, %v5264, 0
      %v5410 = vsel %vm468, %v5265, 0
      %v5413 = vsel %vm468, %v5266, 0
      %v5416 = vsel %vm468, %v5267, 0
      %v5419 = vsel %vm468, %v5268, 0
      %v5422 = vsel %vm468, %v5269, 0
      %v5425 = vsel %vm468, %v5270, 0
      %v5428 = vsel %vm468, %v5271, 0
      %v5431 = vsel %vm468, %v5272, 0
      %v5434 = vsel %vm468, %v5273, 0
      %v5437 = vsel %vm468, %v5274, 0
      %v5440 = vsel %vm468, %v5275, 0
      %v5443 = vsel %vm468, %v5276, 0
      %v5446 = vsel %vm565, %v5348, 0
      %5448 = vmatprep.subr.bf16.mxu0 0
      %5449 = vmatpush1.bf16.msra.mxu0 %v5446
      %5450 = vmatprep.subr.bf16.mxu0 0
      %5451 = vmatpush1.bf16.msra.mxu0 0
      %5452 = vmatprep.subr.bf16.mxu0 0
      %5453 = vmatpush1.bf16.msra.mxu0 0
      %5454 = vmatprep.subr.bf16.mxu0 0
      %5455 = vmatpush1.bf16.msra.mxu0 0
      %5456 = vmatprep.subr.bf16.mxu0 0
      %5457 = vmatpush1.bf16.msra.mxu0 0
      %5458 = vmatprep.subr.bf16.mxu0 0
      %5459 = vmatpush1.bf16.msra.mxu0 0
      %5460 = vmatprep.subr.bf16.mxu0 0
      %5461 = vmatpush1.bf16.msra.mxu0 0
      %5462 = vmatprep.subr.bf16.mxu0 0
      %5463 = vmatpush1.bf16.msra.mxu0 0
      %5464 = vmatprep.subr.bf16.mxu0 0
      %5465 = vmatpush1.bf16.msra.mxu0 0
      %5466 = vmatprep.subr.bf16.mxu0 0
      %5467 = vmatpush1.bf16.msra.mxu0 0
      %5468 = vmatprep.subr.bf16.mxu0 0
      %5469 = vmatpush1.bf16.msra.mxu0 0
      %5470 = vmatprep.subr.bf16.mxu0 0
      %5471 = vmatpush1.bf16.msra.mxu0 0
      %5472 = vmatprep.subr.bf16.mxu0 0
      %5473 = vmatpush1.bf16.msra.mxu0 0
      %5474 = vmatprep.subr.bf16.mxu0 0
      %5475 = vmatpush1.bf16.msra.mxu0 0
      %5476 = vmatprep.subr.bf16.mxu0 0
      %5477 = vmatpush1.bf16.msra.mxu0 0
      %5478 = vmatprep.subr.bf16.mxu0 0
      %5479 = vmatpush1.bf16.msra.mxu0 0
      %5480 = vmatprep.mubr.bf16.mxu0 0
      %5481 = vmatmul.mubr.bf16.gmra.mrb[0].mxu0 %v5350
      %v5482 = vpop.f32.mrb[0].mxu0
      %v5483 = vadd.f32 0.0, %v5482
      %v5484 = vpop.f32.mrb[0].mxu0
      %v5485 = vpop.f32.mrb[0].mxu0
      %v5486 = vadd.f32 0.0, %v5485
      %v5487 = vpop.f32.mrb[0].mxu0
      %5488 = vmatprep.mubr.bf16.mxu0 0
      %5489 = vmatmul.mubr.bf16.gmra.mrb[0].mxu0 %v5353
      %v5490 = vpop.f32.mrb[0].mxu0
      %v5491 = vadd.f32 0.0, %v5490
      %v5492 = vpop.f32.mrb[0].mxu0
      %v5493 = vpop.f32.mrb[0].mxu0
      %v5494 = vadd.f32 0.0, %v5493
      %v5495 = vpop.f32.mrb[0].mxu0
      %5496 = vmatprep.mubr.bf16.mxu0 0
      %5497 = vmatmul.mubr.bf16.gmra.mrb[0].mxu0 %v5356
      %v5498 = vpop.f32.mrb[0].mxu0
      %v5499 = vadd.f32 0.0, %v5498
      %v5500 = vpop.f32.mrb[0].mxu0
      %v5501 = vpop.f32.mrb[0].mxu0
      %v5502 = vadd.f32 0.0, %v5501
      %v5503 = vpop.f32.mrb[0].mxu0
      %5504 = vmatprep.mubr.bf16.mxu0 0
      %5505 = vmatmul.mubr.bf16.gmra.mrb[0].mxu0 %v5359
      %v5506 = vpop.f32.mrb[0].mxu0
      %v5507 = vadd.f32 0.0, %v5506
      %v5508 = vpop.f32.mrb[0].mxu0
      %v5509 = vpop.f32.mrb[0].mxu0
      %v5510 = vadd.f32 0.0, %v5509
      %v5511 = vpop.f32.mrb[0].mxu0
      %5512 = vmatprep.mubr.bf16.mxu0 0
      %5513 = vmatmul.mubr.bf16.gmra.mrb[0].mxu0 %v5362
      %v5514 = vpop.f32.mrb[0].mxu0
      %v5515 = vadd.f32 0.0, %v5514
      %v5516 = vpop.f32.mrb[0].mxu0
      %v5517 = vpop.f32.mrb[0].mxu0
      %v5518 = vadd.f32 0.0, %v5517
      %v5519 = vpop.f32.mrb[0].mxu0
      %5520 = vmatprep.mubr.bf16.mxu0 0
      %5521 = vmatmul.mubr.bf16.gmra.mrb[0].mxu0 %v5365
      %v5522 = vpop.f32.mrb[0].mxu0
      %v5523 = vadd.f32 0.0, %v5522
      %v5524 = vpop.f32.mrb[0].mxu0
      %v5525 = vpop.f32.mrb[0].mxu0
      %v5526 = vadd.f32 0.0, %v5525
      %v5527 = vpop.f32.mrb[0].mxu0
      %5528 = vmatprep.mubr.bf16.mxu0 0
      %5529 = vmatmul.mubr.bf16.gmra.mrb[0].mxu0 %v5368
      %v5530 = vpop.f32.mrb[0].mxu0
      %v5531 = vadd.f32 0.0, %v5530
      %v5532 = vpop.f32.mrb[0].mxu0
      %v5533 = vpop.f32.mrb[0].mxu0
      %v5534 = vadd.f32 0.0, %v5533
      %v5535 = vpop.f32.mrb[0].mxu0
      %5536 = vmatprep.mubr.bf16.mxu0 0
      %5537 = vmatmul.mubr.bf16.gmra.mrb[0].mxu0 %v5371
      %v5538 = vpop.f32.mrb[0].mxu0
      %v5539 = vadd.f32 0.0, %v5538
      %v5540 = vpop.f32.mrb[0].mxu0
      %v5541 = vpop.f32.mrb[0].mxu0
      %v5542 = vadd.f32 0.0, %v5541
      %v5543 = vpop.f32.mrb[0].mxu0
      %5544 = vmatprep.mubr.bf16.mxu0 0
      %5545 = vmatmul.mubr.bf16.gmra.mrb[0].mxu0 %v5374
      %v5546 = vpop.f32.mrb[0].mxu0
      %v5547 = vadd.f32 0.0, %v5546
      %v5548 = vpop.f32.mrb[0].mxu0
      %v5549 = vpop.f32.mrb[0].mxu0
      %v5550 = vadd.f32 0.0, %v5549
      %v5551 = vpop.f32.mrb[0].mxu0
      %5552 = vmatprep.mubr.bf16.mxu0 0
      %5553 = vmatmul.mubr.bf16.gmra.mrb[0].mxu0 %v5377
      %v5554 = vpop.f32.mrb[0].mxu0
      %v5555 = vadd.f32 0.0, %v5554
      %v5556 = vpop.f32.mrb[0].mxu0
      %v5557 = vpop.f32.mrb[0].mxu0
      %v5558 = vadd.f32 0.0, %v5557
      %v5559 = vpop.f32.mrb[0].mxu0
      %5560 = vmatprep.mubr.bf16.mxu0 0
      %5561 = vmatmul.mubr.bf16.gmra.mrb[0].mxu0 %v5380
      %v5562 = vpop.f32.mrb[0].mxu0
      %v5563 = vadd.f32 0.0, %v5562
      %v5564 = vpop.f32.mrb[0].mxu0
      %v5565 = vpop.f32.mrb[0].mxu0
      %v5566 = vadd.f32 0.0, %v5565
      %v5567 = vpop.f32.mrb[0].mxu0
      %5568 = vmatprep.mubr.bf16.mxu0 0
      %5569 = vmatmul.mubr.bf16.gmra.mrb[0].mxu0 %v5383
      %v5570 = vpop.f32.mrb[0].mxu0
      %v5571 = vadd.f32 0.0, %v5570
      %v5572 = vpop.f32.mrb[0].mxu0
      %v5573 = vpop.f32.mrb[0].mxu0
      %v5574 = vadd.f32 0.0, %v5573
      %v5575 = vpop.f32.mrb[0].mxu0
      %5576 = vmatprep.mubr.bf16.mxu0 0
      %5577 = vmatmul.mubr.bf16.gmra.mrb[0].mxu0 %v5386
      %v5578 = vpop.f32.mrb[0].mxu0
      %v5579 = vadd.f32 0.0, %v5578
      %v5580 = vpop.f32.mrb[0].mxu0
      %v5581 = vpop.f32.mrb[0].mxu0
      %v5582 = vadd.f32 0.0, %v5581
      %v5583 = vpop.f32.mrb[0].mxu0
      %5584 = vmatprep.mubr.bf16.mxu0 0
      %5585 = vmatmul.mubr.bf16.gmra.mrb[0].mxu0 %v5389
      %v5586 = vpop.f32.mrb[0].mxu0
      %v5587 = vadd.f32 0.0, %v5586
      %v5588 = vpop.f32.mrb[0].mxu0
      %v5589 = vpop.f32.mrb[0].mxu0
      %v5590 = vadd.f32 0.0, %v5589
      %v5591 = vpop.f32.mrb[0].mxu0
      %5592 = vmatprep.mubr.bf16.mxu0 0
      %5593 = vmatmul.mubr.bf16.gmra.mrb[0].mxu0 %v5392
      %v5594 = vpop.f32.mrb[0].mxu0
      %v5595 = vadd.f32 0.0, %v5594
      %v5596 = vpop.f32.mrb[0].mxu0
      %v5597 = vpop.f32.mrb[0].mxu0
      %v5598 = vadd.f32 0.0, %v5597
      %v5599 = vpop.f32.mrb[0].mxu0
      %5600 = vmatprep.mubr.bf16.mxu0 0
      %5601 = vmatmul.mubr.bf16.gmra.mrb[0].mxu0 %v5395
      %v5602 = vpop.f32.mrb[0].mxu0
      %v5603 = vadd.f32 0.0, %v5602
      %v5604 = vpop.f32.mrb[0].mxu0
      %v5605 = vpop.f32.mrb[0].mxu0
      %v5606 = vadd.f32 0.0, %v5605
      %v5607 = vpop.f32.mrb[0].mxu0
      %5608 = vmatprep.mubr.bf16.mxu0 0
      %5609 = vmatmul.mubr.bf16.gmra.mrb[0].mxu0 %v5398
      %v5610 = vpop.f32.mrb[0].mxu0
      %v5611 = vadd.f32 0.0, %v5610
      %v5612 = vpop.f32.mrb[0].mxu0
      %v5613 = vpop.f32.mrb[0].mxu0
      %v5614 = vadd.f32 0.0, %v5613
      %v5615 = vpop.f32.mrb[0].mxu0
      %5616 = vmatprep.mubr.bf16.mxu0 0
      %5617 = vmatmul.mubr.bf16.gmra.mrb[0].mxu0 %v5401
      %v5618 = vpop.f32.mrb[0].mxu0
      %v5619 = vadd.f32 0.0, %v5618
      %v5620 = vpop.f32.mrb[0].mxu0
      %v5621 = vpop.f32.mrb[0].mxu0
      %v5622 = vadd.f32 0.0, %v5621
      %v5623 = vpop.f32.mrb[0].mxu0
      %5624 = vmatprep.mubr.bf16.mxu0 0
      %5625 = vmatmul.mubr.bf16.gmra.mrb[0].mxu0 %v5404
      %v5626 = vpop.f32.mrb[0].mxu0
      %v5627 = vadd.f32 0.0, %v5626
      %v5628 = vpop.f32.mrb[0].mxu0
      %v5629 = vpop.f32.mrb[0].mxu0
      %v5630 = vadd.f32 0.0, %v5629
      %v5631 = vpop.f32.mrb[0].mxu0
      %5632 = vmatprep.mubr.bf16.mxu0 0
      %5633 = vmatmul.mubr.bf16.gmra.mrb[0].mxu0 %v5407
      %v5634 = vpop.f32.mrb[0].mxu0
      %v5635 = vadd.f32 0.0, %v5634
      %v5636 = vpop.f32.mrb[0].mxu0
      %v5637 = vpop.f32.mrb[0].mxu0
      %v5638 = vadd.f32 0.0, %v5637
      %v5639 = vpop.f32.mrb[0].mxu0
      %5640 = vmatprep.mubr.bf16.mxu0 0
      %5641 = vmatmul.mubr.bf16.gmra.mrb[0].mxu0 %v5410
      %v5642 = vpop.f32.mrb[0].mxu0
      %v5643 = vadd.f32 0.0, %v5642
      %v5644 = vpop.f32.mrb[0].mxu0
      %v5645 = vpop.f32.mrb[0].mxu0
      %v5646 = vadd.f32 0.0, %v5645
      %v5647 = vpop.f32.mrb[0].mxu0
      %5648 = vmatprep.mubr.bf16.mxu0 0
      %5649 = vmatmul.mubr.bf16.gmra.mrb[0].mxu0 %v5413
      %v5650 = vpop.f32.mrb[0].mxu0
      %v5651 = vadd.f32 0.0, %v5650
      %v5652 = vpop.f32.mrb[0].mxu0
      %v5653 = vpop.f32.mrb[0].mxu0
      %v5654 = vadd.f32 0.0, %v5653
      %v5655 = vpop.f32.mrb[0].mxu0
      %5656 = vmatprep.mubr.bf16.mxu0 0
      %5657 = vmatmul.mubr.bf16.gmra.mrb[0].mxu0 %v5416
      %v5658 = vpop.f32.mrb[0].mxu0
      %v5659 = vadd.f32 0.0, %v5658
      %v5660 = vpop.f32.mrb[0].mxu0
      %v5661 = vpop.f32.mrb[0].mxu0
      %v5662 = vadd.f32 0.0, %v5661
      %v5663 = vpop.f32.mrb[0].mxu0
      %5664 = vmatprep.mubr.bf16.mxu0 0
      %5665 = vmatmul.mubr.bf16.gmra.mrb[0].mxu0 %v5419
      %v5666 = vpop.f32.mrb[0].mxu0
      %v5667 = vadd.f32 0.0, %v5666
      %v5668 = vpop.f32.mrb[0].mxu0
      %v5669 = vpop.f32.mrb[0].mxu0
      %v5670 = vadd.f32 0.0, %v5669
      %v5671 = vpop.f32.mrb[0].mxu0
      %5672 = vmatprep.mubr.bf16.mxu0 0
      %5673 = vmatmul.mubr.bf16.gmra.mrb[0].mxu0 %v5422
      %v5674 = vpop.f32.mrb[0].mxu0
      %v5675 = vadd.f32 0.0, %v5674
      %v5676 = vpop.f32.mrb[0].mxu0
      %v5677 = vpop.f32.mrb[0].mxu0
      %v5678 = vadd.f32 0.0, %v5677
      %v5679 = vpop.f32.mrb[0].mxu0
      %5680 = vmatprep.mubr.bf16.mxu0 0
      %5681 = vmatmul.mubr.bf16.gmra.mrb[0].mxu0 %v5425
      %v5682 = vpop.f32.mrb[0].mxu0
      %v5683 = vadd.f32 0.0, %v5682
      %v5684 = vpop.f32.mrb[0].mxu0
      %v5685 = vpop.f32.mrb[0].mxu0
      %v5686 = vadd.f32 0.0, %v5685
      %v5687 = vpop.f32.mrb[0].mxu0
      %5688 = vmatprep.mubr.bf16.mxu0 0
      %5689 = vmatmul.mubr.bf16.gmra.mrb[0].mxu0 %v5428
      %v5690 = vpop.f32.mrb[0].mxu0
      %v5691 = vadd.f32 0.0, %v5690
      %v5692 = vpop.f32.mrb[0].mxu0
      %v5693 = vpop.f32.mrb[0].mxu0
      %v5694 = vadd.f32 0.0, %v5693
      %v5695 = vpop.f32.mrb[0].mxu0
      %5696 = vmatprep.mubr.bf16.mxu0 0
      %5697 = vmatmul.mubr.bf16.gmra.mrb[0].mxu0 %v5431
      %v5698 = vpop.f32.mrb[0].mxu0
      %v5699 = vadd.f32 0.0, %v5698
      %v5700 = vpop.f32.mrb[0].mxu0
      %v5701 = vpop.f32.mrb[0].mxu0
      %v5702 = vadd.f32 0.0, %v5701
      %v5703 = vpop.f32.mrb[0].mxu0
      %5704 = vmatprep.mubr.bf16.mxu0 0
      %5705 = vmatmul.mubr.bf16.gmra.mrb[0].mxu0 %v5434
      %v5706 = vpop.f32.mrb[0].mxu0
      %v5707 = vadd.f32 0.0, %v5706
      %v5708 = vpop.f32.mrb[0].mxu0
      %v5709 = vpop.f32.mrb[0].mxu0
      %v5710 = vadd.f32 0.0, %v5709
      %v5711 = vpop.f32.mrb[0].mxu0
      %5712 = vmatprep.mubr.bf16.mxu0 0
      %5713 = vmatmul.mubr.bf16.gmra.mrb[0].mxu0 %v5437
      %v5714 = vpop.f32.mrb[0].mxu0
      %v5715 = vadd.f32 0.0, %v5714
      %v5716 = vpop.f32.mrb[0].mxu0
      %v5717 = vpop.f32.mrb[0].mxu0
      %v5718 = vadd.f32 0.0, %v5717
      %v5719 = vpop.f32.mrb[0].mxu0
      %5720 = vmatprep.mubr.bf16.mxu0 0
      %5721 = vmatmul.mubr.bf16.gmra.mrb[0].mxu0 %v5440
      %v5722 = vpop.f32.mrb[0].mxu0
      %v5723 = vadd.f32 0.0, %v5722
      %v5724 = vpop.f32.mrb[0].mxu0
      %v5725 = vpop.f32.mrb[0].mxu0
      %v5726 = vadd.f32 0.0, %v5725
      %v5727 = vpop.f32.mrb[0].mxu0
      %5728 = vmatprep.mubr.bf16.mxu0 0
      %5729 = vmatmul.mubr.bf16.gmra.mrb[0].mxu0 %v5443
      %v5730 = vpop.f32.mrb[0].mxu0
      %v5731 = vadd.f32 0.0, %v5730
      %v5732 = vpop.f32.mrb[0].mxu0
      %v5733 = vpop.f32.mrb[0].mxu0
      %v5734 = vadd.f32 0.0, %v5733
      %v5735 = vpop.f32.mrb[0].mxu0
      %5736 = vdwg.mxu0
      %v5737 = vadd.f32 %v5277, %v5483
      %v5738 = vadd.f32 %v5278, %v5486
      %v5739 = vadd.f32 %v5279, %v5491
      %v5740 = vadd.f32 %v5280, %v5494
      %v5741 = vadd.f32 %v5281, %v5499
      %v5742 = vadd.f32 %v5282, %v5502
      %v5743 = vadd.f32 %v5283, %v5507
      %v5744 = vadd.f32 %v5284, %v5510
      %v5745 = vadd.f32 %v5285, %v5515
      %v5746 = vadd.f32 %v5286, %v5518
      %v5747 = vadd.f32 %v5287, %v5523
      %v5748 = vadd.f32 %v5288, %v5526
      %v5749 = vadd.f32 %v5289, %v5531
      %v5750 = vadd.f32 %v5290, %v5534
      %v5751 = vadd.f32 %v5291, %v5539
      %v5752 = vadd.f32 %v5292, %v5542
      %v5753 = vadd.f32 %v5293, %v5547
      %v5754 = vadd.f32 %v5294, %v5550
      %v5755 = vadd.f32 %v5295, %v5555
      %v5756 = vadd.f32 %v5296, %v5558
      %v5757 = vadd.f32 %v5297, %v5563
      %v5758 = vadd.f32 %v5298, %v5566
      %v5759 = vadd.f32 %v5299, %v5571
      %v5760 = vadd.f32 %v5300, %v5574
      %v5761 = vadd.f32 %v5301, %v5579
      %v5762 = vadd.f32 %v5302, %v5582
      %v5763 = vadd.f32 %v5303, %v5587
      %v5764 = vadd.f32 %v5304, %v5590
      %v5765 = vadd.f32 %v5305, %v5595
      %v5766 = vadd.f32 %v5306, %v5598
      %v5767 = vadd.f32 %v5307, %v5603
      %v5768 = vadd.f32 %v5308, %v5606
      %v5769 = vadd.f32 %v5309, %v5611
      %v5770 = vadd.f32 %v5310, %v5614
      %v5771 = vadd.f32 %v5311, %v5619
      %v5772 = vadd.f32 %v5312, %v5622
      %v5773 = vadd.f32 %v5313, %v5627
      %v5774 = vadd.f32 %v5314, %v5630
      %v5775 = vadd.f32 %v5315, %v5635
      %v5776 = vadd.f32 %v5316, %v5638
      %v5777 = vadd.f32 %v5317, %v5643
      %v5778 = vadd.f32 %v5318, %v5646
      %v5779 = vadd.f32 %v5319, %v5651
      %v5780 = vadd.f32 %v5320, %v5654
      %v5781 = vadd.f32 %v5321, %v5659
      %v5782 = vadd.f32 %v5322, %v5662
      %v5783 = vadd.f32 %v5323, %v5667
      %v5784 = vadd.f32 %v5324, %v5670
      %v5785 = vadd.f32 %v5325, %v5675
      %v5786 = vadd.f32 %v5326, %v5678
      %v5787 = vadd.f32 %v5327, %v5683
      %v5788 = vadd.f32 %v5328, %v5686
      %v5789 = vadd.f32 %v5329, %v5691
      %v5790 = vadd.f32 %v5330, %v5694
      %v5791 = vadd.f32 %v5331, %v5699
      %v5792 = vadd.f32 %v5332, %v5702
      %v5793 = vadd.f32 %v5333, %v5707
      %v5794 = vadd.f32 %v5334, %v5710
      %v5795 = vadd.f32 %v5335, %v5715
      %v5796 = vadd.f32 %v5336, %v5718
      %v5797 = vadd.f32 %v5337, %v5723
      %v5798 = vadd.f32 %v5338, %v5726
      %v5799 = vadd.f32 %v5339, %v5731
      %v5800 = vadd.f32 %v5340, %v5734
      %5801 = vst [vmem:[#allocation2] sm:$0xff] %v5737
      %5802 = vst [vmem:[#allocation2 + $0x8] sm:$0xff] %v5738
      %5803 = vst [vmem:[#allocation2 + $0x10] sm:$0xff] %v5739
      %5804 = vst [vmem:[#allocation2 + $0x18] sm:$0xff] %v5740
      %5805 = vst [vmem:[#allocation2 + $0x20] sm:$0xff] %v5741
      %5806 = vst [vmem:[#allocation2 + $0x28] sm:$0xff] %v5742
      %5807 = vst [vmem:[#allocation2 + $0x30] sm:$0xff] %v5743
      %5808 = vst [vmem:[#allocation2 + $0x38] sm:$0xff] %v5744
      %5809 = vst [vmem:[#allocation2 + $0x40] sm:$0xff] %v5745
      %5810 = vst [vmem:[#allocation2 + $0x48] sm:$0xff] %v5746
      %5811 = vst [vmem:[#allocation2 + $0x50] sm:$0xff] %v5747
      %5812 = vst [vmem:[#allocation2 + $0x58] sm:$0xff] %v5748
      %5813 = vst [vmem:[#allocation2 + $0x60] sm:$0xff] %v5749
      %5814 = vst [vmem:[#allocation2 + $0x68] sm:$0xff] %v5750
      %5815 = vst [vmem:[#allocation2 + $0x70] sm:$0xff] %v5751
      %5816 = vst [vmem:[#allocation2 + $0x78] sm:$0xff] %v5752
      %5817 = vst [vmem:[#allocation2 + $0x80] sm:$0xff] %v5753
      %5818 = vst [vmem:[#allocation2 + $0x88] sm:$0xff] %v5754
      %5819 = vst [vmem:[#allocation2 + $0x90] sm:$0xff] %v5755
      %5820 = vst [vmem:[#allocation2 + $0x98] sm:$0xff] %v5756
      %5821 = vst [vmem:[#allocation2 + $0xa0] sm:$0xff] %v5757
      %5822 = vst [vmem:[#allocation2 + $0xa8] sm:$0xff] %v5758
      %5823 = vst [vmem:[#allocation2 + $0xb0] sm:$0xff] %v5759
      %5824 = vst [vmem:[#allocation2 + $0xb8] sm:$0xff] %v5760
      %5825 = vst [vmem:[#allocation2 + $0xc0] sm:$0xff] %v5761
      %5826 = vst [vmem:[#allocation2 + $0xc8] sm:$0xff] %v5762
      %5827 = vst [vmem:[#allocation2 + $0xd0] sm:$0xff] %v5763
      %5828 = vst [vmem:[#allocation2 + $0xd8] sm:$0xff] %v5764
      %5829 = vst [vmem:[#allocation2 + $0xe0] sm:$0xff] %v5765
      %5830 = vst [vmem:[#allocation2 + $0xe8] sm:$0xff] %v5766
      %5831 = vst [vmem:[#allocation2 + $0xf0] sm:$0xff] %v5767
      %5832 = vst [vmem:[#allocation2 + $0xf8] sm:$0xff] %v5768
      %5833 = vst [vmem:[#allocation2 + $0x100] sm:$0xff] %v5769
      %5834 = vst [vmem:[#allocation2 + $0x108] sm:$0xff] %v5770
      %5835 = vst [vmem:[#allocation2 + $0x110] sm:$0xff] %v5771
      %5836 = vst [vmem:[#allocation2 + $0x118] sm:$0xff] %v5772
      %5837 = vst [vmem:[#allocation2 + $0x120] sm:$0xff] %v5773
      %5838 = vst [vmem:[#allocation2 + $0x128] sm:$0xff] %v5774
      %5839 = vst [vmem:[#allocation2 + $0x130] sm:$0xff] %v5775
      %5840 = vst [vmem:[#allocation2 + $0x138] sm:$0xff] %v5776
      %5841 = vst [vmem:[#allocation2 + $0x140] sm:$0xff] %v5777
      %5842 = vst [vmem:[#allocation2 + $0x148] sm:$0xff] %v5778
      %5843 = vst [vmem:[#allocation2 + $0x150] sm:$0xff] %v5779
      %5844 = vst [vmem:[#allocation2 + $0x158] sm:$0xff] %v5780
      %5845 = vst [vmem:[#allocation2 + $0x160] sm:$0xff] %v5781
      %5846 = vst [vmem:[#allocation2 + $0x168] sm:$0xff] %v5782
      %5847 = vst [vmem:[#allocation2 + $0x170] sm:$0xff] %v5783
      %5848 = vst [vmem:[#allocation2 + $0x178] sm:$0xff] %v5784
      %5849 = vst [vmem:[#allocation2 + $0x180] sm:$0xff] %v5785
      %5850 = vst [vmem:[#allocation2 + $0x188] sm:$0xff] %v5786
      %5851 = vst [vmem:[#allocation2 + $0x190] sm:$0xff] %v5787
      %5852 = vst [vmem:[#allocation2 + $0x198] sm:$0xff] %v5788
      %5853 = vst [vmem:[#allocation2 + $0x1a0] sm:$0xff] %v5789
      %5854 = vst [vmem:[#allocation2 + $0x1a8] sm:$0xff] %v5790
      %5855 = vst [vmem:[#allocation2 + $0x1b0] sm:$0xff] %v5791
      %5856 = vst [vmem:[#allocation2 + $0x1b8] sm:$0xff] %v5792
      %5857 = vst [vmem:[#allocation2 + $0x1c0] sm:$0xff] %v5793
      %5858 = vst [vmem:[#allocation2 + $0x1c8] sm:$0xff] %v5794
      %5859 = vst [vmem:[#allocation2 + $0x1d0] sm:$0xff] %v5795
      %5860 = vst [vmem:[#allocation2 + $0x1d8] sm:$0xff] %v5796
      %5861 = vst [vmem:[#allocation2 + $0x1e0] sm:$0xff] %v5797
      %5862 = vst [vmem:[#allocation2 + $0x1e8] sm:$0xff] %v5798
      %5863 = vst [vmem:[#allocation2 + $0x1f0] sm:$0xff] %v5799
      %5864 = vst [vmem:[#allocation2 + $0x1f8] sm:$0xff] %v5800
      %v5945 = vrot.slane %v5165, 1
      %v5946 = vrot.slane %v5166, 1
      %v5947 = vsel %vm1066, %v5945, %v5946
      %v5948 = vrot.slane %v5167, 1
      %v5949 = vsel %vm1066, %v5946, %v5948
      %v5950 = vrot.slane %v5168, 1
      %v5951 = vsel %vm1066, %v5948, %v5950
      %v5952 = vrot.slane %v5169, 1
      %v5953 = vsel %vm1066, %v5950, %v5952
      %v5954 = vrot.slane %v5170, 1
      %v5955 = vrot.slane %v5171, 1
      %v5956 = vsel %vm1066, %v5954, %v5955
      %v5957 = vrot.slane %v5172, 1
      %v5958 = vsel %vm1066, %v5955, %v5957
      %v5959 = vrot.slane %v5173, 1
      %v5960 = vsel %vm1066, %v5957, %v5959
      %v5961 = vrot.slane %v5174, 1
      %v5962 = vsel %vm1066, %v5959, %v5961
      %v5963 = vrot.slane %v5175, 1
      %v5964 = vrot.slane %v5176, 1
      %v5965 = vsel %vm1066, %v5963, %v5964
      %v5966 = vrot.slane %v5177, 1
      %v5967 = vsel %vm1066, %v5964, %v5966
      %v5968 = vrot.slane %v5178, 1
      %v5969 = vsel %vm1066, %v5966, %v5968
      %v5970 = vrot.slane %v5179, 1
      %v5971 = vsel %vm1066, %v5968, %v5970
      %v5972 = vrot.slane %v5180, 1
      %v5973 = vrot.slane %v5181, 1
      %v5974 = vsel %vm1066, %v5972, %v5973
      %v5975 = vrot.slane %v5182, 1
      %v5976 = vsel %vm1066, %v5973, %v5975
      %v5977 = vrot.slane %v5183, 1
      %v5978 = vsel %vm1066, %v5975, %v5977
      %v5979 = vrot.slane %v5184, 1
      %v5980 = vsel %vm1066, %v5977, %v5979
      %v5981 = vrot.slane %v5185, 1
      %v5982 = vrot.slane %v5186, 1
      %v5983 = vsel %vm1066, %v5981, %v5982
      %v5984 = vrot.slane %v5187, 1
      %v5985 = vsel %vm1066, %v5982, %v5984
      %v5986 = vrot.slane %v5188, 1
      %v5987 = vsel %vm1066, %v5984, %v5986
      %v5988 = vrot.slane %v5189, 1
      %v5989 = vsel %vm1066, %v5986, %v5988
      %v5990 = vrot.slane %v5190, 1
      %v5991 = vrot.slane %v5191, 1
      %v5992 = vsel %vm1066, %v5990, %v5991
      %v5993 = vrot.slane %v5192, 1
      %v5994 = vsel %vm1066, %v5991, %v5993
      %v5995 = vrot.slane %v5193, 1
      %v5996 = vsel %vm1066, %v5993, %v5995
      %v5997 = vrot.slane %v5194, 1
      %v5998 = vsel %vm1066, %v5995, %v5997
      %v5999 = vrot.slane %v5195, 1
      %v6000 = vrot.slane %v5196, 1
      %v6001 = vsel %vm1066, %v5999, %v6000
      %v6002 = vrot.slane %v5197, 1
      %v6003 = vsel %vm1066, %v6000, %v6002
      %v6004 = vrot.slane %v5198, 1
      %v6005 = vsel %vm1066, %v6002, %v6004
      %v6006 = vrot.slane %v5199, 1
      %v6007 = vsel %vm1066, %v6004, %v6006
      %v6008 = vrot.slane %v5200, 1
      %v6009 = vrot.slane %v5201, 1
      %v6010 = vsel %vm1066, %v6008, %v6009
      %v6011 = vrot.slane %v5202, 1
      %v6012 = vsel %vm1066, %v6009, %v6011
      %v6013 = vrot.slane %v5203, 1
      %v6014 = vsel %vm1066, %v6011, %v6013
      %v6015 = vrot.slane %v5204, 1
      %v6016 = vsel %vm1066, %v6013, %v6015
      %v6017 = vrot.slane %v5205, 1
      %v6018 = vrot.slane %v5206, 1
      %v6019 = vsel %vm1066, %v6017, %v6018
      %v6020 = vrot.slane %v5207, 1
      %v6021 = vsel %vm1066, %v6018, %v6020
      %v6022 = vrot.slane %v5208, 1
      %v6023 = vsel %vm1066, %v6020, %v6022
      %v6024 = vrot.slane %v5209, 1
      %v6025 = vsel %vm1066, %v6022, %v6024
      %v6026 = vrot.slane %v5210, 1
      %v6027 = vrot.slane %v5211, 1
      %v6028 = vsel %vm1066, %v6026, %v6027
      %v6029 = vrot.slane %v5212, 1
      %v6030 = vsel %vm1066, %v6027, %v6029
      %v6031 = vrot.slane %v5213, 1
      %v6032 = vsel %vm1066, %v6029, %v6031
      %v6033 = vrot.slane %v5214, 1
      %v6034 = vsel %vm1066, %v6031, %v6033
      %v6035 = vrot.slane %v5215, 1
      %v6036 = vrot.slane %v5216, 1
      %v6037 = vsel %vm1066, %v6035, %v6036
      %v6038 = vrot.slane %v5217, 1
      %v6039 = vsel %vm1066, %v6036, %v6038
      %v6040 = vrot.slane %v5218, 1
      %v6041 = vsel %vm1066, %v6038, %v6040
      %v6042 = vrot.slane %v5219, 1
      %v6043 = vsel %vm1066, %v6040, %v6042
      %v6044 = vrot.slane %v5220, 1
      %v6045 = vrot.slane %v5221, 1
      %v6046 = vsel %vm1066, %v6044, %v6045
      %v6047 = vrot.slane %v5222, 1
      %v6048 = vsel %vm1066, %v6045, %v6047
      %v6049 = vrot.slane %v5223, 1
      %v6050 = vsel %vm1066, %v6047, %v6049
      %v6051 = vrot.slane %v5224, 1
      %v6052 = vsel %vm1066, %v6049, %v6051
      %v6053 = vrot.slane %v5225, 1
      %v6054 = vrot.slane %v5226, 1
      %v6055 = vsel %vm1066, %v6053, %v6054
      %v6056 = vrot.slane %v5227, 1
      %v6057 = vsel %vm1066, %v6054, %v6056
      %v6058 = vrot.slane %v5228, 1
      %v6059 = vsel %vm1066, %v6056, %v6058
      %v6060 = vrot.slane %v5229, 1
      %v6061 = vsel %vm1066, %v6058, %v6060
      %v6062 = vrot.slane %v5230, 1
      %v6063 = vrot.slane %v5231, 1
      %v6064 = vsel %vm1066, %v6062, %v6063
      %v6065 = vrot.slane %v5232, 1
      %v6066 = vsel %vm1066, %v6063, %v6065
      %v6067 = vrot.slane %v5233, 1
      %v6068 = vsel %vm1066, %v6065, %v6067
      %v6069 = vrot.slane %v5234, 1
      %v6070 = vsel %vm1066, %v6067, %v6069
      %v6071 = vrot.slane %v5235, 1
      %v6072 = vrot.slane %v5236, 1
      %v6073 = vsel %vm1066, %v6071, %v6072
      %v6074 = vrot.slane %v5237, 1
      %v6075 = vsel %vm1066, %v6072, %v6074
      %v6076 = vrot.slane %v5238, 1
      %v6077 = vsel %vm1066, %v6074, %v6076
      %v6078 = vrot.slane %v5239, 1
      %v6079 = vsel %vm1066, %v6076, %v6078
      %v6080 = vrot.slane %v5240, 1
      %v6081 = vrot.slane %v5241, 1
      %v6082 = vsel %vm1066, %v6080, %v6081
      %v6083 = vrot.slane %v5242, 1
      %v6084 = vsel %vm1066, %v6081, %v6083
      %v6085 = vrot.slane %v5243, 1
      %v6086 = vsel %vm1066, %v6083, %v6085
      %v6087 = vrot.slane %v5244, 1
      %v6088 = vsel %vm1066, %v6085, %v6087
      %v6153 = vpack.c.bf16 %v5949, %v5947
      %v6154 = vpack.c.bf16 %v5953, %v5951
      %v6155 = vpack.c.bf16 %v5958, %v5956
      %v6156 = vpack.c.bf16 %v5962, %v5960
      %v6157 = vpack.c.bf16 %v5967, %v5965
      %v6158 = vpack.c.bf16 %v5971, %v5969
      %v6159 = vpack.c.bf16 %v5976, %v5974
      %v6160 = vpack.c.bf16 %v5980, %v5978
      %v6161 = vpack.c.bf16 %v5985, %v5983
      %v6162 = vpack.c.bf16 %v5989, %v5987
      %v6163 = vpack.c.bf16 %v5994, %v5992
      %v6164 = vpack.c.bf16 %v5998, %v5996
      %v6165 = vpack.c.bf16 %v6003, %v6001
      %v6166 = vpack.c.bf16 %v6007, %v6005
      %v6167 = vpack.c.bf16 %v6012, %v6010
      %v6168 = vpack.c.bf16 %v6016, %v6014
      %v6169 = vpack.c.bf16 %v6021, %v6019
      %v6170 = vpack.c.bf16 %v6025, %v6023
      %v6171 = vpack.c.bf16 %v6030, %v6028
      %v6172 = vpack.c.bf16 %v6034, %v6032
      %v6173 = vpack.c.bf16 %v6039, %v6037
      %v6174 = vpack.c.bf16 %v6043, %v6041
      %v6175 = vpack.c.bf16 %v6048, %v6046
      %v6176 = vpack.c.bf16 %v6052, %v6050
      %v6177 = vpack.c.bf16 %v6057, %v6055
      %v6178 = vpack.c.bf16 %v6061, %v6059
      %v6179 = vpack.c.bf16 %v6066, %v6064
      %v6180 = vpack.c.bf16 %v6070, %v6068
      %v6181 = vpack.c.bf16 %v6075, %v6073
      %v6182 = vpack.c.bf16 %v6079, %v6077
      %v6183 = vpack.c.bf16 %v6084, %v6082
      %v6184 = vpack.c.bf16 %v6088, %v6086
      %v6185 = vld [vmem:[#allocation2] sm:$0xff]
      %v6186 = vld [vmem:[#allocation2 + $0x8] sm:$0xff]
      %v6187 = vld [vmem:[#allocation2 + $0x10] sm:$0xff]
      %v6188 = vld [vmem:[#allocation2 + $0x18] sm:$0xff]
      %v6189 = vld [vmem:[#allocation2 + $0x20] sm:$0xff]
      %v6190 = vld [vmem:[#allocation2 + $0x28] sm:$0xff]
      %v6191 = vld [vmem:[#allocation2 + $0x30] sm:$0xff]
      %v6192 = vld [vmem:[#allocation2 + $0x38] sm:$0xff]
      %v6193 = vld [vmem:[#allocation2 + $0x40] sm:$0xff]
      %v6194 = vld [vmem:[#allocation2 + $0x48] sm:$0xff]
      %v6195 = vld [vmem:[#allocation2 + $0x50] sm:$0xff]
      %v6196 = vld [vmem:[#allocation2 + $0x58] sm:$0xff]
      %v6197 = vld [vmem:[#allocation2 + $0x60] sm:$0xff]
      %v6198 = vld [vmem:[#allocation2 + $0x68] sm:$0xff]
      %v6199 = vld [vmem:[#allocation2 + $0x70] sm:$0xff]
      %v6200 = vld [vmem:[#allocation2 + $0x78] sm:$0xff]
      %v6201 = vld [vmem:[#allocation2 + $0x80] sm:$0xff]
      %v6202 = vld [vmem:[#allocation2 + $0x88] sm:$0xff]
      %v6203 = vld [vmem:[#allocation2 + $0x90] sm:$0xff]
      %v6204 = vld [vmem:[#allocation2 + $0x98] sm:$0xff]
      %v6205 = vld [vmem:[#allocation2 + $0xa0] sm:$0xff]
      %v6206 = vld [vmem:[#allocation2 + $0xa8] sm:$0xff]
      %v6207 = vld [vmem:[#allocation2 + $0xb0] sm:$0xff]
      %v6208 = vld [vmem:[#allocation2 + $0xb8] sm:$0xff]
      %v6209 = vld [vmem:[#allocation2 + $0xc0] sm:$0xff]
      %v6210 = vld [vmem:[#allocation2 + $0xc8] sm:$0xff]
      %v6211 = vld [vmem:[#allocation2 + $0xd0] sm:$0xff]
      %v6212 = vld [vmem:[#allocation2 + $0xd8] sm:$0xff]
      %v6213 = vld [vmem:[#allocation2 + $0xe0] sm:$0xff]
      %v6214 = vld [vmem:[#allocation2 + $0xe8] sm:$0xff]
      %v6215 = vld [vmem:[#allocation2 + $0xf0] sm:$0xff]
      %v6216 = vld [vmem:[#allocation2 + $0xf8] sm:$0xff]
      %v6217 = vld [vmem:[#allocation2 + $0x100] sm:$0xff]
      %v6218 = vld [vmem:[#allocation2 + $0x108] sm:$0xff]
      %v6219 = vld [vmem:[#allocation2 + $0x110] sm:$0xff]
      %v6220 = vld [vmem:[#allocation2 + $0x118] sm:$0xff]
      %v6221 = vld [vmem:[#allocation2 + $0x120] sm:$0xff]
      %v6222 = vld [vmem:[#allocation2 + $0x128] sm:$0xff]
      %v6223 = vld [vmem:[#allocation2 + $0x130] sm:$0xff]
      %v6224 = vld [vmem:[#allocation2 + $0x138] sm:$0xff]
      %v6225 = vld [vmem:[#allocation2 + $0x140] sm:$0xff]
      %v6226 = vld [vmem:[#allocation2 + $0x148] sm:$0xff]
      %v6227 = vld [vmem:[#allocation2 + $0x150] sm:$0xff]
      %v6228 = vld [vmem:[#allocation2 + $0x158] sm:$0xff]
      %v6229 = vld [vmem:[#allocation2 + $0x160] sm:$0xff]
      %v6230 = vld [vmem:[#allocation2 + $0x168] sm:$0xff]
      %v6231 = vld [vmem:[#allocation2 + $0x170] sm:$0xff]
      %v6232 = vld [vmem:[#allocation2 + $0x178] sm:$0xff]
      %v6233 = vld [vmem:[#allocation2 + $0x180] sm:$0xff]
      %v6234 = vld [vmem:[#allocation2 + $0x188] sm:$0xff]
      %v6235 = vld [vmem:[#allocation2 + $0x190] sm:$0xff]
      %v6236 = vld [vmem:[#allocation2 + $0x198] sm:$0xff]
      %v6237 = vld [vmem:[#allocation2 + $0x1a0] sm:$0xff]
      %v6238 = vld [vmem:[#allocation2 + $0x1a8] sm:$0xff]
      %v6239 = vld [vmem:[#allocation2 + $0x1b0] sm:$0xff]
      %v6240 = vld [vmem:[#allocation2 + $0x1b8] sm:$0xff]
      %v6241 = vld [vmem:[#allocation2 + $0x1c0] sm:$0xff]
      %v6242 = vld [vmem:[#allocation2 + $0x1c8] sm:$0xff]
      %v6243 = vld [vmem:[#allocation2 + $0x1d0] sm:$0xff]
      %v6244 = vld [vmem:[#allocation2 + $0x1d8] sm:$0xff]
      %v6245 = vld [vmem:[#allocation2 + $0x1e0] sm:$0xff]
      %v6246 = vld [vmem:[#allocation2 + $0x1e8] sm:$0xff]
      %v6247 = vld [vmem:[#allocation2 + $0x1f0] sm:$0xff]
      %v6248 = vld [vmem:[#allocation2 + $0x1f8] sm:$0xff]
      %s6249 = scalar_lea.vmem %s1, 56
      %v6250 = vld [vmem:[%s6249] sm:$0xf]
      %v6251 = vld [vmem:[%s6249 + $0x4] sm:$0x3]
      %v6254 = vunpack.c.l.b16 %v6250
      %v6255 = vunpack.c.l.b16 %v6251
      %v6256 = vpack.c.b16 %v6255, %v6254
      %v6258 = vsel %vm468, %v6153, 0
      %v6261 = vsel %vm468, %v6154, 0
      %v6264 = vsel %vm468, %v6155, 0
      %v6267 = vsel %vm468, %v6156, 0
      %v6270 = vsel %vm468, %v6157, 0
      %v6273 = vsel %vm468, %v6158, 0
      %v6276 = vsel %vm468, %v6159, 0
      %v6279 = vsel %vm468, %v6160, 0
      %v6282 = vsel %vm468, %v6161, 0
      %v6285 = vsel %vm468, %v6162, 0
      %v6288 = vsel %vm468, %v6163, 0
      %v6291 = vsel %vm468, %v6164, 0
      %v6294 = vsel %vm468, %v6165, 0
      %v6297 = vsel %vm468, %v6166, 0
      %v6300 = vsel %vm468, %v6167, 0
      %v6303 = vsel %vm468, %v6168, 0
      %v6306 = vsel %vm468, %v6169, 0
      %v6309 = vsel %vm468, %v6170, 0
      %v6312 = vsel %vm468, %v6171, 0
      %v6315 = vsel %vm468, %v6172, 0
      %v6318 = vsel %vm468, %v6173, 0
      %v6321 = vsel %vm468, %v6174, 0
      %v6324 = vsel %vm468, %v6175, 0
      %v6327 = vsel %vm468, %v6176, 0
      %v6330 = vsel %vm468, %v6177, 0
      %v6333 = vsel %vm468, %v6178, 0
      %v6336 = vsel %vm468, %v6179, 0
      %v6339 = vsel %vm468, %v6180, 0
      %v6342 = vsel %vm468, %v6181, 0
      %v6345 = vsel %vm468, %v6182, 0
      %v6348 = vsel %vm468, %v6183, 0
      %v6351 = vsel %vm468, %v6184, 0
      %v6354 = vsel %vm565, %v6256, 0
      %6356 = vmatprep.subr.bf16.mxu0 0
      %6357 = vmatpush1.bf16.msra.mxu0 %v6354
      %6358 = vmatprep.subr.bf16.mxu0 0
      %6359 = vmatpush1.bf16.msra.mxu0 0
      %6360 = vmatprep.subr.bf16.mxu0 0
      %6361 = vmatpush1.bf16.msra.mxu0 0
      %6362 = vmatprep.subr.bf16.mxu0 0
      %6363 = vmatpush1.bf16.msra.mxu0 0
      %6364 = vmatprep.subr.bf16.mxu0 0
      %6365 = vmatpush1.bf16.msra.mxu0 0
      %6366 = vmatprep.subr.bf16.mxu0 0
      %6367 = vmatpush1.bf16.msra.mxu0 0
      %6368 = vmatprep.subr.bf16.mxu0 0
      %6369 = vmatpush1.bf16.msra.mxu0 0
      %6370 = vmatprep.subr.bf16.mxu0 0
      %6371 = vmatpush1.bf16.msra.mxu0 0
      %6372 = vmatprep.subr.bf16.mxu0 0
      %6373 = vmatpush1.bf16.msra.mxu0 0
      %6374 = vmatprep.subr.bf16.mxu0 0
      %6375 = vmatpush1.bf16.msra.mxu0 0
      %6376 = vmatprep.subr.bf16.mxu0 0
      %6377 = vmatpush1.bf16.msra.mxu0 0
      %6378 = vmatprep.subr.bf16.mxu0 0
      %6379 = vmatpush1.bf16.msra.mxu0 0
      %6380 = vmatprep.subr.bf16.mxu0 0
      %6381 = vmatpush1.bf16.msra.mxu0 0
      %6382 = vmatprep.subr.bf16.mxu0 0
      %6383 = vmatpush1.bf16.msra.mxu0 0
      %6384 = vmatprep.subr.bf16.mxu0 0
      %6385 = vmatpush1.bf16.msra.mxu0 0
      %6386 = vmatprep.subr.bf16.mxu0 0
      %6387 = vmatpush1.bf16.msra.mxu0 0
      %6388 = vmatprep.mubr.bf16.mxu0 0
      %6389 = vmatmul.mubr.bf16.gmra.mrb[0].mxu0 %v6258
      %v6390 = vpop.f32.mrb[0].mxu0
      %v6391 = vadd.f32 0.0, %v6390
      %v6392 = vpop.f32.mrb[0].mxu0
      %v6393 = vpop.f32.mrb[0].mxu0
      %v6394 = vadd.f32 0.0, %v6393
      %v6395 = vpop.f32.mrb[0].mxu0
      %6396 = vmatprep.mubr.bf16.mxu0 0
      %6397 = vmatmul.mubr.bf16.gmra.mrb[0].mxu0 %v6261
      %v6398 = vpop.f32.mrb[0].mxu0
      %v6399 = vadd.f32 0.0, %v6398
      %v6400 = vpop.f32.mrb[0].mxu0
      %v6401 = vpop.f32.mrb[0].mxu0
      %v6402 = vadd.f32 0.0, %v6401
      %v6403 = vpop.f32.mrb[0].mxu0
      %6404 = vmatprep.mubr.bf16.mxu0 0
      %6405 = vmatmul.mubr.bf16.gmra.mrb[0].mxu0 %v6264
      %v6406 = vpop.f32.mrb[0].mxu0
      %v6407 = vadd.f32 0.0, %v6406
      %v6408 = vpop.f32.mrb[0].mxu0
      %v6409 = vpop.f32.mrb[0].mxu0
      %v6410 = vadd.f32 0.0, %v6409
      %v6411 = vpop.f32.mrb[0].mxu0
      %6412 = vmatprep.mubr.bf16.mxu0 0
      %6413 = vmatmul.mubr.bf16.gmra.mrb[0].mxu0 %v6267
      %v6414 = vpop.f32.mrb[0].mxu0
      %v6415 = vadd.f32 0.0, %v6414
      %v6416 = vpop.f32.mrb[0].mxu0
      %v6417 = vpop.f32.mrb[0].mxu0
      %v6418 = vadd.f32 0.0, %v6417
      %v6419 = vpop.f32.mrb[0].mxu0
      %6420 = vmatprep.mubr.bf16.mxu0 0
      %6421 = vmatmul.mubr.bf16.gmra.mrb[0].mxu0 %v6270
      %v6422 = vpop.f32.mrb[0].mxu0
      %v6423 = vadd.f32 0.0, %v6422
      %v6424 = vpop.f32.mrb[0].mxu0
      %v6425 = vpop.f32.mrb[0].mxu0
      %v6426 = vadd.f32 0.0, %v6425
      %v6427 = vpop.f32.mrb[0].mxu0
      %6428 = vmatprep.mubr.bf16.mxu0 0
      %6429 = vmatmul.mubr.bf16.gmra.mrb[0].mxu0 %v6273
      %v6430 = vpop.f32.mrb[0].mxu0
      %v6431 = vadd.f32 0.0, %v6430
      %v6432 = vpop.f32.mrb[0].mxu0
      %v6433 = vpop.f32.mrb[0].mxu0
      %v6434 = vadd.f32 0.0, %v6433
      %v6435 = vpop.f32.mrb[0].mxu0
      %6436 = vmatprep.mubr.bf16.mxu0 0
      %6437 = vmatmul.mubr.bf16.gmra.mrb[0].mxu0 %v6276
      %v6438 = vpop.f32.mrb[0].mxu0
      %v6439 = vadd.f32 0.0, %v6438
      %v6440 = vpop.f32.mrb[0].mxu0
      %v6441 = vpop.f32.mrb[0].mxu0
      %v6442 = vadd.f32 0.0, %v6441
      %v6443 = vpop.f32.mrb[0].mxu0
      %6444 = vmatprep.mubr.bf16.mxu0 0
      %6445 = vmatmul.mubr.bf16.gmra.mrb[0].mxu0 %v6279
      %v6446 = vpop.f32.mrb[0].mxu0
      %v6447 = vadd.f32 0.0, %v6446
      %v6448 = vpop.f32.mrb[0].mxu0
      %v6449 = vpop.f32.mrb[0].mxu0
      %v6450 = vadd.f32 0.0, %v6449
      %v6451 = vpop.f32.mrb[0].mxu0
      %6452 = vmatprep.mubr.bf16.mxu0 0
      %6453 = vmatmul.mubr.bf16.gmra.mrb[0].mxu0 %v6282
      %v6454 = vpop.f32.mrb[0].mxu0
      %v6455 = vadd.f32 0.0, %v6454
      %v6456 = vpop.f32.mrb[0].mxu0
      %v6457 = vpop.f32.mrb[0].mxu0
      %v6458 = vadd.f32 0.0, %v6457
      %v6459 = vpop.f32.mrb[0].mxu0
      %6460 = vmatprep.mubr.bf16.mxu0 0
      %6461 = vmatmul.mubr.bf16.gmra.mrb[0].mxu0 %v6285
      %v6462 = vpop.f32.mrb[0].mxu0
      %v6463 = vadd.f32 0.0, %v6462
      %v6464 = vpop.f32.mrb[0].mxu0
      %v6465 = vpop.f32.mrb[0].mxu0
      %v6466 = vadd.f32 0.0, %v6465
      %v6467 = vpop.f32.mrb[0].mxu0
      %6468 = vmatprep.mubr.bf16.mxu0 0
      %6469 = vmatmul.mubr.bf16.gmra.mrb[0].mxu0 %v6288
      %v6470 = vpop.f32.mrb[0].mxu0
      %v6471 = vadd.f32 0.0, %v6470
      %v6472 = vpop.f32.mrb[0].mxu0
      %v6473 = vpop.f32.mrb[0].mxu0
      %v6474 = vadd.f32 0.0, %v6473
      %v6475 = vpop.f32.mrb[0].mxu0
      %6476 = vmatprep.mubr.bf16.mxu0 0
      %6477 = vmatmul.mubr.bf16.gmra.mrb[0].mxu0 %v6291
      %v6478 = vpop.f32.mrb[0].mxu0
      %v6479 = vadd.f32 0.0, %v6478
      %v6480 = vpop.f32.mrb[0].mxu0
      %v6481 = vpop.f32.mrb[0].mxu0
      %v6482 = vadd.f32 0.0, %v6481
      %v6483 = vpop.f32.mrb[0].mxu0
      %6484 = vmatprep.mubr.bf16.mxu0 0
      %6485 = vmatmul.mubr.bf16.gmra.mrb[0].mxu0 %v6294
      %v6486 = vpop.f32.mrb[0].mxu0
      %v6487 = vadd.f32 0.0, %v6486
      %v6488 = vpop.f32.mrb[0].mxu0
      %v6489 = vpop.f32.mrb[0].mxu0
      %v6490 = vadd.f32 0.0, %v6489
      %v6491 = vpop.f32.mrb[0].mxu0
      %6492 = vmatprep.mubr.bf16.mxu0 0
      %6493 = vmatmul.mubr.bf16.gmra.mrb[0].mxu0 %v6297
      %v6494 = vpop.f32.mrb[0].mxu0
      %v6495 = vadd.f32 0.0, %v6494
      %v6496 = vpop.f32.mrb[0].mxu0
      %v6497 = vpop.f32.mrb[0].mxu0
      %v6498 = vadd.f32 0.0, %v6497
      %v6499 = vpop.f32.mrb[0].mxu0
      %6500 = vmatprep.mubr.bf16.mxu0 0
      %6501 = vmatmul.mubr.bf16.gmra.mrb[0].mxu0 %v6300
      %v6502 = vpop.f32.mrb[0].mxu0
      %v6503 = vadd.f32 0.0, %v6502
      %v6504 = vpop.f32.mrb[0].mxu0
      %v6505 = vpop.f32.mrb[0].mxu0
      %v6506 = vadd.f32 0.0, %v6505
      %v6507 = vpop.f32.mrb[0].mxu0
      %6508 = vmatprep.mubr.bf16.mxu0 0
      %6509 = vmatmul.mubr.bf16.gmra.mrb[0].mxu0 %v6303
      %v6510 = vpop.f32.mrb[0].mxu0
      %v6511 = vadd.f32 0.0, %v6510
      %v6512 = vpop.f32.mrb[0].mxu0
      %v6513 = vpop.f32.mrb[0].mxu0
      %v6514 = vadd.f32 0.0, %v6513
      %v6515 = vpop.f32.mrb[0].mxu0
      %6516 = vmatprep.mubr.bf16.mxu0 0
      %6517 = vmatmul.mubr.bf16.gmra.mrb[0].mxu0 %v6306
      %v6518 = vpop.f32.mrb[0].mxu0
      %v6519 = vadd.f32 0.0, %v6518
      %v6520 = vpop.f32.mrb[0].mxu0
      %v6521 = vpop.f32.mrb[0].mxu0
      %v6522 = vadd.f32 0.0, %v6521
      %v6523 = vpop.f32.mrb[0].mxu0
      %6524 = vmatprep.mubr.bf16.mxu0 0
      %6525 = vmatmul.mubr.bf16.gmra.mrb[0].mxu0 %v6309
      %v6526 = vpop.f32.mrb[0].mxu0
      %v6527 = vadd.f32 0.0, %v6526
      %v6528 = vpop.f32.mrb[0].mxu0
      %v6529 = vpop.f32.mrb[0].mxu0
      %v6530 = vadd.f32 0.0, %v6529
      %v6531 = vpop.f32.mrb[0].mxu0
      %6532 = vmatprep.mubr.bf16.mxu0 0
      %6533 = vmatmul.mubr.bf16.gmra.mrb[0].mxu0 %v6312
      %v6534 = vpop.f32.mrb[0].mxu0
      %v6535 = vadd.f32 0.0, %v6534
      %v6536 = vpop.f32.mrb[0].mxu0
      %v6537 = vpop.f32.mrb[0].mxu0
      %v6538 = vadd.f32 0.0, %v6537
      %v6539 = vpop.f32.mrb[0].mxu0
      %6540 = vmatprep.mubr.bf16.mxu0 0
      %6541 = vmatmul.mubr.bf16.gmra.mrb[0].mxu0 %v6315
      %v6542 = vpop.f32.mrb[0].mxu0
      %v6543 = vadd.f32 0.0, %v6542
      %v6544 = vpop.f32.mrb[0].mxu0
      %v6545 = vpop.f32.mrb[0].mxu0
      %v6546 = vadd.f32 0.0, %v6545
      %v6547 = vpop.f32.mrb[0].mxu0
      %6548 = vmatprep.mubr.bf16.mxu0 0
      %6549 = vmatmul.mubr.bf16.gmra.mrb[0].mxu0 %v6318
      %v6550 = vpop.f32.mrb[0].mxu0
      %v6551 = vadd.f32 0.0, %v6550
      %v6552 = vpop.f32.mrb[0].mxu0
      %v6553 = vpop.f32.mrb[0].mxu0
      %v6554 = vadd.f32 0.0, %v6553
      %v6555 = vpop.f32.mrb[0].mxu0
      %6556 = vmatprep.mubr.bf16.mxu0 0
      %6557 = vmatmul.mubr.bf16.gmra.mrb[0].mxu0 %v6321
      %v6558 = vpop.f32.mrb[0].mxu0
      %v6559 = vadd.f32 0.0, %v6558
      %v6560 = vpop.f32.mrb[0].mxu0
      %v6561 = vpop.f32.mrb[0].mxu0
      %v6562 = vadd.f32 0.0, %v6561
      %v6563 = vpop.f32.mrb[0].mxu0
      %6564 = vmatprep.mubr.bf16.mxu0 0
      %6565 = vmatmul.mubr.bf16.gmra.mrb[0].mxu0 %v6324
      %v6566 = vpop.f32.mrb[0].mxu0
      %v6567 = vadd.f32 0.0, %v6566
      %v6568 = vpop.f32.mrb[0].mxu0
      %v6569 = vpop.f32.mrb[0].mxu0
      %v6570 = vadd.f32 0.0, %v6569
      %v6571 = vpop.f32.mrb[0].mxu0
      %6572 = vmatprep.mubr.bf16.mxu0 0
      %6573 = vmatmul.mubr.bf16.gmra.mrb[0].mxu0 %v6327
      %v6574 = vpop.f32.mrb[0].mxu0
      %v6575 = vadd.f32 0.0, %v6574
      %v6576 = vpop.f32.mrb[0].mxu0
      %v6577 = vpop.f32.mrb[0].mxu0
      %v6578 = vadd.f32 0.0, %v6577
      %v6579 = vpop.f32.mrb[0].mxu0
      %6580 = vmatprep.mubr.bf16.mxu0 0
      %6581 = vmatmul.mubr.bf16.gmra.mrb[0].mxu0 %v6330
      %v6582 = vpop.f32.mrb[0].mxu0
      %v6583 = vadd.f32 0.0, %v6582
      %v6584 = vpop.f32.mrb[0].mxu0
      %v6585 = vpop.f32.mrb[0].mxu0
      %v6586 = vadd.f32 0.0, %v6585
      %v6587 = vpop.f32.mrb[0].mxu0
      %6588 = vmatprep.mubr.bf16.mxu0 0
      %6589 = vmatmul.mubr.bf16.gmra.mrb[0].mxu0 %v6333
      %v6590 = vpop.f32.mrb[0].mxu0
      %v6591 = vadd.f32 0.0, %v6590
      %v6592 = vpop.f32.mrb[0].mxu0
      %v6593 = vpop.f32.mrb[0].mxu0
      %v6594 = vadd.f32 0.0, %v6593
      %v6595 = vpop.f32.mrb[0].mxu0
      %6596 = vmatprep.mubr.bf16.mxu0 0
      %6597 = vmatmul.mubr.bf16.gmra.mrb[0].mxu0 %v6336
      %v6598 = vpop.f32.mrb[0].mxu0
      %v6599 = vadd.f32 0.0, %v6598
      %v6600 = vpop.f32.mrb[0].mxu0
      %v6601 = vpop.f32.mrb[0].mxu0
      %v6602 = vadd.f32 0.0, %v6601
      %v6603 = vpop.f32.mrb[0].mxu0
      %6604 = vmatprep.mubr.bf16.mxu0 0
      %6605 = vmatmul.mubr.bf16.gmra.mrb[0].mxu0 %v6339
      %v6606 = vpop.f32.mrb[0].mxu0
      %v6607 = vadd.f32 0.0, %v6606
      %v6608 = vpop.f32.mrb[0].mxu0
      %v6609 = vpop.f32.mrb[0].mxu0
      %v6610 = vadd.f32 0.0, %v6609
      %v6611 = vpop.f32.mrb[0].mxu0
      %6612 = vmatprep.mubr.bf16.mxu0 0
      %6613 = vmatmul.mubr.bf16.gmra.mrb[0].mxu0 %v6342
      %v6614 = vpop.f32.mrb[0].mxu0
      %v6615 = vadd.f32 0.0, %v6614
      %v6616 = vpop.f32.mrb[0].mxu0
      %v6617 = vpop.f32.mrb[0].mxu0
      %v6618 = vadd.f32 0.0, %v6617
      %v6619 = vpop.f32.mrb[0].mxu0
      %6620 = vmatprep.mubr.bf16.mxu0 0
      %6621 = vmatmul.mubr.bf16.gmra.mrb[0].mxu0 %v6345
      %v6622 = vpop.f32.mrb[0].mxu0
      %v6623 = vadd.f32 0.0, %v6622
      %v6624 = vpop.f32.mrb[0].mxu0
      %v6625 = vpop.f32.mrb[0].mxu0
      %v6626 = vadd.f32 0.0, %v6625
      %v6627 = vpop.f32.mrb[0].mxu0
      %6628 = vmatprep.mubr.bf16.mxu0 0
      %6629 = vmatmul.mubr.bf16.gmra.mrb[0].mxu0 %v6348
      %v6630 = vpop.f32.mrb[0].mxu0
      %v6631 = vadd.f32 0.0, %v6630
      %v6632 = vpop.f32.mrb[0].mxu0
      %v6633 = vpop.f32.mrb[0].mxu0
      %v6634 = vadd.f32 0.0, %v6633
      %v6635 = vpop.f32.mrb[0].mxu0
      %6636 = vmatprep.mubr.bf16.mxu0 0
      %6637 = vmatmul.mubr.bf16.gmra.mrb[0].mxu0 %v6351
      %v6638 = vpop.f32.mrb[0].mxu0
      %v6639 = vadd.f32 0.0, %v6638
      %v6640 = vpop.f32.mrb[0].mxu0
      %v6641 = vpop.f32.mrb[0].mxu0
      %v6642 = vadd.f32 0.0, %v6641
      %v6643 = vpop.f32.mrb[0].mxu0
      %6644 = vdwg.mxu0
      %v6645 = vadd.f32 %v6185, %v6391
      %v6646 = vadd.f32 %v6186, %v6394
      %v6647 = vadd.f32 %v6187, %v6399
      %v6648 = vadd.f32 %v6188, %v6402
      %v6649 = vadd.f32 %v6189, %v6407
      %v6650 = vadd.f32 %v6190, %v6410
      %v6651 = vadd.f32 %v6191, %v6415
      %v6652 = vadd.f32 %v6192, %v6418
      %v6653 = vadd.f32 %v6193, %v6423
      %v6654 = vadd.f32 %v6194, %v6426
      %v6655 = vadd.f32 %v6195, %v6431
      %v6656 = vadd.f32 %v6196, %v6434
      %v6657 = vadd.f32 %v6197, %v6439
      %v6658 = vadd.f32 %v6198, %v6442
      %v6659 = vadd.f32 %v6199, %v6447
      %v6660 = vadd.f32 %v6200, %v6450
      %v6661 = vadd.f32 %v6201, %v6455
      %v6662 = vadd.f32 %v6202, %v6458
      %v6663 = vadd.f32 %v6203, %v6463
      %v6664 = vadd.f32 %v6204, %v6466
      %v6665 = vadd.f32 %v6205, %v6471
      %v6666 = vadd.f32 %v6206, %v6474
      %v6667 = vadd.f32 %v6207, %v6479
      %v6668 = vadd.f32 %v6208, %v6482
      %v6669 = vadd.f32 %v6209, %v6487
      %v6670 = vadd.f32 %v6210, %v6490
      %v6671 = vadd.f32 %v6211, %v6495
      %v6672 = vadd.f32 %v6212, %v6498
      %v6673 = vadd.f32 %v6213, %v6503
      %v6674 = vadd.f32 %v6214, %v6506
      %v6675 = vadd.f32 %v6215, %v6511
      %v6676 = vadd.f32 %v6216, %v6514
      %v6677 = vadd.f32 %v6217, %v6519
      %v6678 = vadd.f32 %v6218, %v6522
      %v6679 = vadd.f32 %v6219, %v6527
      %v6680 = vadd.f32 %v6220, %v6530
      %v6681 = vadd.f32 %v6221, %v6535
      %v6682 = vadd.f32 %v6222, %v6538
      %v6683 = vadd.f32 %v6223, %v6543
      %v6684 = vadd.f32 %v6224, %v6546
      %v6685 = vadd.f32 %v6225, %v6551
      %v6686 = vadd.f32 %v6226, %v6554
      %v6687 = vadd.f32 %v6227, %v6559
      %v6688 = vadd.f32 %v6228, %v6562
      %v6689 = vadd.f32 %v6229, %v6567
      %v6690 = vadd.f32 %v6230, %v6570
      %v6691 = vadd.f32 %v6231, %v6575
      %v6692 = vadd.f32 %v6232, %v6578
      %v6693 = vadd.f32 %v6233, %v6583
      %v6694 = vadd.f32 %v6234, %v6586
      %v6695 = vadd.f32 %v6235, %v6591
      %v6696 = vadd.f32 %v6236, %v6594
      %v6697 = vadd.f32 %v6237, %v6599
      %v6698 = vadd.f32 %v6238, %v6602
      %v6699 = vadd.f32 %v6239, %v6607
      %v6700 = vadd.f32 %v6240, %v6610
      %v6701 = vadd.f32 %v6241, %v6615
      %v6702 = vadd.f32 %v6242, %v6618
      %v6703 = vadd.f32 %v6243, %v6623
      %v6704 = vadd.f32 %v6244, %v6626
      %v6705 = vadd.f32 %v6245, %v6631
      %v6706 = vadd.f32 %v6246, %v6634
      %v6707 = vadd.f32 %v6247, %v6639
      %v6708 = vadd.f32 %v6248, %v6642
      %6709 = vst [vmem:[#allocation2] sm:$0xff] %v6645
      %6710 = vst [vmem:[#allocation2 + $0x8] sm:$0xff] %v6646
      %6711 = vst [vmem:[#allocation2 + $0x10] sm:$0xff] %v6647
      %6712 = vst [vmem:[#allocation2 + $0x18] sm:$0xff] %v6648
      %6713 = vst [vmem:[#allocation2 + $0x20] sm:$0xff] %v6649
      %6714 = vst [vmem:[#allocation2 + $0x28] sm:$0xff] %v6650
      %6715 = vst [vmem:[#allocation2 + $0x30] sm:$0xff] %v6651
      %6716 = vst [vmem:[#allocation2 + $0x38] sm:$0xff] %v6652
      %6717 = vst [vmem:[#allocation2 + $0x40] sm:$0xff] %v6653
      %6718 = vst [vmem:[#allocation2 + $0x48] sm:$0xff] %v6654
      %6719 = vst [vmem:[#allocation2 + $0x50] sm:$0xff] %v6655
      %6720 = vst [vmem:[#allocation2 + $0x58] sm:$0xff] %v6656
      %6721 = vst [vmem:[#allocation2 + $0x60] sm:$0xff] %v6657
      %6722 = vst [vmem:[#allocation2 + $0x68] sm:$0xff] %v6658
      %6723 = vst [vmem:[#allocation2 + $0x70] sm:$0xff] %v6659
      %6724 = vst [vmem:[#allocation2 + $0x78] sm:$0xff] %v6660
      %6725 = vst [vmem:[#allocation2 + $0x80] sm:$0xff] %v6661
      %6726 = vst [vmem:[#allocation2 + $0x88] sm:$0xff] %v6662
      %6727 = vst [vmem:[#allocation2 + $0x90] sm:$0xff] %v6663
      %6728 = vst [vmem:[#allocation2 + $0x98] sm:$0xff] %v6664
      %6729 = vst [vmem:[#allocation2 + $0xa0] sm:$0xff] %v6665
      %6730 = vst [vmem:[#allocation2 + $0xa8] sm:$0xff] %v6666
      %6731 = vst [vmem:[#allocation2 + $0xb0] sm:$0xff] %v6667
      %6732 = vst [vmem:[#allocation2 + $0xb8] sm:$0xff] %v6668
      %6733 = vst [vmem:[#allocation2 + $0xc0] sm:$0xff] %v6669
      %6734 = vst [vmem:[#allocation2 + $0xc8] sm:$0xff] %v6670
      %6735 = vst [vmem:[#allocation2 + $0xd0] sm:$0xff] %v6671
      %6736 = vst [vmem:[#allocation2 + $0xd8] sm:$0xff] %v6672
      %6737 = vst [vmem:[#allocation2 + $0xe0] sm:$0xff] %v6673
      %6738 = vst [vmem:[#allocation2 + $0xe8] sm:$0xff] %v6674
      %6739 = vst [vmem:[#allocation2 + $0xf0] sm:$0xff] %v6675
      %6740 = vst [vmem:[#allocation2 + $0xf8] sm:$0xff] %v6676
      %6741 = vst [vmem:[#allocation2 + $0x100] sm:$0xff] %v6677
      %6742 = vst [vmem:[#allocation2 + $0x108] sm:$0xff] %v6678
      %6743 = vst [vmem:[#allocation2 + $0x110] sm:$0xff] %v6679
      %6744 = vst [vmem:[#allocation2 + $0x118] sm:$0xff] %v6680
      %6745 = vst [vmem:[#allocation2 + $0x120] sm:$0xff] %v6681
      %6746 = vst [vmem:[#allocation2 + $0x128] sm:$0xff] %v6682
      %6747 = vst [vmem:[#allocation2 + $0x130] sm:$0xff] %v6683
      %6748 = vst [vmem:[#allocation2 + $0x138] sm:$0xff] %v6684
      %6749 = vst [vmem:[#allocation2 + $0x140] sm:$0xff] %v6685
      %6750 = vst [vmem:[#allocation2 + $0x148] sm:$0xff] %v6686
      %6751 = vst [vmem:[#allocation2 + $0x150] sm:$0xff] %v6687
      %6752 = vst [vmem:[#allocation2 + $0x158] sm:$0xff] %v6688
      %6753 = vst [vmem:[#allocation2 + $0x160] sm:$0xff] %v6689
      %6754 = vst [vmem:[#allocation2 + $0x168] sm:$0xff] %v6690
      %6755 = vst [vmem:[#allocation2 + $0x170] sm:$0xff] %v6691
      %6756 = vst [vmem:[#allocation2 + $0x178] sm:$0xff] %v6692
      %6757 = vst [vmem:[#allocation2 + $0x180] sm:$0xff] %v6693
      %6758 = vst [vmem:[#allocation2 + $0x188] sm:$0xff] %v6694
      %6759 = vst [vmem:[#allocation2 + $0x190] sm:$0xff] %v6695
      %6760 = vst [vmem:[#allocation2 + $0x198] sm:$0xff] %v6696
      %6761 = vst [vmem:[#allocation2 + $0x1a0] sm:$0xff] %v6697
      %6762 = vst [vmem:[#allocation2 + $0x1a8] sm:$0xff] %v6698
      %6763 = vst [vmem:[#allocation2 + $0x1b0] sm:$0xff] %v6699
      %6764 = vst [vmem:[#allocation2 + $0x1b8] sm:$0xff] %v6700
      %6765 = vst [vmem:[#allocation2 + $0x1c0] sm:$0xff] %v6701
      %6766 = vst [vmem:[#allocation2 + $0x1c8] sm:$0xff] %v6702
      %6767 = vst [vmem:[#allocation2 + $0x1d0] sm:$0xff] %v6703
      %6768 = vst [vmem:[#allocation2 + $0x1d8] sm:$0xff] %v6704
      %6769 = vst [vmem:[#allocation2 + $0x1e0] sm:$0xff] %v6705
      %6770 = vst [vmem:[#allocation2 + $0x1e8] sm:$0xff] %v6706
      %6771 = vst [vmem:[#allocation2 + $0x1f0] sm:$0xff] %v6707
      %6772 = vst [vmem:[#allocation2 + $0x1f8] sm:$0xff] %v6708
      %v6773 = vrot.slane %v5165, 2
      %v6774 = vrot.slane %v5166, 2
      %v6775 = vsel %vm565, %v6773, %v6774
      %v6776 = vrot.slane %v5167, 2
      %v6777 = vsel %vm565, %v6774, %v6776
      %v6778 = vrot.slane %v5168, 2
      %v6779 = vsel %vm565, %v6776, %v6778
      %v6780 = vrot.slane %v5169, 2
      %v6781 = vsel %vm565, %v6778, %v6780
      %v6782 = vrot.slane %v5170, 2
      %v6783 = vrot.slane %v5171, 2
      %v6784 = vsel %vm565, %v6782, %v6783
      %v6785 = vrot.slane %v5172, 2
      %v6786 = vsel %vm565, %v6783, %v6785
      %v6787 = vrot.slane %v5173, 2
      %v6788 = vsel %vm565, %v6785, %v6787
      %v6789 = vrot.slane %v5174, 2
      %v6790 = vsel %vm565, %v6787, %v6789
      %v6791 = vrot.slane %v5175, 2
      %v6792 = vrot.slane %v5176, 2
      %v6793 = vsel %vm565, %v6791, %v6792
      %v6794 = vrot.slane %v5177, 2
      %v6795 = vsel %vm565, %v6792, %v6794
      %v6796 = vrot.slane %v5178, 2
      %v6797 = vsel %vm565, %v6794, %v6796
      %v6798 = vrot.slane %v5179, 2
      %v6799 = vsel %vm565, %v6796, %v6798
      %v6800 = vrot.slane %v5180, 2
      %v6801 = vrot.slane %v5181, 2
      %v6802 = vsel %vm565, %v6800, %v6801
      %v6803 = vrot.slane %v5182, 2
      %v6804 = vsel %vm565, %v6801, %v6803
      %v6805 = vrot.slane %v5183, 2
      %v6806 = vsel %vm565, %v6803, %v6805
      %v6807 = vrot.slane %v5184, 2
      %v6808 = vsel %vm565, %v6805, %v6807
      %v6809 = vrot.slane %v5185, 2
      %v6810 = vrot.slane %v5186, 2
      %v6811 = vsel %vm565, %v6809, %v6810
      %v6812 = vrot.slane %v5187, 2
      %v6813 = vsel %vm565, %v6810, %v6812
      %v6814 = vrot.slane %v5188, 2
      %v6815 = vsel %vm565, %v6812, %v6814
      %v6816 = vrot.slane %v5189, 2
      %v6817 = vsel %vm565, %v6814, %v6816
      %v6818 = vrot.slane %v5190, 2
      %v6819 = vrot.slane %v5191, 2
      %v6820 = vsel %vm565, %v6818, %v6819
      %v6821 = vrot.slane %v5192, 2
      %v6822 = vsel %vm565, %v6819, %v6821
      %v6823 = vrot.slane %v5193, 2
      %v6824 = vsel %vm565, %v6821, %v6823
      %v6825 = vrot.slane %v5194, 2
      %v6826 = vsel %vm565, %v6823, %v6825
      %v6827 = vrot.slane %v5195, 2
      %v6828 = vrot.slane %v5196, 2
      %v6829 = vsel %vm565, %v6827, %v6828
      %v6830 = vrot.slane %v5197, 2
      %v6831 = vsel %vm565, %v6828, %v6830
      %v6832 = vrot.slane %v5198, 2
      %v6833 = vsel %vm565, %v6830, %v6832
      %v6834 = vrot.slane %v5199, 2
      %v6835 = vsel %vm565, %v6832, %v6834
      %v6836 = vrot.slane %v5200, 2
      %v6837 = vrot.slane %v5201, 2
      %v6838 = vsel %vm565, %v6836, %v6837
      %v6839 = vrot.slane %v5202, 2
      %v6840 = vsel %vm565, %v6837, %v6839
      %v6841 = vrot.slane %v5203, 2
      %v6842 = vsel %vm565, %v6839, %v6841
      %v6843 = vrot.slane %v5204, 2
      %v6844 = vsel %vm565, %v6841, %v6843
      %v6845 = vrot.slane %v5205, 2
      %v6846 = vrot.slane %v5206, 2
      %v6847 = vsel %vm565, %v6845, %v6846
      %v6848 = vrot.slane %v5207, 2
      %v6849 = vsel %vm565, %v6846, %v6848
      %v6850 = vrot.slane %v5208, 2
      %v6851 = vsel %vm565, %v6848, %v6850
      %v6852 = vrot.slane %v5209, 2
      %v6853 = vsel %vm565, %v6850, %v6852
      %v6854 = vrot.slane %v5210, 2
      %v6855 = vrot.slane %v5211, 2
      %v6856 = vsel %vm565, %v6854, %v6855
      %v6857 = vrot.slane %v5212, 2
      %v6858 = vsel %vm565, %v6855, %v6857
      %v6859 = vrot.slane %v5213, 2
      %v6860 = vsel %vm565, %v6857, %v6859
      %v6861 = vrot.slane %v5214, 2
      %v6862 = vsel %vm565, %v6859, %v6861
      %v6863 = vrot.slane %v5215, 2
      %v6864 = vrot.slane %v5216, 2
      %v6865 = vsel %vm565, %v6863, %v6864
      %v6866 = vrot.slane %v5217, 2
      %v6867 = vsel %vm565, %v6864, %v6866
      %v6868 = vrot.slane %v5218, 2
      %v6869 = vsel %vm565, %v6866, %v6868
      %v6870 = vrot.slane %v5219, 2
      %v6871 = vsel %vm565, %v6868, %v6870
      %v6872 = vrot.slane %v5220, 2
      %v6873 = vrot.slane %v5221, 2
      %v6874 = vsel %vm565, %v6872, %v6873
      %v6875 = vrot.slane %v5222, 2
      %v6876 = vsel %vm565, %v6873, %v6875
      %v6877 = vrot.slane %v5223, 2
      %v6878 = vsel %vm565, %v6875, %v6877
      %v6879 = vrot.slane %v5224, 2
      %v6880 = vsel %vm565, %v6877, %v6879
      %v6881 = vrot.slane %v5225, 2
      %v6882 = vrot.slane %v5226, 2
      %v6883 = vsel %vm565, %v6881, %v6882
      %v6884 = vrot.slane %v5227, 2
      %v6885 = vsel %vm565, %v6882, %v6884
      %v6886 = vrot.slane %v5228, 2
      %v6887 = vsel %vm565, %v6884, %v6886
      %v6888 = vrot.slane %v5229, 2
      %v6889 = vsel %vm565, %v6886, %v6888
      %v6890 = vrot.slane %v5230, 2
      %v6891 = vrot.slane %v5231, 2
      %v6892 = vsel %vm565, %v6890, %v6891
      %v6893 = vrot.slane %v5232, 2
      %v6894 = vsel %vm565, %v6891, %v6893
      %v6895 = vrot.slane %v5233, 2
      %v6896 = vsel %vm565, %v6893, %v6895
      %v6897 = vrot.slane %v5234, 2
      %v6898 = vsel %vm565, %v6895, %v6897
      %v6899 = vrot.slane %v5235, 2
      %v6900 = vrot.slane %v5236, 2
      %v6901 = vsel %vm565, %v6899, %v6900
      %v6902 = vrot.slane %v5237, 2
      %v6903 = vsel %vm565, %v6900, %v6902
      %v6904 = vrot.slane %v5238, 2
      %v6905 = vsel %vm565, %v6902, %v6904
      %v6906 = vrot.slane %v5239, 2
      %v6907 = vsel %vm565, %v6904, %v6906
      %v6908 = vrot.slane %v5240, 2
      %v6909 = vrot.slane %v5241, 2
      %v6910 = vsel %vm565, %v6908, %v6909
      %v6911 = vrot.slane %v5242, 2
      %v6912 = vsel %vm565, %v6909, %v6911
      %v6913 = vrot.slane %v5243, 2
      %v6914 = vsel %vm565, %v6911, %v6913
      %v6915 = vrot.slane %v5244, 2
      %v6916 = vsel %vm565, %v6913, %v6915
      %v6981 = vpack.c.bf16 %v6777, %v6775
      %v6982 = vpack.c.bf16 %v6781, %v6779
      %v6983 = vpack.c.bf16 %v6786, %v6784
      %v6984 = vpack.c.bf16 %v6790, %v6788
      %v6985 = vpack.c.bf16 %v6795, %v6793
      %v6986 = vpack.c.bf16 %v6799, %v6797
      %v6987 = vpack.c.bf16 %v6804, %v6802
      %v6988 = vpack.c.bf16 %v6808, %v6806
      %v6989 = vpack.c.bf16 %v6813, %v6811
      %v6990 = vpack.c.bf16 %v6817, %v6815
      %v6991 = vpack.c.bf16 %v6822, %v6820
      %v6992 = vpack.c.bf16 %v6826, %v6824
      %v6993 = vpack.c.bf16 %v6831, %v6829
      %v6994 = vpack.c.bf16 %v6835, %v6833
      %v6995 = vpack.c.bf16 %v6840, %v6838
      %v6996 = vpack.c.bf16 %v6844, %v6842
      %v6997 = vpack.c.bf16 %v6849, %v6847
      %v6998 = vpack.c.bf16 %v6853, %v6851
      %v6999 = vpack.c.bf16 %v6858, %v6856
      %v7000 = vpack.c.bf16 %v6862, %v6860
      %v7001 = vpack.c.bf16 %v6867, %v6865
      %v7002 = vpack.c.bf16 %v6871, %v6869
      %v7003 = vpack.c.bf16 %v6876, %v6874
      %v7004 = vpack.c.bf16 %v6880, %v6878
      %v7005 = vpack.c.bf16 %v6885, %v6883
      %v7006 = vpack.c.bf16 %v6889, %v6887
      %v7007 = vpack.c.bf16 %v6894, %v6892
      %v7008 = vpack.c.bf16 %v6898, %v6896
      %v7009 = vpack.c.bf16 %v6903, %v6901
      %v7010 = vpack.c.bf16 %v6907, %v6905
      %v7011 = vpack.c.bf16 %v6912, %v6910
      %v7012 = vpack.c.bf16 %v6916, %v6914
      %v7013 = vld [vmem:[#allocation2] sm:$0xff]
      %v7014 = vld [vmem:[#allocation2 + $0x8] sm:$0xff]
      %v7015 = vld [vmem:[#allocation2 + $0x10] sm:$0xff]
      %v7016 = vld [vmem:[#allocation2 + $0x18] sm:$0xff]
      %v7017 = vld [vmem:[#allocation2 + $0x20] sm:$0xff]
      %v7018 = vld [vmem:[#allocation2 + $0x28] sm:$0xff]
      %v7019 = vld [vmem:[#allocation2 + $0x30] sm:$0xff]
      %v7020 = vld [vmem:[#allocation2 + $0x38] sm:$0xff]
      %v7021 = vld [vmem:[#allocation2 + $0x40] sm:$0xff]
      %v7022 = vld [vmem:[#allocation2 + $0x48] sm:$0xff]
      %v7023 = vld [vmem:[#allocation2 + $0x50] sm:$0xff]
      %v7024 = vld [vmem:[#allocation2 + $0x58] sm:$0xff]
      %v7025 = vld [vmem:[#allocation2 + $0x60] sm:$0xff]
      %v7026 = vld [vmem:[#allocation2 + $0x68] sm:$0xff]
      %v7027 = vld [vmem:[#allocation2 + $0x70] sm:$0xff]
      %v7028 = vld [vmem:[#allocation2 + $0x78] sm:$0xff]
      %v7029 = vld [vmem:[#allocation2 + $0x80] sm:$0xff]
      %v7030 = vld [vmem:[#allocation2 + $0x88] sm:$0xff]
      %v7031 = vld [vmem:[#allocation2 + $0x90] sm:$0xff]
      %v7032 = vld [vmem:[#allocation2 + $0x98] sm:$0xff]
      %v7033 = vld [vmem:[#allocation2 + $0xa0] sm:$0xff]
      %v7034 = vld [vmem:[#allocation2 + $0xa8] sm:$0xff]
      %v7035 = vld [vmem:[#allocation2 + $0xb0] sm:$0xff]
      %v7036 = vld [vmem:[#allocation2 + $0xb8] sm:$0xff]
      %v7037 = vld [vmem:[#allocation2 + $0xc0] sm:$0xff]
      %v7038 = vld [vmem:[#allocation2 + $0xc8] sm:$0xff]
      %v7039 = vld [vmem:[#allocation2 + $0xd0] sm:$0xff]
      %v7040 = vld [vmem:[#allocation2 + $0xd8] sm:$0xff]
      %v7041 = vld [vmem:[#allocation2 + $0xe0] sm:$0xff]
      %v7042 = vld [vmem:[#allocation2 + $0xe8] sm:$0xff]
      %v7043 = vld [vmem:[#allocation2 + $0xf0] sm:$0xff]
      %v7044 = vld [vmem:[#allocation2 + $0xf8] sm:$0xff]
      %v7045 = vld [vmem:[#allocation2 + $0x100] sm:$0xff]
      %v7046 = vld [vmem:[#allocation2 + $0x108] sm:$0xff]
      %v7047 = vld [vmem:[#allocation2 + $0x110] sm:$0xff]
      %v7048 = vld [vmem:[#allocation2 + $0x118] sm:$0xff]
      %v7049 = vld [vmem:[#allocation2 + $0x120] sm:$0xff]
      %v7050 = vld [vmem:[#allocation2 + $0x128] sm:$0xff]
      %v7051 = vld [vmem:[#allocation2 + $0x130] sm:$0xff]
      %v7052 = vld [vmem:[#allocation2 + $0x138] sm:$0xff]
      %v7053 = vld [vmem:[#allocation2 + $0x140] sm:$0xff]
      %v7054 = vld [vmem:[#allocation2 + $0x148] sm:$0xff]
      %v7055 = vld [vmem:[#allocation2 + $0x150] sm:$0xff]
      %v7056 = vld [vmem:[#allocation2 + $0x158] sm:$0xff]
      %v7057 = vld [vmem:[#allocation2 + $0x160] sm:$0xff]
      %v7058 = vld [vmem:[#allocation2 + $0x168] sm:$0xff]
      %v7059 = vld [vmem:[#allocation2 + $0x170] sm:$0xff]
      %v7060 = vld [vmem:[#allocation2 + $0x178] sm:$0xff]
      %v7061 = vld [vmem:[#allocation2 + $0x180] sm:$0xff]
      %v7062 = vld [vmem:[#allocation2 + $0x188] sm:$0xff]
      %v7063 = vld [vmem:[#allocation2 + $0x190] sm:$0xff]
      %v7064 = vld [vmem:[#allocation2 + $0x198] sm:$0xff]
      %v7065 = vld [vmem:[#allocation2 + $0x1a0] sm:$0xff]
      %v7066 = vld [vmem:[#allocation2 + $0x1a8] sm:$0xff]
      %v7067 = vld [vmem:[#allocation2 + $0x1b0] sm:$0xff]
      %v7068 = vld [vmem:[#allocation2 + $0x1b8] sm:$0xff]
      %v7069 = vld [vmem:[#allocation2 + $0x1c0] sm:$0xff]
      %v7070 = vld [vmem:[#allocation2 + $0x1c8] sm:$0xff]
      %v7071 = vld [vmem:[#allocation2 + $0x1d0] sm:$0xff]
      %v7072 = vld [vmem:[#allocation2 + $0x1d8] sm:$0xff]
      %v7073 = vld [vmem:[#allocation2 + $0x1e0] sm:$0xff]
      %v7074 = vld [vmem:[#allocation2 + $0x1e8] sm:$0xff]
      %v7075 = vld [vmem:[#allocation2 + $0x1f0] sm:$0xff]
      %v7076 = vld [vmem:[#allocation2 + $0x1f8] sm:$0xff]
      %s7077 = scalar_lea.vmem %s1, 64
      %v7078 = vld [vmem:[%s7077] sm:$0xf]
      %v7079 = vld [vmem:[%s7077 + $0x4] sm:$0x3]
      %v7082 = vunpack.c.l.b16 %v7078
      %v7083 = vunpack.c.l.b16 %v7079
      %v7084 = vpack.c.b16 %v7083, %v7082
      %v7086 = vsel %vm468, %v6981, 0
      %v7089 = vsel %vm468, %v6982, 0
      %v7092 = vsel %vm468, %v6983, 0
      %v7095 = vsel %vm468, %v6984, 0
      %v7098 = vsel %vm468, %v6985, 0
      %v7101 = vsel %vm468, %v6986, 0
      %v7104 = vsel %vm468, %v6987, 0
      %v7107 = vsel %vm468, %v6988, 0
      %v7110 = vsel %vm468, %v6989, 0
      %v7113 = vsel %vm468, %v6990, 0
      %v7116 = vsel %vm468, %v6991, 0
      %v7119 = vsel %vm468, %v6992, 0
      %v7122 = vsel %vm468, %v6993, 0
      %v7125 = vsel %vm468, %v6994, 0
      %v7128 = vsel %vm468, %v6995, 0
      %v7131 = vsel %vm468, %v6996, 0
      %v7134 = vsel %vm468, %v6997, 0
      %v7137 = vsel %vm468, %v6998, 0
      %v7140 = vsel %vm468, %v6999, 0
      %v7143 = vsel %vm468, %v7000, 0
      %v7146 = vsel %vm468, %v7001, 0
      %v7149 = vsel %vm468, %v7002, 0
      %v7152 = vsel %vm468, %v7003, 0
      %v7155 = vsel %vm468, %v7004, 0
      %v7158 = vsel %vm468, %v7005, 0
      %v7161 = vsel %vm468, %v7006, 0
      %v7164 = vsel %vm468, %v7007, 0
      %v7167 = vsel %vm468, %v7008, 0
      %v7170 = vsel %vm468, %v7009, 0
      %v7173 = vsel %vm468, %v7010, 0
      %v7176 = vsel %vm468, %v7011, 0
      %v7179 = vsel %vm468, %v7012, 0
      %v7182 = vsel %vm565, %v7084, 0
      %7184 = vmatprep.subr.bf16.mxu0 0
      %7185 = vmatpush1.bf16.msra.mxu0 %v7182
      %7186 = vmatprep.subr.bf16.mxu0 0
      %7187 = vmatpush1.bf16.msra.mxu0 0
      %7188 = vmatprep.subr.bf16.mxu0 0
      %7189 = vmatpush1.bf16.msra.mxu0 0
      %7190 = vmatprep.subr.bf16.mxu0 0
      %7191 = vmatpush1.bf16.msra.mxu0 0
      %7192 = vmatprep.subr.bf16.mxu0 0
      %7193 = vmatpush1.bf16.msra.mxu0 0
      %7194 = vmatprep.subr.bf16.mxu0 0
      %7195 = vmatpush1.bf16.msra.mxu0 0
      %7196 = vmatprep.subr.bf16.mxu0 0
      %7197 = vmatpush1.bf16.msra.mxu0 0
      %7198 = vmatprep.subr.bf16.mxu0 0
      %7199 = vmatpush1.bf16.msra.mxu0 0
      %7200 = vmatprep.subr.bf16.mxu0 0
      %7201 = vmatpush1.bf16.msra.mxu0 0
      %7202 = vmatprep.subr.bf16.mxu0 0
      %7203 = vmatpush1.bf16.msra.mxu0 0
      %7204 = vmatprep.subr.bf16.mxu0 0
      %7205 = vmatpush1.bf16.msra.mxu0 0
      %7206 = vmatprep.subr.bf16.mxu0 0
      %7207 = vmatpush1.bf16.msra.mxu0 0
      %7208 = vmatprep.subr.bf16.mxu0 0
      %7209 = vmatpush1.bf16.msra.mxu0 0
      %7210 = vmatprep.subr.bf16.mxu0 0
      %7211 = vmatpush1.bf16.msra.mxu0 0
      %7212 = vmatprep.subr.bf16.mxu0 0
      %7213 = vmatpush1.bf16.msra.mxu0 0
      %7214 = vmatprep.subr.bf16.mxu0 0
      %7215 = vmatpush1.bf16.msra.mxu0 0
      %7216 = vmatprep.mubr.bf16.mxu0 0
      %7217 = vmatmul.mubr.bf16.gmra.mrb[0].mxu0 %v7086
      %v7218 = vpop.f32.mrb[0].mxu0
      %v7219 = vadd.f32 0.0, %v7218
      %v7220 = vpop.f32.mrb[0].mxu0
      %v7221 = vpop.f32.mrb[0].mxu0
      %v7222 = vadd.f32 0.0, %v7221
      %v7223 = vpop.f32.mrb[0].mxu0
      %7224 = vmatprep.mubr.bf16.mxu0 0
      %7225 = vmatmul.mubr.bf16.gmra.mrb[0].mxu0 %v7089
      %v7226 = vpop.f32.mrb[0].mxu0
      %v7227 = vadd.f32 0.0, %v7226
      %v7228 = vpop.f32.mrb[0].mxu0
      %v7229 = vpop.f32.mrb[0].mxu0
      %v7230 = vadd.f32 0.0, %v7229
      %v7231 = vpop.f32.mrb[0].mxu0
      %7232 = vmatprep.mubr.bf16.mxu0 0
      %7233 = vmatmul.mubr.bf16.gmra.mrb[0].mxu0 %v7092
      %v7234 = vpop.f32.mrb[0].mxu0
      %v7235 = vadd.f32 0.0, %v7234
      %v7236 = vpop.f32.mrb[0].mxu0
      %v7237 = vpop.f32.mrb[0].mxu0
      %v7238 = vadd.f32 0.0, %v7237
      %v7239 = vpop.f32.mrb[0].mxu0
      %7240 = vmatprep.mubr.bf16.mxu0 0
      %7241 = vmatmul.mubr.bf16.gmra.mrb[0].mxu0 %v7095
      %v7242 = vpop.f32.mrb[0].mxu0
      %v7243 = vadd.f32 0.0, %v7242
      %v7244 = vpop.f32.mrb[0].mxu0
      %v7245 = vpop.f32.mrb[0].mxu0
      %v7246 = vadd.f32 0.0, %v7245
      %v7247 = vpop.f32.mrb[0].mxu0
      %7248 = vmatprep.mubr.bf16.mxu0 0
      %7249 = vmatmul.mubr.bf16.gmra.mrb[0].mxu0 %v7098
      %v7250 = vpop.f32.mrb[0].mxu0
      %v7251 = vadd.f32 0.0, %v7250
      %v7252 = vpop.f32.mrb[0].mxu0
      %v7253 = vpop.f32.mrb[0].mxu0
      %v7254 = vadd.f32 0.0, %v7253
      %v7255 = vpop.f32.mrb[0].mxu0
      %7256 = vmatprep.mubr.bf16.mxu0 0
      %7257 = vmatmul.mubr.bf16.gmra.mrb[0].mxu0 %v7101
      %v7258 = vpop.f32.mrb[0].mxu0
      %v7259 = vadd.f32 0.0, %v7258
      %v7260 = vpop.f32.mrb[0].mxu0
      %v7261 = vpop.f32.mrb[0].mxu0
      %v7262 = vadd.f32 0.0, %v7261
      %v7263 = vpop.f32.mrb[0].mxu0
      %7264 = vmatprep.mubr.bf16.mxu0 0
      %7265 = vmatmul.mubr.bf16.gmra.mrb[0].mxu0 %v7104
      %v7266 = vpop.f32.mrb[0].mxu0
      %v7267 = vadd.f32 0.0, %v7266
      %v7268 = vpop.f32.mrb[0].mxu0
      %v7269 = vpop.f32.mrb[0].mxu0
      %v7270 = vadd.f32 0.0, %v7269
      %v7271 = vpop.f32.mrb[0].mxu0
      %7272 = vmatprep.mubr.bf16.mxu0 0
      %7273 = vmatmul.mubr.bf16.gmra.mrb[0].mxu0 %v7107
      %v7274 = vpop.f32.mrb[0].mxu0
      %v7275 = vadd.f32 0.0, %v7274
      %v7276 = vpop.f32.mrb[0].mxu0
      %v7277 = vpop.f32.mrb[0].mxu0
      %v7278 = vadd.f32 0.0, %v7277
      %v7279 = vpop.f32.mrb[0].mxu0
      %7280 = vmatprep.mubr.bf16.mxu0 0
      %7281 = vmatmul.mubr.bf16.gmra.mrb[0].mxu0 %v7110
      %v7282 = vpop.f32.mrb[0].mxu0
      %v7283 = vadd.f32 0.0, %v7282
      %v7284 = vpop.f32.mrb[0].mxu0
      %v7285 = vpop.f32.mrb[0].mxu0
      %v7286 = vadd.f32 0.0, %v7285
      %v7287 = vpop.f32.mrb[0].mxu0
      %7288 = vmatprep.mubr.bf16.mxu0 0
      %7289 = vmatmul.mubr.bf16.gmra.mrb[0].mxu0 %v7113
      %v7290 = vpop.f32.mrb[0].mxu0
      %v7291 = vadd.f32 0.0, %v7290
      %v7292 = vpop.f32.mrb[0].mxu0
      %v7293 = vpop.f32.mrb[0].mxu0
      %v7294 = vadd.f32 0.0, %v7293
      %v7295 = vpop.f32.mrb[0].mxu0
      %7296 = vmatprep.mubr.bf16.mxu0 0
      %7297 = vmatmul.mubr.bf16.gmra.mrb[0].mxu0 %v7116
      %v7298 = vpop.f32.mrb[0].mxu0
      %v7299 = vadd.f32 0.0, %v7298
      %v7300 = vpop.f32.mrb[0].mxu0
      %v7301 = vpop.f32.mrb[0].mxu0
      %v7302 = vadd.f32 0.0, %v7301
      %v7303 = vpop.f32.mrb[0].mxu0
      %7304 = vmatprep.mubr.bf16.mxu0 0
      %7305 = vmatmul.mubr.bf16.gmra.mrb[0].mxu0 %v7119
      %v7306 = vpop.f32.mrb[0].mxu0
      %v7307 = vadd.f32 0.0, %v7306
      %v7308 = vpop.f32.mrb[0].mxu0
      %v7309 = vpop.f32.mrb[0].mxu0
      %v7310 = vadd.f32 0.0, %v7309
      %v7311 = vpop.f32.mrb[0].mxu0
      %7312 = vmatprep.mubr.bf16.mxu0 0
      %7313 = vmatmul.mubr.bf16.gmra.mrb[0].mxu0 %v7122
      %v7314 = vpop.f32.mrb[0].mxu0
      %v7315 = vadd.f32 0.0, %v7314
      %v7316 = vpop.f32.mrb[0].mxu0
      %v7317 = vpop.f32.mrb[0].mxu0
      %v7318 = vadd.f32 0.0, %v7317
      %v7319 = vpop.f32.mrb[0].mxu0
      %7320 = vmatprep.mubr.bf16.mxu0 0
      %7321 = vmatmul.mubr.bf16.gmra.mrb[0].mxu0 %v7125
      %v7322 = vpop.f32.mrb[0].mxu0
      %v7323 = vadd.f32 0.0, %v7322
      %v7324 = vpop.f32.mrb[0].mxu0
      %v7325 = vpop.f32.mrb[0].mxu0
      %v7326 = vadd.f32 0.0, %v7325
      %v7327 = vpop.f32.mrb[0].mxu0
      %7328 = vmatprep.mubr.bf16.mxu0 0
      %7329 = vmatmul.mubr.bf16.gmra.mrb[0].mxu0 %v7128
      %v7330 = vpop.f32.mrb[0].mxu0
      %v7331 = vadd.f32 0.0, %v7330
      %v7332 = vpop.f32.mrb[0].mxu0
      %v7333 = vpop.f32.mrb[0].mxu0
      %v7334 = vadd.f32 0.0, %v7333
      %v7335 = vpop.f32.mrb[0].mxu0
      %7336 = vmatprep.mubr.bf16.mxu0 0
      %7337 = vmatmul.mubr.bf16.gmra.mrb[0].mxu0 %v7131
      %v7338 = vpop.f32.mrb[0].mxu0
      %v7339 = vadd.f32 0.0, %v7338
      %v7340 = vpop.f32.mrb[0].mxu0
      %v7341 = vpop.f32.mrb[0].mxu0
      %v7342 = vadd.f32 0.0, %v7341
      %v7343 = vpop.f32.mrb[0].mxu0
      %7344 = vmatprep.mubr.bf16.mxu0 0
      %7345 = vmatmul.mubr.bf16.gmra.mrb[0].mxu0 %v7134
      %v7346 = vpop.f32.mrb[0].mxu0
      %v7347 = vadd.f32 0.0, %v7346
      %v7348 = vpop.f32.mrb[0].mxu0
      %v7349 = vpop.f32.mrb[0].mxu0
      %v7350 = vadd.f32 0.0, %v7349
      %v7351 = vpop.f32.mrb[0].mxu0
      %7352 = vmatprep.mubr.bf16.mxu0 0
      %7353 = vmatmul.mubr.bf16.gmra.mrb[0].mxu0 %v7137
      %v7354 = vpop.f32.mrb[0].mxu0
      %v7355 = vadd.f32 0.0, %v7354
      %v7356 = vpop.f32.mrb[0].mxu0
      %v7357 = vpop.f32.mrb[0].mxu0
      %v7358 = vadd.f32 0.0, %v7357
      %v7359 = vpop.f32.mrb[0].mxu0
      %7360 = vmatprep.mubr.bf16.mxu0 0
      %7361 = vmatmul.mubr.bf16.gmra.mrb[0].mxu0 %v7140
      %v7362 = vpop.f32.mrb[0].mxu0
      %v7363 = vadd.f32 0.0, %v7362
      %v7364 = vpop.f32.mrb[0].mxu0
      %v7365 = vpop.f32.mrb[0].mxu0
      %v7366 = vadd.f32 0.0, %v7365
      %v7367 = vpop.f32.mrb[0].mxu0
      %7368 = vmatprep.mubr.bf16.mxu0 0
      %7369 = vmatmul.mubr.bf16.gmra.mrb[0].mxu0 %v7143
      %v7370 = vpop.f32.mrb[0].mxu0
      %v7371 = vadd.f32 0.0, %v7370
      %v7372 = vpop.f32.mrb[0].mxu0
      %v7373 = vpop.f32.mrb[0].mxu0
      %v7374 = vadd.f32 0.0, %v7373
      %v7375 = vpop.f32.mrb[0].mxu0
      %7376 = vmatprep.mubr.bf16.mxu0 0
      %7377 = vmatmul.mubr.bf16.gmra.mrb[0].mxu0 %v7146
      %v7378 = vpop.f32.mrb[0].mxu0
      %v7379 = vadd.f32 0.0, %v7378
      %v7380 = vpop.f32.mrb[0].mxu0
      %v7381 = vpop.f32.mrb[0].mxu0
      %v7382 = vadd.f32 0.0, %v7381
      %v7383 = vpop.f32.mrb[0].mxu0
      %7384 = vmatprep.mubr.bf16.mxu0 0
      %7385 = vmatmul.mubr.bf16.gmra.mrb[0].mxu0 %v7149
      %v7386 = vpop.f32.mrb[0].mxu0
      %v7387 = vadd.f32 0.0, %v7386
      %v7388 = vpop.f32.mrb[0].mxu0
      %v7389 = vpop.f32.mrb[0].mxu0
      %v7390 = vadd.f32 0.0, %v7389
      %v7391 = vpop.f32.mrb[0].mxu0
      %7392 = vmatprep.mubr.bf16.mxu0 0
      %7393 = vmatmul.mubr.bf16.gmra.mrb[0].mxu0 %v7152
      %v7394 = vpop.f32.mrb[0].mxu0
      %v7395 = vadd.f32 0.0, %v7394
      %v7396 = vpop.f32.mrb[0].mxu0
      %v7397 = vpop.f32.mrb[0].mxu0
      %v7398 = vadd.f32 0.0, %v7397
      %v7399 = vpop.f32.mrb[0].mxu0
      %7400 = vmatprep.mubr.bf16.mxu0 0
      %7401 = vmatmul.mubr.bf16.gmra.mrb[0].mxu0 %v7155
      %v7402 = vpop.f32.mrb[0].mxu0
      %v7403 = vadd.f32 0.0, %v7402
      %v7404 = vpop.f32.mrb[0].mxu0
      %v7405 = vpop.f32.mrb[0].mxu0
      %v7406 = vadd.f32 0.0, %v7405
      %v7407 = vpop.f32.mrb[0].mxu0
      %7408 = vmatprep.mubr.bf16.mxu0 0
      %7409 = vmatmul.mubr.bf16.gmra.mrb[0].mxu0 %v7158
      %v7410 = vpop.f32.mrb[0].mxu0
      %v7411 = vadd.f32 0.0, %v7410
      %v7412 = vpop.f32.mrb[0].mxu0
      %v7413 = vpop.f32.mrb[0].mxu0
      %v7414 = vadd.f32 0.0, %v7413
      %v7415 = vpop.f32.mrb[0].mxu0
      %7416 = vmatprep.mubr.bf16.mxu0 0
      %7417 = vmatmul.mubr.bf16.gmra.mrb[0].mxu0 %v7161
      %v7418 = vpop.f32.mrb[0].mxu0
      %v7419 = vadd.f32 0.0, %v7418
      %v7420 = vpop.f32.mrb[0].mxu0
      %v7421 = vpop.f32.mrb[0].mxu0
      %v7422 = vadd.f32 0.0, %v7421
      %v7423 = vpop.f32.mrb[0].mxu0
      %7424 = vmatprep.mubr.bf16.mxu0 0
      %7425 = vmatmul.mubr.bf16.gmra.mrb[0].mxu0 %v7164
      %v7426 = vpop.f32.mrb[0].mxu0
      %v7427 = vadd.f32 0.0, %v7426
      %v7428 = vpop.f32.mrb[0].mxu0
      %v7429 = vpop.f32.mrb[0].mxu0
      %v7430 = vadd.f32 0.0, %v7429
      %v7431 = vpop.f32.mrb[0].mxu0
      %7432 = vmatprep.mubr.bf16.mxu0 0
      %7433 = vmatmul.mubr.bf16.gmra.mrb[0].mxu0 %v7167
      %v7434 = vpop.f32.mrb[0].mxu0
      %v7435 = vadd.f32 0.0, %v7434
      %v7436 = vpop.f32.mrb[0].mxu0
      %v7437 = vpop.f32.mrb[0].mxu0
      %v7438 = vadd.f32 0.0, %v7437
      %v7439 = vpop.f32.mrb[0].mxu0
      %7440 = vmatprep.mubr.bf16.mxu0 0
      %7441 = vmatmul.mubr.bf16.gmra.mrb[0].mxu0 %v7170
      %v7442 = vpop.f32.mrb[0].mxu0
      %v7443 = vadd.f32 0.0, %v7442
      %v7444 = vpop.f32.mrb[0].mxu0
      %v7445 = vpop.f32.mrb[0].mxu0
      %v7446 = vadd.f32 0.0, %v7445
      %v7447 = vpop.f32.mrb[0].mxu0
      %7448 = vmatprep.mubr.bf16.mxu0 0
      %7449 = vmatmul.mubr.bf16.gmra.mrb[0].mxu0 %v7173
      %v7450 = vpop.f32.mrb[0].mxu0
      %v7451 = vadd.f32 0.0, %v7450
      %v7452 = vpop.f32.mrb[0].mxu0
      %v7453 = vpop.f32.mrb[0].mxu0
      %v7454 = vadd.f32 0.0, %v7453
      %v7455 = vpop.f32.mrb[0].mxu0
      %7456 = vmatprep.mubr.bf16.mxu0 0
      %7457 = vmatmul.mubr.bf16.gmra.mrb[0].mxu0 %v7176
      %v7458 = vpop.f32.mrb[0].mxu0
      %v7459 = vadd.f32 0.0, %v7458
      %v7460 = vpop.f32.mrb[0].mxu0
      %v7461 = vpop.f32.mrb[0].mxu0
      %v7462 = vadd.f32 0.0, %v7461
      %v7463 = vpop.f32.mrb[0].mxu0
      %7464 = vmatprep.mubr.bf16.mxu0 0
      %7465 = vmatmul.mubr.bf16.gmra.mrb[0].mxu0 %v7179
      %v7466 = vpop.f32.mrb[0].mxu0
      %v7467 = vadd.f32 0.0, %v7466
      %v7468 = vpop.f32.mrb[0].mxu0
      %v7469 = vpop.f32.mrb[0].mxu0
      %v7470 = vadd.f32 0.0, %v7469
      %v7471 = vpop.f32.mrb[0].mxu0
      %7472 = vdwg.mxu0
      %v7473 = vadd.f32 %v7013, %v7219
      %v7474 = vadd.f32 %v7014, %v7222
      %v7475 = vadd.f32 %v7015, %v7227
      %v7476 = vadd.f32 %v7016, %v7230
      %v7477 = vadd.f32 %v7017, %v7235
      %v7478 = vadd.f32 %v7018, %v7238
      %v7479 = vadd.f32 %v7019, %v7243
      %v7480 = vadd.f32 %v7020, %v7246
      %v7481 = vadd.f32 %v7021, %v7251
      %v7482 = vadd.f32 %v7022, %v7254
      %v7483 = vadd.f32 %v7023, %v7259
      %v7484 = vadd.f32 %v7024, %v7262
      %v7485 = vadd.f32 %v7025, %v7267
      %v7486 = vadd.f32 %v7026, %v7270
      %v7487 = vadd.f32 %v7027, %v7275
      %v7488 = vadd.f32 %v7028, %v7278
      %v7489 = vadd.f32 %v7029, %v7283
      %v7490 = vadd.f32 %v7030, %v7286
      %v7491 = vadd.f32 %v7031, %v7291
      %v7492 = vadd.f32 %v7032, %v7294
      %v7493 = vadd.f32 %v7033, %v7299
      %v7494 = vadd.f32 %v7034, %v7302
      %v7495 = vadd.f32 %v7035, %v7307
      %v7496 = vadd.f32 %v7036, %v7310
      %v7497 = vadd.f32 %v7037, %v7315
      %v7498 = vadd.f32 %v7038, %v7318
      %v7499 = vadd.f32 %v7039, %v7323
      %v7500 = vadd.f32 %v7040, %v7326
      %v7501 = vadd.f32 %v7041, %v7331
      %v7502 = vadd.f32 %v7042, %v7334
      %v7503 = vadd.f32 %v7043, %v7339
      %v7504 = vadd.f32 %v7044, %v7342
      %v7505 = vadd.f32 %v7045, %v7347
      %v7506 = vadd.f32 %v7046, %v7350
      %v7507 = vadd.f32 %v7047, %v7355
      %v7508 = vadd.f32 %v7048, %v7358
      %v7509 = vadd.f32 %v7049, %v7363
      %v7510 = vadd.f32 %v7050, %v7366
      %v7511 = vadd.f32 %v7051, %v7371
      %v7512 = vadd.f32 %v7052, %v7374
      %v7513 = vadd.f32 %v7053, %v7379
      %v7514 = vadd.f32 %v7054, %v7382
      %v7515 = vadd.f32 %v7055, %v7387
      %v7516 = vadd.f32 %v7056, %v7390
      %v7517 = vadd.f32 %v7057, %v7395
      %v7518 = vadd.f32 %v7058, %v7398
      %v7519 = vadd.f32 %v7059, %v7403
      %v7520 = vadd.f32 %v7060, %v7406
      %v7521 = vadd.f32 %v7061, %v7411
      %v7522 = vadd.f32 %v7062, %v7414
      %v7523 = vadd.f32 %v7063, %v7419
      %v7524 = vadd.f32 %v7064, %v7422
      %v7525 = vadd.f32 %v7065, %v7427
      %v7526 = vadd.f32 %v7066, %v7430
      %v7527 = vadd.f32 %v7067, %v7435
      %v7528 = vadd.f32 %v7068, %v7438
      %v7529 = vadd.f32 %v7069, %v7443
      %v7530 = vadd.f32 %v7070, %v7446
      %v7531 = vadd.f32 %v7071, %v7451
      %v7532 = vadd.f32 %v7072, %v7454
      %v7533 = vadd.f32 %v7073, %v7459
      %v7534 = vadd.f32 %v7074, %v7462
      %v7535 = vadd.f32 %v7075, %v7467
      %v7536 = vadd.f32 %v7076, %v7470
      %7537 = vst [vmem:[#allocation2] sm:$0xff] %v7473
      %7538 = vst [vmem:[#allocation2 + $0x8] sm:$0xff] %v7474
      %7539 = vst [vmem:[#allocation2 + $0x10] sm:$0xff] %v7475
      %7540 = vst [vmem:[#allocation2 + $0x18] sm:$0xff] %v7476
      %7541 = vst [vmem:[#allocation2 + $0x20] sm:$0xff] %v7477
      %7542 = vst [vmem:[#allocation2 + $0x28] sm:$0xff] %v7478
      %7543 = vst [vmem:[#allocation2 + $0x30] sm:$0xff] %v7479
      %7544 = vst [vmem:[#allocation2 + $0x38] sm:$0xff] %v7480
      %7545 = vst [vmem:[#allocation2 + $0x40] sm:$0xff] %v7481
      %7546 = vst [vmem:[#allocation2 + $0x48] sm:$0xff] %v7482
      %7547 = vst [vmem:[#allocation2 + $0x50] sm:$0xff] %v7483
      %7548 = vst [vmem:[#allocation2 + $0x58] sm:$0xff] %v7484
      %7549 = vst [vmem:[#allocation2 + $0x60] sm:$0xff] %v7485
      %7550 = vst [vmem:[#allocation2 + $0x68] sm:$0xff] %v7486
      %7551 = vst [vmem:[#allocation2 + $0x70] sm:$0xff] %v7487
      %7552 = vst [vmem:[#allocation2 + $0x78] sm:$0xff] %v7488
      %7553 = vst [vmem:[#allocation2 + $0x80] sm:$0xff] %v7489
      %7554 = vst [vmem:[#allocation2 + $0x88] sm:$0xff] %v7490
      %7555 = vst [vmem:[#allocation2 + $0x90] sm:$0xff] %v7491
      %7556 = vst [vmem:[#allocation2 + $0x98] sm:$0xff] %v7492
      %7557 = vst [vmem:[#allocation2 + $0xa0] sm:$0xff] %v7493
      %7558 = vst [vmem:[#allocation2 + $0xa8] sm:$0xff] %v7494
      %7559 = vst [vmem:[#allocation2 + $0xb0] sm:$0xff] %v7495
      %7560 = vst [vmem:[#allocation2 + $0xb8] sm:$0xff] %v7496
      %7561 = vst [vmem:[#allocation2 + $0xc0] sm:$0xff] %v7497
      %7562 = vst [vmem:[#allocation2 + $0xc8] sm:$0xff] %v7498
      %7563 = vst [vmem:[#allocation2 + $0xd0] sm:$0xff] %v7499
      %7564 = vst [vmem:[#allocation2 + $0xd8] sm:$0xff] %v7500
      %7565 = vst [vmem:[#allocation2 + $0xe0] sm:$0xff] %v7501
      %7566 = vst [vmem:[#allocation2 + $0xe8] sm:$0xff] %v7502
      %7567 = vst [vmem:[#allocation2 + $0xf0] sm:$0xff] %v7503
      %7568 = vst [vmem:[#allocation2 + $0xf8] sm:$0xff] %v7504
      %7569 = vst [vmem:[#allocation2 + $0x100] sm:$0xff] %v7505
      %7570 = vst [vmem:[#allocation2 + $0x108] sm:$0xff] %v7506
      %7571 = vst [vmem:[#allocation2 + $0x110] sm:$0xff] %v7507
      %7572 = vst [vmem:[#allocation2 + $0x118] sm:$0xff] %v7508
      %7573 = vst [vmem:[#allocation2 + $0x120] sm:$0xff] %v7509
      %7574 = vst [vmem:[#allocation2 + $0x128] sm:$0xff] %v7510
      %7575 = vst [vmem:[#allocation2 + $0x130] sm:$0xff] %v7511
      %7576 = vst [vmem:[#allocation2 + $0x138] sm:$0xff] %v7512
      %7577 = vst [vmem:[#allocation2 + $0x140] sm:$0xff] %v7513
      %7578 = vst [vmem:[#allocation2 + $0x148] sm:$0xff] %v7514
      %7579 = vst [vmem:[#allocation2 + $0x150] sm:$0xff] %v7515
      %7580 = vst [vmem:[#allocation2 + $0x158] sm:$0xff] %v7516
      %7581 = vst [vmem:[#allocation2 + $0x160] sm:$0xff] %v7517
      %7582 = vst [vmem:[#allocation2 + $0x168] sm:$0xff] %v7518
      %7583 = vst [vmem:[#allocation2 + $0x170] sm:$0xff] %v7519
      %7584 = vst [vmem:[#allocation2 + $0x178] sm:$0xff] %v7520
      %7585 = vst [vmem:[#allocation2 + $0x180] sm:$0xff] %v7521
      %7586 = vst [vmem:[#allocation2 + $0x188] sm:$0xff] %v7522
      %7587 = vst [vmem:[#allocation2 + $0x190] sm:$0xff] %v7523
      %7588 = vst [vmem:[#allocation2 + $0x198] sm:$0xff] %v7524
      %7589 = vst [vmem:[#allocation2 + $0x1a0] sm:$0xff] %v7525
      %7590 = vst [vmem:[#allocation2 + $0x1a8] sm:$0xff] %v7526
      %7591 = vst [vmem:[#allocation2 + $0x1b0] sm:$0xff] %v7527
      %7592 = vst [vmem:[#allocation2 + $0x1b8] sm:$0xff] %v7528
      %7593 = vst [vmem:[#allocation2 + $0x1c0] sm:$0xff] %v7529
      %7594 = vst [vmem:[#allocation2 + $0x1c8] sm:$0xff] %v7530
      %7595 = vst [vmem:[#allocation2 + $0x1d0] sm:$0xff] %v7531
      %7596 = vst [vmem:[#allocation2 + $0x1d8] sm:$0xff] %v7532
      %7597 = vst [vmem:[#allocation2 + $0x1e0] sm:$0xff] %v7533
      %7598 = vst [vmem:[#allocation2 + $0x1e8] sm:$0xff] %v7534
      %7599 = vst [vmem:[#allocation2 + $0x1f0] sm:$0xff] %v7535
      %7600 = vst [vmem:[#allocation2 + $0x1f8] sm:$0xff] %v7536
      %v7601 = vld [vmem:[#allocation2] sm:$0xff]
      %v7602 = vld [vmem:[#allocation2 + $0x8] sm:$0xff]
      %v7603 = vld [vmem:[#allocation2 + $0x10] sm:$0xff]
      %v7604 = vld [vmem:[#allocation2 + $0x18] sm:$0xff]
      %v7605 = vld [vmem:[#allocation2 + $0x20] sm:$0xff]
      %v7606 = vld [vmem:[#allocation2 + $0x28] sm:$0xff]
      %v7607 = vld [vmem:[#allocation2 + $0x30] sm:$0xff]
      %v7608 = vld [vmem:[#allocation2 + $0x38] sm:$0xff]
      %v7609 = vld [vmem:[#allocation2 + $0x40] sm:$0xff]
      %v7610 = vld [vmem:[#allocation2 + $0x48] sm:$0xff]
      %v7611 = vld [vmem:[#allocation2 + $0x50] sm:$0xff]
      %v7612 = vld [vmem:[#allocation2 + $0x58] sm:$0xff]
      %v7613 = vld [vmem:[#allocation2 + $0x60] sm:$0xff]
      %v7614 = vld [vmem:[#allocation2 + $0x68] sm:$0xff]
      %v7615 = vld [vmem:[#allocation2 + $0x70] sm:$0xff]
      %v7616 = vld [vmem:[#allocation2 + $0x78] sm:$0xff]
      %v7617 = vld [vmem:[#allocation2 + $0x80] sm:$0xff]
      %v7618 = vld [vmem:[#allocation2 + $0x88] sm:$0xff]
      %v7619 = vld [vmem:[#allocation2 + $0x90] sm:$0xff]
      %v7620 = vld [vmem:[#allocation2 + $0x98] sm:$0xff]
      %v7621 = vld [vmem:[#allocation2 + $0xa0] sm:$0xff]
      %v7622 = vld [vmem:[#allocation2 + $0xa8] sm:$0xff]
      %v7623 = vld [vmem:[#allocation2 + $0xb0] sm:$0xff]
      %v7624 = vld [vmem:[#allocation2 + $0xb8] sm:$0xff]
      %v7625 = vld [vmem:[#allocation2 + $0xc0] sm:$0xff]
      %v7626 = vld [vmem:[#allocation2 + $0xc8] sm:$0xff]
      %v7627 = vld [vmem:[#allocation2 + $0xd0] sm:$0xff]
      %v7628 = vld [vmem:[#allocation2 + $0xd8] sm:$0xff]
      %v7629 = vld [vmem:[#allocation2 + $0xe0] sm:$0xff]
      %v7630 = vld [vmem:[#allocation2 + $0xe8] sm:$0xff]
      %v7631 = vld [vmem:[#allocation2 + $0xf0] sm:$0xff]
      %v7632 = vld [vmem:[#allocation2 + $0xf8] sm:$0xff]
      %v7633 = vld [vmem:[#allocation2 + $0x100] sm:$0xff]
      %v7634 = vld [vmem:[#allocation2 + $0x108] sm:$0xff]
      %v7635 = vld [vmem:[#allocation2 + $0x110] sm:$0xff]
      %v7636 = vld [vmem:[#allocation2 + $0x118] sm:$0xff]
      %v7637 = vld [vmem:[#allocation2 + $0x120] sm:$0xff]
      %v7638 = vld [vmem:[#allocation2 + $0x128] sm:$0xff]
      %v7639 = vld [vmem:[#allocation2 + $0x130] sm:$0xff]
      %v7640 = vld [vmem:[#allocation2 + $0x138] sm:$0xff]
      %v7641 = vld [vmem:[#allocation2 + $0x140] sm:$0xff]
      %v7642 = vld [vmem:[#allocation2 + $0x148] sm:$0xff]
      %v7643 = vld [vmem:[#allocation2 + $0x150] sm:$0xff]
      %v7644 = vld [vmem:[#allocation2 + $0x158] sm:$0xff]
      %v7645 = vld [vmem:[#allocation2 + $0x160] sm:$0xff]
      %v7646 = vld [vmem:[#allocation2 + $0x168] sm:$0xff]
      %v7647 = vld [vmem:[#allocation2 + $0x170] sm:$0xff]
      %v7648 = vld [vmem:[#allocation2 + $0x178] sm:$0xff]
      %v7649 = vld [vmem:[#allocation2 + $0x180] sm:$0xff]
      %v7650 = vld [vmem:[#allocation2 + $0x188] sm:$0xff]
      %v7651 = vld [vmem:[#allocation2 + $0x190] sm:$0xff]
      %v7652 = vld [vmem:[#allocation2 + $0x198] sm:$0xff]
      %v7653 = vld [vmem:[#allocation2 + $0x1a0] sm:$0xff]
      %v7654 = vld [vmem:[#allocation2 + $0x1a8] sm:$0xff]
      %v7655 = vld [vmem:[#allocation2 + $0x1b0] sm:$0xff]
      %v7656 = vld [vmem:[#allocation2 + $0x1b8] sm:$0xff]
      %v7657 = vld [vmem:[#allocation2 + $0x1c0] sm:$0xff]
      %v7658 = vld [vmem:[#allocation2 + $0x1c8] sm:$0xff]
      %v7659 = vld [vmem:[#allocation2 + $0x1d0] sm:$0xff]
      %v7660 = vld [vmem:[#allocation2 + $0x1d8] sm:$0xff]
      %v7661 = vld [vmem:[#allocation2 + $0x1e0] sm:$0xff]
      %v7662 = vld [vmem:[#allocation2 + $0x1e8] sm:$0xff]
      %v7663 = vld [vmem:[#allocation2 + $0x1f0] sm:$0xff]
      %v7664 = vld [vmem:[#allocation2 + $0x1f8] sm:$0xff]
      %7665 = vst [vmem:[%s207] sm:$0xff] %v7601
      %7666 = vst [vmem:[%s207 + $0x8] sm:$0xff] %v7602
      %7667 = vst [vmem:[%s207 + $0x10] sm:$0xff] %v7603
      %7668 = vst [vmem:[%s207 + $0x18] sm:$0xff] %v7604
      %7669 = vst [vmem:[%s207 + $0x20] sm:$0xff] %v7605
      %7670 = vst [vmem:[%s207 + $0x28] sm:$0xff] %v7606
      %7671 = vst [vmem:[%s207 + $0x30] sm:$0xff] %v7607
      %7672 = vst [vmem:[%s207 + $0x38] sm:$0xff] %v7608
      %7673 = vst [vmem:[%s207 + $0x40] sm:$0xff] %v7609
      %7674 = vst [vmem:[%s207 + $0x48] sm:$0xff] %v7610
      %7675 = vst [vmem:[%s207 + $0x50] sm:$0xff] %v7611
      %7676 = vst [vmem:[%s207 + $0x58] sm:$0xff] %v7612
      %7677 = vst [vmem:[%s207 + $0x60] sm:$0xff] %v7613
      %7678 = vst [vmem:[%s207 + $0x68] sm:$0xff] %v7614
      %7679 = vst [vmem:[%s207 + $0x70] sm:$0xff] %v7615
      %7680 = vst [vmem:[%s207 + $0x78] sm:$0xff] %v7616
      %7681 = vst [vmem:[%s207 + $0x80] sm:$0xff] %v7617
      %7682 = vst [vmem:[%s207 + $0x88] sm:$0xff] %v7618
      %7683 = vst [vmem:[%s207 + $0x90] sm:$0xff] %v7619
      %7684 = vst [vmem:[%s207 + $0x98] sm:$0xff] %v7620
      %7685 = vst [vmem:[%s207 + $0xa0] sm:$0xff] %v7621
      %7686 = vst [vmem:[%s207 + $0xa8] sm:$0xff] %v7622
      %7687 = vst [vmem:[%s207 + $0xb0] sm:$0xff] %v7623
      %7688 = vst [vmem:[%s207 + $0xb8] sm:$0xff] %v7624
      %7689 = vst [vmem:[%s207 + $0xc0] sm:$0xff] %v7625
      %7690 = vst [vmem:[%s207 + $0xc8] sm:$0xff] %v7626
      %7691 = vst [vmem:[%s207 + $0xd0] sm:$0xff] %v7627
      %7692 = vst [vmem:[%s207 + $0xd8] sm:$0xff] %v7628
      %7693 = vst [vmem:[%s207 + $0xe0] sm:$0xff] %v7629
      %7694 = vst [vmem:[%s207 + $0xe8] sm:$0xff] %v7630
      %7695 = vst [vmem:[%s207 + $0xf0] sm:$0xff] %v7631
      %7696 = vst [vmem:[%s207 + $0xf8] sm:$0xff] %v7632
      %7697 = vst [vmem:[%s207 + $0x100] sm:$0xff] %v7633
      %7698 = vst [vmem:[%s207 + $0x108] sm:$0xff] %v7634
      %7699 = vst [vmem:[%s207 + $0x110] sm:$0xff] %v7635
      %7700 = vst [vmem:[%s207 + $0x118] sm:$0xff] %v7636
      %7701 = vst [vmem:[%s207 + $0x120] sm:$0xff] %v7637
      %7702 = vst [vmem:[%s207 + $0x128] sm:$0xff] %v7638
      %7703 = vst [vmem:[%s207 + $0x130] sm:$0xff] %v7639
      %7704 = vst [vmem:[%s207 + $0x138] sm:$0xff] %v7640
      %7705 = vst [vmem:[%s207 + $0x140] sm:$0xff] %v7641
      %7706 = vst [vmem:[%s207 + $0x148] sm:$0xff] %v7642
      %7707 = vst [vmem:[%s207 + $0x150] sm:$0xff] %v7643
      %7708 = vst [vmem:[%s207 + $0x158] sm:$0xff] %v7644
      %7709 = vst [vmem:[%s207 + $0x160] sm:$0xff] %v7645
      %7710 = vst [vmem:[%s207 + $0x168] sm:$0xff] %v7646
      %7711 = vst [vmem:[%s207 + $0x170] sm:$0xff] %v7647
      %7712 = vst [vmem:[%s207 + $0x178] sm:$0xff] %v7648
      %7713 = vst [vmem:[%s207 + $0x180] sm:$0xff] %v7649
      %7714 = vst [vmem:[%s207 + $0x188] sm:$0xff] %v7650
      %7715 = vst [vmem:[%s207 + $0x190] sm:$0xff] %v7651
      %7716 = vst [vmem:[%s207 + $0x198] sm:$0xff] %v7652
      %7717 = vst [vmem:[%s207 + $0x1a0] sm:$0xff] %v7653
      %7718 = vst [vmem:[%s207 + $0x1a8] sm:$0xff] %v7654
      %7719 = vst [vmem:[%s207 + $0x1b0] sm:$0xff] %v7655
      %7720 = vst [vmem:[%s207 + $0x1b8] sm:$0xff] %v7656
      %7721 = vst [vmem:[%s207 + $0x1c0] sm:$0xff] %v7657
      %7722 = vst [vmem:[%s207 + $0x1c8] sm:$0xff] %v7658
      %7723 = vst [vmem:[%s207 + $0x1d0] sm:$0xff] %v7659
      %7724 = vst [vmem:[%s207 + $0x1d8] sm:$0xff] %v7660
      %7725 = vst [vmem:[%s207 + $0x1e0] sm:$0xff] %v7661
      %7726 = vst [vmem:[%s207 + $0x1e8] sm:$0xff] %v7662
      %7727 = vst [vmem:[%s207 + $0x1f0] sm:$0xff] %v7663
      %7728 = vst [vmem:[%s207 + $0x1f8] sm:$0xff] %v7664
      %v7729 = vadd.f32 %v7601, %v7602
      %v7730 = vadd.f32 %v7729, %v7603
      %v7731 = vadd.f32 %v7730, %v7604
      %v7732 = vadd.f32 %v7731, %v7605
      %v7733 = vadd.f32 %v7732, %v7606
      %v7734 = vadd.f32 %v7733, %v7607
      %v7735 = vadd.f32 %v7734, %v7608
      %v7736 = vadd.f32 %v7735, %v7609
      %v7737 = vadd.f32 %v7736, %v7610
      %v7738 = vadd.f32 %v7737, %v7611
      %v7739 = vadd.f32 %v7738, %v7612
      %v7740 = vadd.f32 %v7739, %v7613
      %v7741 = vadd.f32 %v7740, %v7614
      %v7742 = vadd.f32 %v7741, %v7615
      %v7743 = vadd.f32 %v7742, %v7616
      %v7744 = vadd.f32 %v7743, %v7617
      %v7745 = vadd.f32 %v7744, %v7618
      %v7746 = vadd.f32 %v7745, %v7619
      %v7747 = vadd.f32 %v7746, %v7620
      %v7748 = vadd.f32 %v7747, %v7621
      %v7749 = vadd.f32 %v7748, %v7622
      %v7750 = vadd.f32 %v7749, %v7623
      %v7751 = vadd.f32 %v7750, %v7624
      %v7752 = vadd.f32 %v7751, %v7625
      %v7753 = vadd.f32 %v7752, %v7626
      %v7754 = vadd.f32 %v7753, %v7627
      %v7755 = vadd.f32 %v7754, %v7628
      %v7756 = vadd.f32 %v7755, %v7629
      %v7757 = vadd.f32 %v7756, %v7630
      %v7758 = vadd.f32 %v7757, %v7631
      %v7759 = vadd.f32 %v7758, %v7632
      %v7760 = vadd.f32 %v7759, %v7633
      %v7761 = vadd.f32 %v7760, %v7634
      %v7762 = vadd.f32 %v7761, %v7635
      %v7763 = vadd.f32 %v7762, %v7636
      %v7764 = vadd.f32 %v7763, %v7637
      %v7765 = vadd.f32 %v7764, %v7638
      %v7766 = vadd.f32 %v7765, %v7639
      %v7767 = vadd.f32 %v7766, %v7640
      %v7768 = vadd.f32 %v7767, %v7641
      %v7769 = vadd.f32 %v7768, %v7642
      %v7770 = vadd.f32 %v7769, %v7643
      %v7771 = vadd.f32 %v7770, %v7644
      %v7772 = vadd.f32 %v7771, %v7645
      %v7773 = vadd.f32 %v7772, %v7646
      %v7774 = vadd.f32 %v7773, %v7647
      %v7775 = vadd.f32 %v7774, %v7648
      %v7776 = vadd.f32 %v7775, %v7649
      %v7777 = vadd.f32 %v7776, %v7650
      %v7778 = vadd.f32 %v7777, %v7651
      %v7779 = vadd.f32 %v7778, %v7652
      %v7780 = vadd.f32 %v7779, %v7653
      %v7781 = vadd.f32 %v7780, %v7654
      %v7782 = vadd.f32 %v7781, %v7655
      %v7783 = vadd.f32 %v7782, %v7656
      %v7784 = vadd.f32 %v7783, %v7657
      %v7785 = vadd.f32 %v7784, %v7658
      %v7786 = vadd.f32 %v7785, %v7659
      %v7787 = vadd.f32 %v7786, %v7660
      %v7788 = vadd.f32 %v7787, %v7661
      %v7789 = vadd.f32 %v7788, %v7662
      %v7790 = vadd.f32 %v7789, %v7663
      %v7791 = vadd.f32 %v7790, %v7664
      %v7792 = vrot.slane %v7791, 4
      %v7793 = vadd.f32 %v7791, %v7792
      %v7794 = vrot.slane %v7793, 2
      %v7795 = vadd.f32 %v7793, %v7794
      %v7796 = vrot.slane %v7795, 1
      %v7797 = vadd.f32 %v7795, %v7796
      %v7798 = vmul.f32 %v7601, %v7601
      %v7799 = vmul.f32 %v7602, %v7602
      %v7800 = vmul.f32 %v7603, %v7603
      %v7801 = vmul.f32 %v7604, %v7604
      %v7802 = vmul.f32 %v7605, %v7605
      %v7803 = vmul.f32 %v7606, %v7606
      %v7804 = vmul.f32 %v7607, %v7607
      %v7805 = vmul.f32 %v7608, %v7608
      %v7806 = vmul.f32 %v7609, %v7609
      %v7807 = vmul.f32 %v7610, %v7610
      %v7808 = vmul.f32 %v7611, %v7611
      %v7809 = vmul.f32 %v7612, %v7612
      %v7810 = vmul.f32 %v7613, %v7613
      %v7811 = vmul.f32 %v7614, %v7614
      %v7812 = vmul.f32 %v7615, %v7615
      %v7813 = vmul.f32 %v7616, %v7616
      %v7814 = vmul.f32 %v7617, %v7617
      %v7815 = vmul.f32 %v7618, %v7618
      %v7816 = vmul.f32 %v7619, %v7619
      %v7817 = vmul.f32 %v7620, %v7620
      %v7818 = vmul.f32 %v7621, %v7621
      %v7819 = vmul.f32 %v7622, %v7622
      %v7820 = vmul.f32 %v7623, %v7623
      %v7821 = vmul.f32 %v7624, %v7624
      %v7822 = vmul.f32 %v7625, %v7625
      %v7823 = vmul.f32 %v7626, %v7626
      %v7824 = vmul.f32 %v7627, %v7627
      %v7825 = vmul.f32 %v7628, %v7628
      %v7826 = vmul.f32 %v7629, %v7629
      %v7827 = vmul.f32 %v7630, %v7630
      %v7828 = vmul.f32 %v7631, %v7631
      %v7829 = vmul.f32 %v7632, %v7632
      %v7830 = vmul.f32 %v7633, %v7633
      %v7831 = vmul.f32 %v7634, %v7634
      %v7832 = vmul.f32 %v7635, %v7635
      %v7833 = vmul.f32 %v7636, %v7636
      %v7834 = vmul.f32 %v7637, %v7637
      %v7835 = vmul.f32 %v7638, %v7638
      %v7836 = vmul.f32 %v7639, %v7639
      %v7837 = vmul.f32 %v7640, %v7640
      %v7838 = vmul.f32 %v7641, %v7641
      %v7839 = vmul.f32 %v7642, %v7642
      %v7840 = vmul.f32 %v7643, %v7643
      %v7841 = vmul.f32 %v7644, %v7644
      %v7842 = vmul.f32 %v7645, %v7645
      %v7843 = vmul.f32 %v7646, %v7646
      %v7844 = vmul.f32 %v7647, %v7647
      %v7845 = vmul.f32 %v7648, %v7648
      %v7846 = vmul.f32 %v7649, %v7649
      %v7847 = vmul.f32 %v7650, %v7650
      %v7848 = vmul.f32 %v7651, %v7651
      %v7849 = vmul.f32 %v7652, %v7652
      %v7850 = vmul.f32 %v7653, %v7653
      %v7851 = vmul.f32 %v7654, %v7654
      %v7852 = vmul.f32 %v7655, %v7655
      %v7853 = vmul.f32 %v7656, %v7656
      %v7854 = vmul.f32 %v7657, %v7657
      %v7855 = vmul.f32 %v7658, %v7658
      %v7856 = vmul.f32 %v7659, %v7659
      %v7857 = vmul.f32 %v7660, %v7660
      %v7858 = vmul.f32 %v7661, %v7661
      %v7859 = vmul.f32 %v7662, %v7662
      %v7860 = vmul.f32 %v7663, %v7663
      %v7861 = vmul.f32 %v7664, %v7664
      %v7862 = vadd.f32 %v7798, %v7799
      %v7863 = vadd.f32 %v7862, %v7800
      %v7864 = vadd.f32 %v7863, %v7801
      %v7865 = vadd.f32 %v7864, %v7802
      %v7866 = vadd.f32 %v7865, %v7803
      %v7867 = vadd.f32 %v7866, %v7804
      %v7868 = vadd.f32 %v7867, %v7805
      %v7869 = vadd.f32 %v7868, %v7806
      %v7870 = vadd.f32 %v7869, %v7807
      %v7871 = vadd.f32 %v7870, %v7808
      %v7872 = vadd.f32 %v7871, %v7809
      %v7873 = vadd.f32 %v7872, %v7810
      %v7874 = vadd.f32 %v7873, %v7811
      %v7875 = vadd.f32 %v7874, %v7812
      %v7876 = vadd.f32 %v7875, %v7813
      %v7877 = vadd.f32 %v7876, %v7814
      %v7878 = vadd.f32 %v7877, %v7815
      %v7879 = vadd.f32 %v7878, %v7816
      %v7880 = vadd.f32 %v7879, %v7817
      %v7881 = vadd.f32 %v7880, %v7818
      %v7882 = vadd.f32 %v7881, %v7819
      %v7883 = vadd.f32 %v7882, %v7820
      %v7884 = vadd.f32 %v7883, %v7821
      %v7885 = vadd.f32 %v7884, %v7822
      %v7886 = vadd.f32 %v7885, %v7823
      %v7887 = vadd.f32 %v7886, %v7824
      %v7888 = vadd.f32 %v7887, %v7825
      %v7889 = vadd.f32 %v7888, %v7826
      %v7890 = vadd.f32 %v7889, %v7827
      %v7891 = vadd.f32 %v7890, %v7828
      %v7892 = vadd.f32 %v7891, %v7829
      %v7893 = vadd.f32 %v7892, %v7830
      %v7894 = vadd.f32 %v7893, %v7831
      %v7895 = vadd.f32 %v7894, %v7832
      %v7896 = vadd.f32 %v7895, %v7833
      %v7897 = vadd.f32 %v7896, %v7834
      %v7898 = vadd.f32 %v7897, %v7835
      %v7899 = vadd.f32 %v7898, %v7836
      %v7900 = vadd.f32 %v7899, %v7837
      %v7901 = vadd.f32 %v7900, %v7838
      %v7902 = vadd.f32 %v7901, %v7839
      %v7903 = vadd.f32 %v7902, %v7840
      %v7904 = vadd.f32 %v7903, %v7841
      %v7905 = vadd.f32 %v7904, %v7842
      %v7906 = vadd.f32 %v7905, %v7843
      %v7907 = vadd.f32 %v7906, %v7844
      %v7908 = vadd.f32 %v7907, %v7845
      %v7909 = vadd.f32 %v7908, %v7846
      %v7910 = vadd.f32 %v7909, %v7847
      %v7911 = vadd.f32 %v7910, %v7848
      %v7912 = vadd.f32 %v7911, %v7849
      %v7913 = vadd.f32 %v7912, %v7850
      %v7914 = vadd.f32 %v7913, %v7851
      %v7915 = vadd.f32 %v7914, %v7852
      %v7916 = vadd.f32 %v7915, %v7853
      %v7917 = vadd.f32 %v7916, %v7854
      %v7918 = vadd.f32 %v7917, %v7855
      %v7919 = vadd.f32 %v7918, %v7856
      %v7920 = vadd.f32 %v7919, %v7857
      %v7921 = vadd.f32 %v7920, %v7858
      %v7922 = vadd.f32 %v7921, %v7859
      %v7923 = vadd.f32 %v7922, %v7860
      %v7924 = vadd.f32 %v7923, %v7861
      %v7925 = vrot.slane %v7924, 4
      %v7926 = vadd.f32 %v7924, %v7925
      %v7927 = vrot.slane %v7926, 2
      %v7928 = vadd.f32 %v7926, %v7927
      %v7929 = vrot.slane %v7928, 1
      %v7930 = vadd.f32 %v7928, %v7929
      %vm7931 = vcmask 1040384
      %v7932 = vsel %vm7931, %v7797, %v7930
      %7933 = vst [vmem:[%s216] sm:$0x3] %v7932
      %s7934 = smul.u32 16, %s20
      %p7935 = scmp.lt.s32.totalorder %s19, 1
      %s7936 = scalar_select %p7935, %s19, 1
      %p7937 = scmp.lt.s32.totalorder %s7934, 31
      %s7938 = scalar_select %p7937, %s7934, 31
      %s7939 = smul.addr %s7938, 4
      %s7940 = smul.addr %s7936, 128
      %s7941 = sadd.s32 %s7939, %s7940
      %s7942 = smul.addr %s7941, 8
      %s7943 = scalar_lea.vmem %s2, %s7942
      %p7944 = scmp.lt.s32.totalorder %s19, 1
      %s7945 = scalar_select %p7944, %s19, 1
      %p7946 = scmp.lt.s32.totalorder %s20, 1
      %s7947 = scalar_select %p7946, %s20, 1
      %s7948 = smul.addr %s7945, 2
      %s7949 = sadd.s32 %s7947, %s7948
      %s7950 = smul.addr %s7949, 2
      %s7951 = scalar_lea.vmem %s3, %s7950
      // Predicated region
      $region29: #{upsampling_block_forward.2} parent=27 // pred_check
        %p7952 = pneg %p94
      $region30: #{upsampling_block_forward.2} parent=27 // pred_check_branch
        %7954 = sbr.rel (%p7952) target = $region32
      $region31: #{upsampling_block_forward.2} parent=27 // pred_region
        %s7955 = smul.u32 16, %s20
      $region32: #{upsampling_block_forward.2} parent=27 // pred_fallthru
        _
      // Predicated region
      $region33: #{upsampling_block_forward.2} parent=27 // pred_check
        %p7956 = pneg %p122
      $region34: #{upsampling_block_forward.2} parent=27 // pred_check_branch
        %7958 = sbr.rel (%p7956) target = $region36
      $region35: #{upsampling_block_forward.2} parent=27 // pred_region
        _
      $region36: #{upsampling_block_forward.2} parent=27 // pred_fallthru
        _
    $region28: #{upsampling_block_forward.2} parent=5 // pred_fallthru
      _
    %p7959 = scmp.le.s32.totalorder 2, %s10
    // Predicated region
    $region37: #{upsampling_block_forward.2} parent=5 // pred_check
      %p7960 = pneg %p7959
    $region38: #{upsampling_block_forward.2} parent=5 // pred_check_branch
      %7962 = sbr.rel (%p7960) target = $region40
    $region39: #{upsampling_block_forward.2} parent=5 // pred_region
      %s7963 = ssub.s32 %s10, 2
      // Predicated region
      $region41: #{upsampling_block_forward.2} parent=39 // pred_check
        %p7964 = pneg %p100
      $region42: #{upsampling_block_forward.2} parent=39 // pred_check_branch
        %7966 = sbr.rel (%p7964) target = $region44
      $region43: #{upsampling_block_forward.2} parent=39 // pred_region
        %s7967 = smul.u32 16, %s22
        %p7968 = scmp.lt.s32.totalorder %s21, 1
        %s7969 = scalar_select %p7968, %s21, 1
        %p7970 = scmp.lt.s32.totalorder %s7967, 31
        %s7971 = scalar_select %p7970, %s7967, 31
        %s7972 = smul.addr %s7971, 4
        %s7973 = smul.addr %s7969, 128
        %s7974 = sadd.s32 %s7972, %s7973
        %s7975 = smul.addr %s7974, 8
        %s7976 = scalar_lea.vmem %s2, %s7975
      $region44: #{upsampling_block_forward.2} parent=39 // pred_fallthru
        _
      // Predicated region
      $region45: #{upsampling_block_forward.2} parent=39 // pred_check
        %p7977 = pneg %p128
      $region46: #{upsampling_block_forward.2} parent=39 // pred_check_branch
        %7979 = sbr.rel (%p7977) target = $region48
      $region47: #{upsampling_block_forward.2} parent=39 // pred_region
        %p7980 = scmp.lt.s32.totalorder %s21, 1
        %s7981 = scalar_select %p7980, %s21, 1
        %p7982 = scmp.lt.s32.totalorder %s22, 1
        %s7983 = scalar_select %p7982, %s22, 1
        %s7984 = smul.addr %s7981, 2
        %s7985 = sadd.s32 %s7983, %s7984
        %s7986 = smul.addr %s7985, 2
        %s7987 = scalar_lea.vmem %s3, %s7986
      $region48: #{upsampling_block_forward.2} parent=39 // pred_fallthru
        _
    $region40: #{upsampling_block_forward.2} parent=5 // pred_fallthru
      _
  $region6: #{upsampling_block_forward.2} parent=0 // loop_footer
    %s14 = sadd.s32 1, %s10
  $region7: #{upsampling_block_forward.2} parent=0 // loop_footer_branch
    %9 = sbr.rel target = $region3
  $region8: #{upsampling_block_forward.2} parent=0 // loop_exit
    _

</llo_original>
